<compile_context>
chip_gen: v7x
topology: tpu7x:2x2x1
jax: 0.10.0
libtpu: 0.0.40
codegen_flags: <defaults>
</compile_context>

<pallas_src>
import functools

import jax
import jax.numpy as jnp
from jax.experimental import pallas as pl
from jax.experimental.pallas import tpu as pltpu

_LANE = 128
_ROW_QUANT = 16          # bf16 packs two rows per sublane -> row tiles % 16 == 0
_NEG_SLOPE = 0.2
_BN_EPS = 1e-5


# ----------------------------- small helpers -------------------------------

def _round_up(x, m):
    return (x + m - 1) // m * m


def _pick_tile_m(m, kdim):
    """Bigger M tiles for the memory-bound small-K layers; 512 for deep ones."""
    base = 1024 if kdim <= 256 else 512
    return min(base, _round_up(max(m, _ROW_QUANT), _ROW_QUANT))


def _pick_tile_k(kdim):
    """K tiling bounds VMEM independently of ndf (K = 16*Cin)."""
    if kdim > 256 and kdim % 256 == 0:
        return 256
    return kdim


def _pick_tile_m_stream(mp, tm, cp):
    """scale/shift is pure streaming: one big block when it fits comfortably."""
    if mp <= 2048 and mp * cp * 4 * 4 < (24 << 20):
        return mp
    return tm


def _pad_axis(x, axis, target):
    pad = target - x.shape[axis]
    if pad == 0:
        return x
    widths = [(0, 0)] * x.ndim
    widths[axis] = (0, pad)
    return jnp.pad(x, widths)


def _compiler_params(semantics, tile_bytes):
    # 2 pipeline buffers per block + scratch + headroom; clamp at 56 MiB so the
    # request always fits v7x's 64 MiB physical VMEM with compiler headroom
    # (v5e/v6e have 128 MiB and never get near the clamp at these tile sizes).
    need = 2 * int(tile_bytes) + (4 << 20)
    limit = int(min(max(need, 32 << 20), 56 << 20))
    return pltpu.CompilerParams(dimension_semantics=semantics,
                                vmem_limit_bytes=limit)


# ----------------------------- Pallas kernels -------------------------------

def _matmul_leaky_kernel(x_ref, w_ref, o_ref, acc_ref):
    """K-tiled bf16 matmul (f32 VMEM accumulator) + LeakyReLU epilogue."""
    k = pl.program_id(1)

    @pl.when(k == 0)
    def _():
        acc_ref[...] = jnp.zeros_like(acc_ref)

    acc_ref[...] += jnp.dot(x_ref[...], w_ref[...],
                            preferred_element_type=jnp.float32)

    @pl.when(k == pl.num_programs(1) - 1)
    def _():
        y = acc_ref[...]
        y = jnp.where(y >= 0.0, y, _NEG_SLOPE * y)
        o_ref[...] = y.astype(o_ref.dtype)


def _matmul_stats_kernel(x_ref, w_ref, y_ref, sum_ref, ssq_ref, acc_ref):
    """BN pass 1: K-tiled matmul; emits bf16 pre-BN y plus per-M-tile partial
    channel sum / sum-of-squares taken from the f32 accumulator.

    Per-tile partial outputs (distinct block per M index) keep the M axis
    'parallel' so v7x can shard it across both TensorCores.
    """
    k = pl.program_id(1)

    @pl.when(k == 0)
    def _():
        acc_ref[...] = jnp.zeros_like(acc_ref)

    acc_ref[...] += jnp.dot(x_ref[...], w_ref[...],
                            preferred_element_type=jnp.float32)

    @pl.when(k == pl.num_programs(1) - 1)
    def _():
        y = acc_ref[...]
        y_ref[...] = y.astype(y_ref.dtype)
        s = jnp.sum(y, axis=0, keepdims=True)        # (1, Cp), exact f32 stats
        q = jnp.sum(y * y, axis=0, keepdims=True)
        sum_ref[...] = jnp.broadcast_to(s[None], sum_ref.shape)
        ssq_ref[...] = jnp.broadcast_to(q[None], ssq_ref.shape)


def _scale_shift_leaky_kernel(y_ref, scale_ref, shift_ref, o_ref):
    """BN pass 2: y * scale + shift (gamma/beta pre-folded) + LeakyReLU."""
    y = y_ref[...].astype(jnp.float32) * scale_ref[...] + shift_ref[...]
    y = jnp.where(y >= 0.0, y, _NEG_SLOPE * y)
    o_ref[...] = y.astype(o_ref.dtype)


# --------------------------- pallas_call wrappers ---------------------------

def _matmul_leaky(patches, w_mat, tm):
    """patches (Mp, K) bf16, w_mat (K, Cp) bf16; Mp % tm == 0."""
    mp, kdim = patches.shape
    cp = w_mat.shape[1]
    tk = _pick_tile_k(kdim)
    gm, gk = mp // tm, kdim // tk
    tile_bytes = 2 * (tm * tk * 2) + 2 * (tk * cp * 2) + 2 * (tm * cp * 2) + tm * cp * 4
    return pl.pallas_call(
        _matmul_leaky_kernel,
        out_shape=jax.ShapeDtypeStruct((mp, cp), jnp.bfloat16),
        grid_spec=pltpu.PrefetchScalarGridSpec(
            num_scalar_prefetch=0,
            grid=(gm, gk),
            in_specs=[pl.BlockSpec((tm, tk), lambda i, k: (i, k)),
                      pl.BlockSpec((tk, cp), lambda i, k: (k, 0))],
            out_specs=pl.BlockSpec((tm, cp), lambda i, k: (i, 0)),
            scratch_shapes=[pltpu.VMEM((tm, cp), jnp.float32)]),
        compiler_params=_compiler_params(("parallel", "arbitrary"), tile_bytes),
        cost_estimate=pl.CostEstimate(
            flops=int(2 * mp * kdim * cp),
            transcendentals=0,
            bytes_accessed=int(mp * kdim * 2 + kdim * cp * 2 + mp * cp * 2)),
    )(patches, w_mat)


def _matmul_stats(patches, w_mat, tm):
    """BN pass 1: returns (bf16 pre-BN conv out, per-tile sums, per-tile sumsq)."""
    mp, kdim = patches.shape
    cp = w_mat.shape[1]
    tk = _pick_tile_k(kdim)
    gm, gk = mp // tm, kdim // tk
    tile_bytes = (2 * (tm * tk * 2) + 2 * (tk * cp * 2) + 2 * (tm * cp * 2)
                  + tm * cp * 4 + 4 * 8 * cp * 4)
    return pl.pallas_call(
        _matmul_stats_kernel,
        out_shape=(jax.ShapeDtypeStruct((mp, cp), jnp.bfloat16),
                   jax.ShapeDtypeStruct((gm, 8, cp), jnp.float32),
                   jax.ShapeDtypeStruct((gm, 8, cp), jnp.float32)),
        grid_spec=pltpu.PrefetchScalarGridSpec(
            num_scalar_prefetch=0,
            grid=(gm, gk),
            in_specs=[pl.BlockSpec((tm, tk), lambda i, k: (i, k)),
                      pl.BlockSpec((tk, cp), lambda i, k: (k, 0))],
            out_specs=[pl.BlockSpec((tm, cp), lambda i, k: (i, 0)),
                       pl.BlockSpec((1, 8, cp), lambda i, k: (i, 0, 0)),
                       pl.BlockSpec((1, 8, cp), lambda i, k: (i, 0, 0))],
            scratch_shapes=[pltpu.VMEM((tm, cp), jnp.float32)]),
        compiler_params=_compiler_params(("parallel", "arbitrary"), tile_bytes),
        cost_estimate=pl.CostEstimate(
            flops=int(2 * mp * kdim * cp + 3 * mp * cp),
            transcendentals=0,
            bytes_accessed=int(mp * kdim * 2 + kdim * cp * 2 + mp * cp * 2
                               + 2 * gm * 8 * cp * 4)),
    )(patches, w_mat)


def _scale_shift_leaky(y, scale, shift, tm):
    """BN pass 2: tiled elementwise normalize + LeakyReLU (bf16 in / bf16 out)."""
    mp, cp = y.shape
    tm2 = _pick_tile_m_stream(mp, tm, cp)
    tile_bytes = 2 * (tm2 * cp * 2) * 2 + 2 * cp * 4
    return pl.pallas_call(
        _scale_shift_leaky_kernel,
        out_shape=jax.ShapeDtypeStruct((mp, cp), jnp.bfloat16),
        grid_spec=pltpu.PrefetchScalarGridSpec(
            num_scalar_prefetch=0,
            grid=(mp // tm2,),
            in_specs=[pl.BlockSpec((tm2, cp), lambda i: (i, 0)),
                      pl.BlockSpec((1, cp), lambda i: (0, 0)),
                      pl.BlockSpec((1, cp), lambda i: (0, 0))],
            out_specs=pl.BlockSpec((tm2, cp), lambda i: (i, 0)),
        ),
        compiler_params=_compiler_params(("parallel",), tile_bytes),
        cost_estimate=pl.CostEstimate(
            flops=int(4 * mp * cp),
            transcendentals=0,
            bytes_accessed=int(mp * cp * 4 + 2 * cp * 4)),
    )(y, scale, shift)


# ------------------------------- JAX glue -----------------------------------

def _im2col_nhwc(x, ksize, stride, pad):
    """x: (N, H, W, C) -> (N*Hout*Wout, ksize*ksize*C), K ordered (kh, kw, c)."""
    n, _, _, c = x.shape
    if pad:
        x = jnp.pad(x, ((0, 0), (pad, pad), (pad, pad), (0, 0)))
    hp, wp = x.shape[1], x.shape[2]
    hout = (hp - ksize) // stride + 1
    wout = (wp - ksize) // stride + 1
    taps = []
    for kh in range(ksize):
        for kw in range(ksize):
            taps.append(x[:, kh:kh + stride * hout:stride,
                          kw:kw + stride * wout:stride, :])
    p = jnp.stack(taps, axis=3)                       # (N, Hout, Wout, k*k, C)
    return p.reshape(n * hout * wout, ksize * ksize * c), hout, wout


def _conv_block(x_nhwc, w, gamma, beta, use_bn, stride, pad):
    """x_nhwc: (N, H, W, Cin) bf16; w: (Cout, Cin, 4, 4) f32.  Returns NHWC bf16."""
    n = x_nhwc.shape[0]
    cout = w.shape[0]
    patches, hout, wout = _im2col_nhwc(x_nhwc, 4, stride, pad)
    m, kdim = patches.shape

    cp = _round_up(cout, _LANE)
    tm = _pick_tile_m(m, kdim)
    mp = _round_up(m, tm)

    # K is left unpadded: the block spans the full K extent (or a 256 K tile),
    # so layer 1 avoids the 48 -> 128 inflation entirely.
    patches = _pad_axis(patches, 0, mp).astype(jnp.bfloat16)
    w_mat = w.transpose(2, 3, 1, 0).reshape(kdim, cout)       # K ordered (kh, kw, ci)
    w_mat = _pad_axis(w_mat, 1, cp).astype(jnp.bfloat16)

    if use_bn:
        y, psum, pssq = _matmul_stats(patches, w_mat, tm)
        csum = jnp.sum(psum[:, 0, :], axis=0, keepdims=True)  # (1, Cp)
        cssq = jnp.sum(pssq[:, 0, :], axis=0, keepdims=True)
        inv_m = jnp.float32(1.0 / m)                          # true M (padded rows add 0)
        mean = csum * inv_m
        var = jnp.maximum(cssq * inv_m - mean * mean, 0.0)    # biased var (PyTorch BN train)
        gp = _pad_axis(gamma.reshape(1, -1).astype(jnp.float32), 1, cp)
        bp = _pad_axis(beta.reshape(1, -1).astype(jnp.float32), 1, cp)
        scale = gp * jax.lax.rsqrt(var + _BN_EPS)             # gamma folded into scale
        shift = bp - mean * scale
        out = _scale_shift_leaky(y, scale, shift, tm)
    else:
        out = _matmul_leaky(patches, w_mat, tm)

    return out[:m, :cout].reshape(n, hout, wout, cout)


def _final_conv_sigmoid(x_nhwc, w):
    """Conv2d(ndf*8, 1, 4, 1, 0) on a 4x4 map + Sigmoid.

    M = batch and Cout = 1: a padded MXU pallas_call would do 128x the useful
    work, so this stays a plain matvec + sigmoid in the glue (per review).
    """
    n = x_nhwc.shape[0]
    kdim = 16 * w.shape[1]
    x_flat = x_nhwc.reshape(n, kdim).astype(jnp.float32)          # (kh, kw, c) order
    w_vec = w.transpose(2, 3, 1, 0).reshape(kdim, 1).astype(jnp.float32)
    return jax.nn.sigmoid(jnp.dot(x_flat, w_vec))                 # (N, 1)


# ------------------------------- model ---------------------------------------

def init_params(key, nc, ndf):
    """Deterministic DCGAN-style init: conv ~ N(0, 0.02), BN gamma=1, beta=0."""
    keys = jax.random.split(key, 5)

    def conv_w(k, co, ci):
        return 0.02 * jax.random.normal(k, (co, ci, 4, 4), jnp.float32)

    return {
        "w1": conv_w(keys[0], ndf, nc),
        "w2": conv_w(keys[1], ndf * 2, ndf),
        "g2": jnp.ones((ndf * 2,), jnp.float32),
        "b2": jnp.zeros((ndf * 2,), jnp.float32),
        "w3": conv_w(keys[2], ndf * 4, ndf * 2),
        "g3": jnp.ones((ndf * 4,), jnp.float32),
        "b3": jnp.zeros((ndf * 4,), jnp.float32),
        "w4": conv_w(keys[3], ndf * 8, ndf * 4),
        "g4": jnp.ones((ndf * 8,), jnp.float32),
        "b4": jnp.zeros((ndf * 8,), jnp.float32),
        "w5": conv_w(keys[4], 1, ndf * 8),
    }


@jax.jit
def discriminator_forward(x, params):
    """x: (N, nc, 64, 64) NCHW -> (N,) sigmoid scores."""
    # Single layout change at the API boundary; everything downstream is NHWC.
    h = jnp.transpose(x, (0, 2, 3, 1)).astype(jnp.bfloat16)
    h = _conv_block(h, params["w1"], None, None, False, 2, 1)                 # 64 -> 32
    h = _conv_block(h, params["w2"], params["g2"], params["b2"], True, 2, 1)  # 32 -> 16
    h = _conv_block(h, params["w3"], params["g3"], params["b3"], True, 2, 1)  # 16 -> 8
    h = _conv_block(h, params["w4"], params["g4"], params["b4"], True, 2, 1)  # 8 -> 4
    out = _final_conv_sigmoid(h, params["w5"])                                # 4 -> 1
    # output.view(-1, 1).squeeze(1)
    return out.reshape(-1)


# --------------------------------- main --------------------------------------

if __name__ == "__main__":
    batch, nc, ndf, hw = 2, 3, 8, 64   # 64x64 input so the final 4x4 conv yields 1x1
    key = jax.random.PRNGKey(0)
    k_x, k_p = jax.random.split(key)
    x = jax.random.normal(k_x, (batch, nc, hw, hw), jnp.float32)
    params = init_params(k_p, nc, ndf)

    out = discriminator_forward(x, params)
    out = jax.block_until_ready(out)

    assert out.shape == (batch,), out.shape
    assert bool(jnp.all(jnp.isfinite(out)))
    assert bool(jnp.all((out >= 0.0) & (out <= 1.0)))
    print("KERNEL_OK")
</pallas_src>

<mosaic_0001>
module attributes {stable_mosaic.version = 11 : i64} {
  func.func @_matmul_leaky_kernel(%arg0: i32, %arg1: i32, %arg2: memref<1024x48xbf16, #tpu.memory_space<vmem>>, %arg3: memref<48x128xbf16, #tpu.memory_space<vmem>>, %arg4: memref<1024x128xbf16, #tpu.memory_space<vmem>>, %arg5: memref<1024x128xf32, #tpu.memory_space<vmem>>) attributes {dimension_semantics = [#tpu.dimension_semantics<parallel>, #tpu.dimension_semantics<arbitrary>], iteration_bounds = array<i64: 2, 1>, scalar_prefetch = 0 : i64, scratch_operands = 1 : i64, tpu.core_type = #tpu.core_type<tc>, window_params = [{transform_indices = @transform_0, window_bounds = array<i64: 1024, 48>}, {transform_indices = @transform_1, window_bounds = array<i64: 48, 128>}, {transform_indices = @transform_2, window_bounds = array<i64: 1024, 128>}]} {
    %c0_i32 = arith.constant 0 : i32
    %0 = arith.cmpi eq, %arg1, %c0_i32 : i32
    %1 = arith.extui %0 : i1 to i32
    %c0_i32_0 = arith.constant 0 : i32
    %2 = arith.cmpi ne, %1, %c0_i32_0 : i32
    scf.if %2 {
      %cst_10 = arith.constant 0.000000e+00 : f32
      %12 = vector.broadcast %cst_10 : f32 to vector<1024x128xf32>
      %c0_11 = arith.constant 0 : index
      %c0_12 = arith.constant 0 : index
      %13 = vector.load %arg5[%c0_11, %c0_12] : memref<1024x128xf32, #tpu.memory_space<vmem>>, vector<1024x128xf32>
      tpu.vector_store %arg5[%c0_11, %c0_12], %12 {strides = array<i32>} : memref<1024x128xf32, #tpu.memory_space<vmem>>, vector<1024x128xf32>,
    } else {
    }
    %c0 = arith.constant 0 : index
    %c0_1 = arith.constant 0 : index
    %3 = vector.load %arg5[%c0, %c0_1] : memref<1024x128xf32, #tpu.memory_space<vmem>>, vector<1024x128xf32>
    %c0_2 = arith.constant 0 : index
    %c0_3 = arith.constant 0 : index
    %4 = vector.load %arg2[%c0_2, %c0_3] : memref<1024x48xbf16, #tpu.memory_space<vmem>>, vector<1024x48xbf16>
    %c0_4 = arith.constant 0 : index
    %c0_5 = arith.constant 0 : index
    %5 = vector.load %arg3[%c0_4, %c0_5] : memref<48x128xbf16, #tpu.memory_space<vmem>>, vector<48x128xbf16>
    %cst = arith.constant dense<0.000000e+00> : vector<1024x128xf32>
    %6 = tpu.matmul %4, %5, %cst {dimension_numbers = #tpu.dot_dimension_numbers<[1], [0], [0], [1], [0, 0, 1, 1], [], []>} : vector<1024x48xbf16>, vector<48x128xbf16>, vector<1024x128xf32> -> vector<1024x128xf32>
    %7 = arith.addf %3, %6 : vector<1024x128xf32>
    %c0_6 = arith.constant 0 : index
    %c0_7 = arith.constant 0 : index
    %8 = vector.load %arg5[%c0_6, %c0_7] : memref<1024x128xf32, #tpu.memory_space<vmem>>, vector<1024x128xf32>
    tpu.vector_store %arg5[%c0_6, %c0_7], %7 {strides = array<i32>} : memref<1024x128xf32, #tpu.memory_space<vmem>>, vector<1024x128xf32>,
    %c0_i32_8 = arith.constant 0 : i32
    %9 = arith.cmpi eq, %arg1, %c0_i32_8 : i32
    %10 = arith.extui %9 : i1 to i32
    %c0_i32_9 = arith.constant 0 : i32
    %11 = arith.cmpi ne, %10, %c0_i32_9 : i32
    scf.if %11 {
      %c0_10 = arith.constant 0 : index
      %c0_11 = arith.constant 0 : index
      %12 = vector.load %arg5[%c0_10, %c0_11] : memref<1024x128xf32, #tpu.memory_space<vmem>>, vector<1024x128xf32>
      %cst_12 = arith.constant 0.000000e+00 : f32
      %13 = vector.broadcast %cst_12 : f32 to vector<1024x128xf32>
      %14 = arith.cmpf oge, %12, %13 : vector<1024x128xf32>
      %cst_13 = arith.constant 2.000000e-01 : f32
      %15 = vector.broadcast %cst_13 : f32 to vector<1024x128xf32>
      %16 = arith.mulf %15, %12 : vector<1024x128xf32>
      %17 = arith.select %14, %12, %16 : vector<1024x128xi1>, vector<1024x128xf32>
      %18 = arith.truncf %17 : vector<1024x128xf32> to vector<1024x128xbf16>
      %c0_14 = arith.constant 0 : index
      %c0_15 = arith.constant 0 : index
      %19 = vector.load %arg4[%c0_14, %c0_15] : memref<1024x128xbf16, #tpu.memory_space<vmem>>, vector<1024x128xbf16>
      tpu.vector_store %arg4[%c0_14, %c0_15], %18 {strides = array<i32>} : memref<1024x128xbf16, #tpu.memory_space<vmem>>, vector<1024x128xbf16>,
    } else {
    }
    return
  }
  func.func @transform_0(%arg0: i32, %arg1: i32) -> (i32, i32) {
    %c0_i32 = arith.constant 0 : i32
    return %arg0, %arg1 : i32, i32
  }
  func.func @transform_1(%arg0: i32, %arg1: i32) -> (i32, i32) {
    %c0_i32 = arith.constant 0 : i32
    %c0_i32_0 = arith.constant 0 : i32
    return %arg1, %c0_i32 : i32, i32
  }
  func.func @transform_2(%arg0: i32, %arg1: i32) -> (i32, i32) {
    %c0_i32 = arith.constant 0 : i32
    %c0_i32_0 = arith.constant 0 : i32
    return %arg0, %c0_i32 : i32, i32
  }
}

module attributes {stable_mosaic.version = 11 : i64} {
  func.func @_matmul_stats_kernel(%arg0: i32, %arg1: i32, %arg2: memref<512x128xbf16, #tpu.memory_space<vmem>>, %arg3: memref<128x128xbf16, #tpu.memory_space<vmem>>, %arg4: memref<512x128xbf16, #tpu.memory_space<vmem>>, %arg5: memref<1x8x128xf32, #tpu.memory_space<vmem>>, %arg6: memref<1x8x128xf32, #tpu.memory_space<vmem>>, %arg7: memref<512x128xf32, #tpu.memory_space<vmem>>) attributes {dimension_semantics = [#tpu.dimension_semantics<parallel>, #tpu.dimension_semantics<arbitrary>], iteration_bounds = array<i64: 1, 1>, scalar_prefetch = 0 : i64, scratch_operands = 1 : i64, tpu.core_type = #tpu.core_type<tc>, window_params = [{transform_indices = @transform_0, window_bounds = array<i64: 512, 128>}, {transform_indices = @transform_1, window_bounds = array<i64: 128, 128>}, {transform_indices = @transform_2, window_bounds = array<i64: 512, 128>}, {transform_indices = @transform_3, window_bounds = array<i64: 1, 8, 128>}, {transform_indices = @transform_4, window_bounds = array<i64: 1, 8, 128>}]} {
    %c0_i32 = arith.constant 0 : i32
    %0 = arith.cmpi eq, %arg1, %c0_i32 : i32
    %1 = arith.extui %0 : i1 to i32
    %c0_i32_0 = arith.constant 0 : i32
    %2 = arith.cmpi ne, %1, %c0_i32_0 : i32
    scf.if %2 {
      %cst_10 = arith.constant 0.000000e+00 : f32
      %12 = vector.broadcast %cst_10 : f32 to vector<512x128xf32>
      %c0_11 = arith.constant 0 : index
      %c0_12 = arith.constant 0 : index
      %13 = vector.load %arg7[%c0_11, %c0_12] : memref<512x128xf32, #tpu.memory_space<vmem>>, vector<512x128xf32>
      tpu.vector_store %arg7[%c0_11, %c0_12], %12 {strides = array<i32>} : memref<512x128xf32, #tpu.memory_space<vmem>>, vector<512x128xf32>,
    } else {
    }
    %c0 = arith.constant 0 : index
    %c0_1 = arith.constant 0 : index
    %3 = vector.load %arg7[%c0, %c0_1] : memref<512x128xf32, #tpu.memory_space<vmem>>, vector<512x128xf32>
    %c0_2 = arith.constant 0 : index
    %c0_3 = arith.constant 0 : index
    %4 = vector.load %arg2[%c0_2, %c0_3] : memref<512x128xbf16, #tpu.memory_space<vmem>>, vector<512x128xbf16>
    %c0_4 = arith.constant 0 : index
    %c0_5 = arith.constant 0 : index
    %5 = vector.load %arg3[%c0_4, %c0_5] : memref<128x128xbf16, #tpu.memory_space<vmem>>, vector<128x128xbf16>
    %cst = arith.constant dense<0.000000e+00> : vector<512x128xf32>
    %6 = tpu.matmul %4, %5, %cst {dimension_numbers = #tpu.dot_dimension_numbers<[1], [0], [0], [1], [0, 0, 1, 1], [], []>} : vector<512x128xbf16>, vector<128x128xbf16>, vector<512x128xf32> -> vector<512x128xf32>
    %7 = arith.addf %3, %6 : vector<512x128xf32>
    %c0_6 = arith.constant 0 : index
    %c0_7 = arith.constant 0 : index
    %8 = vector.load %arg7[%c0_6, %c0_7] : memref<512x128xf32, #tpu.memory_space<vmem>>, vector<512x128xf32>
    tpu.vector_store %arg7[%c0_6, %c0_7], %7 {strides = array<i32>} : memref<512x128xf32, #tpu.memory_space<vmem>>, vector<512x128xf32>,
    %c0_i32_8 = arith.constant 0 : i32
    %9 = arith.cmpi eq, %arg1, %c0_i32_8 : i32
    %10 = arith.extui %9 : i1 to i32
    %c0_i32_9 = arith.constant 0 : i32
    %11 = arith.cmpi ne, %10, %c0_i32_9 : i32
    scf.if %11 {
      %c0_10 = arith.constant 0 : index
      %c0_11 = arith.constant 0 : index
      %12 = vector.load %arg7[%c0_10, %c0_11] : memref<512x128xf32, #tpu.memory_space<vmem>>, vector<512x128xf32>
      %13 = arith.truncf %12 : vector<512x128xf32> to vector<512x128xbf16>
      %c0_12 = arith.constant 0 : index
      %c0_13 = arith.constant 0 : index
      %14 = vector.load %arg4[%c0_12, %c0_13] : memref<512x128xbf16, #tpu.memory_space<vmem>>, vector<512x128xbf16>
      tpu.vector_store %arg4[%c0_12, %c0_13], %13 {strides = array<i32>} : memref<512x128xbf16, #tpu.memory_space<vmem>>, vector<512x128xbf16>,
      %cst_14 = arith.constant dense<0.000000e+00> : vector<128xf32>
      %15 = vector.multi_reduction <add>, %12, %cst_14 [0] : vector<512x128xf32> to vector<128xf32>
      %16 = vector.shape_cast %15 : vector<128xf32> to vector<1x128xf32>
      %17 = arith.mulf %12, %12 : vector<512x128xf32>
      %cst_15 = arith.constant dense<0.000000e+00> : vector<128xf32>
      %18 = vector.multi_reduction <add>, %17, %cst_15 [0] : vector<512x128xf32> to vector<128xf32>
      %19 = vector.shape_cast %18 : vector<128xf32> to vector<1x128xf32>
      %20 = vector.shape_cast %16 : vector<1x128xf32> to vector<1x1x128xf32>
      %21 = vector.shape_cast %20 : vector<1x1x128xf32> to vector<1x1x128xf32>
      %22 = vector.broadcast %21 : vector<1x1x128xf32> to vector<1x8x128xf32>
      %c0_16 = arith.constant 0 : index
      %c0_17 = arith.constant 0 : index
      %c0_18 = arith.constant 0 : index
      %23 = vector.load %arg5[%c0_16, %c0_17, %c0_18] : memref<1x8x128xf32, #tpu.memory_space<vmem>>, vector<1x8x128xf32>
      tpu.vector_store %arg5[%c0_16, %c0_17, %c0_18], %22 {strides = array<i32>} : memref<1x8x128xf32, #tpu.memory_space<vmem>>, vector<1x8x128xf32>,
      %24 = vector.shape_cast %19 : vector<1x128xf32> to vector<1x1x128xf32>
      %25 = vector.shape_cast %24 : vector<1x1x128xf32> to vector<1x1x128xf32>
      %26 = vector.broadcast %25 : vector<1x1x128xf32> to vector<1x8x128xf32>
      %c0_19 = arith.constant 0 : index
      %c0_20 = arith.constant 0 : index
      %c0_21 = arith.constant 0 : index
      %27 = vector.load %arg6[%c0_19, %c0_20, %c0_21] : memref<1x8x128xf32, #tpu.memory_space<vmem>>, vector<1x8x128xf32>
      tpu.vector_store %arg6[%c0_19, %c0_20, %c0_21], %26 {strides = array<i32>} : memref<1x8x128xf32, #tpu.memory_space<vmem>>, vector<1x8x128xf32>,
    } else {
    }
    return
  }
  func.func @transform_0(%arg0: i32, %arg1: i32) -> (i32, i32) {
    %c0_i32 = arith.constant 0 : i32
    return %arg0, %arg1 : i32, i32
  }
  func.func @transform_1(%arg0: i32, %arg1: i32) -> (i32, i32) {
    %c0_i32 = arith.constant 0 : i32
    %c0_i32_0 = arith.constant 0 : i32
    return %arg1, %c0_i32 : i32, i32
  }
  func.func @transform_2(%arg0: i32, %arg1: i32) -> (i32, i32) {
    %c0_i32 = arith.constant 0 : i32
    %c0_i32_0 = arith.constant 0 : i32
    return %arg0, %c0_i32 : i32, i32
  }
  func.func @transform_3(%arg0: i32, %arg1: i32) -> (i32, i32, i32) {
    %c0_i32 = arith.constant 0 : i32
    %c0_i32_0 = arith.constant 0 : i32
    %c0_i32_1 = arith.constant 0 : i32
    return %arg0, %c0_i32, %c0_i32_0 : i32, i32, i32
  }
  func.func @transform_4(%arg0: i32, %arg1: i32) -> (i32, i32, i32) {
    %c0_i32 = arith.constant 0 : i32
    %c0_i32_0 = arith.constant 0 : i32
    %c0_i32_1 = arith.constant 0 : i32
    return %arg0, %c0_i32, %c0_i32_0 : i32, i32, i32
  }
}

module attributes {stable_mosaic.version = 11 : i64} {
  func.func @_scale_shift_leaky_kernel(%arg0: i32, %arg1: memref<512x128xbf16, #tpu.memory_space<vmem>>, %arg2: memref<1x128xf32, #tpu.memory_space<vmem>>, %arg3: memref<1x128xf32, #tpu.memory_space<vmem>>, %arg4: memref<512x128xbf16, #tpu.memory_space<vmem>>) attributes {dimension_semantics = [#tpu.dimension_semantics<parallel>], iteration_bounds = array<i64: 1>, scalar_prefetch = 0 : i64, scratch_operands = 0 : i64, tpu.core_type = #tpu.core_type<tc>, window_params = [{transform_indices = @transform_0, window_bounds = array<i64: 512, 128>}, {pipeline_mode = #tpu.pipeline_mode<synchronous>, transform_indices = @transform_1, window_bounds = array<i64: 1, 128>}, {pipeline_mode = #tpu.pipeline_mode<synchronous>, transform_indices = @transform_2, window_bounds = array<i64: 1, 128>}, {transform_indices = @transform_3, window_bounds = array<i64: 512, 128>}]} {
    %c0 = arith.constant 0 : index
    %c0_0 = arith.constant 0 : index
    %0 = vector.load %arg1[%c0, %c0_0] : memref<512x128xbf16, #tpu.memory_space<vmem>>, vector<512x128xbf16>
    %1 = arith.extf %0 : vector<512x128xbf16> to vector<512x128xf32>
    %c0_1 = arith.constant 0 : index
    %c0_2 = arith.constant 0 : index
    %2 = vector.load %arg2[%c0_1, %c0_2] : memref<1x128xf32, #tpu.memory_space<vmem>>, vector<1x128xf32>
    %3 = vector.broadcast %2 : vector<1x128xf32> to vector<512x128xf32>
    %4 = arith.mulf %1, %3 : vector<512x128xf32>
    %c0_3 = arith.constant 0 : index
    %c0_4 = arith.constant 0 : index
    %5 = vector.load %arg3[%c0_3, %c0_4] : memref<1x128xf32, #tpu.memory_space<vmem>>, vector<1x128xf32>
    %6 = vector.broadcast %5 : vector<1x128xf32> to vector<512x128xf32>
    %7 = arith.addf %4, %6 : vector<512x128xf32>
    %cst = arith.constant 0.000000e+00 : f32
    %8 = vector.broadcast %cst : f32 to vector<512x128xf32>
    %9 = arith.cmpf oge, %7, %8 : vector<512x128xf32>
    %cst_5 = arith.constant 2.000000e-01 : f32
    %10 = vector.broadcast %cst_5 : f32 to vector<512x128xf32>
    %11 = arith.mulf %10, %7 : vector<512x128xf32>
    %12 = arith.select %9, %7, %11 : vector<512x128xi1>, vector<512x128xf32>
    %13 = arith.truncf %12 : vector<512x128xf32> to vector<512x128xbf16>
    %c0_6 = arith.constant 0 : index
    %c0_7 = arith.constant 0 : index
    %14 = vector.load %arg4[%c0_6, %c0_7] : memref<512x128xbf16, #tpu.memory_space<vmem>>, vector<512x128xbf16>
    tpu.vector_store %arg4[%c0_6, %c0_7], %13 {strides = array<i32>} : memref<512x128xbf16, #tpu.memory_space<vmem>>, vector<512x128xbf16>,
    return
  }
  func.func @transform_0(%arg0: i32) -> (i32, i32) {
    %c0_i32 = arith.constant 0 : i32
    %c0_i32_0 = arith.constant 0 : i32
    return %arg0, %c0_i32 : i32, i32
  }
  func.func @transform_1(%arg0: i32) -> (i32, i32) {
    %c0_i32 = arith.constant 0 : i32
    %c0_i32_0 = arith.constant 0 : i32
    %c0_i32_1 = arith.constant 0 : i32
    return %c0_i32, %c0_i32_0 : i32, i32
  }
  func.func @transform_2(%arg0: i32) -> (i32, i32) {
    %c0_i32 = arith.constant 0 : i32
    %c0_i32_0 = arith.constant 0 : i32
    %c0_i32_1 = arith.constant 0 : i32
    return %c0_i32, %c0_i32_0 : i32, i32
  }
  func.func @transform_3(%arg0: i32) -> (i32, i32) {
    %c0_i32 = arith.constant 0 : i32
    %c0_i32_0 = arith.constant 0 : i32
    return %arg0, %c0_i32 : i32, i32
  }
}

module attributes {stable_mosaic.version = 11 : i64} {
  func.func @_matmul_stats_kernel(%arg0: i32, %arg1: i32, %arg2: memref<128x256xbf16, #tpu.memory_space<vmem>>, %arg3: memref<256x128xbf16, #tpu.memory_space<vmem>>, %arg4: memref<128x128xbf16, #tpu.memory_space<vmem>>, %arg5: memref<1x8x128xf32, #tpu.memory_space<vmem>>, %arg6: memref<1x8x128xf32, #tpu.memory_space<vmem>>, %arg7: memref<128x128xf32, #tpu.memory_space<vmem>>) attributes {dimension_semantics = [#tpu.dimension_semantics<parallel>, #tpu.dimension_semantics<arbitrary>], iteration_bounds = array<i64: 1, 1>, scalar_prefetch = 0 : i64, scratch_operands = 1 : i64, tpu.core_type = #tpu.core_type<tc>, window_params = [{transform_indices = @transform_0, window_bounds = array<i64: 128, 256>}, {transform_indices = @transform_1, window_bounds = array<i64: 256, 128>}, {transform_indices = @transform_2, window_bounds = array<i64: 128, 128>}, {transform_indices = @transform_3, window_bounds = array<i64: 1, 8, 128>}, {transform_indices = @transform_4, window_bounds = array<i64: 1, 8, 128>}]} {
    %c0_i32 = arith.constant 0 : i32
    %0 = arith.cmpi eq, %arg1, %c0_i32 : i32
    %1 = arith.extui %0 : i1 to i32
    %c0_i32_0 = arith.constant 0 : i32
    %2 = arith.cmpi ne, %1, %c0_i32_0 : i32
    scf.if %2 {
      %cst_10 = arith.constant 0.000000e+00 : f32
      %12 = vector.broadcast %cst_10 : f32 to vector<128x128xf32>
      %c0_11 = arith.constant 0 : index
      %c0_12 = arith.constant 0 : index
      %13 = vector.load %arg7[%c0_11, %c0_12] : memref<128x128xf32, #tpu.memory_space<vmem>>, vector<128x128xf32>
      tpu.vector_store %arg7[%c0_11, %c0_12], %12 {strides = array<i32>} : memref<128x128xf32, #tpu.memory_space<vmem>>, vector<128x128xf32>,
    } else {
    }
    %c0 = arith.constant 0 : index
    %c0_1 = arith.constant 0 : index
    %3 = vector.load %arg7[%c0, %c0_1] : memref<128x128xf32, #tpu.memory_space<vmem>>, vector<128x128xf32>
    %c0_2 = arith.constant 0 : index
    %c0_3 = arith.constant 0 : index
    %4 = vector.load %arg2[%c0_2, %c0_3] : memref<128x256xbf16, #tpu.memory_space<vmem>>, vector<128x256xbf16>
    %c0_4 = arith.constant 0 : index
    %c0_5 = arith.constant 0 : index
    %5 = vector.load %arg3[%c0_4, %c0_5] : memref<256x128xbf16, #tpu.memory_space<vmem>>, vector<256x128xbf16>
    %cst = arith.constant dense<0.000000e+00> : vector<128x128xf32>
    %6 = tpu.matmul %4, %5, %cst {dimension_numbers = #tpu.dot_dimension_numbers<[1], [0], [0], [1], [0, 0, 1, 1], [], []>} : vector<128x256xbf16>, vector<256x128xbf16>, vector<128x128xf32> -> vector<128x128xf32>
    %7 = arith.addf %3, %6 : vector<128x128xf32>
    %c0_6 = arith.constant 0 : index
    %c0_7 = arith.constant 0 : index
    %8 = vector.load %arg7[%c0_6, %c0_7] : memref<128x128xf32, #tpu.memory_space<vmem>>, vector<128x128xf32>
    tpu.vector_store %arg7[%c0_6, %c0_7], %7 {strides = array<i32>} : memref<128x128xf32, #tpu.memory_space<vmem>>, vector<128x128xf32>,
    %c0_i32_8 = arith.constant 0 : i32
    %9 = arith.cmpi eq, %arg1, %c0_i32_8 : i32
    %10 = arith.extui %9 : i1 to i32
    %c0_i32_9 = arith.constant 0 : i32
    %11 = arith.cmpi ne, %10, %c0_i32_9 : i32
    scf.if %11 {
      %c0_10 = arith.constant 0 : index
      %c0_11 = arith.constant 0 : index
      %12 = vector.load %arg7[%c0_10, %c0_11] : memref<128x128xf32, #tpu.memory_space<vmem>>, vector<128x128xf32>
      %13 = arith.truncf %12 : vector<128x128xf32> to vector<128x128xbf16>
      %c0_12 = arith.constant 0 : index
      %c0_13 = arith.constant 0 : index
      %14 = vector.load %arg4[%c0_12, %c0_13] : memref<128x128xbf16, #tpu.memory_space<vmem>>, vector<128x128xbf16>
      tpu.vector_store %arg4[%c0_12, %c0_13], %13 {strides = array<i32>} : memref<128x128xbf16, #tpu.memory_space<vmem>>, vector<128x128xbf16>,
      %cst_14 = arith.constant dense<0.000000e+00> : vector<128xf32>
      %15 = vector.multi_reduction <add>, %12, %cst_14 [0] : vector<128x128xf32> to vector<128xf32>
      %16 = vector.shape_cast %15 : vector<128xf32> to vector<1x128xf32>
      %17 = arith.mulf %12, %12 : vector<128x128xf32>
      %cst_15 = arith.constant dense<0.000000e+00> : vector<128xf32>
      %18 = vector.multi_reduction <add>, %17, %cst_15 [0] : vector<128x128xf32> to vector<128xf32>
      %19 = vector.shape_cast %18 : vector<128xf32> to vector<1x128xf32>
      %20 = vector.shape_cast %16 : vector<1x128xf32> to vector<1x1x128xf32>
      %21 = vector.shape_cast %20 : vector<1x1x128xf32> to vector<1x1x128xf32>
      %22 = vector.broadcast %21 : vector<1x1x128xf32> to vector<1x8x128xf32>
      %c0_16 = arith.constant 0 : index
      %c0_17 = arith.constant 0 : index
      %c0_18 = arith.constant 0 : index
      %23 = vector.load %arg5[%c0_16, %c0_17, %c0_18] : memref<1x8x128xf32, #tpu.memory_space<vmem>>, vector<1x8x128xf32>
      tpu.vector_store %arg5[%c0_16, %c0_17, %c0_18], %22 {strides = array<i32>} : memref<1x8x128xf32, #tpu.memory_space<vmem>>, vector<1x8x128xf32>,
      %24 = vector.shape_cast %19 : vector<1x128xf32> to vector<1x1x128xf32>
      %25 = vector.shape_cast %24 : vector<1x1x128xf32> to vector<1x1x128xf32>
      %26 = vector.broadcast %25 : vector<1x1x128xf32> to vector<1x8x128xf32>
      %c0_19 = arith.constant 0 : index
      %c0_20 = arith.constant 0 : index
      %c0_21 = arith.constant 0 : index
      %27 = vector.load %arg6[%c0_19, %c0_20, %c0_21] : memref<1x8x128xf32, #tpu.memory_space<vmem>>, vector<1x8x128xf32>
      tpu.vector_store %arg6[%c0_19, %c0_20, %c0_21], %26 {strides = array<i32>} : memref<1x8x128xf32, #tpu.memory_space<vmem>>, vector<1x8x128xf32>,
    } else {
    }
    return
  }
  func.func @transform_0(%arg0: i32, %arg1: i32) -> (i32, i32) {
    %c0_i32 = arith.constant 0 : i32
    return %arg0, %arg1 : i32, i32
  }
  func.func @transform_1(%arg0: i32, %arg1: i32) -> (i32, i32) {
    %c0_i32 = arith.constant 0 : i32
    %c0_i32_0 = arith.constant 0 : i32
    return %arg1, %c0_i32 : i32, i32
  }
  func.func @transform_2(%arg0: i32, %arg1: i32) -> (i32, i32) {
    %c0_i32 = arith.constant 0 : i32
    %c0_i32_0 = arith.constant 0 : i32
    return %arg0, %c0_i32 : i32, i32
  }
  func.func @transform_3(%arg0: i32, %arg1: i32) -> (i32, i32, i32) {
    %c0_i32 = arith.constant 0 : i32
    %c0_i32_0 = arith.constant 0 : i32
    %c0_i32_1 = arith.constant 0 : i32
    return %arg0, %c0_i32, %c0_i32_0 : i32, i32, i32
  }
  func.func @transform_4(%arg0: i32, %arg1: i32) -> (i32, i32, i32) {
    %c0_i32 = arith.constant 0 : i32
    %c0_i32_0 = arith.constant 0 : i32
    %c0_i32_1 = arith.constant 0 : i32
    return %arg0, %c0_i32, %c0_i32_0 : i32, i32, i32
  }
}

module attributes {stable_mosaic.version = 11 : i64} {
  func.func @_scale_shift_leaky_kernel(%arg0: i32, %arg1: memref<128x128xbf16, #tpu.memory_space<vmem>>, %arg2: memref<1x128xf32, #tpu.memory_space<vmem>>, %arg3: memref<1x128xf32, #tpu.memory_space<vmem>>, %arg4: memref<128x128xbf16, #tpu.memory_space<vmem>>) attributes {dimension_semantics = [#tpu.dimension_semantics<parallel>], iteration_bounds = array<i64: 1>, scalar_prefetch = 0 : i64, scratch_operands = 0 : i64, tpu.core_type = #tpu.core_type<tc>, window_params = [{transform_indices = @transform_0, window_bounds = array<i64: 128, 128>}, {pipeline_mode = #tpu.pipeline_mode<synchronous>, transform_indices = @transform_1, window_bounds = array<i64: 1, 128>}, {pipeline_mode = #tpu.pipeline_mode<synchronous>, transform_indices = @transform_2, window_bounds = array<i64: 1, 128>}, {transform_indices = @transform_3, window_bounds = array<i64: 128, 128>}]} {
    %c0 = arith.constant 0 : index
    %c0_0 = arith.constant 0 : index
    %0 = vector.load %arg1[%c0, %c0_0] : memref<128x128xbf16, #tpu.memory_space<vmem>>, vector<128x128xbf16>
    %1 = arith.extf %0 : vector<128x128xbf16> to vector<128x128xf32>
    %c0_1 = arith.constant 0 : index
    %c0_2 = arith.constant 0 : index
    %2 = vector.load %arg2[%c0_1, %c0_2] : memref<1x128xf32, #tpu.memory_space<vmem>>, vector<1x128xf32>
    %3 = vector.broadcast %2 : vector<1x128xf32> to vector<128x128xf32>
    %4 = arith.mulf %1, %3 : vector<128x128xf32>
    %c0_3 = arith.constant 0 : index
    %c0_4 = arith.constant 0 : index
    %5 = vector.load %arg3[%c0_3, %c0_4] : memref<1x128xf32, #tpu.memory_space<vmem>>, vector<1x128xf32>
    %6 = vector.broadcast %5 : vector<1x128xf32> to vector<128x128xf32>
    %7 = arith.addf %4, %6 : vector<128x128xf32>
    %cst = arith.constant 0.000000e+00 : f32
    %8 = vector.broadcast %cst : f32 to vector<128x128xf32>
    %9 = arith.cmpf oge, %7, %8 : vector<128x128xf32>
    %cst_5 = arith.constant 2.000000e-01 : f32
    %10 = vector.broadcast %cst_5 : f32 to vector<128x128xf32>
    %11 = arith.mulf %10, %7 : vector<128x128xf32>
    %12 = arith.select %9, %7, %11 : vector<128x128xi1>, vector<128x128xf32>
    %13 = arith.truncf %12 : vector<128x128xf32> to vector<128x128xbf16>
    %c0_6 = arith.constant 0 : index
    %c0_7 = arith.constant 0 : index
    %14 = vector.load %arg4[%c0_6, %c0_7] : memref<128x128xbf16, #tpu.memory_space<vmem>>, vector<128x128xbf16>
    tpu.vector_store %arg4[%c0_6, %c0_7], %13 {strides = array<i32>} : memref<128x128xbf16, #tpu.memory_space<vmem>>, vector<128x128xbf16>,
    return
  }
  func.func @transform_0(%arg0: i32) -> (i32, i32) {
    %c0_i32 = arith.constant 0 : i32
    %c0_i32_0 = arith.constant 0 : i32
    return %arg0, %c0_i32 : i32, i32
  }
  func.func @transform_1(%arg0: i32) -> (i32, i32) {
    %c0_i32 = arith.constant 0 : i32
    %c0_i32_0 = arith.constant 0 : i32
    %c0_i32_1 = arith.constant 0 : i32
    return %c0_i32, %c0_i32_0 : i32, i32
  }
  func.func @transform_2(%arg0: i32) -> (i32, i32) {
    %c0_i32 = arith.constant 0 : i32
    %c0_i32_0 = arith.constant 0 : i32
    %c0_i32_1 = arith.constant 0 : i32
    return %c0_i32, %c0_i32_0 : i32, i32
  }
  func.func @transform_3(%arg0: i32) -> (i32, i32) {
    %c0_i32 = arith.constant 0 : i32
    %c0_i32_0 = arith.constant 0 : i32
    return %arg0, %c0_i32 : i32, i32
  }
}

module attributes {stable_mosaic.version = 11 : i64} {
  func.func @_matmul_stats_kernel(%arg0: i32, %arg1: i32, %arg2: memref<32x256xbf16, #tpu.memory_space<vmem>>, %arg3: memref<256x128xbf16, #tpu.memory_space<vmem>>, %arg4: memref<32x128xbf16, #tpu.memory_space<vmem>>, %arg5: memref<1x8x128xf32, #tpu.memory_space<vmem>>, %arg6: memref<1x8x128xf32, #tpu.memory_space<vmem>>, %arg7: memref<32x128xf32, #tpu.memory_space<vmem>>) attributes {dimension_semantics = [#tpu.dimension_semantics<parallel>, #tpu.dimension_semantics<arbitrary>], iteration_bounds = array<i64: 1, 2>, scalar_prefetch = 0 : i64, scratch_operands = 1 : i64, tpu.core_type = #tpu.core_type<tc>, window_params = [{transform_indices = @transform_0, window_bounds = array<i64: 32, 256>}, {transform_indices = @transform_1, window_bounds = array<i64: 256, 128>}, {transform_indices = @transform_2, window_bounds = array<i64: 32, 128>}, {transform_indices = @transform_3, window_bounds = array<i64: 1, 8, 128>}, {transform_indices = @transform_4, window_bounds = array<i64: 1, 8, 128>}]} {
    %c0_i32 = arith.constant 0 : i32
    %0 = arith.cmpi eq, %arg1, %c0_i32 : i32
    %1 = arith.extui %0 : i1 to i32
    %c0_i32_0 = arith.constant 0 : i32
    %2 = arith.cmpi ne, %1, %c0_i32_0 : i32
    scf.if %2 {
      %cst_9 = arith.constant 0.000000e+00 : f32
      %12 = vector.broadcast %cst_9 : f32 to vector<32x128xf32>
      %c0_10 = arith.constant 0 : index
      %c0_11 = arith.constant 0 : index
      %13 = vector.load %arg7[%c0_10, %c0_11] : memref<32x128xf32, #tpu.memory_space<vmem>>, vector<32x128xf32>
      tpu.vector_store %arg7[%c0_10, %c0_11], %12 {strides = array<i32>} : memref<32x128xf32, #tpu.memory_space<vmem>>, vector<32x128xf32>,
    } else {
    }
    %c0 = arith.constant 0 : index
    %c0_1 = arith.constant 0 : index
    %3 = vector.load %arg7[%c0, %c0_1] : memref<32x128xf32, #tpu.memory_space<vmem>>, vector<32x128xf32>
    %c0_2 = arith.constant 0 : index
    %c0_3 = arith.constant 0 : index
    %4 = vector.load %arg2[%c0_2, %c0_3] : memref<32x256xbf16, #tpu.memory_space<vmem>>, vector<32x256xbf16>
    %c0_4 = arith.constant 0 : index
    %c0_5 = arith.constant 0 : index
    %5 = vector.load %arg3[%c0_4, %c0_5] : memref<256x128xbf16, #tpu.memory_space<vmem>>, vector<256x128xbf16>
    %cst = arith.constant dense<0.000000e+00> : vector<32x128xf32>
    %6 = tpu.matmul %4, %5, %cst {dimension_numbers = #tpu.dot_dimension_numbers<[1], [0], [0], [1], [0, 0, 1, 1], [], []>} : vector<32x256xbf16>, vector<256x128xbf16>, vector<32x128xf32> -> vector<32x128xf32>
    %7 = arith.addf %3, %6 : vector<32x128xf32>
    %c0_6 = arith.constant 0 : index
    %c0_7 = arith.constant 0 : index
    %8 = vector.load %arg7[%c0_6, %c0_7] : memref<32x128xf32, #tpu.memory_space<vmem>>, vector<32x128xf32>
    tpu.vector_store %arg7[%c0_6, %c0_7], %7 {strides = array<i32>} : memref<32x128xf32, #tpu.memory_space<vmem>>, vector<32x128xf32>,
    %c1_i32 = arith.constant 1 : i32
    %9 = arith.cmpi eq, %arg1, %c1_i32 : i32
    %10 = arith.extui %9 : i1 to i32
    %c0_i32_8 = arith.constant 0 : i32
    %11 = arith.cmpi ne, %10, %c0_i32_8 : i32
    scf.if %11 {
      %c0_9 = arith.constant 0 : index
      %c0_10 = arith.constant 0 : index
      %12 = vector.load %arg7[%c0_9, %c0_10] : memref<32x128xf32, #tpu.memory_space<vmem>>, vector<32x128xf32>
      %13 = arith.truncf %12 : vector<32x128xf32> to vector<32x128xbf16>
      %c0_11 = arith.constant 0 : index
      %c0_12 = arith.constant 0 : index
      %14 = vector.load %arg4[%c0_11, %c0_12] : memref<32x128xbf16, #tpu.memory_space<vmem>>, vector<32x128xbf16>
      tpu.vector_store %arg4[%c0_11, %c0_12], %13 {strides = array<i32>} : memref<32x128xbf16, #tpu.memory_space<vmem>>, vector<32x128xbf16>,
      %cst_13 = arith.constant dense<0.000000e+00> : vector<128xf32>
      %15 = vector.multi_reduction <add>, %12, %cst_13 [0] : vector<32x128xf32> to vector<128xf32>
      %16 = vector.shape_cast %15 : vector<128xf32> to vector<1x128xf32>
      %17 = arith.mulf %12, %12 : vector<32x128xf32>
      %cst_14 = arith.constant dense<0.000000e+00> : vector<128xf32>
      %18 = vector.multi_reduction <add>, %17, %cst_14 [0] : vector<32x128xf32> to vector<128xf32>
      %19 = vector.shape_cast %18 : vector<128xf32> to vector<1x128xf32>
      %20 = vector.shape_cast %16 : vector<1x128xf32> to vector<1x1x128xf32>
      %21 = vector.shape_cast %20 : vector<1x1x128xf32> to vector<1x1x128xf32>
      %22 = vector.broadcast %21 : vector<1x1x128xf32> to vector<1x8x128xf32>
      %c0_15 = arith.constant 0 : index
      %c0_16 = arith.constant 0 : index
      %c0_17 = arith.constant 0 : index
      %23 = vector.load %arg5[%c0_15, %c0_16, %c0_17] : memref<1x8x128xf32, #tpu.memory_space<vmem>>, vector<1x8x128xf32>
      tpu.vector_store %arg5[%c0_15, %c0_16, %c0_17], %22 {strides = array<i32>} : memref<1x8x128xf32, #tpu.memory_space<vmem>>, vector<1x8x128xf32>,
      %24 = vector.shape_cast %19 : vector<1x128xf32> to vector<1x1x128xf32>
      %25 = vector.shape_cast %24 : vector<1x1x128xf32> to vector<1x1x128xf32>
      %26 = vector.broadcast %25 : vector<1x1x128xf32> to vector<1x8x128xf32>
      %c0_18 = arith.constant 0 : index
      %c0_19 = arith.constant 0 : index
      %c0_20 = arith.constant 0 : index
      %27 = vector.load %arg6[%c0_18, %c0_19, %c0_20] : memref<1x8x128xf32, #tpu.memory_space<vmem>>, vector<1x8x128xf32>
      tpu.vector_store %arg6[%c0_18, %c0_19, %c0_20], %26 {strides = array<i32>} : memref<1x8x128xf32, #tpu.memory_space<vmem>>, vector<1x8x128xf32>,
    } else {
    }
    return
  }
  func.func @transform_0(%arg0: i32, %arg1: i32) -> (i32, i32) {
    %c0_i32 = arith.constant 0 : i32
    return %arg0, %arg1 : i32, i32
  }
  func.func @transform_1(%arg0: i32, %arg1: i32) -> (i32, i32) {
    %c0_i32 = arith.constant 0 : i32
    %c0_i32_0 = arith.constant 0 : i32
    return %arg1, %c0_i32 : i32, i32
  }
  func.func @transform_2(%arg0: i32, %arg1: i32) -> (i32, i32) {
    %c0_i32 = arith.constant 0 : i32
    %c0_i32_0 = arith.constant 0 : i32
    return %arg0, %c0_i32 : i32, i32
  }
  func.func @transform_3(%arg0: i32, %arg1: i32) -> (i32, i32, i32) {
    %c0_i32 = arith.constant 0 : i32
    %c0_i32_0 = arith.constant 0 : i32
    %c0_i32_1 = arith.constant 0 : i32
    return %arg0, %c0_i32, %c0_i32_0 : i32, i32, i32
  }
  func.func @transform_4(%arg0: i32, %arg1: i32) -> (i32, i32, i32) {
    %c0_i32 = arith.constant 0 : i32
    %c0_i32_0 = arith.constant 0 : i32
    %c0_i32_1 = arith.constant 0 : i32
    return %arg0, %c0_i32, %c0_i32_0 : i32, i32, i32
  }
}

module attributes {stable_mosaic.version = 11 : i64} {
  func.func @_scale_shift_leaky_kernel(%arg0: i32, %arg1: memref<32x128xbf16, #tpu.memory_space<vmem>>, %arg2: memref<1x128xf32, #tpu.memory_space<vmem>>, %arg3: memref<1x128xf32, #tpu.memory_space<vmem>>, %arg4: memref<32x128xbf16, #tpu.memory_space<vmem>>) attributes {dimension_semantics = [#tpu.dimension_semantics<parallel>], iteration_bounds = array<i64: 1>, scalar_prefetch = 0 : i64, scratch_operands = 0 : i64, tpu.core_type = #tpu.core_type<tc>, window_params = [{transform_indices = @transform_0, window_bounds = array<i64: 32, 128>}, {pipeline_mode = #tpu.pipeline_mode<synchronous>, transform_indices = @transform_1, window_bounds = array<i64: 1, 128>}, {pipeline_mode = #tpu.pipeline_mode<synchronous>, transform_indices = @transform_2, window_bounds = array<i64: 1, 128>}, {transform_indices = @transform_3, window_bounds = array<i64: 32, 128>}]} {
    %c0 = arith.constant 0 : index
    %c0_0 = arith.constant 0 : index
    %0 = vector.load %arg1[%c0, %c0_0] : memref<32x128xbf16, #tpu.memory_space<vmem>>, vector<32x128xbf16>
    %1 = arith.extf %0 : vector<32x128xbf16> to vector<32x128xf32>
    %c0_1 = arith.constant 0 : index
    %c0_2 = arith.constant 0 : index
    %2 = vector.load %arg2[%c0_1, %c0_2] : memref<1x128xf32, #tpu.memory_space<vmem>>, vector<1x128xf32>
    %3 = vector.broadcast %2 : vector<1x128xf32> to vector<32x128xf32>
    %4 = arith.mulf %1, %3 : vector<32x128xf32>
    %c0_3 = arith.constant 0 : index
    %c0_4 = arith.constant 0 : index
    %5 = vector.load %arg3[%c0_3, %c0_4] : memref<1x128xf32, #tpu.memory_space<vmem>>, vector<1x128xf32>
    %6 = vector.broadcast %5 : vector<1x128xf32> to vector<32x128xf32>
    %7 = arith.addf %4, %6 : vector<32x128xf32>
    %cst = arith.constant 0.000000e+00 : f32
    %8 = vector.broadcast %cst : f32 to vector<32x128xf32>
    %9 = arith.cmpf oge, %7, %8 : vector<32x128xf32>
    %cst_5 = arith.constant 2.000000e-01 : f32
    %10 = vector.broadcast %cst_5 : f32 to vector<32x128xf32>
    %11 = arith.mulf %10, %7 : vector<32x128xf32>
    %12 = arith.select %9, %7, %11 : vector<32x128xi1>, vector<32x128xf32>
    %13 = arith.truncf %12 : vector<32x128xf32> to vector<32x128xbf16>
    %c0_6 = arith.constant 0 : index
    %c0_7 = arith.constant 0 : index
    %14 = vector.load %arg4[%c0_6, %c0_7] : memref<32x128xbf16, #tpu.memory_space<vmem>>, vector<32x128xbf16>
    tpu.vector_store %arg4[%c0_6, %c0_7], %13 {strides = array<i32>} : memref<32x128xbf16, #tpu.memory_space<vmem>>, vector<32x128xbf16>,
    return
  }
  func.func @transform_0(%arg0: i32) -> (i32, i32) {
    %c0_i32 = arith.constant 0 : i32
    %c0_i32_0 = arith.constant 0 : i32
    return %arg0, %c0_i32 : i32, i32
  }
  func.func @transform_1(%arg0: i32) -> (i32, i32) {
    %c0_i32 = arith.constant 0 : i32
    %c0_i32_0 = arith.constant 0 : i32
    %c0_i32_1 = arith.constant 0 : i32
    return %c0_i32, %c0_i32_0 : i32, i32
  }
  func.func @transform_2(%arg0: i32) -> (i32, i32) {
    %c0_i32 = arith.constant 0 : i32
    %c0_i32_0 = arith.constant 0 : i32
    %c0_i32_1 = arith.constant 0 : i32
    return %c0_i32, %c0_i32_0 : i32, i32
  }
  func.func @transform_3(%arg0: i32) -> (i32, i32) {
    %c0_i32 = arith.constant 0 : i32
    %c0_i32_0 = arith.constant 0 : i32
    return %arg0, %c0_i32 : i32, i32
  }
}

</mosaic_0001>

<llo_original>
// kernel: discriminator_forward.7
$region0: #{discriminator_forward.7}
  #allocation0 [shape = 'u32[]', space=smem, size = 0x4, offset = 0x4, fixed_abs, tag = 'smem constant byte address 0x4 - core index']
  #allocation1 [shape = 'u32[144,128]{1,0:T(1,128)}', space=vmem, size = 0x12000, scoped, tag = 'internal scratch']
  #allocation2 [shape = 'f32[1024,128]{1,0:T(8,128)}', space=vmem, size = 0x80000, scoped, tag = 'scratch operand']
  %s0 = inlined_call_operand.vmem [shape: bf16[2048,48], index: 0, kind: input, shape index: {}]
  %s1 = inlined_call_operand.vmem [shape: bf16[48,128], index: 1, kind: input, shape index: {}]
  %s2 = inlined_call_operand.vmem [shape: bf16[2048,128], index: 2, kind: output, shape index: {}]
  %s3 = sld [smem:[#allocation0]]
  $region49: #{discriminator_forward.7} parent=0
    _
  %s5 = ssub.s32 1, %s3
  %s6 = scalar_select 0, %s5, %s3
  loop: start=0, step=1, limit=4
  $region2: #{discriminator_forward.7} parent=0 // loop_pre_header
    _
  $region3: #{discriminator_forward.7} parent=0 // loop_header
    %s8 = sphi 0, %s12
    %p9 = scmp.ge.s32.totalorder %s8, 4
    %s15 = sphi 0, %s27
    %s16 = sphi 0, %s23
    %s17 = sphi 0, %s15
    %s18 = sphi 0, %s16
    %s19 = sphi 0, %s17
    %s20 = sphi 0, %s18
    %s32 = sphi 0, %s34
    %s35 = sphi 0, %s32
    %s36 = sphi 0, %s35
    %s52 = sphi 0, %s36
    %s58 = sphi 0, %s60
    %s61 = sphi 0, %s58
    %s62 = sphi 0, %s61
    %s78 = sphi 0, %s62
    %s84 = sphi 0, %s86
    %s87 = sphi 0, %s84
    %s88 = sphi 0, %s87
    %s104 = sphi 0, %s88
  $region4: #{discriminator_forward.7} parent=0 // loop_header_branch
    %11 = sbr.rel (%p9) target = $region8
  $region5: #{discriminator_forward.7} parent=0 // loop_body
    %s13 = ssub.s32 %s8, 1
    %s14 = ssub.s32 %s8, 2
    %s21 = sadd.s32 1, %s16
    %p22 = scmp.ge.s32.totalorder %s21, 1
    %s23 = scalar_select %p22, 0, %s21
    %s24 = sadd.s32 1, %s15
    %s25 = scalar_select %p22, %s24, %s15
    %p26 = scmp.ge.s32.totalorder %s25, 2
    %s27 = scalar_select %p26, 0, %s25
    %s28 = ssub.s32 %s15, %s27
    %s29 = ssub.s32 %s16, %s23
    %s30 = sor.u32 %s28, %s29
    %p31 = scmp.eq.s32.totalorder %s30, 0
    %s33 = sadd.s32 %s32, 1
    %s34 = scalar_select %p31, %s32, %s33
    %p37 = pneg %p31
    %p38 = scmp.eq.s32.totalorder %s8, 1
    %p39 = por %p37, %p38
    %p40 = scmp.ne.s32.totalorder %s32, %s35
    %p41 = scmp.eq.s32.totalorder %s8, 0
    %p42 = por %p40, %p41
    %p43 = scmp.ne.s32.totalorder %s32, %s35
    %p44 = scmp.eq.s32.totalorder %s13, 1
    %p45 = por %p43, %p44
    %p46 = scmp.ne.s32.totalorder %s35, %s36
    %p47 = scmp.eq.s32.totalorder %s13, 0
    %p48 = por %p46, %p47
    %p49 = scmp.ne.s32.totalorder %s35, %s36
    %p50 = scmp.eq.s32.totalorder %s14, 1
    %p51 = por %p49, %p50
    %p53 = scmp.ne.s32.totalorder %s36, %s52
    %p54 = scmp.eq.s32.totalorder %s14, 0
    %p55 = por %p53, %p54
    %s56 = ssub.s32 %s16, %s23
    %p57 = scmp.eq.s32.totalorder %s56, 0
    %s59 = sadd.s32 %s58, 1
    %s60 = scalar_select %p57, %s58, %s59
    %p63 = pneg %p57
    %p64 = scmp.eq.s32.totalorder %s8, 1
    %p65 = por %p63, %p64
    %p66 = scmp.ne.s32.totalorder %s58, %s61
    %p67 = scmp.eq.s32.totalorder %s8, 0
    %p68 = por %p66, %p67
    %p69 = scmp.ne.s32.totalorder %s58, %s61
    %p70 = scmp.eq.s32.totalorder %s13, 1
    %p71 = por %p69, %p70
    %p72 = scmp.ne.s32.totalorder %s61, %s62
    %p73 = scmp.eq.s32.totalorder %s13, 0
    %p74 = por %p72, %p73
    %p75 = scmp.ne.s32.totalorder %s61, %s62
    %p76 = scmp.eq.s32.totalorder %s14, 1
    %p77 = por %p75, %p76
    %p79 = scmp.ne.s32.totalorder %s62, %s78
    %p80 = scmp.eq.s32.totalorder %s14, 0
    %p81 = por %p79, %p80
    %s82 = ssub.s32 %s15, %s27
    %p83 = scmp.eq.s32.totalorder %s82, 0
    %s85 = sadd.s32 %s84, 1
    %s86 = scalar_select %p83, %s84, %s85
    %p89 = pneg %p83
    %p90 = scmp.eq.s32.totalorder %s8, 1
    %p91 = por %p89, %p90
    %p92 = scmp.ne.s32.totalorder %s84, %s87
    %p93 = scmp.eq.s32.totalorder %s8, 0
    %p94 = por %p92, %p93
    %p95 = scmp.ne.s32.totalorder %s84, %s87
    %p96 = scmp.eq.s32.totalorder %s13, 1
    %p97 = por %p95, %p96
    %p98 = scmp.ne.s32.totalorder %s87, %s88
    %p99 = scmp.eq.s32.totalorder %s13, 0
    %p100 = por %p98, %p99
    %p101 = scmp.ne.s32.totalorder %s87, %s88
    %p102 = scmp.eq.s32.totalorder %s14, 1
    %p103 = por %p101, %p102
    %p105 = scmp.ne.s32.totalorder %s88, %s104
    %p106 = scmp.eq.s32.totalorder %s14, 0
    %p107 = por %p105, %p106
    %p108 = scmp.le.s32.totalorder 1, %s8
    %p109 = scmp.lt.s32.totalorder %s8, 3
    %p110 = pnand %p108, %p109
    %p111 = pneg %p110
    // Predicated region
    $region9: #{discriminator_forward.7} parent=5 // pred_check
      _
    $region10: #{discriminator_forward.7} parent=5 // pred_check_branch
      %113 = sbr.rel (%p110) target = $region12
    $region11: #{discriminator_forward.7} parent=5 // pred_region
      %s114 = ssub.s32 %s8, 1
      // Predicated region
      $region13: #{discriminator_forward.7} parent=11 // pred_check
        %p115 = pneg %p74
      $region14: #{discriminator_forward.7} parent=11 // pred_check_branch
        %117 = sbr.rel (%p115) target = $region16
      $region15: #{discriminator_forward.7} parent=11 // pred_region
        %s118 = smul.u32 6, %s18
        %p119 = scmp.lt.s32.totalorder %s118, 5
        %s120 = scalar_select %p119, %s118, 5
        %s121 = smul.addr %s120, 4
        %s122 = scalar_lea.vmem %s1, %s121
        %s123 = smul.u32 6, %s18
      $region16: #{discriminator_forward.7} parent=11 // pred_fallthru
        _
    $region12: #{discriminator_forward.7} parent=5 // pred_fallthru
      _
    %p124 = scmp.lt.s32.totalorder %s8, 2
    // Predicated region
    $region17: #{discriminator_forward.7} parent=5 // pred_check
      %p125 = pneg %p124
    $region18: #{discriminator_forward.7} parent=5 // pred_check_branch
      %127 = sbr.rel (%p125) target = $region20
    $region19: #{discriminator_forward.7} parent=5 // pred_region
      // Predicated region
      $region21: #{discriminator_forward.7} parent=19 // pred_check
        %p128 = pneg %p42
      $region22: #{discriminator_forward.7} parent=19 // pred_check_branch
        %130 = sbr.rel (%p128) target = $region24
      $region23: #{discriminator_forward.7} parent=19 // pred_region
        %s131 = smul.u32 128, %s15
        %p132 = scmp.lt.s32.totalorder %s131, 255
        %s133 = scalar_select %p132, %s131, 255
        %p134 = scmp.lt.s32.totalorder %s16, 0
        %s135 = scalar_select %p134, %s16, 0
        %s136 = sadd.s32 %s135, %s133
        %s137 = smul.addr %s136, 4
        %s138 = scalar_lea.vmem %s0, %s137
        %s139 = smul.u32 128, %s15
      $region24: #{discriminator_forward.7} parent=19 // pred_fallthru
        _
    $region20: #{discriminator_forward.7} parent=5 // pred_fallthru
      _
    %p140 = scmp.le.s32.totalorder 1, %s8
    %p141 = scmp.lt.s32.totalorder %s8, 3
    %p142 = pnand %p140, %p141
    %p143 = pneg %p142
    // Predicated region
    $region25: #{discriminator_forward.7} parent=5 // pred_check
      _
    $region26: #{discriminator_forward.7} parent=5 // pred_check_branch
      %145 = sbr.rel (%p142) target = $region28
    $region27: #{discriminator_forward.7} parent=5 // pred_region
      %s146 = ssub.s32 %s8, 1
      %s147 = smul.u32 128, %s17
      %p148 = scmp.lt.s32.totalorder %s147, 255
      %s149 = scalar_select %p148, %s147, 255
      %p150 = scmp.lt.s32.totalorder %s18, 0
      %s151 = scalar_select %p150, %s18, 0
      %s152 = sadd.s32 %s151, %s149
      %s153 = smul.addr %s152, 4
      %s154 = scalar_lea.vmem %s0, %s153
      %p155 = pneg %p48
      %p156 = pneg %p45
      %s157 = smul.u32 6, %s18
      %p158 = scmp.lt.s32.totalorder %s157, 5
      %s159 = scalar_select %p158, %s157, 5
      %s160 = smul.addr %s159, 4
      %s161 = scalar_lea.vmem %s1, %s160
      %p162 = pneg %p74
      %p163 = pneg %p71
      %p164 = pneg %p100
      %p165 = pneg %p97
      %s166 = smul.u32 128, %s17
      %p167 = scmp.lt.s32.totalorder %s166, 255
      %s168 = scalar_select %p167, %s166, 255
      %s169 = smul.addr %s168, 4
      %s170 = scalar_lea.vmem %s2, %s169
      %s171 = smul.u32 128, %s17
      %p172 = scmp.lt.s32.totalorder %s171, 255
      %s173 = scalar_select %p172, %s171, 255
      %p174 = scmp.lt.s32.totalorder %s18, 0
      %s175 = scalar_select %p174, %s18, 0
      %s176 = sadd.s32 %s175, %s173
      %s177 = smul.addr %s176, 4
      %s178 = scalar_lea.vmem %s0, %s177
      %s179 = smul.u32 128, %s17
      %s180 = smul.u32 6, %s18
      %p181 = scmp.lt.s32.totalorder %s180, 5
      %s182 = scalar_select %p181, %s180, 5
      %s183 = smul.addr %s182, 4
      %s184 = scalar_lea.vmem %s1, %s183
      %s185 = smul.u32 6, %s18
      %s186 = smul.u32 128, %s17
      %p187 = scmp.lt.s32.totalorder %s186, 255
      %s188 = scalar_select %p187, %s186, 255
      %s189 = smul.addr %s188, 4
      %s190 = scalar_lea.vmem %s2, %s189
      %s191 = smul.u32 128, %s17
      %p193 = scmp.eq.s32.totalorder %s18, 0
      // Predicated region
      $region29: #{discriminator_forward.7} parent=27 // pred_check
        %p194 = pneg %p193
      $region30: #{discriminator_forward.7} parent=27 // pred_check_branch
        %196 = sbr.rel (%p194) target = $region32
      $region31: #{discriminator_forward.7} parent=27 // pred_region
        %197 = vst [vmem:[#allocation2] sm:$0xff] 0.0
        %198 = vst [vmem:[#allocation2 + $0x8] sm:$0xff] 0.0
        %199 = vst [vmem:[#allocation2 + $0x10] sm:$0xff] 0.0
        %200 = vst [vmem:[#allocation2 + $0x18] sm:$0xff] 0.0
        %201 = vst [vmem:[#allocation2 + $0x20] sm:$0xff] 0.0
        %202 = vst [vmem:[#allocation2 + $0x28] sm:$0xff] 0.0
        %203 = vst [vmem:[#allocation2 + $0x30] sm:$0xff] 0.0
        %204 = vst [vmem:[#allocation2 + $0x38] sm:$0xff] 0.0
        %205 = vst [vmem:[#allocation2 + $0x40] sm:$0xff] 0.0
        %206 = vst [vmem:[#allocation2 + $0x48] sm:$0xff] 0.0
        %207 = vst [vmem:[#allocation2 + $0x50] sm:$0xff] 0.0
        %208 = vst [vmem:[#allocation2 + $0x58] sm:$0xff] 0.0
        %209 = vst [vmem:[#allocation2 + $0x60] sm:$0xff] 0.0
        %210 = vst [vmem:[#allocation2 + $0x68] sm:$0xff] 0.0
        %211 = vst [vmem:[#allocation2 + $0x70] sm:$0xff] 0.0
        %212 = vst [vmem:[#allocation2 + $0x78] sm:$0xff] 0.0
        %213 = vst [vmem:[#allocation2 + $0x80] sm:$0xff] 0.0
        %214 = vst [vmem:[#allocation2 + $0x88] sm:$0xff] 0.0
        %215 = vst [vmem:[#allocation2 + $0x90] sm:$0xff] 0.0
        %216 = vst [vmem:[#allocation2 + $0x98] sm:$0xff] 0.0
        %217 = vst [vmem:[#allocation2 + $0xa0] sm:$0xff] 0.0
        %218 = vst [vmem:[#allocation2 + $0xa8] sm:$0xff] 0.0
        %219 = vst [vmem:[#allocation2 + $0xb0] sm:$0xff] 0.0
        %220 = vst [vmem:[#allocation2 + $0xb8] sm:$0xff] 0.0
        %221 = vst [vmem:[#allocation2 + $0xc0] sm:$0xff] 0.0
        %222 = vst [vmem:[#allocation2 + $0xc8] sm:$0xff] 0.0
        %223 = vst [vmem:[#allocation2 + $0xd0] sm:$0xff] 0.0
        %224 = vst [vmem:[#allocation2 + $0xd8] sm:$0xff] 0.0
        %225 = vst [vmem:[#allocation2 + $0xe0] sm:$0xff] 0.0
        %226 = vst [vmem:[#allocation2 + $0xe8] sm:$0xff] 0.0
        %227 = vst [vmem:[#allocation2 + $0xf0] sm:$0xff] 0.0
        %228 = vst [vmem:[#allocation2 + $0xf8] sm:$0xff] 0.0
        %229 = vst [vmem:[#allocation2 + $0x100] sm:$0xff] 0.0
        %230 = vst [vmem:[#allocation2 + $0x108] sm:$0xff] 0.0
        %231 = vst [vmem:[#allocation2 + $0x110] sm:$0xff] 0.0
        %232 = vst [vmem:[#allocation2 + $0x118] sm:$0xff] 0.0
        %233 = vst [vmem:[#allocation2 + $0x120] sm:$0xff] 0.0
        %234 = vst [vmem:[#allocation2 + $0x128] sm:$0xff] 0.0
        %235 = vst [vmem:[#allocation2 + $0x130] sm:$0xff] 0.0
        %236 = vst [vmem:[#allocation2 + $0x138] sm:$0xff] 0.0
        %237 = vst [vmem:[#allocation2 + $0x140] sm:$0xff] 0.0
        %238 = vst [vmem:[#allocation2 + $0x148] sm:$0xff] 0.0
        %239 = vst [vmem:[#allocation2 + $0x150] sm:$0xff] 0.0
        %240 = vst [vmem:[#allocation2 + $0x158] sm:$0xff] 0.0
        %241 = vst [vmem:[#allocation2 + $0x160] sm:$0xff] 0.0
        %242 = vst [vmem:[#allocation2 + $0x168] sm:$0xff] 0.0
        %243 = vst [vmem:[#allocation2 + $0x170] sm:$0xff] 0.0
        %244 = vst [vmem:[#allocation2 + $0x178] sm:$0xff] 0.0
        %245 = vst [vmem:[#allocation2 + $0x180] sm:$0xff] 0.0
        %246 = vst [vmem:[#allocation2 + $0x188] sm:$0xff] 0.0
        %247 = vst [vmem:[#allocation2 + $0x190] sm:$0xff] 0.0
        %248 = vst [vmem:[#allocation2 + $0x198] sm:$0xff] 0.0
        %249 = vst [vmem:[#allocation2 + $0x1a0] sm:$0xff] 0.0
        %250 = vst [vmem:[#allocation2 + $0x1a8] sm:$0xff] 0.0
        %251 = vst [vmem:[#allocation2 + $0x1b0] sm:$0xff] 0.0
        %252 = vst [vmem:[#allocation2 + $0x1b8] sm:$0xff] 0.0
        %253 = vst [vmem:[#allocation2 + $0x1c0] sm:$0xff] 0.0
        %254 = vst [vmem:[#allocation2 + $0x1c8] sm:$0xff] 0.0
        %255 = vst [vmem:[#allocation2 + $0x1d0] sm:$0xff] 0.0
        %256 = vst [vmem:[#allocation2 + $0x1d8] sm:$0xff] 0.0
        %257 = vst [vmem:[#allocation2 + $0x1e0] sm:$0xff] 0.0
        %258 = vst [vmem:[#allocation2 + $0x1e8] sm:$0xff] 0.0
        %259 = vst [vmem:[#allocation2 + $0x1f0] sm:$0xff] 0.0
        %260 = vst [vmem:[#allocation2 + $0x1f8] sm:$0xff] 0.0
        %261 = vst [vmem:[#allocation2 + $0x200] sm:$0xff] 0.0
        %262 = vst [vmem:[#allocation2 + $0x208] sm:$0xff] 0.0
        %263 = vst [vmem:[#allocation2 + $0x210] sm:$0xff] 0.0
        %264 = vst [vmem:[#allocation2 + $0x218] sm:$0xff] 0.0
        %265 = vst [vmem:[#allocation2 + $0x220] sm:$0xff] 0.0
        %266 = vst [vmem:[#allocation2 + $0x228] sm:$0xff] 0.0
        %267 = vst [vmem:[#allocation2 + $0x230] sm:$0xff] 0.0
        %268 = vst [vmem:[#allocation2 + $0x238] sm:$0xff] 0.0
        %269 = vst [vmem:[#allocation2 + $0x240] sm:$0xff] 0.0
        %270 = vst [vmem:[#allocation2 + $0x248] sm:$0xff] 0.0
        %271 = vst [vmem:[#allocation2 + $0x250] sm:$0xff] 0.0
        %272 = vst [vmem:[#allocation2 + $0x258] sm:$0xff] 0.0
        %273 = vst [vmem:[#allocation2 + $0x260] sm:$0xff] 0.0
        %274 = vst [vmem:[#allocation2 + $0x268] sm:$0xff] 0.0
        %275 = vst [vmem:[#allocation2 + $0x270] sm:$0xff] 0.0
        %276 = vst [vmem:[#allocation2 + $0x278] sm:$0xff] 0.0
        %277 = vst [vmem:[#allocation2 + $0x280] sm:$0xff] 0.0
        %278 = vst [vmem:[#allocation2 + $0x288] sm:$0xff] 0.0
        %279 = vst [vmem:[#allocation2 + $0x290] sm:$0xff] 0.0
        %280 = vst [vmem:[#allocation2 + $0x298] sm:$0xff] 0.0
        %281 = vst [vmem:[#allocation2 + $0x2a0] sm:$0xff] 0.0
        %282 = vst [vmem:[#allocation2 + $0x2a8] sm:$0xff] 0.0
        %283 = vst [vmem:[#allocation2 + $0x2b0] sm:$0xff] 0.0
        %284 = vst [vmem:[#allocation2 + $0x2b8] sm:$0xff] 0.0
        %285 = vst [vmem:[#allocation2 + $0x2c0] sm:$0xff] 0.0
        %286 = vst [vmem:[#allocation2 + $0x2c8] sm:$0xff] 0.0
        %287 = vst [vmem:[#allocation2 + $0x2d0] sm:$0xff] 0.0
        %288 = vst [vmem:[#allocation2 + $0x2d8] sm:$0xff] 0.0
        %289 = vst [vmem:[#allocation2 + $0x2e0] sm:$0xff] 0.0
        %290 = vst [vmem:[#allocation2 + $0x2e8] sm:$0xff] 0.0
        %291 = vst [vmem:[#allocation2 + $0x2f0] sm:$0xff] 0.0
        %292 = vst [vmem:[#allocation2 + $0x2f8] sm:$0xff] 0.0
        %293 = vst [vmem:[#allocation2 + $0x300] sm:$0xff] 0.0
        %294 = vst [vmem:[#allocation2 + $0x308] sm:$0xff] 0.0
        %295 = vst [vmem:[#allocation2 + $0x310] sm:$0xff] 0.0
        %296 = vst [vmem:[#allocation2 + $0x318] sm:$0xff] 0.0
        %297 = vst [vmem:[#allocation2 + $0x320] sm:$0xff] 0.0
        %298 = vst [vmem:[#allocation2 + $0x328] sm:$0xff] 0.0
        %299 = vst [vmem:[#allocation2 + $0x330] sm:$0xff] 0.0
        %300 = vst [vmem:[#allocation2 + $0x338] sm:$0xff] 0.0
        %301 = vst [vmem:[#allocation2 + $0x340] sm:$0xff] 0.0
        %302 = vst [vmem:[#allocation2 + $0x348] sm:$0xff] 0.0
        %303 = vst [vmem:[#allocation2 + $0x350] sm:$0xff] 0.0
        %304 = vst [vmem:[#allocation2 + $0x358] sm:$0xff] 0.0
        %305 = vst [vmem:[#allocation2 + $0x360] sm:$0xff] 0.0
        %306 = vst [vmem:[#allocation2 + $0x368] sm:$0xff] 0.0
        %307 = vst [vmem:[#allocation2 + $0x370] sm:$0xff] 0.0
        %308 = vst [vmem:[#allocation2 + $0x378] sm:$0xff] 0.0
        %309 = vst [vmem:[#allocation2 + $0x380] sm:$0xff] 0.0
        %310 = vst [vmem:[#allocation2 + $0x388] sm:$0xff] 0.0
        %311 = vst [vmem:[#allocation2 + $0x390] sm:$0xff] 0.0
        %312 = vst [vmem:[#allocation2 + $0x398] sm:$0xff] 0.0
        %313 = vst [vmem:[#allocation2 + $0x3a0] sm:$0xff] 0.0
        %314 = vst [vmem:[#allocation2 + $0x3a8] sm:$0xff] 0.0
        %315 = vst [vmem:[#allocation2 + $0x3b0] sm:$0xff] 0.0
        %316 = vst [vmem:[#allocation2 + $0x3b8] sm:$0xff] 0.0
        %317 = vst [vmem:[#allocation2 + $0x3c0] sm:$0xff] 0.0
        %318 = vst [vmem:[#allocation2 + $0x3c8] sm:$0xff] 0.0
        %319 = vst [vmem:[#allocation2 + $0x3d0] sm:$0xff] 0.0
        %320 = vst [vmem:[#allocation2 + $0x3d8] sm:$0xff] 0.0
        %321 = vst [vmem:[#allocation2 + $0x3e0] sm:$0xff] 0.0
        %322 = vst [vmem:[#allocation2 + $0x3e8] sm:$0xff] 0.0
        %323 = vst [vmem:[#allocation2 + $0x3f0] sm:$0xff] 0.0
        %324 = vst [vmem:[#allocation2 + $0x3f8] sm:$0xff] 0.0
      $region32: #{discriminator_forward.7} parent=27 // pred_fallthru
        _
      %v325 = vld [vmem:[#allocation2] sm:$0xff]
      %v326 = vld [vmem:[#allocation2 + $0x8] sm:$0xff]
      %v327 = vld [vmem:[#allocation2 + $0x10] sm:$0xff]
      %v328 = vld [vmem:[#allocation2 + $0x18] sm:$0xff]
      %v329 = vld [vmem:[#allocation2 + $0x20] sm:$0xff]
      %v330 = vld [vmem:[#allocation2 + $0x28] sm:$0xff]
      %v331 = vld [vmem:[#allocation2 + $0x30] sm:$0xff]
      %v332 = vld [vmem:[#allocation2 + $0x38] sm:$0xff]
      %v333 = vld [vmem:[#allocation2 + $0x40] sm:$0xff]
      %v334 = vld [vmem:[#allocation2 + $0x48] sm:$0xff]
      %v335 = vld [vmem:[#allocation2 + $0x50] sm:$0xff]
      %v336 = vld [vmem:[#allocation2 + $0x58] sm:$0xff]
      %v337 = vld [vmem:[#allocation2 + $0x60] sm:$0xff]
      %v338 = vld [vmem:[#allocation2 + $0x68] sm:$0xff]
      %v339 = vld [vmem:[#allocation2 + $0x70] sm:$0xff]
      %v340 = vld [vmem:[#allocation2 + $0x78] sm:$0xff]
      %v341 = vld [vmem:[#allocation2 + $0x80] sm:$0xff]
      %v342 = vld [vmem:[#allocation2 + $0x88] sm:$0xff]
      %v343 = vld [vmem:[#allocation2 + $0x90] sm:$0xff]
      %v344 = vld [vmem:[#allocation2 + $0x98] sm:$0xff]
      %v345 = vld [vmem:[#allocation2 + $0xa0] sm:$0xff]
      %v346 = vld [vmem:[#allocation2 + $0xa8] sm:$0xff]
      %v347 = vld [vmem:[#allocation2 + $0xb0] sm:$0xff]
      %v348 = vld [vmem:[#allocation2 + $0xb8] sm:$0xff]
      %v349 = vld [vmem:[#allocation2 + $0xc0] sm:$0xff]
      %v350 = vld [vmem:[#allocation2 + $0xc8] sm:$0xff]
      %v351 = vld [vmem:[#allocation2 + $0xd0] sm:$0xff]
      %v352 = vld [vmem:[#allocation2 + $0xd8] sm:$0xff]
      %v353 = vld [vmem:[#allocation2 + $0xe0] sm:$0xff]
      %v354 = vld [vmem:[#allocation2 + $0xe8] sm:$0xff]
      %v355 = vld [vmem:[#allocation2 + $0xf0] sm:$0xff]
      %v356 = vld [vmem:[#allocation2 + $0xf8] sm:$0xff]
      %v357 = vld [vmem:[#allocation2 + $0x100] sm:$0xff]
      %v358 = vld [vmem:[#allocation2 + $0x108] sm:$0xff]
      %v359 = vld [vmem:[#allocation2 + $0x110] sm:$0xff]
      %v360 = vld [vmem:[#allocation2 + $0x118] sm:$0xff]
      %v361 = vld [vmem:[#allocation2 + $0x120] sm:$0xff]
      %v362 = vld [vmem:[#allocation2 + $0x128] sm:$0xff]
      %v363 = vld [vmem:[#allocation2 + $0x130] sm:$0xff]
      %v364 = vld [vmem:[#allocation2 + $0x138] sm:$0xff]
      %v365 = vld [vmem:[#allocation2 + $0x140] sm:$0xff]
      %v366 = vld [vmem:[#allocation2 + $0x148] sm:$0xff]
      %v367 = vld [vmem:[#allocation2 + $0x150] sm:$0xff]
      %v368 = vld [vmem:[#allocation2 + $0x158] sm:$0xff]
      %v369 = vld [vmem:[#allocation2 + $0x160] sm:$0xff]
      %v370 = vld [vmem:[#allocation2 + $0x168] sm:$0xff]
      %v371 = vld [vmem:[#allocation2 + $0x170] sm:$0xff]
      %v372 = vld [vmem:[#allocation2 + $0x178] sm:$0xff]
      %v373 = vld [vmem:[#allocation2 + $0x180] sm:$0xff]
      %v374 = vld [vmem:[#allocation2 + $0x188] sm:$0xff]
      %v375 = vld [vmem:[#allocation2 + $0x190] sm:$0xff]
      %v376 = vld [vmem:[#allocation2 + $0x198] sm:$0xff]
      %v377 = vld [vmem:[#allocation2 + $0x1a0] sm:$0xff]
      %v378 = vld [vmem:[#allocation2 + $0x1a8] sm:$0xff]
      %v379 = vld [vmem:[#allocation2 + $0x1b0] sm:$0xff]
      %v380 = vld [vmem:[#allocation2 + $0x1b8] sm:$0xff]
      %v381 = vld [vmem:[#allocation2 + $0x1c0] sm:$0xff]
      %v382 = vld [vmem:[#allocation2 + $0x1c8] sm:$0xff]
      %v383 = vld [vmem:[#allocation2 + $0x1d0] sm:$0xff]
      %v384 = vld [vmem:[#allocation2 + $0x1d8] sm:$0xff]
      %v385 = vld [vmem:[#allocation2 + $0x1e0] sm:$0xff]
      %v386 = vld [vmem:[#allocation2 + $0x1e8] sm:$0xff]
      %v387 = vld [vmem:[#allocation2 + $0x1f0] sm:$0xff]
      %v388 = vld [vmem:[#allocation2 + $0x1f8] sm:$0xff]
      %v389 = vld [vmem:[#allocation2 + $0x200] sm:$0xff]
      %v390 = vld [vmem:[#allocation2 + $0x208] sm:$0xff]
      %v391 = vld [vmem:[#allocation2 + $0x210] sm:$0xff]
      %v392 = vld [vmem:[#allocation2 + $0x218] sm:$0xff]
      %v393 = vld [vmem:[#allocation2 + $0x220] sm:$0xff]
      %v394 = vld [vmem:[#allocation2 + $0x228] sm:$0xff]
      %v395 = vld [vmem:[#allocation2 + $0x230] sm:$0xff]
      %v396 = vld [vmem:[#allocation2 + $0x238] sm:$0xff]
      %v397 = vld [vmem:[#allocation2 + $0x240] sm:$0xff]
      %v398 = vld [vmem:[#allocation2 + $0x248] sm:$0xff]
      %v399 = vld [vmem:[#allocation2 + $0x250] sm:$0xff]
      %v400 = vld [vmem:[#allocation2 + $0x258] sm:$0xff]
      %v401 = vld [vmem:[#allocation2 + $0x260] sm:$0xff]
      %v402 = vld [vmem:[#allocation2 + $0x268] sm:$0xff]
      %v403 = vld [vmem:[#allocation2 + $0x270] sm:$0xff]
      %v404 = vld [vmem:[#allocation2 + $0x278] sm:$0xff]
      %v405 = vld [vmem:[#allocation2 + $0x280] sm:$0xff]
      %v406 = vld [vmem:[#allocation2 + $0x288] sm:$0xff]
      %v407 = vld [vmem:[#allocation2 + $0x290] sm:$0xff]
      %v408 = vld [vmem:[#allocation2 + $0x298] sm:$0xff]
      %v409 = vld [vmem:[#allocation2 + $0x2a0] sm:$0xff]
      %v410 = vld [vmem:[#allocation2 + $0x2a8] sm:$0xff]
      %v411 = vld [vmem:[#allocation2 + $0x2b0] sm:$0xff]
      %v412 = vld [vmem:[#allocation2 + $0x2b8] sm:$0xff]
      %v413 = vld [vmem:[#allocation2 + $0x2c0] sm:$0xff]
      %v414 = vld [vmem:[#allocation2 + $0x2c8] sm:$0xff]
      %v415 = vld [vmem:[#allocation2 + $0x2d0] sm:$0xff]
      %v416 = vld [vmem:[#allocation2 + $0x2d8] sm:$0xff]
      %v417 = vld [vmem:[#allocation2 + $0x2e0] sm:$0xff]
      %v418 = vld [vmem:[#allocation2 + $0x2e8] sm:$0xff]
      %v419 = vld [vmem:[#allocation2 + $0x2f0] sm:$0xff]
      %v420 = vld [vmem:[#allocation2 + $0x2f8] sm:$0xff]
      %v421 = vld [vmem:[#allocation2 + $0x300] sm:$0xff]
      %v422 = vld [vmem:[#allocation2 + $0x308] sm:$0xff]
      %v423 = vld [vmem:[#allocation2 + $0x310] sm:$0xff]
      %v424 = vld [vmem:[#allocation2 + $0x318] sm:$0xff]
      %v425 = vld [vmem:[#allocation2 + $0x320] sm:$0xff]
      %v426 = vld [vmem:[#allocation2 + $0x328] sm:$0xff]
      %v427 = vld [vmem:[#allocation2 + $0x330] sm:$0xff]
      %v428 = vld [vmem:[#allocation2 + $0x338] sm:$0xff]
      %v429 = vld [vmem:[#allocation2 + $0x340] sm:$0xff]
      %v430 = vld [vmem:[#allocation2 + $0x348] sm:$0xff]
      %v431 = vld [vmem:[#allocation2 + $0x350] sm:$0xff]
      %v432 = vld [vmem:[#allocation2 + $0x358] sm:$0xff]
      %v433 = vld [vmem:[#allocation2 + $0x360] sm:$0xff]
      %v434 = vld [vmem:[#allocation2 + $0x368] sm:$0xff]
      %v435 = vld [vmem:[#allocation2 + $0x370] sm:$0xff]
      %v436 = vld [vmem:[#allocation2 + $0x378] sm:$0xff]
      %v437 = vld [vmem:[#allocation2 + $0x380] sm:$0xff]
      %v438 = vld [vmem:[#allocation2 + $0x388] sm:$0xff]
      %v439 = vld [vmem:[#allocation2 + $0x390] sm:$0xff]
      %v440 = vld [vmem:[#allocation2 + $0x398] sm:$0xff]
      %v441 = vld [vmem:[#allocation2 + $0x3a0] sm:$0xff]
      %v442 = vld [vmem:[#allocation2 + $0x3a8] sm:$0xff]
      %v443 = vld [vmem:[#allocation2 + $0x3b0] sm:$0xff]
      %v444 = vld [vmem:[#allocation2 + $0x3b8] sm:$0xff]
      %v445 = vld [vmem:[#allocation2 + $0x3c0] sm:$0xff]
      %v446 = vld [vmem:[#allocation2 + $0x3c8] sm:$0xff]
      %v447 = vld [vmem:[#allocation2 + $0x3d0] sm:$0xff]
      %v448 = vld [vmem:[#allocation2 + $0x3d8] sm:$0xff]
      %v449 = vld [vmem:[#allocation2 + $0x3e0] sm:$0xff]
      %v450 = vld [vmem:[#allocation2 + $0x3e8] sm:$0xff]
      %v451 = vld [vmem:[#allocation2 + $0x3f0] sm:$0xff]
      %v452 = vld [vmem:[#allocation2 + $0x3f8] sm:$0xff]
      %v453 = vld [vmem:[%s178] sm:$0xf]
      %v454 = vld [vmem:[%s178 + $0x4] sm:$0xf]
      %v455 = vld [vmem:[%s178 + $0x8] sm:$0xf]
      %v456 = vld [vmem:[%s178 + $0xc] sm:$0xf]
      %v457 = vld [vmem:[%s178 + $0x10] sm:$0xf]
      %v458 = vld [vmem:[%s178 + $0x14] sm:$0xf]
      %v459 = vld [vmem:[%s178 + $0x18] sm:$0xf]
      %v460 = vld [vmem:[%s178 + $0x1c] sm:$0xf]
      %v461 = vld [vmem:[%s178 + $0x20] sm:$0xf]
      %v462 = vld [vmem:[%s178 + $0x24] sm:$0xf]
      %v463 = vld [vmem:[%s178 + $0x28] sm:$0xf]
      %v464 = vld [vmem:[%s178 + $0x2c] sm:$0xf]
      %v465 = vld [vmem:[%s178 + $0x30] sm:$0xf]
      %v466 = vld [vmem:[%s178 + $0x34] sm:$0xf]
      %v467 = vld [vmem:[%s178 + $0x38] sm:$0xf]
      %v468 = vld [vmem:[%s178 + $0x3c] sm:$0xf]
      %v469 = vld [vmem:[%s178 + $0x40] sm:$0xf]
      %v470 = vld [vmem:[%s178 + $0x44] sm:$0xf]
      %v471 = vld [vmem:[%s178 + $0x48] sm:$0xf]
      %v472 = vld [vmem:[%s178 + $0x4c] sm:$0xf]
      %v473 = vld [vmem:[%s178 + $0x50] sm:$0xf]
      %v474 = vld [vmem:[%s178 + $0x54] sm:$0xf]
      %v475 = vld [vmem:[%s178 + $0x58] sm:$0xf]
      %v476 = vld [vmem:[%s178 + $0x5c] sm:$0xf]
      %v477 = vld [vmem:[%s178 + $0x60] sm:$0xf]
      %v478 = vld [vmem:[%s178 + $0x64] sm:$0xf]
      %v479 = vld [vmem:[%s178 + $0x68] sm:$0xf]
      %v480 = vld [vmem:[%s178 + $0x6c] sm:$0xf]
      %v481 = vld [vmem:[%s178 + $0x70] sm:$0xf]
      %v482 = vld [vmem:[%s178 + $0x74] sm:$0xf]
      %v483 = vld [vmem:[%s178 + $0x78] sm:$0xf]
      %v484 = vld [vmem:[%s178 + $0x7c] sm:$0xf]
      %v485 = vld [vmem:[%s178 + $0x80] sm:$0xf]
      %v486 = vld [vmem:[%s178 + $0x84] sm:$0xf]
      %v487 = vld [vmem:[%s178 + $0x88] sm:$0xf]
      %v488 = vld [vmem:[%s178 + $0x8c] sm:$0xf]
      %v489 = vld [vmem:[%s178 + $0x90] sm:$0xf]
      %v490 = vld [vmem:[%s178 + $0x94] sm:$0xf]
      %v491 = vld [vmem:[%s178 + $0x98] sm:$0xf]
      %v492 = vld [vmem:[%s178 + $0x9c] sm:$0xf]
      %v493 = vld [vmem:[%s178 + $0xa0] sm:$0xf]
      %v494 = vld [vmem:[%s178 + $0xa4] sm:$0xf]
      %v495 = vld [vmem:[%s178 + $0xa8] sm:$0xf]
      %v496 = vld [vmem:[%s178 + $0xac] sm:$0xf]
      %v497 = vld [vmem:[%s178 + $0xb0] sm:$0xf]
      %v498 = vld [vmem:[%s178 + $0xb4] sm:$0xf]
      %v499 = vld [vmem:[%s178 + $0xb8] sm:$0xf]
      %v500 = vld [vmem:[%s178 + $0xbc] sm:$0xf]
      %v501 = vld [vmem:[%s178 + $0xc0] sm:$0xf]
      %v502 = vld [vmem:[%s178 + $0xc4] sm:$0xf]
      %v503 = vld [vmem:[%s178 + $0xc8] sm:$0xf]
      %v504 = vld [vmem:[%s178 + $0xcc] sm:$0xf]
      %v505 = vld [vmem:[%s178 + $0xd0] sm:$0xf]
      %v506 = vld [vmem:[%s178 + $0xd4] sm:$0xf]
      %v507 = vld [vmem:[%s178 + $0xd8] sm:$0xf]
      %v508 = vld [vmem:[%s178 + $0xdc] sm:$0xf]
      %v509 = vld [vmem:[%s178 + $0xe0] sm:$0xf]
      %v510 = vld [vmem:[%s178 + $0xe4] sm:$0xf]
      %v511 = vld [vmem:[%s178 + $0xe8] sm:$0xf]
      %v512 = vld [vmem:[%s178 + $0xec] sm:$0xf]
      %v513 = vld [vmem:[%s178 + $0xf0] sm:$0xf]
      %v514 = vld [vmem:[%s178 + $0xf4] sm:$0xf]
      %v515 = vld [vmem:[%s178 + $0xf8] sm:$0xf]
      %v516 = vld [vmem:[%s178 + $0xfc] sm:$0xf]
      %v517 = vld [vmem:[%s178 + $0x100] sm:$0xf]
      %v518 = vld [vmem:[%s178 + $0x104] sm:$0xf]
      %v519 = vld [vmem:[%s178 + $0x108] sm:$0xf]
      %v520 = vld [vmem:[%s178 + $0x10c] sm:$0xf]
      %v521 = vld [vmem:[%s178 + $0x110] sm:$0xf]
      %v522 = vld [vmem:[%s178 + $0x114] sm:$0xf]
      %v523 = vld [vmem:[%s178 + $0x118] sm:$0xf]
      %v524 = vld [vmem:[%s178 + $0x11c] sm:$0xf]
      %v525 = vld [vmem:[%s178 + $0x120] sm:$0xf]
      %v526 = vld [vmem:[%s178 + $0x124] sm:$0xf]
      %v527 = vld [vmem:[%s178 + $0x128] sm:$0xf]
      %v528 = vld [vmem:[%s178 + $0x12c] sm:$0xf]
      %v529 = vld [vmem:[%s178 + $0x130] sm:$0xf]
      %v530 = vld [vmem:[%s178 + $0x134] sm:$0xf]
      %v531 = vld [vmem:[%s178 + $0x138] sm:$0xf]
      %v532 = vld [vmem:[%s178 + $0x13c] sm:$0xf]
      %v533 = vld [vmem:[%s178 + $0x140] sm:$0xf]
      %v534 = vld [vmem:[%s178 + $0x144] sm:$0xf]
      %v535 = vld [vmem:[%s178 + $0x148] sm:$0xf]
      %v536 = vld [vmem:[%s178 + $0x14c] sm:$0xf]
      %v537 = vld [vmem:[%s178 + $0x150] sm:$0xf]
      %v538 = vld [vmem:[%s178 + $0x154] sm:$0xf]
      %v539 = vld [vmem:[%s178 + $0x158] sm:$0xf]
      %v540 = vld [vmem:[%s178 + $0x15c] sm:$0xf]
      %v541 = vld [vmem:[%s178 + $0x160] sm:$0xf]
      %v542 = vld [vmem:[%s178 + $0x164] sm:$0xf]
      %v543 = vld [vmem:[%s178 + $0x168] sm:$0xf]
      %v544 = vld [vmem:[%s178 + $0x16c] sm:$0xf]
      %v545 = vld [vmem:[%s178 + $0x170] sm:$0xf]
      %v546 = vld [vmem:[%s178 + $0x174] sm:$0xf]
      %v547 = vld [vmem:[%s178 + $0x178] sm:$0xf]
      %v548 = vld [vmem:[%s178 + $0x17c] sm:$0xf]
      %v549 = vld [vmem:[%s178 + $0x180] sm:$0xf]
      %v550 = vld [vmem:[%s178 + $0x184] sm:$0xf]
      %v551 = vld [vmem:[%s178 + $0x188] sm:$0xf]
      %v552 = vld [vmem:[%s178 + $0x18c] sm:$0xf]
      %v553 = vld [vmem:[%s178 + $0x190] sm:$0xf]
      %v554 = vld [vmem:[%s178 + $0x194] sm:$0xf]
      %v555 = vld [vmem:[%s178 + $0x198] sm:$0xf]
      %v556 = vld [vmem:[%s178 + $0x19c] sm:$0xf]
      %v557 = vld [vmem:[%s178 + $0x1a0] sm:$0xf]
      %v558 = vld [vmem:[%s178 + $0x1a4] sm:$0xf]
      %v559 = vld [vmem:[%s178 + $0x1a8] sm:$0xf]
      %v560 = vld [vmem:[%s178 + $0x1ac] sm:$0xf]
      %v561 = vld [vmem:[%s178 + $0x1b0] sm:$0xf]
      %v562 = vld [vmem:[%s178 + $0x1b4] sm:$0xf]
      %v563 = vld [vmem:[%s178 + $0x1b8] sm:$0xf]
      %v564 = vld [vmem:[%s178 + $0x1bc] sm:$0xf]
      %v565 = vld [vmem:[%s178 + $0x1c0] sm:$0xf]
      %v566 = vld [vmem:[%s178 + $0x1c4] sm:$0xf]
      %v567 = vld [vmem:[%s178 + $0x1c8] sm:$0xf]
      %v568 = vld [vmem:[%s178 + $0x1cc] sm:$0xf]
      %v569 = vld [vmem:[%s178 + $0x1d0] sm:$0xf]
      %v570 = vld [vmem:[%s178 + $0x1d4] sm:$0xf]
      %v571 = vld [vmem:[%s178 + $0x1d8] sm:$0xf]
      %v572 = vld [vmem:[%s178 + $0x1dc] sm:$0xf]
      %v573 = vld [vmem:[%s178 + $0x1e0] sm:$0xf]
      %v574 = vld [vmem:[%s178 + $0x1e4] sm:$0xf]
      %v575 = vld [vmem:[%s178 + $0x1e8] sm:$0xf]
      %v576 = vld [vmem:[%s178 + $0x1ec] sm:$0xf]
      %v577 = vld [vmem:[%s178 + $0x1f0] sm:$0xf]
      %v578 = vld [vmem:[%s178 + $0x1f4] sm:$0xf]
      %v579 = vld [vmem:[%s178 + $0x1f8] sm:$0xf]
      %v580 = vld [vmem:[%s178 + $0x1fc] sm:$0xf]
      %v581 = vld [vmem:[%s184] sm:$0xf]
      %v582 = vld [vmem:[%s184 + $0x4] sm:$0xf]
      %v583 = vld [vmem:[%s184 + $0x8] sm:$0xf]
      %v584 = vld [vmem:[%s184 + $0xc] sm:$0xf]
      %v585 = vld [vmem:[%s184 + $0x10] sm:$0xf]
      %v586 = vld [vmem:[%s184 + $0x14] sm:$0xf]
      %v715 = vunpack.c.l.b16 %v453
      %v716 = vunpack.c.l.b16 %v454
      %v717 = vunpack.c.l.b16 %v455
      %v718 = vunpack.c.l.b16 %v456
      %v719 = vunpack.c.l.b16 %v457
      %v720 = vunpack.c.l.b16 %v458
      %v721 = vunpack.c.l.b16 %v459
      %v722 = vunpack.c.l.b16 %v460
      %v723 = vunpack.c.l.b16 %v461
      %v724 = vunpack.c.l.b16 %v462
      %v725 = vunpack.c.l.b16 %v463
      %v726 = vunpack.c.l.b16 %v464
      %v727 = vunpack.c.l.b16 %v465
      %v728 = vunpack.c.l.b16 %v466
      %v729 = vunpack.c.l.b16 %v467
      %v730 = vunpack.c.l.b16 %v468
      %v731 = vunpack.c.l.b16 %v469
      %v732 = vunpack.c.l.b16 %v470
      %v733 = vunpack.c.l.b16 %v471
      %v734 = vunpack.c.l.b16 %v472
      %v735 = vunpack.c.l.b16 %v473
      %v736 = vunpack.c.l.b16 %v474
      %v737 = vunpack.c.l.b16 %v475
      %v738 = vunpack.c.l.b16 %v476
      %v739 = vunpack.c.l.b16 %v477
      %v740 = vunpack.c.l.b16 %v478
      %v741 = vunpack.c.l.b16 %v479
      %v742 = vunpack.c.l.b16 %v480
      %v743 = vunpack.c.l.b16 %v481
      %v744 = vunpack.c.l.b16 %v482
      %v745 = vunpack.c.l.b16 %v483
      %v746 = vunpack.c.l.b16 %v484
      %v747 = vunpack.c.l.b16 %v485
      %v748 = vunpack.c.l.b16 %v486
      %v749 = vunpack.c.l.b16 %v487
      %v750 = vunpack.c.l.b16 %v488
      %v751 = vunpack.c.l.b16 %v489
      %v752 = vunpack.c.l.b16 %v490
      %v753 = vunpack.c.l.b16 %v491
      %v754 = vunpack.c.l.b16 %v492
      %v755 = vunpack.c.l.b16 %v493
      %v756 = vunpack.c.l.b16 %v494
      %v757 = vunpack.c.l.b16 %v495
      %v758 = vunpack.c.l.b16 %v496
      %v759 = vunpack.c.l.b16 %v497
      %v760 = vunpack.c.l.b16 %v498
      %v761 = vunpack.c.l.b16 %v499
      %v762 = vunpack.c.l.b16 %v500
      %v763 = vunpack.c.l.b16 %v501
      %v764 = vunpack.c.l.b16 %v502
      %v765 = vunpack.c.l.b16 %v503
      %v766 = vunpack.c.l.b16 %v504
      %v767 = vunpack.c.l.b16 %v505
      %v768 = vunpack.c.l.b16 %v506
      %v769 = vunpack.c.l.b16 %v507
      %v770 = vunpack.c.l.b16 %v508
      %v771 = vunpack.c.l.b16 %v509
      %v772 = vunpack.c.l.b16 %v510
      %v773 = vunpack.c.l.b16 %v511
      %v774 = vunpack.c.l.b16 %v512
      %v775 = vunpack.c.l.b16 %v513
      %v776 = vunpack.c.l.b16 %v514
      %v777 = vunpack.c.l.b16 %v515
      %v778 = vunpack.c.l.b16 %v516
      %v779 = vunpack.c.l.b16 %v517
      %v780 = vunpack.c.l.b16 %v518
      %v781 = vunpack.c.l.b16 %v519
      %v782 = vunpack.c.l.b16 %v520
      %v783 = vunpack.c.l.b16 %v521
      %v784 = vunpack.c.l.b16 %v522
      %v785 = vunpack.c.l.b16 %v523
      %v786 = vunpack.c.l.b16 %v524
      %v787 = vunpack.c.l.b16 %v525
      %v788 = vunpack.c.l.b16 %v526
      %v789 = vunpack.c.l.b16 %v527
      %v790 = vunpack.c.l.b16 %v528
      %v791 = vunpack.c.l.b16 %v529
      %v792 = vunpack.c.l.b16 %v530
      %v793 = vunpack.c.l.b16 %v531
      %v794 = vunpack.c.l.b16 %v532
      %v795 = vunpack.c.l.b16 %v533
      %v796 = vunpack.c.l.b16 %v534
      %v797 = vunpack.c.l.b16 %v535
      %v798 = vunpack.c.l.b16 %v536
      %v799 = vunpack.c.l.b16 %v537
      %v800 = vunpack.c.l.b16 %v538
      %v801 = vunpack.c.l.b16 %v539
      %v802 = vunpack.c.l.b16 %v540
      %v803 = vunpack.c.l.b16 %v541
      %v804 = vunpack.c.l.b16 %v542
      %v805 = vunpack.c.l.b16 %v543
      %v806 = vunpack.c.l.b16 %v544
      %v807 = vunpack.c.l.b16 %v545
      %v808 = vunpack.c.l.b16 %v546
      %v809 = vunpack.c.l.b16 %v547
      %v810 = vunpack.c.l.b16 %v548
      %v811 = vunpack.c.l.b16 %v549
      %v812 = vunpack.c.l.b16 %v550
      %v813 = vunpack.c.l.b16 %v551
      %v814 = vunpack.c.l.b16 %v552
      %v815 = vunpack.c.l.b16 %v553
      %v816 = vunpack.c.l.b16 %v554
      %v817 = vunpack.c.l.b16 %v555
      %v818 = vunpack.c.l.b16 %v556
      %v819 = vunpack.c.l.b16 %v557
      %v820 = vunpack.c.l.b16 %v558
      %v821 = vunpack.c.l.b16 %v559
      %v822 = vunpack.c.l.b16 %v560
      %v823 = vunpack.c.l.b16 %v561
      %v824 = vunpack.c.l.b16 %v562
      %v825 = vunpack.c.l.b16 %v563
      %v826 = vunpack.c.l.b16 %v564
      %v827 = vunpack.c.l.b16 %v565
      %v828 = vunpack.c.l.b16 %v566
      %v829 = vunpack.c.l.b16 %v567
      %v830 = vunpack.c.l.b16 %v568
      %v831 = vunpack.c.l.b16 %v569
      %v832 = vunpack.c.l.b16 %v570
      %v833 = vunpack.c.l.b16 %v571
      %v834 = vunpack.c.l.b16 %v572
      %v835 = vunpack.c.l.b16 %v573
      %v836 = vunpack.c.l.b16 %v574
      %v837 = vunpack.c.l.b16 %v575
      %v838 = vunpack.c.l.b16 %v576
      %v839 = vunpack.c.l.b16 %v577
      %v840 = vunpack.c.l.b16 %v578
      %v841 = vunpack.c.l.b16 %v579
      %v842 = vunpack.c.l.b16 %v580
      %v843 = vpack.c.b16 %v716, %v715
      %v844 = vpack.c.b16 %v718, %v717
      %v845 = vpack.c.b16 %v720, %v719
      %v846 = vpack.c.b16 %v722, %v721
      %v847 = vpack.c.b16 %v724, %v723
      %v848 = vpack.c.b16 %v726, %v725
      %v849 = vpack.c.b16 %v728, %v727
      %v850 = vpack.c.b16 %v730, %v729
      %v851 = vpack.c.b16 %v732, %v731
      %v852 = vpack.c.b16 %v734, %v733
      %v853 = vpack.c.b16 %v736, %v735
      %v854 = vpack.c.b16 %v738, %v737
      %v855 = vpack.c.b16 %v740, %v739
      %v856 = vpack.c.b16 %v742, %v741
      %v857 = vpack.c.b16 %v744, %v743
      %v858 = vpack.c.b16 %v746, %v745
      %v859 = vpack.c.b16 %v748, %v747
      %v860 = vpack.c.b16 %v750, %v749
      %v861 = vpack.c.b16 %v752, %v751
      %v862 = vpack.c.b16 %v754, %v753
      %v863 = vpack.c.b16 %v756, %v755
      %v864 = vpack.c.b16 %v758, %v757
      %v865 = vpack.c.b16 %v760, %v759
      %v866 = vpack.c.b16 %v762, %v761
      %v867 = vpack.c.b16 %v764, %v763
      %v868 = vpack.c.b16 %v766, %v765
      %v869 = vpack.c.b16 %v768, %v767
      %v870 = vpack.c.b16 %v770, %v769
      %v871 = vpack.c.b16 %v772, %v771
      %v872 = vpack.c.b16 %v774, %v773
      %v873 = vpack.c.b16 %v776, %v775
      %v874 = vpack.c.b16 %v778, %v777
      %v875 = vpack.c.b16 %v780, %v779
      %v876 = vpack.c.b16 %v782, %v781
      %v877 = vpack.c.b16 %v784, %v783
      %v878 = vpack.c.b16 %v786, %v785
      %v879 = vpack.c.b16 %v788, %v787
      %v880 = vpack.c.b16 %v790, %v789
      %v881 = vpack.c.b16 %v792, %v791
      %v882 = vpack.c.b16 %v794, %v793
      %v883 = vpack.c.b16 %v796, %v795
      %v884 = vpack.c.b16 %v798, %v797
      %v885 = vpack.c.b16 %v800, %v799
      %v886 = vpack.c.b16 %v802, %v801
      %v887 = vpack.c.b16 %v804, %v803
      %v888 = vpack.c.b16 %v806, %v805
      %v889 = vpack.c.b16 %v808, %v807
      %v890 = vpack.c.b16 %v810, %v809
      %v891 = vpack.c.b16 %v812, %v811
      %v892 = vpack.c.b16 %v814, %v813
      %v893 = vpack.c.b16 %v816, %v815
      %v894 = vpack.c.b16 %v818, %v817
      %v895 = vpack.c.b16 %v820, %v819
      %v896 = vpack.c.b16 %v822, %v821
      %v897 = vpack.c.b16 %v824, %v823
      %v898 = vpack.c.b16 %v826, %v825
      %v899 = vpack.c.b16 %v828, %v827
      %v900 = vpack.c.b16 %v830, %v829
      %v901 = vpack.c.b16 %v832, %v831
      %v902 = vpack.c.b16 %v834, %v833
      %v903 = vpack.c.b16 %v836, %v835
      %v904 = vpack.c.b16 %v838, %v837
      %v905 = vpack.c.b16 %v840, %v839
      %v906 = vpack.c.b16 %v842, %v841
      %v913 = vunpack.c.l.b16 %v581
      %v914 = vunpack.c.l.b16 %v582
      %v915 = vunpack.c.l.b16 %v583
      %v916 = vunpack.c.l.b16 %v584
      %v917 = vunpack.c.l.b16 %v585
      %v918 = vunpack.c.l.b16 %v586
      %v919 = vpack.c.b16 %v914, %v913
      %v920 = vpack.c.b16 %v916, %v915
      %v921 = vpack.c.b16 %v918, %v917
      %vm925 = vcmask 392192
      %v927 = vsel %vm925, %v843, 0
      %v930 = vsel %vm925, %v844, 0
      %v933 = vsel %vm925, %v845, 0
      %v936 = vsel %vm925, %v846, 0
      %v939 = vsel %vm925, %v847, 0
      %v942 = vsel %vm925, %v848, 0
      %v945 = vsel %vm925, %v849, 0
      %v948 = vsel %vm925, %v850, 0
      %v951 = vsel %vm925, %v851, 0
      %v954 = vsel %vm925, %v852, 0
      %v957 = vsel %vm925, %v853, 0
      %v960 = vsel %vm925, %v854, 0
      %v963 = vsel %vm925, %v855, 0
      %v966 = vsel %vm925, %v856, 0
      %v969 = vsel %vm925, %v857, 0
      %v972 = vsel %vm925, %v858, 0
      %v975 = vsel %vm925, %v859, 0
      %v978 = vsel %vm925, %v860, 0
      %v981 = vsel %vm925, %v861, 0
      %v984 = vsel %vm925, %v862, 0
      %v987 = vsel %vm925, %v863, 0
      %v990 = vsel %vm925, %v864, 0
      %v993 = vsel %vm925, %v865, 0
      %v996 = vsel %vm925, %v866, 0
      %v999 = vsel %vm925, %v867, 0
      %v1002 = vsel %vm925, %v868, 0
      %v1005 = vsel %vm925, %v869, 0
      %v1008 = vsel %vm925, %v870, 0
      %v1011 = vsel %vm925, %v871, 0
      %v1014 = vsel %vm925, %v872, 0
      %v1017 = vsel %vm925, %v873, 0
      %v1020 = vsel %vm925, %v874, 0
      %v1023 = vsel %vm925, %v875, 0
      %v1026 = vsel %vm925, %v876, 0
      %v1029 = vsel %vm925, %v877, 0
      %v1032 = vsel %vm925, %v878, 0
      %v1035 = vsel %vm925, %v879, 0
      %v1038 = vsel %vm925, %v880, 0
      %v1041 = vsel %vm925, %v881, 0
      %v1044 = vsel %vm925, %v882, 0
      %v1047 = vsel %vm925, %v883, 0
      %v1050 = vsel %vm925, %v884, 0
      %v1053 = vsel %vm925, %v885, 0
      %v1056 = vsel %vm925, %v886, 0
      %v1059 = vsel %vm925, %v887, 0
      %v1062 = vsel %vm925, %v888, 0
      %v1065 = vsel %vm925, %v889, 0
      %v1068 = vsel %vm925, %v890, 0
      %v1071 = vsel %vm925, %v891, 0
      %v1074 = vsel %vm925, %v892, 0
      %v1077 = vsel %vm925, %v893, 0
      %v1080 = vsel %vm925, %v894, 0
      %v1083 = vsel %vm925, %v895, 0
      %v1086 = vsel %vm925, %v896, 0
      %v1089 = vsel %vm925, %v897, 0
      %v1092 = vsel %vm925, %v898, 0
      %v1095 = vsel %vm925, %v899, 0
      %v1098 = vsel %vm925, %v900, 0
      %v1101 = vsel %vm925, %v901, 0
      %v1104 = vsel %vm925, %v902, 0
      %v1107 = vsel %vm925, %v903, 0
      %v1110 = vsel %vm925, %v904, 0
      %v1113 = vsel %vm925, %v905, 0
      %v1116 = vsel %vm925, %v906, 0
      %1118 = vmatprep.subr.bf16.mxu0 0
      %1119 = vmatpush1.bf16.msra.mxu0 %v919
      %1120 = vmatprep.subr.bf16.mxu0 0
      %1121 = vmatpush1.bf16.msra.mxu0 %v920
      %1122 = vmatprep.subr.bf16.mxu0 0
      %1123 = vmatpush1.bf16.msra.mxu0 %v921
      %1124 = vmatprep.subr.bf16.mxu0 0
      %1125 = vmatpush1.bf16.msra.mxu0 0
      %1126 = vmatprep.subr.bf16.mxu0 0
      %1127 = vmatpush1.bf16.msra.mxu0 0
      %1128 = vmatprep.subr.bf16.mxu0 0
      %1129 = vmatpush1.bf16.msra.mxu0 0
      %1130 = vmatprep.subr.bf16.mxu0 0
      %1131 = vmatpush1.bf16.msra.mxu0 0
      %1132 = vmatprep.subr.bf16.mxu0 0
      %1133 = vmatpush1.bf16.msra.mxu0 0
      %1134 = vmatprep.subr.bf16.mxu0 0
      %1135 = vmatpush1.bf16.msra.mxu0 0
      %1136 = vmatprep.subr.bf16.mxu0 0
      %1137 = vmatpush1.bf16.msra.mxu0 0
      %1138 = vmatprep.subr.bf16.mxu0 0
      %1139 = vmatpush1.bf16.msra.mxu0 0
      %1140 = vmatprep.subr.bf16.mxu0 0
      %1141 = vmatpush1.bf16.msra.mxu0 0
      %1142 = vmatprep.subr.bf16.mxu0 0
      %1143 = vmatpush1.bf16.msra.mxu0 0
      %1144 = vmatprep.subr.bf16.mxu0 0
      %1145 = vmatpush1.bf16.msra.mxu0 0
      %1146 = vmatprep.subr.bf16.mxu0 0
      %1147 = vmatpush1.bf16.msra.mxu0 0
      %1148 = vmatprep.subr.bf16.mxu0 0
      %1149 = vmatpush1.bf16.msra.mxu0 0
      %1150 = vmatprep.mubr.bf16.mxu0 0
      %1151 = vmatmul.mubr.bf16.gmra.mrb[0].mxu0 %v927
      %v1152 = vpop.f32.mrb[0].mxu0
      %v1153 = vadd.f32 0.0, %v1152
      %v1154 = vpop.f32.mrb[0].mxu0
      %v1155 = vpop.f32.mrb[0].mxu0
      %v1156 = vadd.f32 0.0, %v1155
      %v1157 = vpop.f32.mrb[0].mxu0
      %1158 = vmatprep.mubr.bf16.mxu0 0
      %1159 = vmatmul.mubr.bf16.gmra.mrb[0].mxu0 %v930
      %v1160 = vpop.f32.mrb[0].mxu0
      %v1161 = vadd.f32 0.0, %v1160
      %v1162 = vpop.f32.mrb[0].mxu0
      %v1163 = vpop.f32.mrb[0].mxu0
      %v1164 = vadd.f32 0.0, %v1163
      %v1165 = vpop.f32.mrb[0].mxu0
      %1166 = vmatprep.mubr.bf16.mxu0 0
      %1167 = vmatmul.mubr.bf16.gmra.mrb[0].mxu0 %v933
      %v1168 = vpop.f32.mrb[0].mxu0
      %v1169 = vadd.f32 0.0, %v1168
      %v1170 = vpop.f32.mrb[0].mxu0
      %v1171 = vpop.f32.mrb[0].mxu0
      %v1172 = vadd.f32 0.0, %v1171
      %v1173 = vpop.f32.mrb[0].mxu0
      %1174 = vmatprep.mubr.bf16.mxu0 0
      %1175 = vmatmul.mubr.bf16.gmra.mrb[0].mxu0 %v936
      %v1176 = vpop.f32.mrb[0].mxu0
      %v1177 = vadd.f32 0.0, %v1176
      %v1178 = vpop.f32.mrb[0].mxu0
      %v1179 = vpop.f32.mrb[0].mxu0
      %v1180 = vadd.f32 0.0, %v1179
      %v1181 = vpop.f32.mrb[0].mxu0
      %1182 = vmatprep.mubr.bf16.mxu0 0
      %1183 = vmatmul.mubr.bf16.gmra.mrb[0].mxu0 %v939
      %v1184 = vpop.f32.mrb[0].mxu0
      %v1185 = vadd.f32 0.0, %v1184
      %v1186 = vpop.f32.mrb[0].mxu0
      %v1187 = vpop.f32.mrb[0].mxu0
      %v1188 = vadd.f32 0.0, %v1187
      %v1189 = vpop.f32.mrb[0].mxu0
      %1190 = vmatprep.mubr.bf16.mxu0 0
      %1191 = vmatmul.mubr.bf16.gmra.mrb[0].mxu0 %v942
      %v1192 = vpop.f32.mrb[0].mxu0
      %v1193 = vadd.f32 0.0, %v1192
      %v1194 = vpop.f32.mrb[0].mxu0
      %v1195 = vpop.f32.mrb[0].mxu0
      %v1196 = vadd.f32 0.0, %v1195
      %v1197 = vpop.f32.mrb[0].mxu0
      %1198 = vmatprep.mubr.bf16.mxu0 0
      %1199 = vmatmul.mubr.bf16.gmra.mrb[0].mxu0 %v945
      %v1200 = vpop.f32.mrb[0].mxu0
      %v1201 = vadd.f32 0.0, %v1200
      %v1202 = vpop.f32.mrb[0].mxu0
      %v1203 = vpop.f32.mrb[0].mxu0
      %v1204 = vadd.f32 0.0, %v1203
      %v1205 = vpop.f32.mrb[0].mxu0
      %1206 = vmatprep.mubr.bf16.mxu0 0
      %1207 = vmatmul.mubr.bf16.gmra.mrb[0].mxu0 %v948
      %v1208 = vpop.f32.mrb[0].mxu0
      %v1209 = vadd.f32 0.0, %v1208
      %v1210 = vpop.f32.mrb[0].mxu0
      %v1211 = vpop.f32.mrb[0].mxu0
      %v1212 = vadd.f32 0.0, %v1211
      %v1213 = vpop.f32.mrb[0].mxu0
      %1214 = vmatprep.mubr.bf16.mxu0 0
      %1215 = vmatmul.mubr.bf16.gmra.mrb[0].mxu0 %v951
      %v1216 = vpop.f32.mrb[0].mxu0
      %v1217 = vadd.f32 0.0, %v1216
      %v1218 = vpop.f32.mrb[0].mxu0
      %v1219 = vpop.f32.mrb[0].mxu0
      %v1220 = vadd.f32 0.0, %v1219
      %v1221 = vpop.f32.mrb[0].mxu0
      %1222 = vmatprep.mubr.bf16.mxu0 0
      %1223 = vmatmul.mubr.bf16.gmra.mrb[0].mxu0 %v954
      %v1224 = vpop.f32.mrb[0].mxu0
      %v1225 = vadd.f32 0.0, %v1224
      %v1226 = vpop.f32.mrb[0].mxu0
      %v1227 = vpop.f32.mrb[0].mxu0
      %v1228 = vadd.f32 0.0, %v1227
      %v1229 = vpop.f32.mrb[0].mxu0
      %1230 = vmatprep.mubr.bf16.mxu0 0
      %1231 = vmatmul.mubr.bf16.gmra.mrb[0].mxu0 %v957
      %v1232 = vpop.f32.mrb[0].mxu0
      %v1233 = vadd.f32 0.0, %v1232
      %v1234 = vpop.f32.mrb[0].mxu0
      %v1235 = vpop.f32.mrb[0].mxu0
      %v1236 = vadd.f32 0.0, %v1235
      %v1237 = vpop.f32.mrb[0].mxu0
      %1238 = vmatprep.mubr.bf16.mxu0 0
      %1239 = vmatmul.mubr.bf16.gmra.mrb[0].mxu0 %v960
      %v1240 = vpop.f32.mrb[0].mxu0
      %v1241 = vadd.f32 0.0, %v1240
      %v1242 = vpop.f32.mrb[0].mxu0
      %v1243 = vpop.f32.mrb[0].mxu0
      %v1244 = vadd.f32 0.0, %v1243
      %v1245 = vpop.f32.mrb[0].mxu0
      %1246 = vmatprep.mubr.bf16.mxu0 0
      %1247 = vmatmul.mubr.bf16.gmra.mrb[0].mxu0 %v963
      %v1248 = vpop.f32.mrb[0].mxu0
      %v1249 = vadd.f32 0.0, %v1248
      %v1250 = vpop.f32.mrb[0].mxu0
      %v1251 = vpop.f32.mrb[0].mxu0
      %v1252 = vadd.f32 0.0, %v1251
      %v1253 = vpop.f32.mrb[0].mxu0
      %1254 = vmatprep.mubr.bf16.mxu0 0
      %1255 = vmatmul.mubr.bf16.gmra.mrb[0].mxu0 %v966
      %v1256 = vpop.f32.mrb[0].mxu0
      %v1257 = vadd.f32 0.0, %v1256
      %v1258 = vpop.f32.mrb[0].mxu0
      %v1259 = vpop.f32.mrb[0].mxu0
      %v1260 = vadd.f32 0.0, %v1259
      %v1261 = vpop.f32.mrb[0].mxu0
      %1262 = vmatprep.mubr.bf16.mxu0 0
      %1263 = vmatmul.mubr.bf16.gmra.mrb[0].mxu0 %v969
      %v1264 = vpop.f32.mrb[0].mxu0
      %v1265 = vadd.f32 0.0, %v1264
      %v1266 = vpop.f32.mrb[0].mxu0
      %v1267 = vpop.f32.mrb[0].mxu0
      %v1268 = vadd.f32 0.0, %v1267
      %v1269 = vpop.f32.mrb[0].mxu0
      %1270 = vmatprep.mubr.bf16.mxu0 0
      %1271 = vmatmul.mubr.bf16.gmra.mrb[0].mxu0 %v972
      %v1272 = vpop.f32.mrb[0].mxu0
      %v1273 = vadd.f32 0.0, %v1272
      %v1274 = vpop.f32.mrb[0].mxu0
      %v1275 = vpop.f32.mrb[0].mxu0
      %v1276 = vadd.f32 0.0, %v1275
      %v1277 = vpop.f32.mrb[0].mxu0
      %1278 = vmatprep.mubr.bf16.mxu0 0
      %1279 = vmatmul.mubr.bf16.gmra.mrb[0].mxu0 %v975
      %v1280 = vpop.f32.mrb[0].mxu0
      %v1281 = vadd.f32 0.0, %v1280
      %v1282 = vpop.f32.mrb[0].mxu0
      %v1283 = vpop.f32.mrb[0].mxu0
      %v1284 = vadd.f32 0.0, %v1283
      %v1285 = vpop.f32.mrb[0].mxu0
      %1286 = vmatprep.mubr.bf16.mxu0 0
      %1287 = vmatmul.mubr.bf16.gmra.mrb[0].mxu0 %v978
      %v1288 = vpop.f32.mrb[0].mxu0
      %v1289 = vadd.f32 0.0, %v1288
      %v1290 = vpop.f32.mrb[0].mxu0
      %v1291 = vpop.f32.mrb[0].mxu0
      %v1292 = vadd.f32 0.0, %v1291
      %v1293 = vpop.f32.mrb[0].mxu0
      %1294 = vmatprep.mubr.bf16.mxu0 0
      %1295 = vmatmul.mubr.bf16.gmra.mrb[0].mxu0 %v981
      %v1296 = vpop.f32.mrb[0].mxu0
      %v1297 = vadd.f32 0.0, %v1296
      %v1298 = vpop.f32.mrb[0].mxu0
      %v1299 = vpop.f32.mrb[0].mxu0
      %v1300 = vadd.f32 0.0, %v1299
      %v1301 = vpop.f32.mrb[0].mxu0
      %1302 = vmatprep.mubr.bf16.mxu0 0
      %1303 = vmatmul.mubr.bf16.gmra.mrb[0].mxu0 %v984
      %v1304 = vpop.f32.mrb[0].mxu0
      %v1305 = vadd.f32 0.0, %v1304
      %v1306 = vpop.f32.mrb[0].mxu0
      %v1307 = vpop.f32.mrb[0].mxu0
      %v1308 = vadd.f32 0.0, %v1307
      %v1309 = vpop.f32.mrb[0].mxu0
      %1310 = vmatprep.mubr.bf16.mxu0 0
      %1311 = vmatmul.mubr.bf16.gmra.mrb[0].mxu0 %v987
      %v1312 = vpop.f32.mrb[0].mxu0
      %v1313 = vadd.f32 0.0, %v1312
      %v1314 = vpop.f32.mrb[0].mxu0
      %v1315 = vpop.f32.mrb[0].mxu0
      %v1316 = vadd.f32 0.0, %v1315
      %v1317 = vpop.f32.mrb[0].mxu0
      %1318 = vmatprep.mubr.bf16.mxu0 0
      %1319 = vmatmul.mubr.bf16.gmra.mrb[0].mxu0 %v990
      %v1320 = vpop.f32.mrb[0].mxu0
      %v1321 = vadd.f32 0.0, %v1320
      %v1322 = vpop.f32.mrb[0].mxu0
      %v1323 = vpop.f32.mrb[0].mxu0
      %v1324 = vadd.f32 0.0, %v1323
      %v1325 = vpop.f32.mrb[0].mxu0
      %1326 = vmatprep.mubr.bf16.mxu0 0
      %1327 = vmatmul.mubr.bf16.gmra.mrb[0].mxu0 %v993
      %v1328 = vpop.f32.mrb[0].mxu0
      %v1329 = vadd.f32 0.0, %v1328
      %v1330 = vpop.f32.mrb[0].mxu0
      %v1331 = vpop.f32.mrb[0].mxu0
      %v1332 = vadd.f32 0.0, %v1331
      %v1333 = vpop.f32.mrb[0].mxu0
      %1334 = vmatprep.mubr.bf16.mxu0 0
      %1335 = vmatmul.mubr.bf16.gmra.mrb[0].mxu0 %v996
      %v1336 = vpop.f32.mrb[0].mxu0
      %v1337 = vadd.f32 0.0, %v1336
      %v1338 = vpop.f32.mrb[0].mxu0
      %v1339 = vpop.f32.mrb[0].mxu0
      %v1340 = vadd.f32 0.0, %v1339
      %v1341 = vpop.f32.mrb[0].mxu0
      %1342 = vmatprep.mubr.bf16.mxu0 0
      %1343 = vmatmul.mubr.bf16.gmra.mrb[0].mxu0 %v999
      %v1344 = vpop.f32.mrb[0].mxu0
      %v1345 = vadd.f32 0.0, %v1344
      %v1346 = vpop.f32.mrb[0].mxu0
      %v1347 = vpop.f32.mrb[0].mxu0
      %v1348 = vadd.f32 0.0, %v1347
      %v1349 = vpop.f32.mrb[0].mxu0
      %1350 = vmatprep.mubr.bf16.mxu0 0
      %1351 = vmatmul.mubr.bf16.gmra.mrb[0].mxu0 %v1002
      %v1352 = vpop.f32.mrb[0].mxu0
      %v1353 = vadd.f32 0.0, %v1352
      %v1354 = vpop.f32.mrb[0].mxu0
      %v1355 = vpop.f32.mrb[0].mxu0
      %v1356 = vadd.f32 0.0, %v1355
      %v1357 = vpop.f32.mrb[0].mxu0
      %1358 = vmatprep.mubr.bf16.mxu0 0
      %1359 = vmatmul.mubr.bf16.gmra.mrb[0].mxu0 %v1005
      %v1360 = vpop.f32.mrb[0].mxu0
      %v1361 = vadd.f32 0.0, %v1360
      %v1362 = vpop.f32.mrb[0].mxu0
      %v1363 = vpop.f32.mrb[0].mxu0
      %v1364 = vadd.f32 0.0, %v1363
      %v1365 = vpop.f32.mrb[0].mxu0
      %1366 = vmatprep.mubr.bf16.mxu0 0
      %1367 = vmatmul.mubr.bf16.gmra.mrb[0].mxu0 %v1008
      %v1368 = vpop.f32.mrb[0].mxu0
      %v1369 = vadd.f32 0.0, %v1368
      %v1370 = vpop.f32.mrb[0].mxu0
      %v1371 = vpop.f32.mrb[0].mxu0
      %v1372 = vadd.f32 0.0, %v1371
      %v1373 = vpop.f32.mrb[0].mxu0
      %1374 = vmatprep.mubr.bf16.mxu0 0
      %1375 = vmatmul.mubr.bf16.gmra.mrb[0].mxu0 %v1011
      %v1376 = vpop.f32.mrb[0].mxu0
      %v1377 = vadd.f32 0.0, %v1376
      %v1378 = vpop.f32.mrb[0].mxu0
      %v1379 = vpop.f32.mrb[0].mxu0
      %v1380 = vadd.f32 0.0, %v1379
      %v1381 = vpop.f32.mrb[0].mxu0
      %1382 = vmatprep.mubr.bf16.mxu0 0
      %1383 = vmatmul.mubr.bf16.gmra.mrb[0].mxu0 %v1014
      %v1384 = vpop.f32.mrb[0].mxu0
      %v1385 = vadd.f32 0.0, %v1384
      %v1386 = vpop.f32.mrb[0].mxu0
      %v1387 = vpop.f32.mrb[0].mxu0
      %v1388 = vadd.f32 0.0, %v1387
      %v1389 = vpop.f32.mrb[0].mxu0
      %1390 = vmatprep.mubr.bf16.mxu0 0
      %1391 = vmatmul.mubr.bf16.gmra.mrb[0].mxu0 %v1017
      %v1392 = vpop.f32.mrb[0].mxu0
      %v1393 = vadd.f32 0.0, %v1392
      %v1394 = vpop.f32.mrb[0].mxu0
      %v1395 = vpop.f32.mrb[0].mxu0
      %v1396 = vadd.f32 0.0, %v1395
      %v1397 = vpop.f32.mrb[0].mxu0
      %1398 = vmatprep.mubr.bf16.mxu0 0
      %1399 = vmatmul.mubr.bf16.gmra.mrb[0].mxu0 %v1020
      %v1400 = vpop.f32.mrb[0].mxu0
      %v1401 = vadd.f32 0.0, %v1400
      %v1402 = vpop.f32.mrb[0].mxu0
      %v1403 = vpop.f32.mrb[0].mxu0
      %v1404 = vadd.f32 0.0, %v1403
      %v1405 = vpop.f32.mrb[0].mxu0
      %1406 = vmatprep.mubr.bf16.mxu0 0
      %1407 = vmatmul.mubr.bf16.gmra.mrb[0].mxu0 %v1023
      %v1408 = vpop.f32.mrb[0].mxu0
      %v1409 = vadd.f32 0.0, %v1408
      %v1410 = vpop.f32.mrb[0].mxu0
      %v1411 = vpop.f32.mrb[0].mxu0
      %v1412 = vadd.f32 0.0, %v1411
      %v1413 = vpop.f32.mrb[0].mxu0
      %1414 = vmatprep.mubr.bf16.mxu0 0
      %1415 = vmatmul.mubr.bf16.gmra.mrb[0].mxu0 %v1026
      %v1416 = vpop.f32.mrb[0].mxu0
      %v1417 = vadd.f32 0.0, %v1416
      %v1418 = vpop.f32.mrb[0].mxu0
      %v1419 = vpop.f32.mrb[0].mxu0
      %v1420 = vadd.f32 0.0, %v1419
      %v1421 = vpop.f32.mrb[0].mxu0
      %1422 = vmatprep.mubr.bf16.mxu0 0
      %1423 = vmatmul.mubr.bf16.gmra.mrb[0].mxu0 %v1029
      %v1424 = vpop.f32.mrb[0].mxu0
      %v1425 = vadd.f32 0.0, %v1424
      %v1426 = vpop.f32.mrb[0].mxu0
      %v1427 = vpop.f32.mrb[0].mxu0
      %v1428 = vadd.f32 0.0, %v1427
      %v1429 = vpop.f32.mrb[0].mxu0
      %1430 = vmatprep.mubr.bf16.mxu0 0
      %1431 = vmatmul.mubr.bf16.gmra.mrb[0].mxu0 %v1032
      %v1432 = vpop.f32.mrb[0].mxu0
      %v1433 = vadd.f32 0.0, %v1432
      %v1434 = vpop.f32.mrb[0].mxu0
      %v1435 = vpop.f32.mrb[0].mxu0
      %v1436 = vadd.f32 0.0, %v1435
      %v1437 = vpop.f32.mrb[0].mxu0
      %1438 = vmatprep.mubr.bf16.mxu0 0
      %1439 = vmatmul.mubr.bf16.gmra.mrb[0].mxu0 %v1035
      %v1440 = vpop.f32.mrb[0].mxu0
      %v1441 = vadd.f32 0.0, %v1440
      %v1442 = vpop.f32.mrb[0].mxu0
      %v1443 = vpop.f32.mrb[0].mxu0
      %v1444 = vadd.f32 0.0, %v1443
      %v1445 = vpop.f32.mrb[0].mxu0
      %1446 = vmatprep.mubr.bf16.mxu0 0
      %1447 = vmatmul.mubr.bf16.gmra.mrb[0].mxu0 %v1038
      %v1448 = vpop.f32.mrb[0].mxu0
      %v1449 = vadd.f32 0.0, %v1448
      %v1450 = vpop.f32.mrb[0].mxu0
      %v1451 = vpop.f32.mrb[0].mxu0
      %v1452 = vadd.f32 0.0, %v1451
      %v1453 = vpop.f32.mrb[0].mxu0
      %1454 = vmatprep.mubr.bf16.mxu0 0
      %1455 = vmatmul.mubr.bf16.gmra.mrb[0].mxu0 %v1041
      %v1456 = vpop.f32.mrb[0].mxu0
      %v1457 = vadd.f32 0.0, %v1456
      %v1458 = vpop.f32.mrb[0].mxu0
      %v1459 = vpop.f32.mrb[0].mxu0
      %v1460 = vadd.f32 0.0, %v1459
      %v1461 = vpop.f32.mrb[0].mxu0
      %1462 = vmatprep.mubr.bf16.mxu0 0
      %1463 = vmatmul.mubr.bf16.gmra.mrb[0].mxu0 %v1044
      %v1464 = vpop.f32.mrb[0].mxu0
      %v1465 = vadd.f32 0.0, %v1464
      %v1466 = vpop.f32.mrb[0].mxu0
      %v1467 = vpop.f32.mrb[0].mxu0
      %v1468 = vadd.f32 0.0, %v1467
      %v1469 = vpop.f32.mrb[0].mxu0
      %1470 = vmatprep.mubr.bf16.mxu0 0
      %1471 = vmatmul.mubr.bf16.gmra.mrb[0].mxu0 %v1047
      %v1472 = vpop.f32.mrb[0].mxu0
      %v1473 = vadd.f32 0.0, %v1472
      %v1474 = vpop.f32.mrb[0].mxu0
      %v1475 = vpop.f32.mrb[0].mxu0
      %v1476 = vadd.f32 0.0, %v1475
      %v1477 = vpop.f32.mrb[0].mxu0
      %1478 = vmatprep.mubr.bf16.mxu0 0
      %1479 = vmatmul.mubr.bf16.gmra.mrb[0].mxu0 %v1050
      %v1480 = vpop.f32.mrb[0].mxu0
      %v1481 = vadd.f32 0.0, %v1480
      %v1482 = vpop.f32.mrb[0].mxu0
      %v1483 = vpop.f32.mrb[0].mxu0
      %v1484 = vadd.f32 0.0, %v1483
      %v1485 = vpop.f32.mrb[0].mxu0
      %1486 = vmatprep.mubr.bf16.mxu0 0
      %1487 = vmatmul.mubr.bf16.gmra.mrb[0].mxu0 %v1053
      %v1488 = vpop.f32.mrb[0].mxu0
      %v1489 = vadd.f32 0.0, %v1488
      %v1490 = vpop.f32.mrb[0].mxu0
      %v1491 = vpop.f32.mrb[0].mxu0
      %v1492 = vadd.f32 0.0, %v1491
      %v1493 = vpop.f32.mrb[0].mxu0
      %1494 = vmatprep.mubr.bf16.mxu0 0
      %1495 = vmatmul.mubr.bf16.gmra.mrb[0].mxu0 %v1056
      %v1496 = vpop.f32.mrb[0].mxu0
      %v1497 = vadd.f32 0.0, %v1496
      %v1498 = vpop.f32.mrb[0].mxu0
      %v1499 = vpop.f32.mrb[0].mxu0
      %v1500 = vadd.f32 0.0, %v1499
      %v1501 = vpop.f32.mrb[0].mxu0
      %1502 = vmatprep.mubr.bf16.mxu0 0
      %1503 = vmatmul.mubr.bf16.gmra.mrb[0].mxu0 %v1059
      %v1504 = vpop.f32.mrb[0].mxu0
      %v1505 = vadd.f32 0.0, %v1504
      %v1506 = vpop.f32.mrb[0].mxu0
      %v1507 = vpop.f32.mrb[0].mxu0
      %v1508 = vadd.f32 0.0, %v1507
      %v1509 = vpop.f32.mrb[0].mxu0
      %1510 = vmatprep.mubr.bf16.mxu0 0
      %1511 = vmatmul.mubr.bf16.gmra.mrb[0].mxu0 %v1062
      %v1512 = vpop.f32.mrb[0].mxu0
      %v1513 = vadd.f32 0.0, %v1512
      %v1514 = vpop.f32.mrb[0].mxu0
      %v1515 = vpop.f32.mrb[0].mxu0
      %v1516 = vadd.f32 0.0, %v1515
      %v1517 = vpop.f32.mrb[0].mxu0
      %1518 = vmatprep.mubr.bf16.mxu0 0
      %1519 = vmatmul.mubr.bf16.gmra.mrb[0].mxu0 %v1065
      %v1520 = vpop.f32.mrb[0].mxu0
      %v1521 = vadd.f32 0.0, %v1520
      %v1522 = vpop.f32.mrb[0].mxu0
      %v1523 = vpop.f32.mrb[0].mxu0
      %v1524 = vadd.f32 0.0, %v1523
      %v1525 = vpop.f32.mrb[0].mxu0
      %1526 = vmatprep.mubr.bf16.mxu0 0
      %1527 = vmatmul.mubr.bf16.gmra.mrb[0].mxu0 %v1068
      %v1528 = vpop.f32.mrb[0].mxu0
      %v1529 = vadd.f32 0.0, %v1528
      %v1530 = vpop.f32.mrb[0].mxu0
      %v1531 = vpop.f32.mrb[0].mxu0
      %v1532 = vadd.f32 0.0, %v1531
      %v1533 = vpop.f32.mrb[0].mxu0
      %1534 = vmatprep.mubr.bf16.mxu0 0
      %1535 = vmatmul.mubr.bf16.gmra.mrb[0].mxu0 %v1071
      %v1536 = vpop.f32.mrb[0].mxu0
      %v1537 = vadd.f32 0.0, %v1536
      %v1538 = vpop.f32.mrb[0].mxu0
      %v1539 = vpop.f32.mrb[0].mxu0
      %v1540 = vadd.f32 0.0, %v1539
      %v1541 = vpop.f32.mrb[0].mxu0
      %1542 = vmatprep.mubr.bf16.mxu0 0
      %1543 = vmatmul.mubr.bf16.gmra.mrb[0].mxu0 %v1074
      %v1544 = vpop.f32.mrb[0].mxu0
      %v1545 = vadd.f32 0.0, %v1544
      %v1546 = vpop.f32.mrb[0].mxu0
      %v1547 = vpop.f32.mrb[0].mxu0
      %v1548 = vadd.f32 0.0, %v1547
      %v1549 = vpop.f32.mrb[0].mxu0
      %1550 = vmatprep.mubr.bf16.mxu0 0
      %1551 = vmatmul.mubr.bf16.gmra.mrb[0].mxu0 %v1077
      %v1552 = vpop.f32.mrb[0].mxu0
      %v1553 = vadd.f32 0.0, %v1552
      %v1554 = vpop.f32.mrb[0].mxu0
      %v1555 = vpop.f32.mrb[0].mxu0
      %v1556 = vadd.f32 0.0, %v1555
      %v1557 = vpop.f32.mrb[0].mxu0
      %1558 = vmatprep.mubr.bf16.mxu0 0
      %1559 = vmatmul.mubr.bf16.gmra.mrb[0].mxu0 %v1080
      %v1560 = vpop.f32.mrb[0].mxu0
      %v1561 = vadd.f32 0.0, %v1560
      %v1562 = vpop.f32.mrb[0].mxu0
      %v1563 = vpop.f32.mrb[0].mxu0
      %v1564 = vadd.f32 0.0, %v1563
      %v1565 = vpop.f32.mrb[0].mxu0
      %1566 = vmatprep.mubr.bf16.mxu0 0
      %1567 = vmatmul.mubr.bf16.gmra.mrb[0].mxu0 %v1083
      %v1568 = vpop.f32.mrb[0].mxu0
      %v1569 = vadd.f32 0.0, %v1568
      %v1570 = vpop.f32.mrb[0].mxu0
      %v1571 = vpop.f32.mrb[0].mxu0
      %v1572 = vadd.f32 0.0, %v1571
      %v1573 = vpop.f32.mrb[0].mxu0
      %1574 = vmatprep.mubr.bf16.mxu0 0
      %1575 = vmatmul.mubr.bf16.gmra.mrb[0].mxu0 %v1086
      %v1576 = vpop.f32.mrb[0].mxu0
      %v1577 = vadd.f32 0.0, %v1576
      %v1578 = vpop.f32.mrb[0].mxu0
      %v1579 = vpop.f32.mrb[0].mxu0
      %v1580 = vadd.f32 0.0, %v1579
      %v1581 = vpop.f32.mrb[0].mxu0
      %1582 = vmatprep.mubr.bf16.mxu0 0
      %1583 = vmatmul.mubr.bf16.gmra.mrb[0].mxu0 %v1089
      %v1584 = vpop.f32.mrb[0].mxu0
      %v1585 = vadd.f32 0.0, %v1584
      %v1586 = vpop.f32.mrb[0].mxu0
      %v1587 = vpop.f32.mrb[0].mxu0
      %v1588 = vadd.f32 0.0, %v1587
      %v1589 = vpop.f32.mrb[0].mxu0
      %1590 = vmatprep.mubr.bf16.mxu0 0
      %1591 = vmatmul.mubr.bf16.gmra.mrb[0].mxu0 %v1092
      %v1592 = vpop.f32.mrb[0].mxu0
      %v1593 = vadd.f32 0.0, %v1592
      %v1594 = vpop.f32.mrb[0].mxu0
      %v1595 = vpop.f32.mrb[0].mxu0
      %v1596 = vadd.f32 0.0, %v1595
      %v1597 = vpop.f32.mrb[0].mxu0
      %1598 = vmatprep.mubr.bf16.mxu0 0
      %1599 = vmatmul.mubr.bf16.gmra.mrb[0].mxu0 %v1095
      %v1600 = vpop.f32.mrb[0].mxu0
      %v1601 = vadd.f32 0.0, %v1600
      %v1602 = vpop.f32.mrb[0].mxu0
      %v1603 = vpop.f32.mrb[0].mxu0
      %v1604 = vadd.f32 0.0, %v1603
      %v1605 = vpop.f32.mrb[0].mxu0
      %1606 = vmatprep.mubr.bf16.mxu0 0
      %1607 = vmatmul.mubr.bf16.gmra.mrb[0].mxu0 %v1098
      %v1608 = vpop.f32.mrb[0].mxu0
      %v1609 = vadd.f32 0.0, %v1608
      %v1610 = vpop.f32.mrb[0].mxu0
      %v1611 = vpop.f32.mrb[0].mxu0
      %v1612 = vadd.f32 0.0, %v1611
      %v1613 = vpop.f32.mrb[0].mxu0
      %1614 = vmatprep.mubr.bf16.mxu0 0
      %1615 = vmatmul.mubr.bf16.gmra.mrb[0].mxu0 %v1101
      %v1616 = vpop.f32.mrb[0].mxu0
      %v1617 = vadd.f32 0.0, %v1616
      %v1618 = vpop.f32.mrb[0].mxu0
      %v1619 = vpop.f32.mrb[0].mxu0
      %v1620 = vadd.f32 0.0, %v1619
      %v1621 = vpop.f32.mrb[0].mxu0
      %1622 = vmatprep.mubr.bf16.mxu0 0
      %1623 = vmatmul.mubr.bf16.gmra.mrb[0].mxu0 %v1104
      %v1624 = vpop.f32.mrb[0].mxu0
      %v1625 = vadd.f32 0.0, %v1624
      %v1626 = vpop.f32.mrb[0].mxu0
      %v1627 = vpop.f32.mrb[0].mxu0
      %v1628 = vadd.f32 0.0, %v1627
      %v1629 = vpop.f32.mrb[0].mxu0
      %1630 = vmatprep.mubr.bf16.mxu0 0
      %1631 = vmatmul.mubr.bf16.gmra.mrb[0].mxu0 %v1107
      %v1632 = vpop.f32.mrb[0].mxu0
      %v1633 = vadd.f32 0.0, %v1632
      %v1634 = vpop.f32.mrb[0].mxu0
      %v1635 = vpop.f32.mrb[0].mxu0
      %v1636 = vadd.f32 0.0, %v1635
      %v1637 = vpop.f32.mrb[0].mxu0
      %1638 = vmatprep.mubr.bf16.mxu0 0
      %1639 = vmatmul.mubr.bf16.gmra.mrb[0].mxu0 %v1110
      %v1640 = vpop.f32.mrb[0].mxu0
      %v1641 = vadd.f32 0.0, %v1640
      %v1642 = vpop.f32.mrb[0].mxu0
      %v1643 = vpop.f32.mrb[0].mxu0
      %v1644 = vadd.f32 0.0, %v1643
      %v1645 = vpop.f32.mrb[0].mxu0
      %1646 = vmatprep.mubr.bf16.mxu0 0
      %1647 = vmatmul.mubr.bf16.gmra.mrb[0].mxu0 %v1113
      %v1648 = vpop.f32.mrb[0].mxu0
      %v1649 = vadd.f32 0.0, %v1648
      %v1650 = vpop.f32.mrb[0].mxu0
      %v1651 = vpop.f32.mrb[0].mxu0
      %v1652 = vadd.f32 0.0, %v1651
      %v1653 = vpop.f32.mrb[0].mxu0
      %1654 = vmatprep.mubr.bf16.mxu0 0
      %1655 = vmatmul.mubr.bf16.gmra.mrb[0].mxu0 %v1116
      %v1656 = vpop.f32.mrb[0].mxu0
      %v1657 = vadd.f32 0.0, %v1656
      %v1658 = vpop.f32.mrb[0].mxu0
      %v1659 = vpop.f32.mrb[0].mxu0
      %v1660 = vadd.f32 0.0, %v1659
      %v1661 = vpop.f32.mrb[0].mxu0
      %1662 = vdwg.mxu0
      %v1663 = vadd.f32 %v325, %v1153
      %v1664 = vadd.f32 %v326, %v1156
      %v1665 = vadd.f32 %v327, %v1161
      %v1666 = vadd.f32 %v328, %v1164
      %v1667 = vadd.f32 %v329, %v1169
      %v1668 = vadd.f32 %v330, %v1172
      %v1669 = vadd.f32 %v331, %v1177
      %v1670 = vadd.f32 %v332, %v1180
      %v1671 = vadd.f32 %v333, %v1185
      %v1672 = vadd.f32 %v334, %v1188
      %v1673 = vadd.f32 %v335, %v1193
      %v1674 = vadd.f32 %v336, %v1196
      %v1675 = vadd.f32 %v337, %v1201
      %v1676 = vadd.f32 %v338, %v1204
      %v1677 = vadd.f32 %v339, %v1209
      %v1678 = vadd.f32 %v340, %v1212
      %v1679 = vadd.f32 %v341, %v1217
      %v1680 = vadd.f32 %v342, %v1220
      %v1681 = vadd.f32 %v343, %v1225
      %v1682 = vadd.f32 %v344, %v1228
      %v1683 = vadd.f32 %v345, %v1233
      %v1684 = vadd.f32 %v346, %v1236
      %v1685 = vadd.f32 %v347, %v1241
      %v1686 = vadd.f32 %v348, %v1244
      %v1687 = vadd.f32 %v349, %v1249
      %v1688 = vadd.f32 %v350, %v1252
      %v1689 = vadd.f32 %v351, %v1257
      %v1690 = vadd.f32 %v352, %v1260
      %v1691 = vadd.f32 %v353, %v1265
      %v1692 = vadd.f32 %v354, %v1268
      %v1693 = vadd.f32 %v355, %v1273
      %v1694 = vadd.f32 %v356, %v1276
      %v1695 = vadd.f32 %v357, %v1281
      %v1696 = vadd.f32 %v358, %v1284
      %v1697 = vadd.f32 %v359, %v1289
      %v1698 = vadd.f32 %v360, %v1292
      %v1699 = vadd.f32 %v361, %v1297
      %v1700 = vadd.f32 %v362, %v1300
      %v1701 = vadd.f32 %v363, %v1305
      %v1702 = vadd.f32 %v364, %v1308
      %v1703 = vadd.f32 %v365, %v1313
      %v1704 = vadd.f32 %v366, %v1316
      %v1705 = vadd.f32 %v367, %v1321
      %v1706 = vadd.f32 %v368, %v1324
      %v1707 = vadd.f32 %v369, %v1329
      %v1708 = vadd.f32 %v370, %v1332
      %v1709 = vadd.f32 %v371, %v1337
      %v1710 = vadd.f32 %v372, %v1340
      %v1711 = vadd.f32 %v373, %v1345
      %v1712 = vadd.f32 %v374, %v1348
      %v1713 = vadd.f32 %v375, %v1353
      %v1714 = vadd.f32 %v376, %v1356
      %v1715 = vadd.f32 %v377, %v1361
      %v1716 = vadd.f32 %v378, %v1364
      %v1717 = vadd.f32 %v379, %v1369
      %v1718 = vadd.f32 %v380, %v1372
      %v1719 = vadd.f32 %v381, %v1377
      %v1720 = vadd.f32 %v382, %v1380
      %v1721 = vadd.f32 %v383, %v1385
      %v1722 = vadd.f32 %v384, %v1388
      %v1723 = vadd.f32 %v385, %v1393
      %v1724 = vadd.f32 %v386, %v1396
      %v1725 = vadd.f32 %v387, %v1401
      %v1726 = vadd.f32 %v388, %v1404
      %v1727 = vadd.f32 %v389, %v1409
      %v1728 = vadd.f32 %v390, %v1412
      %v1729 = vadd.f32 %v391, %v1417
      %v1730 = vadd.f32 %v392, %v1420
      %v1731 = vadd.f32 %v393, %v1425
      %v1732 = vadd.f32 %v394, %v1428
      %v1733 = vadd.f32 %v395, %v1433
      %v1734 = vadd.f32 %v396, %v1436
      %v1735 = vadd.f32 %v397, %v1441
      %v1736 = vadd.f32 %v398, %v1444
      %v1737 = vadd.f32 %v399, %v1449
      %v1738 = vadd.f32 %v400, %v1452
      %v1739 = vadd.f32 %v401, %v1457
      %v1740 = vadd.f32 %v402, %v1460
      %v1741 = vadd.f32 %v403, %v1465
      %v1742 = vadd.f32 %v404, %v1468
      %v1743 = vadd.f32 %v405, %v1473
      %v1744 = vadd.f32 %v406, %v1476
      %v1745 = vadd.f32 %v407, %v1481
      %v1746 = vadd.f32 %v408, %v1484
      %v1747 = vadd.f32 %v409, %v1489
      %v1748 = vadd.f32 %v410, %v1492
      %v1749 = vadd.f32 %v411, %v1497
      %v1750 = vadd.f32 %v412, %v1500
      %v1751 = vadd.f32 %v413, %v1505
      %v1752 = vadd.f32 %v414, %v1508
      %v1753 = vadd.f32 %v415, %v1513
      %v1754 = vadd.f32 %v416, %v1516
      %v1755 = vadd.f32 %v417, %v1521
      %v1756 = vadd.f32 %v418, %v1524
      %v1757 = vadd.f32 %v419, %v1529
      %v1758 = vadd.f32 %v420, %v1532
      %v1759 = vadd.f32 %v421, %v1537
      %v1760 = vadd.f32 %v422, %v1540
      %v1761 = vadd.f32 %v423, %v1545
      %v1762 = vadd.f32 %v424, %v1548
      %v1763 = vadd.f32 %v425, %v1553
      %v1764 = vadd.f32 %v426, %v1556
      %v1765 = vadd.f32 %v427, %v1561
      %v1766 = vadd.f32 %v428, %v1564
      %v1767 = vadd.f32 %v429, %v1569
      %v1768 = vadd.f32 %v430, %v1572
      %v1769 = vadd.f32 %v431, %v1577
      %v1770 = vadd.f32 %v432, %v1580
      %v1771 = vadd.f32 %v433, %v1585
      %v1772 = vadd.f32 %v434, %v1588
      %v1773 = vadd.f32 %v435, %v1593
      %v1774 = vadd.f32 %v436, %v1596
      %v1775 = vadd.f32 %v437, %v1601
      %v1776 = vadd.f32 %v438, %v1604
      %v1777 = vadd.f32 %v439, %v1609
      %v1778 = vadd.f32 %v440, %v1612
      %v1779 = vadd.f32 %v441, %v1617
      %v1780 = vadd.f32 %v442, %v1620
      %v1781 = vadd.f32 %v443, %v1625
      %v1782 = vadd.f32 %v444, %v1628
      %v1783 = vadd.f32 %v445, %v1633
      %v1784 = vadd.f32 %v446, %v1636
      %v1785 = vadd.f32 %v447, %v1641
      %v1786 = vadd.f32 %v448, %v1644
      %v1787 = vadd.f32 %v449, %v1649
      %v1788 = vadd.f32 %v450, %v1652
      %v1789 = vadd.f32 %v451, %v1657
      %v1790 = vadd.f32 %v452, %v1660
      %1791 = vst [vmem:[#allocation2] sm:$0xff] %v1663
      %1792 = vst [vmem:[#allocation2 + $0x8] sm:$0xff] %v1664
      %1793 = vst [vmem:[#allocation2 + $0x10] sm:$0xff] %v1665
      %1794 = vst [vmem:[#allocation2 + $0x18] sm:$0xff] %v1666
      %1795 = vst [vmem:[#allocation2 + $0x20] sm:$0xff] %v1667
      %1796 = vst [vmem:[#allocation2 + $0x28] sm:$0xff] %v1668
      %1797 = vst [vmem:[#allocation2 + $0x30] sm:$0xff] %v1669
      %1798 = vst [vmem:[#allocation2 + $0x38] sm:$0xff] %v1670
      %1799 = vst [vmem:[#allocation2 + $0x40] sm:$0xff] %v1671
      %1800 = vst [vmem:[#allocation2 + $0x48] sm:$0xff] %v1672
      %1801 = vst [vmem:[#allocation2 + $0x50] sm:$0xff] %v1673
      %1802 = vst [vmem:[#allocation2 + $0x58] sm:$0xff] %v1674
      %1803 = vst [vmem:[#allocation2 + $0x60] sm:$0xff] %v1675
      %1804 = vst [vmem:[#allocation2 + $0x68] sm:$0xff] %v1676
      %1805 = vst [vmem:[#allocation2 + $0x70] sm:$0xff] %v1677
      %1806 = vst [vmem:[#allocation2 + $0x78] sm:$0xff] %v1678
      %1807 = vst [vmem:[#allocation2 + $0x80] sm:$0xff] %v1679
      %1808 = vst [vmem:[#allocation2 + $0x88] sm:$0xff] %v1680
      %1809 = vst [vmem:[#allocation2 + $0x90] sm:$0xff] %v1681
      %1810 = vst [vmem:[#allocation2 + $0x98] sm:$0xff] %v1682
      %1811 = vst [vmem:[#allocation2 + $0xa0] sm:$0xff] %v1683
      %1812 = vst [vmem:[#allocation2 + $0xa8] sm:$0xff] %v1684
      %1813 = vst [vmem:[#allocation2 + $0xb0] sm:$0xff] %v1685
      %1814 = vst [vmem:[#allocation2 + $0xb8] sm:$0xff] %v1686
      %1815 = vst [vmem:[#allocation2 + $0xc0] sm:$0xff] %v1687
      %1816 = vst [vmem:[#allocation2 + $0xc8] sm:$0xff] %v1688
      %1817 = vst [vmem:[#allocation2 + $0xd0] sm:$0xff] %v1689
      %1818 = vst [vmem:[#allocation2 + $0xd8] sm:$0xff] %v1690
      %1819 = vst [vmem:[#allocation2 + $0xe0] sm:$0xff] %v1691
      %1820 = vst [vmem:[#allocation2 + $0xe8] sm:$0xff] %v1692
      %1821 = vst [vmem:[#allocation2 + $0xf0] sm:$0xff] %v1693
      %1822 = vst [vmem:[#allocation2 + $0xf8] sm:$0xff] %v1694
      %1823 = vst [vmem:[#allocation2 + $0x100] sm:$0xff] %v1695
      %1824 = vst [vmem:[#allocation2 + $0x108] sm:$0xff] %v1696
      %1825 = vst [vmem:[#allocation2 + $0x110] sm:$0xff] %v1697
      %1826 = vst [vmem:[#allocation2 + $0x118] sm:$0xff] %v1698
      %1827 = vst [vmem:[#allocation2 + $0x120] sm:$0xff] %v1699
      %1828 = vst [vmem:[#allocation2 + $0x128] sm:$0xff] %v1700
      %1829 = vst [vmem:[#allocation2 + $0x130] sm:$0xff] %v1701
      %1830 = vst [vmem:[#allocation2 + $0x138] sm:$0xff] %v1702
      %1831 = vst [vmem:[#allocation2 + $0x140] sm:$0xff] %v1703
      %1832 = vst [vmem:[#allocation2 + $0x148] sm:$0xff] %v1704
      %1833 = vst [vmem:[#allocation2 + $0x150] sm:$0xff] %v1705
      %1834 = vst [vmem:[#allocation2 + $0x158] sm:$0xff] %v1706
      %1835 = vst [vmem:[#allocation2 + $0x160] sm:$0xff] %v1707
      %1836 = vst [vmem:[#allocation2 + $0x168] sm:$0xff] %v1708
      %1837 = vst [vmem:[#allocation2 + $0x170] sm:$0xff] %v1709
      %1838 = vst [vmem:[#allocation2 + $0x178] sm:$0xff] %v1710
      %1839 = vst [vmem:[#allocation2 + $0x180] sm:$0xff] %v1711
      %1840 = vst [vmem:[#allocation2 + $0x188] sm:$0xff] %v1712
      %1841 = vst [vmem:[#allocation2 + $0x190] sm:$0xff] %v1713
      %1842 = vst [vmem:[#allocation2 + $0x198] sm:$0xff] %v1714
      %1843 = vst [vmem:[#allocation2 + $0x1a0] sm:$0xff] %v1715
      %1844 = vst [vmem:[#allocation2 + $0x1a8] sm:$0xff] %v1716
      %1845 = vst [vmem:[#allocation2 + $0x1b0] sm:$0xff] %v1717
      %1846 = vst [vmem:[#allocation2 + $0x1b8] sm:$0xff] %v1718
      %1847 = vst [vmem:[#allocation2 + $0x1c0] sm:$0xff] %v1719
      %1848 = vst [vmem:[#allocation2 + $0x1c8] sm:$0xff] %v1720
      %1849 = vst [vmem:[#allocation2 + $0x1d0] sm:$0xff] %v1721
      %1850 = vst [vmem:[#allocation2 + $0x1d8] sm:$0xff] %v1722
      %1851 = vst [vmem:[#allocation2 + $0x1e0] sm:$0xff] %v1723
      %1852 = vst [vmem:[#allocation2 + $0x1e8] sm:$0xff] %v1724
      %1853 = vst [vmem:[#allocation2 + $0x1f0] sm:$0xff] %v1725
      %1854 = vst [vmem:[#allocation2 + $0x1f8] sm:$0xff] %v1726
      %1855 = vst [vmem:[#allocation2 + $0x200] sm:$0xff] %v1727
      %1856 = vst [vmem:[#allocation2 + $0x208] sm:$0xff] %v1728
      %1857 = vst [vmem:[#allocation2 + $0x210] sm:$0xff] %v1729
      %1858 = vst [vmem:[#allocation2 + $0x218] sm:$0xff] %v1730
      %1859 = vst [vmem:[#allocation2 + $0x220] sm:$0xff] %v1731
      %1860 = vst [vmem:[#allocation2 + $0x228] sm:$0xff] %v1732
      %1861 = vst [vmem:[#allocation2 + $0x230] sm:$0xff] %v1733
      %1862 = vst [vmem:[#allocation2 + $0x238] sm:$0xff] %v1734
      %1863 = vst [vmem:[#allocation2 + $0x240] sm:$0xff] %v1735
      %1864 = vst [vmem:[#allocation2 + $0x248] sm:$0xff] %v1736
      %1865 = vst [vmem:[#allocation2 + $0x250] sm:$0xff] %v1737
      %1866 = vst [vmem:[#allocation2 + $0x258] sm:$0xff] %v1738
      %1867 = vst [vmem:[#allocation2 + $0x260] sm:$0xff] %v1739
      %1868 = vst [vmem:[#allocation2 + $0x268] sm:$0xff] %v1740
      %1869 = vst [vmem:[#allocation2 + $0x270] sm:$0xff] %v1741
      %1870 = vst [vmem:[#allocation2 + $0x278] sm:$0xff] %v1742
      %1871 = vst [vmem:[#allocation2 + $0x280] sm:$0xff] %v1743
      %1872 = vst [vmem:[#allocation2 + $0x288] sm:$0xff] %v1744
      %1873 = vst [vmem:[#allocation2 + $0x290] sm:$0xff] %v1745
      %1874 = vst [vmem:[#allocation2 + $0x298] sm:$0xff] %v1746
      %1875 = vst [vmem:[#allocation2 + $0x2a0] sm:$0xff] %v1747
      %1876 = vst [vmem:[#allocation2 + $0x2a8] sm:$0xff] %v1748
      %1877 = vst [vmem:[#allocation2 + $0x2b0] sm:$0xff] %v1749
      %1878 = vst [vmem:[#allocation2 + $0x2b8] sm:$0xff] %v1750
      %1879 = vst [vmem:[#allocation2 + $0x2c0] sm:$0xff] %v1751
      %1880 = vst [vmem:[#allocation2 + $0x2c8] sm:$0xff] %v1752
      %1881 = vst [vmem:[#allocation2 + $0x2d0] sm:$0xff] %v1753
      %1882 = vst [vmem:[#allocation2 + $0x2d8] sm:$0xff] %v1754
      %1883 = vst [vmem:[#allocation2 + $0x2e0] sm:$0xff] %v1755
      %1884 = vst [vmem:[#allocation2 + $0x2e8] sm:$0xff] %v1756
      %1885 = vst [vmem:[#allocation2 + $0x2f0] sm:$0xff] %v1757
      %1886 = vst [vmem:[#allocation2 + $0x2f8] sm:$0xff] %v1758
      %1887 = vst [vmem:[#allocation2 + $0x300] sm:$0xff] %v1759
      %1888 = vst [vmem:[#allocation2 + $0x308] sm:$0xff] %v1760
      %1889 = vst [vmem:[#allocation2 + $0x310] sm:$0xff] %v1761
      %1890 = vst [vmem:[#allocation2 + $0x318] sm:$0xff] %v1762
      %1891 = vst [vmem:[#allocation2 + $0x320] sm:$0xff] %v1763
      %1892 = vst [vmem:[#allocation2 + $0x328] sm:$0xff] %v1764
      %1893 = vst [vmem:[#allocation2 + $0x330] sm:$0xff] %v1765
      %1894 = vst [vmem:[#allocation2 + $0x338] sm:$0xff] %v1766
      %1895 = vst [vmem:[#allocation2 + $0x340] sm:$0xff] %v1767
      %1896 = vst [vmem:[#allocation2 + $0x348] sm:$0xff] %v1768
      %1897 = vst [vmem:[#allocation2 + $0x350] sm:$0xff] %v1769
      %1898 = vst [vmem:[#allocation2 + $0x358] sm:$0xff] %v1770
      %1899 = vst [vmem:[#allocation2 + $0x360] sm:$0xff] %v1771
      %1900 = vst [vmem:[#allocation2 + $0x368] sm:$0xff] %v1772
      %1901 = vst [vmem:[#allocation2 + $0x370] sm:$0xff] %v1773
      %1902 = vst [vmem:[#allocation2 + $0x378] sm:$0xff] %v1774
      %1903 = vst [vmem:[#allocation2 + $0x380] sm:$0xff] %v1775
      %1904 = vst [vmem:[#allocation2 + $0x388] sm:$0xff] %v1776
      %1905 = vst [vmem:[#allocation2 + $0x390] sm:$0xff] %v1777
      %1906 = vst [vmem:[#allocation2 + $0x398] sm:$0xff] %v1778
      %1907 = vst [vmem:[#allocation2 + $0x3a0] sm:$0xff] %v1779
      %1908 = vst [vmem:[#allocation2 + $0x3a8] sm:$0xff] %v1780
      %1909 = vst [vmem:[#allocation2 + $0x3b0] sm:$0xff] %v1781
      %1910 = vst [vmem:[#allocation2 + $0x3b8] sm:$0xff] %v1782
      %1911 = vst [vmem:[#allocation2 + $0x3c0] sm:$0xff] %v1783
      %1912 = vst [vmem:[#allocation2 + $0x3c8] sm:$0xff] %v1784
      %1913 = vst [vmem:[#allocation2 + $0x3d0] sm:$0xff] %v1785
      %1914 = vst [vmem:[#allocation2 + $0x3d8] sm:$0xff] %v1786
      %1915 = vst [vmem:[#allocation2 + $0x3e0] sm:$0xff] %v1787
      %1916 = vst [vmem:[#allocation2 + $0x3e8] sm:$0xff] %v1788
      %1917 = vst [vmem:[#allocation2 + $0x3f0] sm:$0xff] %v1789
      %1918 = vst [vmem:[#allocation2 + $0x3f8] sm:$0xff] %v1790
      // Predicated region
      $region33: #{discriminator_forward.7} parent=27 // pred_check
        %p1919 = pneg %p193
      $region34: #{discriminator_forward.7} parent=27 // pred_check_branch
        %1921 = sbr.rel (%p1919) target = $region36
      $region35: #{discriminator_forward.7} parent=27 // pred_region
        %v1922 = vld [vmem:[#allocation2] sm:$0xff]
        %v1923 = vld [vmem:[#allocation2 + $0x8] sm:$0xff]
        %v1924 = vld [vmem:[#allocation2 + $0x10] sm:$0xff]
        %v1925 = vld [vmem:[#allocation2 + $0x18] sm:$0xff]
        %v1926 = vld [vmem:[#allocation2 + $0x20] sm:$0xff]
        %v1927 = vld [vmem:[#allocation2 + $0x28] sm:$0xff]
        %v1928 = vld [vmem:[#allocation2 + $0x30] sm:$0xff]
        %v1929 = vld [vmem:[#allocation2 + $0x38] sm:$0xff]
        %v1930 = vld [vmem:[#allocation2 + $0x40] sm:$0xff]
        %v1931 = vld [vmem:[#allocation2 + $0x48] sm:$0xff]
        %v1932 = vld [vmem:[#allocation2 + $0x50] sm:$0xff]
        %v1933 = vld [vmem:[#allocation2 + $0x58] sm:$0xff]
        %v1934 = vld [vmem:[#allocation2 + $0x60] sm:$0xff]
        %v1935 = vld [vmem:[#allocation2 + $0x68] sm:$0xff]
        %v1936 = vld [vmem:[#allocation2 + $0x70] sm:$0xff]
        %v1937 = vld [vmem:[#allocation2 + $0x78] sm:$0xff]
        %v1938 = vld [vmem:[#allocation2 + $0x80] sm:$0xff]
        %v1939 = vld [vmem:[#allocation2 + $0x88] sm:$0xff]
        %v1940 = vld [vmem:[#allocation2 + $0x90] sm:$0xff]
        %v1941 = vld [vmem:[#allocation2 + $0x98] sm:$0xff]
        %v1942 = vld [vmem:[#allocation2 + $0xa0] sm:$0xff]
        %v1943 = vld [vmem:[#allocation2 + $0xa8] sm:$0xff]
        %v1944 = vld [vmem:[#allocation2 + $0xb0] sm:$0xff]
        %v1945 = vld [vmem:[#allocation2 + $0xb8] sm:$0xff]
        %v1946 = vld [vmem:[#allocation2 + $0xc0] sm:$0xff]
        %v1947 = vld [vmem:[#allocation2 + $0xc8] sm:$0xff]
        %v1948 = vld [vmem:[#allocation2 + $0xd0] sm:$0xff]
        %v1949 = vld [vmem:[#allocation2 + $0xd8] sm:$0xff]
        %v1950 = vld [vmem:[#allocation2 + $0xe0] sm:$0xff]
        %v1951 = vld [vmem:[#allocation2 + $0xe8] sm:$0xff]
        %v1952 = vld [vmem:[#allocation2 + $0xf0] sm:$0xff]
        %v1953 = vld [vmem:[#allocation2 + $0xf8] sm:$0xff]
        %v1954 = vld [vmem:[#allocation2 + $0x100] sm:$0xff]
        %v1955 = vld [vmem:[#allocation2 + $0x108] sm:$0xff]
        %v1956 = vld [vmem:[#allocation2 + $0x110] sm:$0xff]
        %v1957 = vld [vmem:[#allocation2 + $0x118] sm:$0xff]
        %v1958 = vld [vmem:[#allocation2 + $0x120] sm:$0xff]
        %v1959 = vld [vmem:[#allocation2 + $0x128] sm:$0xff]
        %v1960 = vld [vmem:[#allocation2 + $0x130] sm:$0xff]
        %v1961 = vld [vmem:[#allocation2 + $0x138] sm:$0xff]
        %v1962 = vld [vmem:[#allocation2 + $0x140] sm:$0xff]
        %v1963 = vld [vmem:[#allocation2 + $0x148] sm:$0xff]
        %v1964 = vld [vmem:[#allocation2 + $0x150] sm:$0xff]
        %v1965 = vld [vmem:[#allocation2 + $0x158] sm:$0xff]
        %v1966 = vld [vmem:[#allocation2 + $0x160] sm:$0xff]
        %v1967 = vld [vmem:[#allocation2 + $0x168] sm:$0xff]
        %v1968 = vld [vmem:[#allocation2 + $0x170] sm:$0xff]
        %v1969 = vld [vmem:[#allocation2 + $0x178] sm:$0xff]
        %v1970 = vld [vmem:[#allocation2 + $0x180] sm:$0xff]
        %v1971 = vld [vmem:[#allocation2 + $0x188] sm:$0xff]
        %v1972 = vld [vmem:[#allocation2 + $0x190] sm:$0xff]
        %v1973 = vld [vmem:[#allocation2 + $0x198] sm:$0xff]
        %v1974 = vld [vmem:[#allocation2 + $0x1a0] sm:$0xff]
        %v1975 = vld [vmem:[#allocation2 + $0x1a8] sm:$0xff]
        %v1976 = vld [vmem:[#allocation2 + $0x1b0] sm:$0xff]
        %v1977 = vld [vmem:[#allocation2 + $0x1b8] sm:$0xff]
        %v1978 = vld [vmem:[#allocation2 + $0x1c0] sm:$0xff]
        %v1979 = vld [vmem:[#allocation2 + $0x1c8] sm:$0xff]
        %v1980 = vld [vmem:[#allocation2 + $0x1d0] sm:$0xff]
        %v1981 = vld [vmem:[#allocation2 + $0x1d8] sm:$0xff]
        %v1982 = vld [vmem:[#allocation2 + $0x1e0] sm:$0xff]
        %v1983 = vld [vmem:[#allocation2 + $0x1e8] sm:$0xff]
        %v1984 = vld [vmem:[#allocation2 + $0x1f0] sm:$0xff]
        %v1985 = vld [vmem:[#allocation2 + $0x1f8] sm:$0xff]
        %v1986 = vld [vmem:[#allocation2 + $0x200] sm:$0xff]
        %v1987 = vld [vmem:[#allocation2 + $0x208] sm:$0xff]
        %v1988 = vld [vmem:[#allocation2 + $0x210] sm:$0xff]
        %v1989 = vld [vmem:[#allocation2 + $0x218] sm:$0xff]
        %v1990 = vld [vmem:[#allocation2 + $0x220] sm:$0xff]
        %v1991 = vld [vmem:[#allocation2 + $0x228] sm:$0xff]
        %v1992 = vld [vmem:[#allocation2 + $0x230] sm:$0xff]
        %v1993 = vld [vmem:[#allocation2 + $0x238] sm:$0xff]
        %v1994 = vld [vmem:[#allocation2 + $0x240] sm:$0xff]
        %v1995 = vld [vmem:[#allocation2 + $0x248] sm:$0xff]
        %v1996 = vld [vmem:[#allocation2 + $0x250] sm:$0xff]
        %v1997 = vld [vmem:[#allocation2 + $0x258] sm:$0xff]
        %v1998 = vld [vmem:[#allocation2 + $0x260] sm:$0xff]
        %v1999 = vld [vmem:[#allocation2 + $0x268] sm:$0xff]
        %v2000 = vld [vmem:[#allocation2 + $0x270] sm:$0xff]
        %v2001 = vld [vmem:[#allocation2 + $0x278] sm:$0xff]
        %v2002 = vld [vmem:[#allocation2 + $0x280] sm:$0xff]
        %v2003 = vld [vmem:[#allocation2 + $0x288] sm:$0xff]
        %v2004 = vld [vmem:[#allocation2 + $0x290] sm:$0xff]
        %v2005 = vld [vmem:[#allocation2 + $0x298] sm:$0xff]
        %v2006 = vld [vmem:[#allocation2 + $0x2a0] sm:$0xff]
        %v2007 = vld [vmem:[#allocation2 + $0x2a8] sm:$0xff]
        %v2008 = vld [vmem:[#allocation2 + $0x2b0] sm:$0xff]
        %v2009 = vld [vmem:[#allocation2 + $0x2b8] sm:$0xff]
        %v2010 = vld [vmem:[#allocation2 + $0x2c0] sm:$0xff]
        %v2011 = vld [vmem:[#allocation2 + $0x2c8] sm:$0xff]
        %v2012 = vld [vmem:[#allocation2 + $0x2d0] sm:$0xff]
        %v2013 = vld [vmem:[#allocation2 + $0x2d8] sm:$0xff]
        %v2014 = vld [vmem:[#allocation2 + $0x2e0] sm:$0xff]
        %v2015 = vld [vmem:[#allocation2 + $0x2e8] sm:$0xff]
        %v2016 = vld [vmem:[#allocation2 + $0x2f0] sm:$0xff]
        %v2017 = vld [vmem:[#allocation2 + $0x2f8] sm:$0xff]
        %v2018 = vld [vmem:[#allocation2 + $0x300] sm:$0xff]
        %v2019 = vld [vmem:[#allocation2 + $0x308] sm:$0xff]
        %v2020 = vld [vmem:[#allocation2 + $0x310] sm:$0xff]
        %v2021 = vld [vmem:[#allocation2 + $0x318] sm:$0xff]
        %v2022 = vld [vmem:[#allocation2 + $0x320] sm:$0xff]
        %v2023 = vld [vmem:[#allocation2 + $0x328] sm:$0xff]
        %v2024 = vld [vmem:[#allocation2 + $0x330] sm:$0xff]
        %v2025 = vld [vmem:[#allocation2 + $0x338] sm:$0xff]
        %v2026 = vld [vmem:[#allocation2 + $0x340] sm:$0xff]
        %v2027 = vld [vmem:[#allocation2 + $0x348] sm:$0xff]
        %v2028 = vld [vmem:[#allocation2 + $0x350] sm:$0xff]
        %v2029 = vld [vmem:[#allocation2 + $0x358] sm:$0xff]
        %v2030 = vld [vmem:[#allocation2 + $0x360] sm:$0xff]
        %v2031 = vld [vmem:[#allocation2 + $0x368] sm:$0xff]
        %v2032 = vld [vmem:[#allocation2 + $0x370] sm:$0xff]
        %v2033 = vld [vmem:[#allocation2 + $0x378] sm:$0xff]
        %v2034 = vld [vmem:[#allocation2 + $0x380] sm:$0xff]
        %v2035 = vld [vmem:[#allocation2 + $0x388] sm:$0xff]
        %v2036 = vld [vmem:[#allocation2 + $0x390] sm:$0xff]
        %v2037 = vld [vmem:[#allocation2 + $0x398] sm:$0xff]
        %v2038 = vld [vmem:[#allocation2 + $0x3a0] sm:$0xff]
        %v2039 = vld [vmem:[#allocation2 + $0x3a8] sm:$0xff]
        %v2040 = vld [vmem:[#allocation2 + $0x3b0] sm:$0xff]
        %v2041 = vld [vmem:[#allocation2 + $0x3b8] sm:$0xff]
        %v2042 = vld [vmem:[#allocation2 + $0x3c0] sm:$0xff]
        %v2043 = vld [vmem:[#allocation2 + $0x3c8] sm:$0xff]
        %v2044 = vld [vmem:[#allocation2 + $0x3d0] sm:$0xff]
        %v2045 = vld [vmem:[#allocation2 + $0x3d8] sm:$0xff]
        %v2046 = vld [vmem:[#allocation2 + $0x3e0] sm:$0xff]
        %v2047 = vld [vmem:[#allocation2 + $0x3e8] sm:$0xff]
        %v2048 = vld [vmem:[#allocation2 + $0x3f0] sm:$0xff]
        %v2049 = vld [vmem:[#allocation2 + $0x3f8] sm:$0xff]
        %vm2050 = vcmp.ge.f32.partialorder %v1922, 0.0
        %vm2051 = vcmp.ge.f32.partialorder %v1923, 0.0
        %vm2052 = vcmp.ge.f32.partialorder %v1924, 0.0
        %vm2053 = vcmp.ge.f32.partialorder %v1925, 0.0
        %vm2054 = vcmp.ge.f32.partialorder %v1926, 0.0
        %vm2055 = vcmp.ge.f32.partialorder %v1927, 0.0
        %vm2056 = vcmp.ge.f32.partialorder %v1928, 0.0
        %vm2057 = vcmp.ge.f32.partialorder %v1929, 0.0
        %vm2058 = vcmp.ge.f32.partialorder %v1930, 0.0
        %vm2059 = vcmp.ge.f32.partialorder %v1931, 0.0
        %vm2060 = vcmp.ge.f32.partialorder %v1932, 0.0
        %vm2061 = vcmp.ge.f32.partialorder %v1933, 0.0
        %vm2062 = vcmp.ge.f32.partialorder %v1934, 0.0
        %vm2063 = vcmp.ge.f32.partialorder %v1935, 0.0
        %vm2064 = vcmp.ge.f32.partialorder %v1936, 0.0
        %vm2065 = vcmp.ge.f32.partialorder %v1937, 0.0
        %vm2066 = vcmp.ge.f32.partialorder %v1938, 0.0
        %vm2067 = vcmp.ge.f32.partialorder %v1939, 0.0
        %vm2068 = vcmp.ge.f32.partialorder %v1940, 0.0
        %vm2069 = vcmp.ge.f32.partialorder %v1941, 0.0
        %vm2070 = vcmp.ge.f32.partialorder %v1942, 0.0
        %vm2071 = vcmp.ge.f32.partialorder %v1943, 0.0
        %vm2072 = vcmp.ge.f32.partialorder %v1944, 0.0
        %vm2073 = vcmp.ge.f32.partialorder %v1945, 0.0
        %vm2074 = vcmp.ge.f32.partialorder %v1946, 0.0
        %vm2075 = vcmp.ge.f32.partialorder %v1947, 0.0
        %vm2076 = vcmp.ge.f32.partialorder %v1948, 0.0
        %vm2077 = vcmp.ge.f32.partialorder %v1949, 0.0
        %vm2078 = vcmp.ge.f32.partialorder %v1950, 0.0
        %vm2079 = vcmp.ge.f32.partialorder %v1951, 0.0
        %vm2080 = vcmp.ge.f32.partialorder %v1952, 0.0
        %vm2081 = vcmp.ge.f32.partialorder %v1953, 0.0
        %vm2082 = vcmp.ge.f32.partialorder %v1954, 0.0
        %vm2083 = vcmp.ge.f32.partialorder %v1955, 0.0
        %vm2084 = vcmp.ge.f32.partialorder %v1956, 0.0
        %vm2085 = vcmp.ge.f32.partialorder %v1957, 0.0
        %vm2086 = vcmp.ge.f32.partialorder %v1958, 0.0
        %vm2087 = vcmp.ge.f32.partialorder %v1959, 0.0
        %vm2088 = vcmp.ge.f32.partialorder %v1960, 0.0
        %vm2089 = vcmp.ge.f32.partialorder %v1961, 0.0
        %vm2090 = vcmp.ge.f32.partialorder %v1962, 0.0
        %vm2091 = vcmp.ge.f32.partialorder %v1963, 0.0
        %vm2092 = vcmp.ge.f32.partialorder %v1964, 0.0
        %vm2093 = vcmp.ge.f32.partialorder %v1965, 0.0
        %vm2094 = vcmp.ge.f32.partialorder %v1966, 0.0
        %vm2095 = vcmp.ge.f32.partialorder %v1967, 0.0
        %vm2096 = vcmp.ge.f32.partialorder %v1968, 0.0
        %vm2097 = vcmp.ge.f32.partialorder %v1969, 0.0
        %vm2098 = vcmp.ge.f32.partialorder %v1970, 0.0
        %vm2099 = vcmp.ge.f32.partialorder %v1971, 0.0
        %vm2100 = vcmp.ge.f32.partialorder %v1972, 0.0
        %vm2101 = vcmp.ge.f32.partialorder %v1973, 0.0
        %vm2102 = vcmp.ge.f32.partialorder %v1974, 0.0
        %vm2103 = vcmp.ge.f32.partialorder %v1975, 0.0
        %vm2104 = vcmp.ge.f32.partialorder %v1976, 0.0
        %vm2105 = vcmp.ge.f32.partialorder %v1977, 0.0
        %vm2106 = vcmp.ge.f32.partialorder %v1978, 0.0
        %vm2107 = vcmp.ge.f32.partialorder %v1979, 0.0
        %vm2108 = vcmp.ge.f32.partialorder %v1980, 0.0
        %vm2109 = vcmp.ge.f32.partialorder %v1981, 0.0
        %vm2110 = vcmp.ge.f32.partialorder %v1982, 0.0
        %vm2111 = vcmp.ge.f32.partialorder %v1983, 0.0
        %vm2112 = vcmp.ge.f32.partialorder %v1984, 0.0
        %vm2113 = vcmp.ge.f32.partialorder %v1985, 0.0
        %vm2114 = vcmp.ge.f32.partialorder %v1986, 0.0
        %vm2115 = vcmp.ge.f32.partialorder %v1987, 0.0
        %vm2116 = vcmp.ge.f32.partialorder %v1988, 0.0
        %vm2117 = vcmp.ge.f32.partialorder %v1989, 0.0
        %vm2118 = vcmp.ge.f32.partialorder %v1990, 0.0
        %vm2119 = vcmp.ge.f32.partialorder %v1991, 0.0
        %vm2120 = vcmp.ge.f32.partialorder %v1992, 0.0
        %vm2121 = vcmp.ge.f32.partialorder %v1993, 0.0
        %vm2122 = vcmp.ge.f32.partialorder %v1994, 0.0
        %vm2123 = vcmp.ge.f32.partialorder %v1995, 0.0
        %vm2124 = vcmp.ge.f32.partialorder %v1996, 0.0
        %vm2125 = vcmp.ge.f32.partialorder %v1997, 0.0
        %vm2126 = vcmp.ge.f32.partialorder %v1998, 0.0
        %vm2127 = vcmp.ge.f32.partialorder %v1999, 0.0
        %vm2128 = vcmp.ge.f32.partialorder %v2000, 0.0
        %vm2129 = vcmp.ge.f32.partialorder %v2001, 0.0
        %vm2130 = vcmp.ge.f32.partialorder %v2002, 0.0
        %vm2131 = vcmp.ge.f32.partialorder %v2003, 0.0
        %vm2132 = vcmp.ge.f32.partialorder %v2004, 0.0
        %vm2133 = vcmp.ge.f32.partialorder %v2005, 0.0
        %vm2134 = vcmp.ge.f32.partialorder %v2006, 0.0
        %vm2135 = vcmp.ge.f32.partialorder %v2007, 0.0
        %vm2136 = vcmp.ge.f32.partialorder %v2008, 0.0
        %vm2137 = vcmp.ge.f32.partialorder %v2009, 0.0
        %vm2138 = vcmp.ge.f32.partialorder %v2010, 0.0
        %vm2139 = vcmp.ge.f32.partialorder %v2011, 0.0
        %vm2140 = vcmp.ge.f32.partialorder %v2012, 0.0
        %vm2141 = vcmp.ge.f32.partialorder %v2013, 0.0
        %vm2142 = vcmp.ge.f32.partialorder %v2014, 0.0
        %vm2143 = vcmp.ge.f32.partialorder %v2015, 0.0
        %vm2144 = vcmp.ge.f32.partialorder %v2016, 0.0
        %vm2145 = vcmp.ge.f32.partialorder %v2017, 0.0
        %vm2146 = vcmp.ge.f32.partialorder %v2018, 0.0
        %vm2147 = vcmp.ge.f32.partialorder %v2019, 0.0
        %vm2148 = vcmp.ge.f32.partialorder %v2020, 0.0
        %vm2149 = vcmp.ge.f32.partialorder %v2021, 0.0
        %vm2150 = vcmp.ge.f32.partialorder %v2022, 0.0
        %vm2151 = vcmp.ge.f32.partialorder %v2023, 0.0
        %vm2152 = vcmp.ge.f32.partialorder %v2024, 0.0
        %vm2153 = vcmp.ge.f32.partialorder %v2025, 0.0
        %vm2154 = vcmp.ge.f32.partialorder %v2026, 0.0
        %vm2155 = vcmp.ge.f32.partialorder %v2027, 0.0
        %vm2156 = vcmp.ge.f32.partialorder %v2028, 0.0
        %vm2157 = vcmp.ge.f32.partialorder %v2029, 0.0
        %vm2158 = vcmp.ge.f32.partialorder %v2030, 0.0
        %vm2159 = vcmp.ge.f32.partialorder %v2031, 0.0
        %vm2160 = vcmp.ge.f32.partialorder %v2032, 0.0
        %vm2161 = vcmp.ge.f32.partialorder %v2033, 0.0
        %vm2162 = vcmp.ge.f32.partialorder %v2034, 0.0
        %vm2163 = vcmp.ge.f32.partialorder %v2035, 0.0
        %vm2164 = vcmp.ge.f32.partialorder %v2036, 0.0
        %vm2165 = vcmp.ge.f32.partialorder %v2037, 0.0
        %vm2166 = vcmp.ge.f32.partialorder %v2038, 0.0
        %vm2167 = vcmp.ge.f32.partialorder %v2039, 0.0
        %vm2168 = vcmp.ge.f32.partialorder %v2040, 0.0
        %vm2169 = vcmp.ge.f32.partialorder %v2041, 0.0
        %vm2170 = vcmp.ge.f32.partialorder %v2042, 0.0
        %vm2171 = vcmp.ge.f32.partialorder %v2043, 0.0
        %vm2172 = vcmp.ge.f32.partialorder %v2044, 0.0
        %vm2173 = vcmp.ge.f32.partialorder %v2045, 0.0
        %vm2174 = vcmp.ge.f32.partialorder %v2046, 0.0
        %vm2175 = vcmp.ge.f32.partialorder %v2047, 0.0
        %vm2176 = vcmp.ge.f32.partialorder %v2048, 0.0
        %vm2177 = vcmp.ge.f32.partialorder %v2049, 0.0
        %v2178 = vmul.f32 %v1922, 0.2
        %v2179 = vmul.f32 %v1923, 0.2
        %v2180 = vmul.f32 %v1924, 0.2
        %v2181 = vmul.f32 %v1925, 0.2
        %v2182 = vmul.f32 %v1926, 0.2
        %v2183 = vmul.f32 %v1927, 0.2
        %v2184 = vmul.f32 %v1928, 0.2
        %v2185 = vmul.f32 %v1929, 0.2
        %v2186 = vmul.f32 %v1930, 0.2
        %v2187 = vmul.f32 %v1931, 0.2
        %v2188 = vmul.f32 %v1932, 0.2
        %v2189 = vmul.f32 %v1933, 0.2
        %v2190 = vmul.f32 %v1934, 0.2
        %v2191 = vmul.f32 %v1935, 0.2
        %v2192 = vmul.f32 %v1936, 0.2
        %v2193 = vmul.f32 %v1937, 0.2
        %v2194 = vmul.f32 %v1938, 0.2
        %v2195 = vmul.f32 %v1939, 0.2
        %v2196 = vmul.f32 %v1940, 0.2
        %v2197 = vmul.f32 %v1941, 0.2
        %v2198 = vmul.f32 %v1942, 0.2
        %v2199 = vmul.f32 %v1943, 0.2
        %v2200 = vmul.f32 %v1944, 0.2
        %v2201 = vmul.f32 %v1945, 0.2
        %v2202 = vmul.f32 %v1946, 0.2
        %v2203 = vmul.f32 %v1947, 0.2
        %v2204 = vmul.f32 %v1948, 0.2
        %v2205 = vmul.f32 %v1949, 0.2
        %v2206 = vmul.f32 %v1950, 0.2
        %v2207 = vmul.f32 %v1951, 0.2
        %v2208 = vmul.f32 %v1952, 0.2
        %v2209 = vmul.f32 %v1953, 0.2
        %v2210 = vmul.f32 %v1954, 0.2
        %v2211 = vmul.f32 %v1955, 0.2
        %v2212 = vmul.f32 %v1956, 0.2
        %v2213 = vmul.f32 %v1957, 0.2
        %v2214 = vmul.f32 %v1958, 0.2
        %v2215 = vmul.f32 %v1959, 0.2
        %v2216 = vmul.f32 %v1960, 0.2
        %v2217 = vmul.f32 %v1961, 0.2
        %v2218 = vmul.f32 %v1962, 0.2
        %v2219 = vmul.f32 %v1963, 0.2
        %v2220 = vmul.f32 %v1964, 0.2
        %v2221 = vmul.f32 %v1965, 0.2
        %v2222 = vmul.f32 %v1966, 0.2
        %v2223 = vmul.f32 %v1967, 0.2
        %v2224 = vmul.f32 %v1968, 0.2
        %v2225 = vmul.f32 %v1969, 0.2
        %v2226 = vmul.f32 %v1970, 0.2
        %v2227 = vmul.f32 %v1971, 0.2
        %v2228 = vmul.f32 %v1972, 0.2
        %v2229 = vmul.f32 %v1973, 0.2
        %v2230 = vmul.f32 %v1974, 0.2
        %v2231 = vmul.f32 %v1975, 0.2
        %v2232 = vmul.f32 %v1976, 0.2
        %v2233 = vmul.f32 %v1977, 0.2
        %v2234 = vmul.f32 %v1978, 0.2
        %v2235 = vmul.f32 %v1979, 0.2
        %v2236 = vmul.f32 %v1980, 0.2
        %v2237 = vmul.f32 %v1981, 0.2
        %v2238 = vmul.f32 %v1982, 0.2
        %v2239 = vmul.f32 %v1983, 0.2
        %v2240 = vmul.f32 %v1984, 0.2
        %v2241 = vmul.f32 %v1985, 0.2
        %v2242 = vmul.f32 %v1986, 0.2
        %v2243 = vmul.f32 %v1987, 0.2
        %v2244 = vmul.f32 %v1988, 0.2
        %v2245 = vmul.f32 %v1989, 0.2
        %v2246 = vmul.f32 %v1990, 0.2
        %v2247 = vmul.f32 %v1991, 0.2
        %v2248 = vmul.f32 %v1992, 0.2
        %v2249 = vmul.f32 %v1993, 0.2
        %v2250 = vmul.f32 %v1994, 0.2
        %v2251 = vmul.f32 %v1995, 0.2
        %v2252 = vmul.f32 %v1996, 0.2
        %v2253 = vmul.f32 %v1997, 0.2
        %v2254 = vmul.f32 %v1998, 0.2
        %v2255 = vmul.f32 %v1999, 0.2
        %v2256 = vmul.f32 %v2000, 0.2
        %v2257 = vmul.f32 %v2001, 0.2
        %v2258 = vmul.f32 %v2002, 0.2
        %v2259 = vmul.f32 %v2003, 0.2
        %v2260 = vmul.f32 %v2004, 0.2
        %v2261 = vmul.f32 %v2005, 0.2
        %v2262 = vmul.f32 %v2006, 0.2
        %v2263 = vmul.f32 %v2007, 0.2
        %v2264 = vmul.f32 %v2008, 0.2
        %v2265 = vmul.f32 %v2009, 0.2
        %v2266 = vmul.f32 %v2010, 0.2
        %v2267 = vmul.f32 %v2011, 0.2
        %v2268 = vmul.f32 %v2012, 0.2
        %v2269 = vmul.f32 %v2013, 0.2
        %v2270 = vmul.f32 %v2014, 0.2
        %v2271 = vmul.f32 %v2015, 0.2
        %v2272 = vmul.f32 %v2016, 0.2
        %v2273 = vmul.f32 %v2017, 0.2
        %v2274 = vmul.f32 %v2018, 0.2
        %v2275 = vmul.f32 %v2019, 0.2
        %v2276 = vmul.f32 %v2020, 0.2
        %v2277 = vmul.f32 %v2021, 0.2
        %v2278 = vmul.f32 %v2022, 0.2
        %v2279 = vmul.f32 %v2023, 0.2
        %v2280 = vmul.f32 %v2024, 0.2
        %v2281 = vmul.f32 %v2025, 0.2
        %v2282 = vmul.f32 %v2026, 0.2
        %v2283 = vmul.f32 %v2027, 0.2
        %v2284 = vmul.f32 %v2028, 0.2
        %v2285 = vmul.f32 %v2029, 0.2
        %v2286 = vmul.f32 %v2030, 0.2
        %v2287 = vmul.f32 %v2031, 0.2
        %v2288 = vmul.f32 %v2032, 0.2
        %v2289 = vmul.f32 %v2033, 0.2
        %v2290 = vmul.f32 %v2034, 0.2
        %v2291 = vmul.f32 %v2035, 0.2
        %v2292 = vmul.f32 %v2036, 0.2
        %v2293 = vmul.f32 %v2037, 0.2
        %v2294 = vmul.f32 %v2038, 0.2
        %v2295 = vmul.f32 %v2039, 0.2
        %v2296 = vmul.f32 %v2040, 0.2
        %v2297 = vmul.f32 %v2041, 0.2
        %v2298 = vmul.f32 %v2042, 0.2
        %v2299 = vmul.f32 %v2043, 0.2
        %v2300 = vmul.f32 %v2044, 0.2
        %v2301 = vmul.f32 %v2045, 0.2
        %v2302 = vmul.f32 %v2046, 0.2
        %v2303 = vmul.f32 %v2047, 0.2
        %v2304 = vmul.f32 %v2048, 0.2
        %v2305 = vmul.f32 %v2049, 0.2
        %v2306 = vsel %vm2050, %v1922, %v2178
        %v2307 = vsel %vm2051, %v1923, %v2179
        %v2308 = vsel %vm2052, %v1924, %v2180
        %v2309 = vsel %vm2053, %v1925, %v2181
        %v2310 = vsel %vm2054, %v1926, %v2182
        %v2311 = vsel %vm2055, %v1927, %v2183
        %v2312 = vsel %vm2056, %v1928, %v2184
        %v2313 = vsel %vm2057, %v1929, %v2185
        %v2314 = vsel %vm2058, %v1930, %v2186
        %v2315 = vsel %vm2059, %v1931, %v2187
        %v2316 = vsel %vm2060, %v1932, %v2188
        %v2317 = vsel %vm2061, %v1933, %v2189
        %v2318 = vsel %vm2062, %v1934, %v2190
        %v2319 = vsel %vm2063, %v1935, %v2191
        %v2320 = vsel %vm2064, %v1936, %v2192
        %v2321 = vsel %vm2065, %v1937, %v2193
        %v2322 = vsel %vm2066, %v1938, %v2194
        %v2323 = vsel %vm2067, %v1939, %v2195
        %v2324 = vsel %vm2068, %v1940, %v2196
        %v2325 = vsel %vm2069, %v1941, %v2197
        %v2326 = vsel %vm2070, %v1942, %v2198
        %v2327 = vsel %vm2071, %v1943, %v2199
        %v2328 = vsel %vm2072, %v1944, %v2200
        %v2329 = vsel %vm2073, %v1945, %v2201
        %v2330 = vsel %vm2074, %v1946, %v2202
        %v2331 = vsel %vm2075, %v1947, %v2203
        %v2332 = vsel %vm2076, %v1948, %v2204
        %v2333 = vsel %vm2077, %v1949, %v2205
        %v2334 = vsel %vm2078, %v1950, %v2206
        %v2335 = vsel %vm2079, %v1951, %v2207
        %v2336 = vsel %vm2080, %v1952, %v2208
        %v2337 = vsel %vm2081, %v1953, %v2209
        %v2338 = vsel %vm2082, %v1954, %v2210
        %v2339 = vsel %vm2083, %v1955, %v2211
        %v2340 = vsel %vm2084, %v1956, %v2212
        %v2341 = vsel %vm2085, %v1957, %v2213
        %v2342 = vsel %vm2086, %v1958, %v2214
        %v2343 = vsel %vm2087, %v1959, %v2215
        %v2344 = vsel %vm2088, %v1960, %v2216
        %v2345 = vsel %vm2089, %v1961, %v2217
        %v2346 = vsel %vm2090, %v1962, %v2218
        %v2347 = vsel %vm2091, %v1963, %v2219
        %v2348 = vsel %vm2092, %v1964, %v2220
        %v2349 = vsel %vm2093, %v1965, %v2221
        %v2350 = vsel %vm2094, %v1966, %v2222
        %v2351 = vsel %vm2095, %v1967, %v2223
        %v2352 = vsel %vm2096, %v1968, %v2224
        %v2353 = vsel %vm2097, %v1969, %v2225
        %v2354 = vsel %vm2098, %v1970, %v2226
        %v2355 = vsel %vm2099, %v1971, %v2227
        %v2356 = vsel %vm2100, %v1972, %v2228
        %v2357 = vsel %vm2101, %v1973, %v2229
        %v2358 = vsel %vm2102, %v1974, %v2230
        %v2359 = vsel %vm2103, %v1975, %v2231
        %v2360 = vsel %vm2104, %v1976, %v2232
        %v2361 = vsel %vm2105, %v1977, %v2233
        %v2362 = vsel %vm2106, %v1978, %v2234
        %v2363 = vsel %vm2107, %v1979, %v2235
        %v2364 = vsel %vm2108, %v1980, %v2236
        %v2365 = vsel %vm2109, %v1981, %v2237
        %v2366 = vsel %vm2110, %v1982, %v2238
        %v2367 = vsel %vm2111, %v1983, %v2239
        %v2368 = vsel %vm2112, %v1984, %v2240
        %v2369 = vsel %vm2113, %v1985, %v2241
        %v2370 = vsel %vm2114, %v1986, %v2242
        %v2371 = vsel %vm2115, %v1987, %v2243
        %v2372 = vsel %vm2116, %v1988, %v2244
        %v2373 = vsel %vm2117, %v1989, %v2245
        %v2374 = vsel %vm2118, %v1990, %v2246
        %v2375 = vsel %vm2119, %v1991, %v2247
        %v2376 = vsel %vm2120, %v1992, %v2248
        %v2377 = vsel %vm2121, %v1993, %v2249
        %v2378 = vsel %vm2122, %v1994, %v2250
        %v2379 = vsel %vm2123, %v1995, %v2251
        %v2380 = vsel %vm2124, %v1996, %v2252
        %v2381 = vsel %vm2125, %v1997, %v2253
        %v2382 = vsel %vm2126, %v1998, %v2254
        %v2383 = vsel %vm2127, %v1999, %v2255
        %v2384 = vsel %vm2128, %v2000, %v2256
        %v2385 = vsel %vm2129, %v2001, %v2257
        %v2386 = vsel %vm2130, %v2002, %v2258
        %v2387 = vsel %vm2131, %v2003, %v2259
        %v2388 = vsel %vm2132, %v2004, %v2260
        %v2389 = vsel %vm2133, %v2005, %v2261
        %v2390 = vsel %vm2134, %v2006, %v2262
        %v2391 = vsel %vm2135, %v2007, %v2263
        %v2392 = vsel %vm2136, %v2008, %v2264
        %v2393 = vsel %vm2137, %v2009, %v2265
        %v2394 = vsel %vm2138, %v2010, %v2266
        %v2395 = vsel %vm2139, %v2011, %v2267
        %v2396 = vsel %vm2140, %v2012, %v2268
        %v2397 = vsel %vm2141, %v2013, %v2269
        %v2398 = vsel %vm2142, %v2014, %v2270
        %v2399 = vsel %vm2143, %v2015, %v2271
        %v2400 = vsel %vm2144, %v2016, %v2272
        %v2401 = vsel %vm2145, %v2017, %v2273
        %v2402 = vsel %vm2146, %v2018, %v2274
        %v2403 = vsel %vm2147, %v2019, %v2275
        %v2404 = vsel %vm2148, %v2020, %v2276
        %v2405 = vsel %vm2149, %v2021, %v2277
        %v2406 = vsel %vm2150, %v2022, %v2278
        %v2407 = vsel %vm2151, %v2023, %v2279
        %v2408 = vsel %vm2152, %v2024, %v2280
        %v2409 = vsel %vm2153, %v2025, %v2281
        %v2410 = vsel %vm2154, %v2026, %v2282
        %v2411 = vsel %vm2155, %v2027, %v2283
        %v2412 = vsel %vm2156, %v2028, %v2284
        %v2413 = vsel %vm2157, %v2029, %v2285
        %v2414 = vsel %vm2158, %v2030, %v2286
        %v2415 = vsel %vm2159, %v2031, %v2287
        %v2416 = vsel %vm2160, %v2032, %v2288
        %v2417 = vsel %vm2161, %v2033, %v2289
        %v2418 = vsel %vm2162, %v2034, %v2290
        %v2419 = vsel %vm2163, %v2035, %v2291
        %v2420 = vsel %vm2164, %v2036, %v2292
        %v2421 = vsel %vm2165, %v2037, %v2293
        %v2422 = vsel %vm2166, %v2038, %v2294
        %v2423 = vsel %vm2167, %v2039, %v2295
        %v2424 = vsel %vm2168, %v2040, %v2296
        %v2425 = vsel %vm2169, %v2041, %v2297
        %v2426 = vsel %vm2170, %v2042, %v2298
        %v2427 = vsel %vm2171, %v2043, %v2299
        %v2428 = vsel %vm2172, %v2044, %v2300
        %v2429 = vsel %vm2173, %v2045, %v2301
        %v2430 = vsel %vm2174, %v2046, %v2302
        %v2431 = vsel %vm2175, %v2047, %v2303
        %v2432 = vsel %vm2176, %v2048, %v2304
        %v2433 = vsel %vm2177, %v2049, %v2305
        %v2434 = vpack.c.bf16 %v2307, %v2306
        %v2435 = vpack.c.bf16 %v2309, %v2308
        %v2436 = vpack.c.bf16 %v2311, %v2310
        %v2437 = vpack.c.bf16 %v2313, %v2312
        %v2438 = vpack.c.bf16 %v2315, %v2314
        %v2439 = vpack.c.bf16 %v2317, %v2316
        %v2440 = vpack.c.bf16 %v2319, %v2318
        %v2441 = vpack.c.bf16 %v2321, %v2320
        %v2442 = vpack.c.bf16 %v2323, %v2322
        %v2443 = vpack.c.bf16 %v2325, %v2324
        %v2444 = vpack.c.bf16 %v2327, %v2326
        %v2445 = vpack.c.bf16 %v2329, %v2328
        %v2446 = vpack.c.bf16 %v2331, %v2330
        %v2447 = vpack.c.bf16 %v2333, %v2332
        %v2448 = vpack.c.bf16 %v2335, %v2334
        %v2449 = vpack.c.bf16 %v2337, %v2336
        %v2450 = vpack.c.bf16 %v2339, %v2338
        %v2451 = vpack.c.bf16 %v2341, %v2340
        %v2452 = vpack.c.bf16 %v2343, %v2342
        %v2453 = vpack.c.bf16 %v2345, %v2344
        %v2454 = vpack.c.bf16 %v2347, %v2346
        %v2455 = vpack.c.bf16 %v2349, %v2348
        %v2456 = vpack.c.bf16 %v2351, %v2350
        %v2457 = vpack.c.bf16 %v2353, %v2352
        %v2458 = vpack.c.bf16 %v2355, %v2354
        %v2459 = vpack.c.bf16 %v2357, %v2356
        %v2460 = vpack.c.bf16 %v2359, %v2358
        %v2461 = vpack.c.bf16 %v2361, %v2360
        %v2462 = vpack.c.bf16 %v2363, %v2362
        %v2463 = vpack.c.bf16 %v2365, %v2364
        %v2464 = vpack.c.bf16 %v2367, %v2366
        %v2465 = vpack.c.bf16 %v2369, %v2368
        %v2466 = vpack.c.bf16 %v2371, %v2370
        %v2467 = vpack.c.bf16 %v2373, %v2372
        %v2468 = vpack.c.bf16 %v2375, %v2374
        %v2469 = vpack.c.bf16 %v2377, %v2376
        %v2470 = vpack.c.bf16 %v2379, %v2378
        %v2471 = vpack.c.bf16 %v2381, %v2380
        %v2472 = vpack.c.bf16 %v2383, %v2382
        %v2473 = vpack.c.bf16 %v2385, %v2384
        %v2474 = vpack.c.bf16 %v2387, %v2386
        %v2475 = vpack.c.bf16 %v2389, %v2388
        %v2476 = vpack.c.bf16 %v2391, %v2390
        %v2477 = vpack.c.bf16 %v2393, %v2392
        %v2478 = vpack.c.bf16 %v2395, %v2394
        %v2479 = vpack.c.bf16 %v2397, %v2396
        %v2480 = vpack.c.bf16 %v2399, %v2398
        %v2481 = vpack.c.bf16 %v2401, %v2400
        %v2482 = vpack.c.bf16 %v2403, %v2402
        %v2483 = vpack.c.bf16 %v2405, %v2404
        %v2484 = vpack.c.bf16 %v2407, %v2406
        %v2485 = vpack.c.bf16 %v2409, %v2408
        %v2486 = vpack.c.bf16 %v2411, %v2410
        %v2487 = vpack.c.bf16 %v2413, %v2412
        %v2488 = vpack.c.bf16 %v2415, %v2414
        %v2489 = vpack.c.bf16 %v2417, %v2416
        %v2490 = vpack.c.bf16 %v2419, %v2418
        %v2491 = vpack.c.bf16 %v2421, %v2420
        %v2492 = vpack.c.bf16 %v2423, %v2422
        %v2493 = vpack.c.bf16 %v2425, %v2424
        %v2494 = vpack.c.bf16 %v2427, %v2426
        %v2495 = vpack.c.bf16 %v2429, %v2428
        %v2496 = vpack.c.bf16 %v2431, %v2430
        %v2497 = vpack.c.bf16 %v2433, %v2432
        %v2562 = vunpack.c.l.b16 %v2434
        %v2563 = vunpack.c.h.b16 %v2434
        %v2564 = vunpack.c.l.b16 %v2435
        %v2565 = vunpack.c.h.b16 %v2435
        %v2566 = vunpack.c.l.b16 %v2436
        %v2567 = vunpack.c.h.b16 %v2436
        %v2568 = vunpack.c.l.b16 %v2437
        %v2569 = vunpack.c.h.b16 %v2437
        %v2570 = vunpack.c.l.b16 %v2438
        %v2571 = vunpack.c.h.b16 %v2438
        %v2572 = vunpack.c.l.b16 %v2439
        %v2573 = vunpack.c.h.b16 %v2439
        %v2574 = vunpack.c.l.b16 %v2440
        %v2575 = vunpack.c.h.b16 %v2440
        %v2576 = vunpack.c.l.b16 %v2441
        %v2577 = vunpack.c.h.b16 %v2441
        %v2578 = vunpack.c.l.b16 %v2442
        %v2579 = vunpack.c.h.b16 %v2442
        %v2580 = vunpack.c.l.b16 %v2443
        %v2581 = vunpack.c.h.b16 %v2443
        %v2582 = vunpack.c.l.b16 %v2444
        %v2583 = vunpack.c.h.b16 %v2444
        %v2584 = vunpack.c.l.b16 %v2445
        %v2585 = vunpack.c.h.b16 %v2445
        %v2586 = vunpack.c.l.b16 %v2446
        %v2587 = vunpack.c.h.b16 %v2446
        %v2588 = vunpack.c.l.b16 %v2447
        %v2589 = vunpack.c.h.b16 %v2447
        %v2590 = vunpack.c.l.b16 %v2448
        %v2591 = vunpack.c.h.b16 %v2448
        %v2592 = vunpack.c.l.b16 %v2449
        %v2593 = vunpack.c.h.b16 %v2449
        %v2594 = vunpack.c.l.b16 %v2450
        %v2595 = vunpack.c.h.b16 %v2450
        %v2596 = vunpack.c.l.b16 %v2451
        %v2597 = vunpack.c.h.b16 %v2451
        %v2598 = vunpack.c.l.b16 %v2452
        %v2599 = vunpack.c.h.b16 %v2452
        %v2600 = vunpack.c.l.b16 %v2453
        %v2601 = vunpack.c.h.b16 %v2453
        %v2602 = vunpack.c.l.b16 %v2454
        %v2603 = vunpack.c.h.b16 %v2454
        %v2604 = vunpack.c.l.b16 %v2455
        %v2605 = vunpack.c.h.b16 %v2455
        %v2606 = vunpack.c.l.b16 %v2456
        %v2607 = vunpack.c.h.b16 %v2456
        %v2608 = vunpack.c.l.b16 %v2457
        %v2609 = vunpack.c.h.b16 %v2457
        %v2610 = vunpack.c.l.b16 %v2458
        %v2611 = vunpack.c.h.b16 %v2458
        %v2612 = vunpack.c.l.b16 %v2459
        %v2613 = vunpack.c.h.b16 %v2459
        %v2614 = vunpack.c.l.b16 %v2460
        %v2615 = vunpack.c.h.b16 %v2460
        %v2616 = vunpack.c.l.b16 %v2461
        %v2617 = vunpack.c.h.b16 %v2461
        %v2618 = vunpack.c.l.b16 %v2462
        %v2619 = vunpack.c.h.b16 %v2462
        %v2620 = vunpack.c.l.b16 %v2463
        %v2621 = vunpack.c.h.b16 %v2463
        %v2622 = vunpack.c.l.b16 %v2464
        %v2623 = vunpack.c.h.b16 %v2464
        %v2624 = vunpack.c.l.b16 %v2465
        %v2625 = vunpack.c.h.b16 %v2465
        %v2626 = vunpack.c.l.b16 %v2466
        %v2627 = vunpack.c.h.b16 %v2466
        %v2628 = vunpack.c.l.b16 %v2467
        %v2629 = vunpack.c.h.b16 %v2467
        %v2630 = vunpack.c.l.b16 %v2468
        %v2631 = vunpack.c.h.b16 %v2468
        %v2632 = vunpack.c.l.b16 %v2469
        %v2633 = vunpack.c.h.b16 %v2469
        %v2634 = vunpack.c.l.b16 %v2470
        %v2635 = vunpack.c.h.b16 %v2470
        %v2636 = vunpack.c.l.b16 %v2471
        %v2637 = vunpack.c.h.b16 %v2471
        %v2638 = vunpack.c.l.b16 %v2472
        %v2639 = vunpack.c.h.b16 %v2472
        %v2640 = vunpack.c.l.b16 %v2473
        %v2641 = vunpack.c.h.b16 %v2473
        %v2642 = vunpack.c.l.b16 %v2474
        %v2643 = vunpack.c.h.b16 %v2474
        %v2644 = vunpack.c.l.b16 %v2475
        %v2645 = vunpack.c.h.b16 %v2475
        %v2646 = vunpack.c.l.b16 %v2476
        %v2647 = vunpack.c.h.b16 %v2476
        %v2648 = vunpack.c.l.b16 %v2477
        %v2649 = vunpack.c.h.b16 %v2477
        %v2650 = vunpack.c.l.b16 %v2478
        %v2651 = vunpack.c.h.b16 %v2478
        %v2652 = vunpack.c.l.b16 %v2479
        %v2653 = vunpack.c.h.b16 %v2479
        %v2654 = vunpack.c.l.b16 %v2480
        %v2655 = vunpack.c.h.b16 %v2480
        %v2656 = vunpack.c.l.b16 %v2481
        %v2657 = vunpack.c.h.b16 %v2481
        %v2658 = vunpack.c.l.b16 %v2482
        %v2659 = vunpack.c.h.b16 %v2482
        %v2660 = vunpack.c.l.b16 %v2483
        %v2661 = vunpack.c.h.b16 %v2483
        %v2662 = vunpack.c.l.b16 %v2484
        %v2663 = vunpack.c.h.b16 %v2484
        %v2664 = vunpack.c.l.b16 %v2485
        %v2665 = vunpack.c.h.b16 %v2485
        %v2666 = vunpack.c.l.b16 %v2486
        %v2667 = vunpack.c.h.b16 %v2486
        %v2668 = vunpack.c.l.b16 %v2487
        %v2669 = vunpack.c.h.b16 %v2487
        %v2670 = vunpack.c.l.b16 %v2488
        %v2671 = vunpack.c.h.b16 %v2488
        %v2672 = vunpack.c.l.b16 %v2489
        %v2673 = vunpack.c.h.b16 %v2489
        %v2674 = vunpack.c.l.b16 %v2490
        %v2675 = vunpack.c.h.b16 %v2490
        %v2676 = vunpack.c.l.b16 %v2491
        %v2677 = vunpack.c.h.b16 %v2491
        %v2678 = vunpack.c.l.b16 %v2492
        %v2679 = vunpack.c.h.b16 %v2492
        %v2680 = vunpack.c.l.b16 %v2493
        %v2681 = vunpack.c.h.b16 %v2493
        %v2682 = vunpack.c.l.b16 %v2494
        %v2683 = vunpack.c.h.b16 %v2494
        %v2684 = vunpack.c.l.b16 %v2495
        %v2685 = vunpack.c.h.b16 %v2495
        %v2686 = vunpack.c.l.b16 %v2496
        %v2687 = vunpack.c.h.b16 %v2496
        %v2688 = vunpack.c.l.b16 %v2497
        %v2689 = vunpack.c.h.b16 %v2497
        %v2690 = vpack.c.b16 %v2562, %v2562
        %v2691 = vpack.c.b16 %v2563, %v2563
        %v2692 = vpack.c.b16 %v2564, %v2564
        %v2693 = vpack.c.b16 %v2565, %v2565
        %v2694 = vpack.c.b16 %v2566, %v2566
        %v2695 = vpack.c.b16 %v2567, %v2567
        %v2696 = vpack.c.b16 %v2568, %v2568
        %v2697 = vpack.c.b16 %v2569, %v2569
        %v2698 = vpack.c.b16 %v2570, %v2570
        %v2699 = vpack.c.b16 %v2571, %v2571
        %v2700 = vpack.c.b16 %v2572, %v2572
        %v2701 = vpack.c.b16 %v2573, %v2573
        %v2702 = vpack.c.b16 %v2574, %v2574
        %v2703 = vpack.c.b16 %v2575, %v2575
        %v2704 = vpack.c.b16 %v2576, %v2576
        %v2705 = vpack.c.b16 %v2577, %v2577
        %v2706 = vpack.c.b16 %v2578, %v2578
        %v2707 = vpack.c.b16 %v2579, %v2579
        %v2708 = vpack.c.b16 %v2580, %v2580
        %v2709 = vpack.c.b16 %v2581, %v2581
        %v2710 = vpack.c.b16 %v2582, %v2582
        %v2711 = vpack.c.b16 %v2583, %v2583
        %v2712 = vpack.c.b16 %v2584, %v2584
        %v2713 = vpack.c.b16 %v2585, %v2585
        %v2714 = vpack.c.b16 %v2586, %v2586
        %v2715 = vpack.c.b16 %v2587, %v2587
        %v2716 = vpack.c.b16 %v2588, %v2588
        %v2717 = vpack.c.b16 %v2589, %v2589
        %v2718 = vpack.c.b16 %v2590, %v2590
        %v2719 = vpack.c.b16 %v2591, %v2591
        %v2720 = vpack.c.b16 %v2592, %v2592
        %v2721 = vpack.c.b16 %v2593, %v2593
        %v2722 = vpack.c.b16 %v2594, %v2594
        %v2723 = vpack.c.b16 %v2595, %v2595
        %v2724 = vpack.c.b16 %v2596, %v2596
        %v2725 = vpack.c.b16 %v2597, %v2597
        %v2726 = vpack.c.b16 %v2598, %v2598
        %v2727 = vpack.c.b16 %v2599, %v2599
        %v2728 = vpack.c.b16 %v2600, %v2600
        %v2729 = vpack.c.b16 %v2601, %v2601
        %v2730 = vpack.c.b16 %v2602, %v2602
        %v2731 = vpack.c.b16 %v2603, %v2603
        %v2732 = vpack.c.b16 %v2604, %v2604
        %v2733 = vpack.c.b16 %v2605, %v2605
        %v2734 = vpack.c.b16 %v2606, %v2606
        %v2735 = vpack.c.b16 %v2607, %v2607
        %v2736 = vpack.c.b16 %v2608, %v2608
        %v2737 = vpack.c.b16 %v2609, %v2609
        %v2738 = vpack.c.b16 %v2610, %v2610
        %v2739 = vpack.c.b16 %v2611, %v2611
        %v2740 = vpack.c.b16 %v2612, %v2612
        %v2741 = vpack.c.b16 %v2613, %v2613
        %v2742 = vpack.c.b16 %v2614, %v2614
        %v2743 = vpack.c.b16 %v2615, %v2615
        %v2744 = vpack.c.b16 %v2616, %v2616
        %v2745 = vpack.c.b16 %v2617, %v2617
        %v2746 = vpack.c.b16 %v2618, %v2618
        %v2747 = vpack.c.b16 %v2619, %v2619
        %v2748 = vpack.c.b16 %v2620, %v2620
        %v2749 = vpack.c.b16 %v2621, %v2621
        %v2750 = vpack.c.b16 %v2622, %v2622
        %v2751 = vpack.c.b16 %v2623, %v2623
        %v2752 = vpack.c.b16 %v2624, %v2624
        %v2753 = vpack.c.b16 %v2625, %v2625
        %v2754 = vpack.c.b16 %v2626, %v2626
        %v2755 = vpack.c.b16 %v2627, %v2627
        %v2756 = vpack.c.b16 %v2628, %v2628
        %v2757 = vpack.c.b16 %v2629, %v2629
        %v2758 = vpack.c.b16 %v2630, %v2630
        %v2759 = vpack.c.b16 %v2631, %v2631
        %v2760 = vpack.c.b16 %v2632, %v2632
        %v2761 = vpack.c.b16 %v2633, %v2633
        %v2762 = vpack.c.b16 %v2634, %v2634
        %v2763 = vpack.c.b16 %v2635, %v2635
        %v2764 = vpack.c.b16 %v2636, %v2636
        %v2765 = vpack.c.b16 %v2637, %v2637
        %v2766 = vpack.c.b16 %v2638, %v2638
        %v2767 = vpack.c.b16 %v2639, %v2639
        %v2768 = vpack.c.b16 %v2640, %v2640
        %v2769 = vpack.c.b16 %v2641, %v2641
        %v2770 = vpack.c.b16 %v2642, %v2642
        %v2771 = vpack.c.b16 %v2643, %v2643
        %v2772 = vpack.c.b16 %v2644, %v2644
        %v2773 = vpack.c.b16 %v2645, %v2645
        %v2774 = vpack.c.b16 %v2646, %v2646
        %v2775 = vpack.c.b16 %v2647, %v2647
        %v2776 = vpack.c.b16 %v2648, %v2648
        %v2777 = vpack.c.b16 %v2649, %v2649
        %v2778 = vpack.c.b16 %v2650, %v2650
        %v2779 = vpack.c.b16 %v2651, %v2651
        %v2780 = vpack.c.b16 %v2652, %v2652
        %v2781 = vpack.c.b16 %v2653, %v2653
        %v2782 = vpack.c.b16 %v2654, %v2654
        %v2783 = vpack.c.b16 %v2655, %v2655
        %v2784 = vpack.c.b16 %v2656, %v2656
        %v2785 = vpack.c.b16 %v2657, %v2657
        %v2786 = vpack.c.b16 %v2658, %v2658
        %v2787 = vpack.c.b16 %v2659, %v2659
        %v2788 = vpack.c.b16 %v2660, %v2660
        %v2789 = vpack.c.b16 %v2661, %v2661
        %v2790 = vpack.c.b16 %v2662, %v2662
        %v2791 = vpack.c.b16 %v2663, %v2663
        %v2792 = vpack.c.b16 %v2664, %v2664
        %v2793 = vpack.c.b16 %v2665, %v2665
        %v2794 = vpack.c.b16 %v2666, %v2666
        %v2795 = vpack.c.b16 %v2667, %v2667
        %v2796 = vpack.c.b16 %v2668, %v2668
        %v2797 = vpack.c.b16 %v2669, %v2669
        %v2798 = vpack.c.b16 %v2670, %v2670
        %v2799 = vpack.c.b16 %v2671, %v2671
        %v2800 = vpack.c.b16 %v2672, %v2672
        %v2801 = vpack.c.b16 %v2673, %v2673
        %v2802 = vpack.c.b16 %v2674, %v2674
        %v2803 = vpack.c.b16 %v2675, %v2675
        %v2804 = vpack.c.b16 %v2676, %v2676
        %v2805 = vpack.c.b16 %v2677, %v2677
        %v2806 = vpack.c.b16 %v2678, %v2678
        %v2807 = vpack.c.b16 %v2679, %v2679
        %v2808 = vpack.c.b16 %v2680, %v2680
        %v2809 = vpack.c.b16 %v2681, %v2681
        %v2810 = vpack.c.b16 %v2682, %v2682
        %v2811 = vpack.c.b16 %v2683, %v2683
        %v2812 = vpack.c.b16 %v2684, %v2684
        %v2813 = vpack.c.b16 %v2685, %v2685
        %v2814 = vpack.c.b16 %v2686, %v2686
        %v2815 = vpack.c.b16 %v2687, %v2687
        %v2816 = vpack.c.b16 %v2688, %v2688
        %v2817 = vpack.c.b16 %v2689, %v2689
        %2946 = vst [vmem:[%s190] sm:$0xf] %v2690
        %2947 = vst [vmem:[%s190 + $0x4] sm:$0xf] %v2691
        %2948 = vst [vmem:[%s190 + $0x8] sm:$0xf] %v2692
        %2949 = vst [vmem:[%s190 + $0xc] sm:$0xf] %v2693
        %2950 = vst [vmem:[%s190 + $0x10] sm:$0xf] %v2694
        %2951 = vst [vmem:[%s190 + $0x14] sm:$0xf] %v2695
        %2952 = vst [vmem:[%s190 + $0x18] sm:$0xf] %v2696
        %2953 = vst [vmem:[%s190 + $0x1c] sm:$0xf] %v2697
        %2954 = vst [vmem:[%s190 + $0x20] sm:$0xf] %v2698
        %2955 = vst [vmem:[%s190 + $0x24] sm:$0xf] %v2699
        %2956 = vst [vmem:[%s190 + $0x28] sm:$0xf] %v2700
        %2957 = vst [vmem:[%s190 + $0x2c] sm:$0xf] %v2701
        %2958 = vst [vmem:[%s190 + $0x30] sm:$0xf] %v2702
        %2959 = vst [vmem:[%s190 + $0x34] sm:$0xf] %v2703
        %2960 = vst [vmem:[%s190 + $0x38] sm:$0xf] %v2704
        %2961 = vst [vmem:[%s190 + $0x3c] sm:$0xf] %v2705
        %2962 = vst [vmem:[%s190 + $0x40] sm:$0xf] %v2706
        %2963 = vst [vmem:[%s190 + $0x44] sm:$0xf] %v2707
        %2964 = vst [vmem:[%s190 + $0x48] sm:$0xf] %v2708
        %2965 = vst [vmem:[%s190 + $0x4c] sm:$0xf] %v2709
        %2966 = vst [vmem:[%s190 + $0x50] sm:$0xf] %v2710
        %2967 = vst [vmem:[%s190 + $0x54] sm:$0xf] %v2711
        %2968 = vst [vmem:[%s190 + $0x58] sm:$0xf] %v2712
        %2969 = vst [vmem:[%s190 + $0x5c] sm:$0xf] %v2713
        %2970 = vst [vmem:[%s190 + $0x60] sm:$0xf] %v2714
        %2971 = vst [vmem:[%s190 + $0x64] sm:$0xf] %v2715
        %2972 = vst [vmem:[%s190 + $0x68] sm:$0xf] %v2716
        %2973 = vst [vmem:[%s190 + $0x6c] sm:$0xf] %v2717
        %2974 = vst [vmem:[%s190 + $0x70] sm:$0xf] %v2718
        %2975 = vst [vmem:[%s190 + $0x74] sm:$0xf] %v2719
        %2976 = vst [vmem:[%s190 + $0x78] sm:$0xf] %v2720
        %2977 = vst [vmem:[%s190 + $0x7c] sm:$0xf] %v2721
        %2978 = vst [vmem:[%s190 + $0x80] sm:$0xf] %v2722
        %2979 = vst [vmem:[%s190 + $0x84] sm:$0xf] %v2723
        %2980 = vst [vmem:[%s190 + $0x88] sm:$0xf] %v2724
        %2981 = vst [vmem:[%s190 + $0x8c] sm:$0xf] %v2725
        %2982 = vst [vmem:[%s190 + $0x90] sm:$0xf] %v2726
        %2983 = vst [vmem:[%s190 + $0x94] sm:$0xf] %v2727
        %2984 = vst [vmem:[%s190 + $0x98] sm:$0xf] %v2728
        %2985 = vst [vmem:[%s190 + $0x9c] sm:$0xf] %v2729
        %2986 = vst [vmem:[%s190 + $0xa0] sm:$0xf] %v2730
        %2987 = vst [vmem:[%s190 + $0xa4] sm:$0xf] %v2731
        %2988 = vst [vmem:[%s190 + $0xa8] sm:$0xf] %v2732
        %2989 = vst [vmem:[%s190 + $0xac] sm:$0xf] %v2733
        %2990 = vst [vmem:[%s190 + $0xb0] sm:$0xf] %v2734
        %2991 = vst [vmem:[%s190 + $0xb4] sm:$0xf] %v2735
        %2992 = vst [vmem:[%s190 + $0xb8] sm:$0xf] %v2736
        %2993 = vst [vmem:[%s190 + $0xbc] sm:$0xf] %v2737
        %2994 = vst [vmem:[%s190 + $0xc0] sm:$0xf] %v2738
        %2995 = vst [vmem:[%s190 + $0xc4] sm:$0xf] %v2739
        %2996 = vst [vmem:[%s190 + $0xc8] sm:$0xf] %v2740
        %2997 = vst [vmem:[%s190 + $0xcc] sm:$0xf] %v2741
        %2998 = vst [vmem:[%s190 + $0xd0] sm:$0xf] %v2742
        %2999 = vst [vmem:[%s190 + $0xd4] sm:$0xf] %v2743
        %3000 = vst [vmem:[%s190 + $0xd8] sm:$0xf] %v2744
        %3001 = vst [vmem:[%s190 + $0xdc] sm:$0xf] %v2745
        %3002 = vst [vmem:[%s190 + $0xe0] sm:$0xf] %v2746
        %3003 = vst [vmem:[%s190 + $0xe4] sm:$0xf] %v2747
        %3004 = vst [vmem:[%s190 + $0xe8] sm:$0xf] %v2748
        %3005 = vst [vmem:[%s190 + $0xec] sm:$0xf] %v2749
        %3006 = vst [vmem:[%s190 + $0xf0] sm:$0xf] %v2750
        %3007 = vst [vmem:[%s190 + $0xf4] sm:$0xf] %v2751
        %3008 = vst [vmem:[%s190 + $0xf8] sm:$0xf] %v2752
        %3009 = vst [vmem:[%s190 + $0xfc] sm:$0xf] %v2753
        %3010 = vst [vmem:[%s190 + $0x100] sm:$0xf] %v2754
        %3011 = vst [vmem:[%s190 + $0x104] sm:$0xf] %v2755
        %3012 = vst [vmem:[%s190 + $0x108] sm:$0xf] %v2756
        %3013 = vst [vmem:[%s190 + $0x10c] sm:$0xf] %v2757
        %3014 = vst [vmem:[%s190 + $0x110] sm:$0xf] %v2758
        %3015 = vst [vmem:[%s190 + $0x114] sm:$0xf] %v2759
        %3016 = vst [vmem:[%s190 + $0x118] sm:$0xf] %v2760
        %3017 = vst [vmem:[%s190 + $0x11c] sm:$0xf] %v2761
        %3018 = vst [vmem:[%s190 + $0x120] sm:$0xf] %v2762
        %3019 = vst [vmem:[%s190 + $0x124] sm:$0xf] %v2763
        %3020 = vst [vmem:[%s190 + $0x128] sm:$0xf] %v2764
        %3021 = vst [vmem:[%s190 + $0x12c] sm:$0xf] %v2765
        %3022 = vst [vmem:[%s190 + $0x130] sm:$0xf] %v2766
        %3023 = vst [vmem:[%s190 + $0x134] sm:$0xf] %v2767
        %3024 = vst [vmem:[%s190 + $0x138] sm:$0xf] %v2768
        %3025 = vst [vmem:[%s190 + $0x13c] sm:$0xf] %v2769
        %3026 = vst [vmem:[%s190 + $0x140] sm:$0xf] %v2770
        %3027 = vst [vmem:[%s190 + $0x144] sm:$0xf] %v2771
        %3028 = vst [vmem:[%s190 + $0x148] sm:$0xf] %v2772
        %3029 = vst [vmem:[%s190 + $0x14c] sm:$0xf] %v2773
        %3030 = vst [vmem:[%s190 + $0x150] sm:$0xf] %v2774
        %3031 = vst [vmem:[%s190 + $0x154] sm:$0xf] %v2775
        %3032 = vst [vmem:[%s190 + $0x158] sm:$0xf] %v2776
        %3033 = vst [vmem:[%s190 + $0x15c] sm:$0xf] %v2777
        %3034 = vst [vmem:[%s190 + $0x160] sm:$0xf] %v2778
        %3035 = vst [vmem:[%s190 + $0x164] sm:$0xf] %v2779
        %3036 = vst [vmem:[%s190 + $0x168] sm:$0xf] %v2780
        %3037 = vst [vmem:[%s190 + $0x16c] sm:$0xf] %v2781
        %3038 = vst [vmem:[%s190 + $0x170] sm:$0xf] %v2782
        %3039 = vst [vmem:[%s190 + $0x174] sm:$0xf] %v2783
        %3040 = vst [vmem:[%s190 + $0x178] sm:$0xf] %v2784
        %3041 = vst [vmem:[%s190 + $0x17c] sm:$0xf] %v2785
        %3042 = vst [vmem:[%s190 + $0x180] sm:$0xf] %v2786
        %3043 = vst [vmem:[%s190 + $0x184] sm:$0xf] %v2787
        %3044 = vst [vmem:[%s190 + $0x188] sm:$0xf] %v2788
        %3045 = vst [vmem:[%s190 + $0x18c] sm:$0xf] %v2789
        %3046 = vst [vmem:[%s190 + $0x190] sm:$0xf] %v2790
        %3047 = vst [vmem:[%s190 + $0x194] sm:$0xf] %v2791
        %3048 = vst [vmem:[%s190 + $0x198] sm:$0xf] %v2792
        %3049 = vst [vmem:[%s190 + $0x19c] sm:$0xf] %v2793
        %3050 = vst [vmem:[%s190 + $0x1a0] sm:$0xf] %v2794
        %3051 = vst [vmem:[%s190 + $0x1a4] sm:$0xf] %v2795
        %3052 = vst [vmem:[%s190 + $0x1a8] sm:$0xf] %v2796
        %3053 = vst [vmem:[%s190 + $0x1ac] sm:$0xf] %v2797
        %3054 = vst [vmem:[%s190 + $0x1b0] sm:$0xf] %v2798
        %3055 = vst [vmem:[%s190 + $0x1b4] sm:$0xf] %v2799
        %3056 = vst [vmem:[%s190 + $0x1b8] sm:$0xf] %v2800
        %3057 = vst [vmem:[%s190 + $0x1bc] sm:$0xf] %v2801
        %3058 = vst [vmem:[%s190 + $0x1c0] sm:$0xf] %v2802
        %3059 = vst [vmem:[%s190 + $0x1c4] sm:$0xf] %v2803
        %3060 = vst [vmem:[%s190 + $0x1c8] sm:$0xf] %v2804
        %3061 = vst [vmem:[%s190 + $0x1cc] sm:$0xf] %v2805
        %3062 = vst [vmem:[%s190 + $0x1d0] sm:$0xf] %v2806
        %3063 = vst [vmem:[%s190 + $0x1d4] sm:$0xf] %v2807
        %3064 = vst [vmem:[%s190 + $0x1d8] sm:$0xf] %v2808
        %3065 = vst [vmem:[%s190 + $0x1dc] sm:$0xf] %v2809
        %3066 = vst [vmem:[%s190 + $0x1e0] sm:$0xf] %v2810
        %3067 = vst [vmem:[%s190 + $0x1e4] sm:$0xf] %v2811
        %3068 = vst [vmem:[%s190 + $0x1e8] sm:$0xf] %v2812
        %3069 = vst [vmem:[%s190 + $0x1ec] sm:$0xf] %v2813
        %3070 = vst [vmem:[%s190 + $0x1f0] sm:$0xf] %v2814
        %3071 = vst [vmem:[%s190 + $0x1f4] sm:$0xf] %v2815
        %3072 = vst [vmem:[%s190 + $0x1f8] sm:$0xf] %v2816
        %3073 = vst [vmem:[%s190 + $0x1fc] sm:$0xf] %v2817
      $region36: #{discriminator_forward.7} parent=27 // pred_fallthru
        _
      %s3074 = smul.u32 128, %s17
      %p3075 = scmp.lt.s32.totalorder %s3074, 255
      %s3076 = scalar_select %p3075, %s3074, 255
      %s3077 = smul.addr %s3076, 4
      %s3078 = scalar_lea.vmem %s2, %s3077
      // Predicated region
      $region37: #{discriminator_forward.7} parent=27 // pred_check
        %p3079 = pneg %p97
      $region38: #{discriminator_forward.7} parent=27 // pred_check_branch
        %3081 = sbr.rel (%p3079) target = $region40
      $region39: #{discriminator_forward.7} parent=27 // pred_region
        %s3082 = smul.u32 128, %s17
      $region40: #{discriminator_forward.7} parent=27 // pred_fallthru
        _
    $region28: #{discriminator_forward.7} parent=5 // pred_fallthru
      _
    %p3083 = scmp.le.s32.totalorder 2, %s8
    // Predicated region
    $region41: #{discriminator_forward.7} parent=5 // pred_check
      %p3084 = pneg %p3083
    $region42: #{discriminator_forward.7} parent=5 // pred_check_branch
      %3086 = sbr.rel (%p3084) target = $region44
    $region43: #{discriminator_forward.7} parent=5 // pred_region
      %s3087 = ssub.s32 %s8, 2
      // Predicated region
      $region45: #{discriminator_forward.7} parent=43 // pred_check
        %p3088 = pneg %p103
      $region46: #{discriminator_forward.7} parent=43 // pred_check_branch
        %3090 = sbr.rel (%p3088) target = $region48
      $region47: #{discriminator_forward.7} parent=43 // pred_region
        %s3091 = smul.u32 128, %s19
        %p3092 = scmp.lt.s32.totalorder %s3091, 255
        %s3093 = scalar_select %p3092, %s3091, 255
        %s3094 = smul.addr %s3093, 4
        %s3095 = scalar_lea.vmem %s2, %s3094
      $region48: #{discriminator_forward.7} parent=43 // pred_fallthru
        _
    $region44: #{discriminator_forward.7} parent=5 // pred_fallthru
      _
  $region6: #{discriminator_forward.7} parent=0 // loop_footer
    %s12 = sadd.s32 1, %s8
  $region7: #{discriminator_forward.7} parent=0 // loop_footer_branch
    %7 = sbr.rel target = $region3
  $region8: #{discriminator_forward.7} parent=0 // loop_exit
    _

// kernel: discriminator_forward.8
$region0: #{discriminator_forward.8}
  #allocation0 [shape = 'u32[]', space=smem, size = 0x4, offset = 0x4, fixed_abs, tag = 'smem constant byte address 0x4 - core index']
  #allocation1 [shape = 'u32[144,128]{1,0:T(1,128)}', space=vmem, size = 0x12000, scoped, tag = 'internal scratch']
  #allocation2 [shape = 'f32[512,128]{1,0:T(8,128)}', space=vmem, size = 0x40000, scoped, tag = 'scratch operand']
  %s0 = inlined_call_operand.vmem [shape: bf16[512,128], index: 0, kind: input, shape index: {}]
  %s1 = inlined_call_operand.vmem [shape: bf16[128,128], index: 1, kind: input, shape index: {}]
  %s2 = inlined_call_operand.vmem [shape: bf16[512,128], index: 2, kind: output, shape index: {0}]
  %s3 = inlined_call_operand.vmem [shape: f32[1,8,128], index: 3, kind: output, shape index: {1}]
  %s4 = inlined_call_operand.vmem [shape: f32[1,8,128], index: 4, kind: output, shape index: {2}]
  %5 = xla_tuple %s2, %s3, %s4
  %s6 = sld [smem:[#allocation0]]
  $region42: #{discriminator_forward.8} parent=0
    _
  %s8 = ssub.s32 1, %s6
  %s9 = scalar_select 0, %s8, %s6
  // Predicated region
  $region2: #{discriminator_forward.8} parent=0 // pred_check
    _
  $region3: #{discriminator_forward.8} parent=0 // pred_check_branch
    %11 = sbr.rel (0) target = $region5
  $region4: #{discriminator_forward.8} parent=0 // pred_region
    _
  $region5: #{discriminator_forward.8} parent=0 // pred_fallthru
    _
  // Predicated region
  $region6: #{discriminator_forward.8} parent=0 // pred_check
    _
  $region7: #{discriminator_forward.8} parent=0 // pred_check_branch
    %13 = sbr.rel (0) target = $region9
  $region8: #{discriminator_forward.8} parent=0 // pred_region
    _
  $region9: #{discriminator_forward.8} parent=0 // pred_fallthru
    _
  %p15 = scmp.eq.s32.totalorder 0, 0
  // Predicated region
  $region10: #{discriminator_forward.8} parent=0 // pred_check
    %p16 = pneg %p15
  $region11: #{discriminator_forward.8} parent=0 // pred_check_branch
    %18 = sbr.rel (%p16) target = $region13
  $region12: #{discriminator_forward.8} parent=0 // pred_region
    %19 = vst [vmem:[#allocation2] sm:$0xff] 0.0
    %20 = vst [vmem:[#allocation2 + $0x8] sm:$0xff] 0.0
    %21 = vst [vmem:[#allocation2 + $0x10] sm:$0xff] 0.0
    %22 = vst [vmem:[#allocation2 + $0x18] sm:$0xff] 0.0
    %23 = vst [vmem:[#allocation2 + $0x20] sm:$0xff] 0.0
    %24 = vst [vmem:[#allocation2 + $0x28] sm:$0xff] 0.0
    %25 = vst [vmem:[#allocation2 + $0x30] sm:$0xff] 0.0
    %26 = vst [vmem:[#allocation2 + $0x38] sm:$0xff] 0.0
    %27 = vst [vmem:[#allocation2 + $0x40] sm:$0xff] 0.0
    %28 = vst [vmem:[#allocation2 + $0x48] sm:$0xff] 0.0
    %29 = vst [vmem:[#allocation2 + $0x50] sm:$0xff] 0.0
    %30 = vst [vmem:[#allocation2 + $0x58] sm:$0xff] 0.0
    %31 = vst [vmem:[#allocation2 + $0x60] sm:$0xff] 0.0
    %32 = vst [vmem:[#allocation2 + $0x68] sm:$0xff] 0.0
    %33 = vst [vmem:[#allocation2 + $0x70] sm:$0xff] 0.0
    %34 = vst [vmem:[#allocation2 + $0x78] sm:$0xff] 0.0
    %35 = vst [vmem:[#allocation2 + $0x80] sm:$0xff] 0.0
    %36 = vst [vmem:[#allocation2 + $0x88] sm:$0xff] 0.0
    %37 = vst [vmem:[#allocation2 + $0x90] sm:$0xff] 0.0
    %38 = vst [vmem:[#allocation2 + $0x98] sm:$0xff] 0.0
    %39 = vst [vmem:[#allocation2 + $0xa0] sm:$0xff] 0.0
    %40 = vst [vmem:[#allocation2 + $0xa8] sm:$0xff] 0.0
    %41 = vst [vmem:[#allocation2 + $0xb0] sm:$0xff] 0.0
    %42 = vst [vmem:[#allocation2 + $0xb8] sm:$0xff] 0.0
    %43 = vst [vmem:[#allocation2 + $0xc0] sm:$0xff] 0.0
    %44 = vst [vmem:[#allocation2 + $0xc8] sm:$0xff] 0.0
    %45 = vst [vmem:[#allocation2 + $0xd0] sm:$0xff] 0.0
    %46 = vst [vmem:[#allocation2 + $0xd8] sm:$0xff] 0.0
    %47 = vst [vmem:[#allocation2 + $0xe0] sm:$0xff] 0.0
    %48 = vst [vmem:[#allocation2 + $0xe8] sm:$0xff] 0.0
    %49 = vst [vmem:[#allocation2 + $0xf0] sm:$0xff] 0.0
    %50 = vst [vmem:[#allocation2 + $0xf8] sm:$0xff] 0.0
    %51 = vst [vmem:[#allocation2 + $0x100] sm:$0xff] 0.0
    %52 = vst [vmem:[#allocation2 + $0x108] sm:$0xff] 0.0
    %53 = vst [vmem:[#allocation2 + $0x110] sm:$0xff] 0.0
    %54 = vst [vmem:[#allocation2 + $0x118] sm:$0xff] 0.0
    %55 = vst [vmem:[#allocation2 + $0x120] sm:$0xff] 0.0
    %56 = vst [vmem:[#allocation2 + $0x128] sm:$0xff] 0.0
    %57 = vst [vmem:[#allocation2 + $0x130] sm:$0xff] 0.0
    %58 = vst [vmem:[#allocation2 + $0x138] sm:$0xff] 0.0
    %59 = vst [vmem:[#allocation2 + $0x140] sm:$0xff] 0.0
    %60 = vst [vmem:[#allocation2 + $0x148] sm:$0xff] 0.0
    %61 = vst [vmem:[#allocation2 + $0x150] sm:$0xff] 0.0
    %62 = vst [vmem:[#allocation2 + $0x158] sm:$0xff] 0.0
    %63 = vst [vmem:[#allocation2 + $0x160] sm:$0xff] 0.0
    %64 = vst [vmem:[#allocation2 + $0x168] sm:$0xff] 0.0
    %65 = vst [vmem:[#allocation2 + $0x170] sm:$0xff] 0.0
    %66 = vst [vmem:[#allocation2 + $0x178] sm:$0xff] 0.0
    %67 = vst [vmem:[#allocation2 + $0x180] sm:$0xff] 0.0
    %68 = vst [vmem:[#allocation2 + $0x188] sm:$0xff] 0.0
    %69 = vst [vmem:[#allocation2 + $0x190] sm:$0xff] 0.0
    %70 = vst [vmem:[#allocation2 + $0x198] sm:$0xff] 0.0
    %71 = vst [vmem:[#allocation2 + $0x1a0] sm:$0xff] 0.0
    %72 = vst [vmem:[#allocation2 + $0x1a8] sm:$0xff] 0.0
    %73 = vst [vmem:[#allocation2 + $0x1b0] sm:$0xff] 0.0
    %74 = vst [vmem:[#allocation2 + $0x1b8] sm:$0xff] 0.0
    %75 = vst [vmem:[#allocation2 + $0x1c0] sm:$0xff] 0.0
    %76 = vst [vmem:[#allocation2 + $0x1c8] sm:$0xff] 0.0
    %77 = vst [vmem:[#allocation2 + $0x1d0] sm:$0xff] 0.0
    %78 = vst [vmem:[#allocation2 + $0x1d8] sm:$0xff] 0.0
    %79 = vst [vmem:[#allocation2 + $0x1e0] sm:$0xff] 0.0
    %80 = vst [vmem:[#allocation2 + $0x1e8] sm:$0xff] 0.0
    %81 = vst [vmem:[#allocation2 + $0x1f0] sm:$0xff] 0.0
    %82 = vst [vmem:[#allocation2 + $0x1f8] sm:$0xff] 0.0
  $region13: #{discriminator_forward.8} parent=0 // pred_fallthru
    _
  %v83 = vld [vmem:[#allocation2] sm:$0xff]
  %v84 = vld [vmem:[#allocation2 + $0x8] sm:$0xff]
  %v85 = vld [vmem:[#allocation2 + $0x10] sm:$0xff]
  %v86 = vld [vmem:[#allocation2 + $0x18] sm:$0xff]
  %v87 = vld [vmem:[#allocation2 + $0x20] sm:$0xff]
  %v88 = vld [vmem:[#allocation2 + $0x28] sm:$0xff]
  %v89 = vld [vmem:[#allocation2 + $0x30] sm:$0xff]
  %v90 = vld [vmem:[#allocation2 + $0x38] sm:$0xff]
  %v91 = vld [vmem:[#allocation2 + $0x40] sm:$0xff]
  %v92 = vld [vmem:[#allocation2 + $0x48] sm:$0xff]
  %v93 = vld [vmem:[#allocation2 + $0x50] sm:$0xff]
  %v94 = vld [vmem:[#allocation2 + $0x58] sm:$0xff]
  %v95 = vld [vmem:[#allocation2 + $0x60] sm:$0xff]
  %v96 = vld [vmem:[#allocation2 + $0x68] sm:$0xff]
  %v97 = vld [vmem:[#allocation2 + $0x70] sm:$0xff]
  %v98 = vld [vmem:[#allocation2 + $0x78] sm:$0xff]
  %v99 = vld [vmem:[#allocation2 + $0x80] sm:$0xff]
  %v100 = vld [vmem:[#allocation2 + $0x88] sm:$0xff]
  %v101 = vld [vmem:[#allocation2 + $0x90] sm:$0xff]
  %v102 = vld [vmem:[#allocation2 + $0x98] sm:$0xff]
  %v103 = vld [vmem:[#allocation2 + $0xa0] sm:$0xff]
  %v104 = vld [vmem:[#allocation2 + $0xa8] sm:$0xff]
  %v105 = vld [vmem:[#allocation2 + $0xb0] sm:$0xff]
  %v106 = vld [vmem:[#allocation2 + $0xb8] sm:$0xff]
  %v107 = vld [vmem:[#allocation2 + $0xc0] sm:$0xff]
  %v108 = vld [vmem:[#allocation2 + $0xc8] sm:$0xff]
  %v109 = vld [vmem:[#allocation2 + $0xd0] sm:$0xff]
  %v110 = vld [vmem:[#allocation2 + $0xd8] sm:$0xff]
  %v111 = vld [vmem:[#allocation2 + $0xe0] sm:$0xff]
  %v112 = vld [vmem:[#allocation2 + $0xe8] sm:$0xff]
  %v113 = vld [vmem:[#allocation2 + $0xf0] sm:$0xff]
  %v114 = vld [vmem:[#allocation2 + $0xf8] sm:$0xff]
  %v115 = vld [vmem:[#allocation2 + $0x100] sm:$0xff]
  %v116 = vld [vmem:[#allocation2 + $0x108] sm:$0xff]
  %v117 = vld [vmem:[#allocation2 + $0x110] sm:$0xff]
  %v118 = vld [vmem:[#allocation2 + $0x118] sm:$0xff]
  %v119 = vld [vmem:[#allocation2 + $0x120] sm:$0xff]
  %v120 = vld [vmem:[#allocation2 + $0x128] sm:$0xff]
  %v121 = vld [vmem:[#allocation2 + $0x130] sm:$0xff]
  %v122 = vld [vmem:[#allocation2 + $0x138] sm:$0xff]
  %v123 = vld [vmem:[#allocation2 + $0x140] sm:$0xff]
  %v124 = vld [vmem:[#allocation2 + $0x148] sm:$0xff]
  %v125 = vld [vmem:[#allocation2 + $0x150] sm:$0xff]
  %v126 = vld [vmem:[#allocation2 + $0x158] sm:$0xff]
  %v127 = vld [vmem:[#allocation2 + $0x160] sm:$0xff]
  %v128 = vld [vmem:[#allocation2 + $0x168] sm:$0xff]
  %v129 = vld [vmem:[#allocation2 + $0x170] sm:$0xff]
  %v130 = vld [vmem:[#allocation2 + $0x178] sm:$0xff]
  %v131 = vld [vmem:[#allocation2 + $0x180] sm:$0xff]
  %v132 = vld [vmem:[#allocation2 + $0x188] sm:$0xff]
  %v133 = vld [vmem:[#allocation2 + $0x190] sm:$0xff]
  %v134 = vld [vmem:[#allocation2 + $0x198] sm:$0xff]
  %v135 = vld [vmem:[#allocation2 + $0x1a0] sm:$0xff]
  %v136 = vld [vmem:[#allocation2 + $0x1a8] sm:$0xff]
  %v137 = vld [vmem:[#allocation2 + $0x1b0] sm:$0xff]
  %v138 = vld [vmem:[#allocation2 + $0x1b8] sm:$0xff]
  %v139 = vld [vmem:[#allocation2 + $0x1c0] sm:$0xff]
  %v140 = vld [vmem:[#allocation2 + $0x1c8] sm:$0xff]
  %v141 = vld [vmem:[#allocation2 + $0x1d0] sm:$0xff]
  %v142 = vld [vmem:[#allocation2 + $0x1d8] sm:$0xff]
  %v143 = vld [vmem:[#allocation2 + $0x1e0] sm:$0xff]
  %v144 = vld [vmem:[#allocation2 + $0x1e8] sm:$0xff]
  %v145 = vld [vmem:[#allocation2 + $0x1f0] sm:$0xff]
  %v146 = vld [vmem:[#allocation2 + $0x1f8] sm:$0xff]
  %v147 = vld [vmem:[%s0] sm:$0xf]
  %v148 = vld [vmem:[%s0 + $0x4] sm:$0xf]
  %v149 = vld [vmem:[%s0 + $0x8] sm:$0xf]
  %v150 = vld [vmem:[%s0 + $0xc] sm:$0xf]
  %v151 = vld [vmem:[%s0 + $0x10] sm:$0xf]
  %v152 = vld [vmem:[%s0 + $0x14] sm:$0xf]
  %v153 = vld [vmem:[%s0 + $0x18] sm:$0xf]
  %v154 = vld [vmem:[%s0 + $0x1c] sm:$0xf]
  %v155 = vld [vmem:[%s0 + $0x20] sm:$0xf]
  %v156 = vld [vmem:[%s0 + $0x24] sm:$0xf]
  %v157 = vld [vmem:[%s0 + $0x28] sm:$0xf]
  %v158 = vld [vmem:[%s0 + $0x2c] sm:$0xf]
  %v159 = vld [vmem:[%s0 + $0x30] sm:$0xf]
  %v160 = vld [vmem:[%s0 + $0x34] sm:$0xf]
  %v161 = vld [vmem:[%s0 + $0x38] sm:$0xf]
  %v162 = vld [vmem:[%s0 + $0x3c] sm:$0xf]
  %v163 = vld [vmem:[%s0 + $0x40] sm:$0xf]
  %v164 = vld [vmem:[%s0 + $0x44] sm:$0xf]
  %v165 = vld [vmem:[%s0 + $0x48] sm:$0xf]
  %v166 = vld [vmem:[%s0 + $0x4c] sm:$0xf]
  %v167 = vld [vmem:[%s0 + $0x50] sm:$0xf]
  %v168 = vld [vmem:[%s0 + $0x54] sm:$0xf]
  %v169 = vld [vmem:[%s0 + $0x58] sm:$0xf]
  %v170 = vld [vmem:[%s0 + $0x5c] sm:$0xf]
  %v171 = vld [vmem:[%s0 + $0x60] sm:$0xf]
  %v172 = vld [vmem:[%s0 + $0x64] sm:$0xf]
  %v173 = vld [vmem:[%s0 + $0x68] sm:$0xf]
  %v174 = vld [vmem:[%s0 + $0x6c] sm:$0xf]
  %v175 = vld [vmem:[%s0 + $0x70] sm:$0xf]
  %v176 = vld [vmem:[%s0 + $0x74] sm:$0xf]
  %v177 = vld [vmem:[%s0 + $0x78] sm:$0xf]
  %v178 = vld [vmem:[%s0 + $0x7c] sm:$0xf]
  %v179 = vld [vmem:[%s0 + $0x80] sm:$0xf]
  %v180 = vld [vmem:[%s0 + $0x84] sm:$0xf]
  %v181 = vld [vmem:[%s0 + $0x88] sm:$0xf]
  %v182 = vld [vmem:[%s0 + $0x8c] sm:$0xf]
  %v183 = vld [vmem:[%s0 + $0x90] sm:$0xf]
  %v184 = vld [vmem:[%s0 + $0x94] sm:$0xf]
  %v185 = vld [vmem:[%s0 + $0x98] sm:$0xf]
  %v186 = vld [vmem:[%s0 + $0x9c] sm:$0xf]
  %v187 = vld [vmem:[%s0 + $0xa0] sm:$0xf]
  %v188 = vld [vmem:[%s0 + $0xa4] sm:$0xf]
  %v189 = vld [vmem:[%s0 + $0xa8] sm:$0xf]
  %v190 = vld [vmem:[%s0 + $0xac] sm:$0xf]
  %v191 = vld [vmem:[%s0 + $0xb0] sm:$0xf]
  %v192 = vld [vmem:[%s0 + $0xb4] sm:$0xf]
  %v193 = vld [vmem:[%s0 + $0xb8] sm:$0xf]
  %v194 = vld [vmem:[%s0 + $0xbc] sm:$0xf]
  %v195 = vld [vmem:[%s0 + $0xc0] sm:$0xf]
  %v196 = vld [vmem:[%s0 + $0xc4] sm:$0xf]
  %v197 = vld [vmem:[%s0 + $0xc8] sm:$0xf]
  %v198 = vld [vmem:[%s0 + $0xcc] sm:$0xf]
  %v199 = vld [vmem:[%s0 + $0xd0] sm:$0xf]
  %v200 = vld [vmem:[%s0 + $0xd4] sm:$0xf]
  %v201 = vld [vmem:[%s0 + $0xd8] sm:$0xf]
  %v202 = vld [vmem:[%s0 + $0xdc] sm:$0xf]
  %v203 = vld [vmem:[%s0 + $0xe0] sm:$0xf]
  %v204 = vld [vmem:[%s0 + $0xe4] sm:$0xf]
  %v205 = vld [vmem:[%s0 + $0xe8] sm:$0xf]
  %v206 = vld [vmem:[%s0 + $0xec] sm:$0xf]
  %v207 = vld [vmem:[%s0 + $0xf0] sm:$0xf]
  %v208 = vld [vmem:[%s0 + $0xf4] sm:$0xf]
  %v209 = vld [vmem:[%s0 + $0xf8] sm:$0xf]
  %v210 = vld [vmem:[%s0 + $0xfc] sm:$0xf]
  %v211 = vld [vmem:[%s1] sm:$0xf]
  %v212 = vld [vmem:[%s1 + $0x4] sm:$0xf]
  %v213 = vld [vmem:[%s1 + $0x8] sm:$0xf]
  %v214 = vld [vmem:[%s1 + $0xc] sm:$0xf]
  %v215 = vld [vmem:[%s1 + $0x10] sm:$0xf]
  %v216 = vld [vmem:[%s1 + $0x14] sm:$0xf]
  %v217 = vld [vmem:[%s1 + $0x18] sm:$0xf]
  %v218 = vld [vmem:[%s1 + $0x1c] sm:$0xf]
  %v219 = vld [vmem:[%s1 + $0x20] sm:$0xf]
  %v220 = vld [vmem:[%s1 + $0x24] sm:$0xf]
  %v221 = vld [vmem:[%s1 + $0x28] sm:$0xf]
  %v222 = vld [vmem:[%s1 + $0x2c] sm:$0xf]
  %v223 = vld [vmem:[%s1 + $0x30] sm:$0xf]
  %v224 = vld [vmem:[%s1 + $0x34] sm:$0xf]
  %v225 = vld [vmem:[%s1 + $0x38] sm:$0xf]
  %v226 = vld [vmem:[%s1 + $0x3c] sm:$0xf]
  %v291 = vunpack.c.l.b16 %v147
  %v292 = vunpack.c.l.b16 %v148
  %v293 = vunpack.c.l.b16 %v149
  %v294 = vunpack.c.l.b16 %v150
  %v295 = vunpack.c.l.b16 %v151
  %v296 = vunpack.c.l.b16 %v152
  %v297 = vunpack.c.l.b16 %v153
  %v298 = vunpack.c.l.b16 %v154
  %v299 = vunpack.c.l.b16 %v155
  %v300 = vunpack.c.l.b16 %v156
  %v301 = vunpack.c.l.b16 %v157
  %v302 = vunpack.c.l.b16 %v158
  %v303 = vunpack.c.l.b16 %v159
  %v304 = vunpack.c.l.b16 %v160
  %v305 = vunpack.c.l.b16 %v161
  %v306 = vunpack.c.l.b16 %v162
  %v307 = vunpack.c.l.b16 %v163
  %v308 = vunpack.c.l.b16 %v164
  %v309 = vunpack.c.l.b16 %v165
  %v310 = vunpack.c.l.b16 %v166
  %v311 = vunpack.c.l.b16 %v167
  %v312 = vunpack.c.l.b16 %v168
  %v313 = vunpack.c.l.b16 %v169
  %v314 = vunpack.c.l.b16 %v170
  %v315 = vunpack.c.l.b16 %v171
  %v316 = vunpack.c.l.b16 %v172
  %v317 = vunpack.c.l.b16 %v173
  %v318 = vunpack.c.l.b16 %v174
  %v319 = vunpack.c.l.b16 %v175
  %v320 = vunpack.c.l.b16 %v176
  %v321 = vunpack.c.l.b16 %v177
  %v322 = vunpack.c.l.b16 %v178
  %v323 = vunpack.c.l.b16 %v179
  %v324 = vunpack.c.l.b16 %v180
  %v325 = vunpack.c.l.b16 %v181
  %v326 = vunpack.c.l.b16 %v182
  %v327 = vunpack.c.l.b16 %v183
  %v328 = vunpack.c.l.b16 %v184
  %v329 = vunpack.c.l.b16 %v185
  %v330 = vunpack.c.l.b16 %v186
  %v331 = vunpack.c.l.b16 %v187
  %v332 = vunpack.c.l.b16 %v188
  %v333 = vunpack.c.l.b16 %v189
  %v334 = vunpack.c.l.b16 %v190
  %v335 = vunpack.c.l.b16 %v191
  %v336 = vunpack.c.l.b16 %v192
  %v337 = vunpack.c.l.b16 %v193
  %v338 = vunpack.c.l.b16 %v194
  %v339 = vunpack.c.l.b16 %v195
  %v340 = vunpack.c.l.b16 %v196
  %v341 = vunpack.c.l.b16 %v197
  %v342 = vunpack.c.l.b16 %v198
  %v343 = vunpack.c.l.b16 %v199
  %v344 = vunpack.c.l.b16 %v200
  %v345 = vunpack.c.l.b16 %v201
  %v346 = vunpack.c.l.b16 %v202
  %v347 = vunpack.c.l.b16 %v203
  %v348 = vunpack.c.l.b16 %v204
  %v349 = vunpack.c.l.b16 %v205
  %v350 = vunpack.c.l.b16 %v206
  %v351 = vunpack.c.l.b16 %v207
  %v352 = vunpack.c.l.b16 %v208
  %v353 = vunpack.c.l.b16 %v209
  %v354 = vunpack.c.l.b16 %v210
  %v355 = vpack.c.b16 %v292, %v291
  %v356 = vpack.c.b16 %v294, %v293
  %v357 = vpack.c.b16 %v296, %v295
  %v358 = vpack.c.b16 %v298, %v297
  %v359 = vpack.c.b16 %v300, %v299
  %v360 = vpack.c.b16 %v302, %v301
  %v361 = vpack.c.b16 %v304, %v303
  %v362 = vpack.c.b16 %v306, %v305
  %v363 = vpack.c.b16 %v308, %v307
  %v364 = vpack.c.b16 %v310, %v309
  %v365 = vpack.c.b16 %v312, %v311
  %v366 = vpack.c.b16 %v314, %v313
  %v367 = vpack.c.b16 %v316, %v315
  %v368 = vpack.c.b16 %v318, %v317
  %v369 = vpack.c.b16 %v320, %v319
  %v370 = vpack.c.b16 %v322, %v321
  %v371 = vpack.c.b16 %v324, %v323
  %v372 = vpack.c.b16 %v326, %v325
  %v373 = vpack.c.b16 %v328, %v327
  %v374 = vpack.c.b16 %v330, %v329
  %v375 = vpack.c.b16 %v332, %v331
  %v376 = vpack.c.b16 %v334, %v333
  %v377 = vpack.c.b16 %v336, %v335
  %v378 = vpack.c.b16 %v338, %v337
  %v379 = vpack.c.b16 %v340, %v339
  %v380 = vpack.c.b16 %v342, %v341
  %v381 = vpack.c.b16 %v344, %v343
  %v382 = vpack.c.b16 %v346, %v345
  %v383 = vpack.c.b16 %v348, %v347
  %v384 = vpack.c.b16 %v350, %v349
  %v385 = vpack.c.b16 %v352, %v351
  %v386 = vpack.c.b16 %v354, %v353
  %v435 = vunpack.c.l.b16 %v211
  %v436 = vunpack.c.l.b16 %v212
  %v437 = vunpack.c.l.b16 %v213
  %v438 = vunpack.c.l.b16 %v214
  %v439 = vunpack.c.l.b16 %v215
  %v440 = vunpack.c.l.b16 %v216
  %v441 = vunpack.c.l.b16 %v217
  %v442 = vunpack.c.l.b16 %v218
  %v443 = vunpack.c.l.b16 %v219
  %v444 = vunpack.c.l.b16 %v220
  %v445 = vunpack.c.l.b16 %v221
  %v446 = vunpack.c.l.b16 %v222
  %v447 = vunpack.c.l.b16 %v223
  %v448 = vunpack.c.l.b16 %v224
  %v449 = vunpack.c.l.b16 %v225
  %v450 = vunpack.c.l.b16 %v226
  %v451 = vpack.c.b16 %v436, %v435
  %v452 = vpack.c.b16 %v438, %v437
  %v453 = vpack.c.b16 %v440, %v439
  %v454 = vpack.c.b16 %v442, %v441
  %v455 = vpack.c.b16 %v444, %v443
  %v456 = vpack.c.b16 %v446, %v445
  %v457 = vpack.c.b16 %v448, %v447
  %v458 = vpack.c.b16 %v450, %v449
  %467 = vmatprep.subr.bf16.mxu0 0
  %468 = vmatpush1.bf16.msra.mxu0 %v451
  %469 = vmatprep.subr.bf16.mxu0 0
  %470 = vmatpush1.bf16.msra.mxu0 %v452
  %471 = vmatprep.subr.bf16.mxu0 0
  %472 = vmatpush1.bf16.msra.mxu0 %v453
  %473 = vmatprep.subr.bf16.mxu0 0
  %474 = vmatpush1.bf16.msra.mxu0 %v454
  %475 = vmatprep.subr.bf16.mxu0 0
  %476 = vmatpush1.bf16.msra.mxu0 %v455
  %477 = vmatprep.subr.bf16.mxu0 0
  %478 = vmatpush1.bf16.msra.mxu0 %v456
  %479 = vmatprep.subr.bf16.mxu0 0
  %480 = vmatpush1.bf16.msra.mxu0 %v457
  %481 = vmatprep.subr.bf16.mxu0 0
  %482 = vmatpush1.bf16.msra.mxu0 %v458
  %483 = vmatprep.subr.bf16.mxu0 0
  %484 = vmatpush1.bf16.msra.mxu0 0
  %485 = vmatprep.subr.bf16.mxu0 0
  %486 = vmatpush1.bf16.msra.mxu0 0
  %487 = vmatprep.subr.bf16.mxu0 0
  %488 = vmatpush1.bf16.msra.mxu0 0
  %489 = vmatprep.subr.bf16.mxu0 0
  %490 = vmatpush1.bf16.msra.mxu0 0
  %491 = vmatprep.subr.bf16.mxu0 0
  %492 = vmatpush1.bf16.msra.mxu0 0
  %493 = vmatprep.subr.bf16.mxu0 0
  %494 = vmatpush1.bf16.msra.mxu0 0
  %495 = vmatprep.subr.bf16.mxu0 0
  %496 = vmatpush1.bf16.msra.mxu0 0
  %497 = vmatprep.subr.bf16.mxu0 0
  %498 = vmatpush1.bf16.msra.mxu0 0
  %499 = vmatprep.mubr.bf16.mxu0 0
  %500 = vmatmul.mubr.bf16.gmra.mrb[0].mxu0 %v355
  %v501 = vpop.f32.mrb[0].mxu0
  %v502 = vadd.f32 0.0, %v501
  %v503 = vpop.f32.mrb[0].mxu0
  %v504 = vpop.f32.mrb[0].mxu0
  %v505 = vadd.f32 0.0, %v504
  %v506 = vpop.f32.mrb[0].mxu0
  %507 = vmatprep.mubr.bf16.mxu0 0
  %508 = vmatmul.mubr.bf16.gmra.mrb[0].mxu0 %v356
  %v509 = vpop.f32.mrb[0].mxu0
  %v510 = vadd.f32 0.0, %v509
  %v511 = vpop.f32.mrb[0].mxu0
  %v512 = vpop.f32.mrb[0].mxu0
  %v513 = vadd.f32 0.0, %v512
  %v514 = vpop.f32.mrb[0].mxu0
  %515 = vmatprep.mubr.bf16.mxu0 0
  %516 = vmatmul.mubr.bf16.gmra.mrb[0].mxu0 %v357
  %v517 = vpop.f32.mrb[0].mxu0
  %v518 = vadd.f32 0.0, %v517
  %v519 = vpop.f32.mrb[0].mxu0
  %v520 = vpop.f32.mrb[0].mxu0
  %v521 = vadd.f32 0.0, %v520
  %v522 = vpop.f32.mrb[0].mxu0
  %523 = vmatprep.mubr.bf16.mxu0 0
  %524 = vmatmul.mubr.bf16.gmra.mrb[0].mxu0 %v358
  %v525 = vpop.f32.mrb[0].mxu0
  %v526 = vadd.f32 0.0, %v525
  %v527 = vpop.f32.mrb[0].mxu0
  %v528 = vpop.f32.mrb[0].mxu0
  %v529 = vadd.f32 0.0, %v528
  %v530 = vpop.f32.mrb[0].mxu0
  %531 = vmatprep.mubr.bf16.mxu0 0
  %532 = vmatmul.mubr.bf16.gmra.mrb[0].mxu0 %v359
  %v533 = vpop.f32.mrb[0].mxu0
  %v534 = vadd.f32 0.0, %v533
  %v535 = vpop.f32.mrb[0].mxu0
  %v536 = vpop.f32.mrb[0].mxu0
  %v537 = vadd.f32 0.0, %v536
  %v538 = vpop.f32.mrb[0].mxu0
  %539 = vmatprep.mubr.bf16.mxu0 0
  %540 = vmatmul.mubr.bf16.gmra.mrb[0].mxu0 %v360
  %v541 = vpop.f32.mrb[0].mxu0
  %v542 = vadd.f32 0.0, %v541
  %v543 = vpop.f32.mrb[0].mxu0
  %v544 = vpop.f32.mrb[0].mxu0
  %v545 = vadd.f32 0.0, %v544
  %v546 = vpop.f32.mrb[0].mxu0
  %547 = vmatprep.mubr.bf16.mxu0 0
  %548 = vmatmul.mubr.bf16.gmra.mrb[0].mxu0 %v361
  %v549 = vpop.f32.mrb[0].mxu0
  %v550 = vadd.f32 0.0, %v549
  %v551 = vpop.f32.mrb[0].mxu0
  %v552 = vpop.f32.mrb[0].mxu0
  %v553 = vadd.f32 0.0, %v552
  %v554 = vpop.f32.mrb[0].mxu0
  %555 = vmatprep.mubr.bf16.mxu0 0
  %556 = vmatmul.mubr.bf16.gmra.mrb[0].mxu0 %v362
  %v557 = vpop.f32.mrb[0].mxu0
  %v558 = vadd.f32 0.0, %v557
  %v559 = vpop.f32.mrb[0].mxu0
  %v560 = vpop.f32.mrb[0].mxu0
  %v561 = vadd.f32 0.0, %v560
  %v562 = vpop.f32.mrb[0].mxu0
  %563 = vmatprep.mubr.bf16.mxu0 0
  %564 = vmatmul.mubr.bf16.gmra.mrb[0].mxu0 %v363
  %v565 = vpop.f32.mrb[0].mxu0
  %v566 = vadd.f32 0.0, %v565
  %v567 = vpop.f32.mrb[0].mxu0
  %v568 = vpop.f32.mrb[0].mxu0
  %v569 = vadd.f32 0.0, %v568
  %v570 = vpop.f32.mrb[0].mxu0
  %571 = vmatprep.mubr.bf16.mxu0 0
  %572 = vmatmul.mubr.bf16.gmra.mrb[0].mxu0 %v364
  %v573 = vpop.f32.mrb[0].mxu0
  %v574 = vadd.f32 0.0, %v573
  %v575 = vpop.f32.mrb[0].mxu0
  %v576 = vpop.f32.mrb[0].mxu0
  %v577 = vadd.f32 0.0, %v576
  %v578 = vpop.f32.mrb[0].mxu0
  %579 = vmatprep.mubr.bf16.mxu0 0
  %580 = vmatmul.mubr.bf16.gmra.mrb[0].mxu0 %v365
  %v581 = vpop.f32.mrb[0].mxu0
  %v582 = vadd.f32 0.0, %v581
  %v583 = vpop.f32.mrb[0].mxu0
  %v584 = vpop.f32.mrb[0].mxu0
  %v585 = vadd.f32 0.0, %v584
  %v586 = vpop.f32.mrb[0].mxu0
  %587 = vmatprep.mubr.bf16.mxu0 0
  %588 = vmatmul.mubr.bf16.gmra.mrb[0].mxu0 %v366
  %v589 = vpop.f32.mrb[0].mxu0
  %v590 = vadd.f32 0.0, %v589
  %v591 = vpop.f32.mrb[0].mxu0
  %v592 = vpop.f32.mrb[0].mxu0
  %v593 = vadd.f32 0.0, %v592
  %v594 = vpop.f32.mrb[0].mxu0
  %595 = vmatprep.mubr.bf16.mxu0 0
  %596 = vmatmul.mubr.bf16.gmra.mrb[0].mxu0 %v367
  %v597 = vpop.f32.mrb[0].mxu0
  %v598 = vadd.f32 0.0, %v597
  %v599 = vpop.f32.mrb[0].mxu0
  %v600 = vpop.f32.mrb[0].mxu0
  %v601 = vadd.f32 0.0, %v600
  %v602 = vpop.f32.mrb[0].mxu0
  %603 = vmatprep.mubr.bf16.mxu0 0
  %604 = vmatmul.mubr.bf16.gmra.mrb[0].mxu0 %v368
  %v605 = vpop.f32.mrb[0].mxu0
  %v606 = vadd.f32 0.0, %v605
  %v607 = vpop.f32.mrb[0].mxu0
  %v608 = vpop.f32.mrb[0].mxu0
  %v609 = vadd.f32 0.0, %v608
  %v610 = vpop.f32.mrb[0].mxu0
  %611 = vmatprep.mubr.bf16.mxu0 0
  %612 = vmatmul.mubr.bf16.gmra.mrb[0].mxu0 %v369
  %v613 = vpop.f32.mrb[0].mxu0
  %v614 = vadd.f32 0.0, %v613
  %v615 = vpop.f32.mrb[0].mxu0
  %v616 = vpop.f32.mrb[0].mxu0
  %v617 = vadd.f32 0.0, %v616
  %v618 = vpop.f32.mrb[0].mxu0
  %619 = vmatprep.mubr.bf16.mxu0 0
  %620 = vmatmul.mubr.bf16.gmra.mrb[0].mxu0 %v370
  %v621 = vpop.f32.mrb[0].mxu0
  %v622 = vadd.f32 0.0, %v621
  %v623 = vpop.f32.mrb[0].mxu0
  %v624 = vpop.f32.mrb[0].mxu0
  %v625 = vadd.f32 0.0, %v624
  %v626 = vpop.f32.mrb[0].mxu0
  %627 = vmatprep.mubr.bf16.mxu0 0
  %628 = vmatmul.mubr.bf16.gmra.mrb[0].mxu0 %v371
  %v629 = vpop.f32.mrb[0].mxu0
  %v630 = vadd.f32 0.0, %v629
  %v631 = vpop.f32.mrb[0].mxu0
  %v632 = vpop.f32.mrb[0].mxu0
  %v633 = vadd.f32 0.0, %v632
  %v634 = vpop.f32.mrb[0].mxu0
  %635 = vmatprep.mubr.bf16.mxu0 0
  %636 = vmatmul.mubr.bf16.gmra.mrb[0].mxu0 %v372
  %v637 = vpop.f32.mrb[0].mxu0
  %v638 = vadd.f32 0.0, %v637
  %v639 = vpop.f32.mrb[0].mxu0
  %v640 = vpop.f32.mrb[0].mxu0
  %v641 = vadd.f32 0.0, %v640
  %v642 = vpop.f32.mrb[0].mxu0
  %643 = vmatprep.mubr.bf16.mxu0 0
  %644 = vmatmul.mubr.bf16.gmra.mrb[0].mxu0 %v373
  %v645 = vpop.f32.mrb[0].mxu0
  %v646 = vadd.f32 0.0, %v645
  %v647 = vpop.f32.mrb[0].mxu0
  %v648 = vpop.f32.mrb[0].mxu0
  %v649 = vadd.f32 0.0, %v648
  %v650 = vpop.f32.mrb[0].mxu0
  %651 = vmatprep.mubr.bf16.mxu0 0
  %652 = vmatmul.mubr.bf16.gmra.mrb[0].mxu0 %v374
  %v653 = vpop.f32.mrb[0].mxu0
  %v654 = vadd.f32 0.0, %v653
  %v655 = vpop.f32.mrb[0].mxu0
  %v656 = vpop.f32.mrb[0].mxu0
  %v657 = vadd.f32 0.0, %v656
  %v658 = vpop.f32.mrb[0].mxu0
  %659 = vmatprep.mubr.bf16.mxu0 0
  %660 = vmatmul.mubr.bf16.gmra.mrb[0].mxu0 %v375
  %v661 = vpop.f32.mrb[0].mxu0
  %v662 = vadd.f32 0.0, %v661
  %v663 = vpop.f32.mrb[0].mxu0
  %v664 = vpop.f32.mrb[0].mxu0
  %v665 = vadd.f32 0.0, %v664
  %v666 = vpop.f32.mrb[0].mxu0
  %667 = vmatprep.mubr.bf16.mxu0 0
  %668 = vmatmul.mubr.bf16.gmra.mrb[0].mxu0 %v376
  %v669 = vpop.f32.mrb[0].mxu0
  %v670 = vadd.f32 0.0, %v669
  %v671 = vpop.f32.mrb[0].mxu0
  %v672 = vpop.f32.mrb[0].mxu0
  %v673 = vadd.f32 0.0, %v672
  %v674 = vpop.f32.mrb[0].mxu0
  %675 = vmatprep.mubr.bf16.mxu0 0
  %676 = vmatmul.mubr.bf16.gmra.mrb[0].mxu0 %v377
  %v677 = vpop.f32.mrb[0].mxu0
  %v678 = vadd.f32 0.0, %v677
  %v679 = vpop.f32.mrb[0].mxu0
  %v680 = vpop.f32.mrb[0].mxu0
  %v681 = vadd.f32 0.0, %v680
  %v682 = vpop.f32.mrb[0].mxu0
  %683 = vmatprep.mubr.bf16.mxu0 0
  %684 = vmatmul.mubr.bf16.gmra.mrb[0].mxu0 %v378
  %v685 = vpop.f32.mrb[0].mxu0
  %v686 = vadd.f32 0.0, %v685
  %v687 = vpop.f32.mrb[0].mxu0
  %v688 = vpop.f32.mrb[0].mxu0
  %v689 = vadd.f32 0.0, %v688
  %v690 = vpop.f32.mrb[0].mxu0
  %691 = vmatprep.mubr.bf16.mxu0 0
  %692 = vmatmul.mubr.bf16.gmra.mrb[0].mxu0 %v379
  %v693 = vpop.f32.mrb[0].mxu0
  %v694 = vadd.f32 0.0, %v693
  %v695 = vpop.f32.mrb[0].mxu0
  %v696 = vpop.f32.mrb[0].mxu0
  %v697 = vadd.f32 0.0, %v696
  %v698 = vpop.f32.mrb[0].mxu0
  %699 = vmatprep.mubr.bf16.mxu0 0
  %700 = vmatmul.mubr.bf16.gmra.mrb[0].mxu0 %v380
  %v701 = vpop.f32.mrb[0].mxu0
  %v702 = vadd.f32 0.0, %v701
  %v703 = vpop.f32.mrb[0].mxu0
  %v704 = vpop.f32.mrb[0].mxu0
  %v705 = vadd.f32 0.0, %v704
  %v706 = vpop.f32.mrb[0].mxu0
  %707 = vmatprep.mubr.bf16.mxu0 0
  %708 = vmatmul.mubr.bf16.gmra.mrb[0].mxu0 %v381
  %v709 = vpop.f32.mrb[0].mxu0
  %v710 = vadd.f32 0.0, %v709
  %v711 = vpop.f32.mrb[0].mxu0
  %v712 = vpop.f32.mrb[0].mxu0
  %v713 = vadd.f32 0.0, %v712
  %v714 = vpop.f32.mrb[0].mxu0
  %715 = vmatprep.mubr.bf16.mxu0 0
  %716 = vmatmul.mubr.bf16.gmra.mrb[0].mxu0 %v382
  %v717 = vpop.f32.mrb[0].mxu0
  %v718 = vadd.f32 0.0, %v717
  %v719 = vpop.f32.mrb[0].mxu0
  %v720 = vpop.f32.mrb[0].mxu0
  %v721 = vadd.f32 0.0, %v720
  %v722 = vpop.f32.mrb[0].mxu0
  %723 = vmatprep.mubr.bf16.mxu0 0
  %724 = vmatmul.mubr.bf16.gmra.mrb[0].mxu0 %v383
  %v725 = vpop.f32.mrb[0].mxu0
  %v726 = vadd.f32 0.0, %v725
  %v727 = vpop.f32.mrb[0].mxu0
  %v728 = vpop.f32.mrb[0].mxu0
  %v729 = vadd.f32 0.0, %v728
  %v730 = vpop.f32.mrb[0].mxu0
  %731 = vmatprep.mubr.bf16.mxu0 0
  %732 = vmatmul.mubr.bf16.gmra.mrb[0].mxu0 %v384
  %v733 = vpop.f32.mrb[0].mxu0
  %v734 = vadd.f32 0.0, %v733
  %v735 = vpop.f32.mrb[0].mxu0
  %v736 = vpop.f32.mrb[0].mxu0
  %v737 = vadd.f32 0.0, %v736
  %v738 = vpop.f32.mrb[0].mxu0
  %739 = vmatprep.mubr.bf16.mxu0 0
  %740 = vmatmul.mubr.bf16.gmra.mrb[0].mxu0 %v385
  %v741 = vpop.f32.mrb[0].mxu0
  %v742 = vadd.f32 0.0, %v741
  %v743 = vpop.f32.mrb[0].mxu0
  %v744 = vpop.f32.mrb[0].mxu0
  %v745 = vadd.f32 0.0, %v744
  %v746 = vpop.f32.mrb[0].mxu0
  %747 = vmatprep.mubr.bf16.mxu0 0
  %748 = vmatmul.mubr.bf16.gmra.mrb[0].mxu0 %v386
  %v749 = vpop.f32.mrb[0].mxu0
  %v750 = vadd.f32 0.0, %v749
  %v751 = vpop.f32.mrb[0].mxu0
  %v752 = vpop.f32.mrb[0].mxu0
  %v753 = vadd.f32 0.0, %v752
  %v754 = vpop.f32.mrb[0].mxu0
  %755 = vdwg.mxu0
  %v756 = vadd.f32 %v83, %v502
  %v757 = vadd.f32 %v84, %v505
  %v758 = vadd.f32 %v85, %v510
  %v759 = vadd.f32 %v86, %v513
  %v760 = vadd.f32 %v87, %v518
  %v761 = vadd.f32 %v88, %v521
  %v762 = vadd.f32 %v89, %v526
  %v763 = vadd.f32 %v90, %v529
  %v764 = vadd.f32 %v91, %v534
  %v765 = vadd.f32 %v92, %v537
  %v766 = vadd.f32 %v93, %v542
  %v767 = vadd.f32 %v94, %v545
  %v768 = vadd.f32 %v95, %v550
  %v769 = vadd.f32 %v96, %v553
  %v770 = vadd.f32 %v97, %v558
  %v771 = vadd.f32 %v98, %v561
  %v772 = vadd.f32 %v99, %v566
  %v773 = vadd.f32 %v100, %v569
  %v774 = vadd.f32 %v101, %v574
  %v775 = vadd.f32 %v102, %v577
  %v776 = vadd.f32 %v103, %v582
  %v777 = vadd.f32 %v104, %v585
  %v778 = vadd.f32 %v105, %v590
  %v779 = vadd.f32 %v106, %v593
  %v780 = vadd.f32 %v107, %v598
  %v781 = vadd.f32 %v108, %v601
  %v782 = vadd.f32 %v109, %v606
  %v783 = vadd.f32 %v110, %v609
  %v784 = vadd.f32 %v111, %v614
  %v785 = vadd.f32 %v112, %v617
  %v786 = vadd.f32 %v113, %v622
  %v787 = vadd.f32 %v114, %v625
  %v788 = vadd.f32 %v115, %v630
  %v789 = vadd.f32 %v116, %v633
  %v790 = vadd.f32 %v117, %v638
  %v791 = vadd.f32 %v118, %v641
  %v792 = vadd.f32 %v119, %v646
  %v793 = vadd.f32 %v120, %v649
  %v794 = vadd.f32 %v121, %v654
  %v795 = vadd.f32 %v122, %v657
  %v796 = vadd.f32 %v123, %v662
  %v797 = vadd.f32 %v124, %v665
  %v798 = vadd.f32 %v125, %v670
  %v799 = vadd.f32 %v126, %v673
  %v800 = vadd.f32 %v127, %v678
  %v801 = vadd.f32 %v128, %v681
  %v802 = vadd.f32 %v129, %v686
  %v803 = vadd.f32 %v130, %v689
  %v804 = vadd.f32 %v131, %v694
  %v805 = vadd.f32 %v132, %v697
  %v806 = vadd.f32 %v133, %v702
  %v807 = vadd.f32 %v134, %v705
  %v808 = vadd.f32 %v135, %v710
  %v809 = vadd.f32 %v136, %v713
  %v810 = vadd.f32 %v137, %v718
  %v811 = vadd.f32 %v138, %v721
  %v812 = vadd.f32 %v139, %v726
  %v813 = vadd.f32 %v140, %v729
  %v814 = vadd.f32 %v141, %v734
  %v815 = vadd.f32 %v142, %v737
  %v816 = vadd.f32 %v143, %v742
  %v817 = vadd.f32 %v144, %v745
  %v818 = vadd.f32 %v145, %v750
  %v819 = vadd.f32 %v146, %v753
  %820 = vst [vmem:[#allocation2] sm:$0xff] %v756
  %821 = vst [vmem:[#allocation2 + $0x8] sm:$0xff] %v757
  %822 = vst [vmem:[#allocation2 + $0x10] sm:$0xff] %v758
  %823 = vst [vmem:[#allocation2 + $0x18] sm:$0xff] %v759
  %824 = vst [vmem:[#allocation2 + $0x20] sm:$0xff] %v760
  %825 = vst [vmem:[#allocation2 + $0x28] sm:$0xff] %v761
  %826 = vst [vmem:[#allocation2 + $0x30] sm:$0xff] %v762
  %827 = vst [vmem:[#allocation2 + $0x38] sm:$0xff] %v763
  %828 = vst [vmem:[#allocation2 + $0x40] sm:$0xff] %v764
  %829 = vst [vmem:[#allocation2 + $0x48] sm:$0xff] %v765
  %830 = vst [vmem:[#allocation2 + $0x50] sm:$0xff] %v766
  %831 = vst [vmem:[#allocation2 + $0x58] sm:$0xff] %v767
  %832 = vst [vmem:[#allocation2 + $0x60] sm:$0xff] %v768
  %833 = vst [vmem:[#allocation2 + $0x68] sm:$0xff] %v769
  %834 = vst [vmem:[#allocation2 + $0x70] sm:$0xff] %v770
  %835 = vst [vmem:[#allocation2 + $0x78] sm:$0xff] %v771
  %836 = vst [vmem:[#allocation2 + $0x80] sm:$0xff] %v772
  %837 = vst [vmem:[#allocation2 + $0x88] sm:$0xff] %v773
  %838 = vst [vmem:[#allocation2 + $0x90] sm:$0xff] %v774
  %839 = vst [vmem:[#allocation2 + $0x98] sm:$0xff] %v775
  %840 = vst [vmem:[#allocation2 + $0xa0] sm:$0xff] %v776
  %841 = vst [vmem:[#allocation2 + $0xa8] sm:$0xff] %v777
  %842 = vst [vmem:[#allocation2 + $0xb0] sm:$0xff] %v778
  %843 = vst [vmem:[#allocation2 + $0xb8] sm:$0xff] %v779
  %844 = vst [vmem:[#allocation2 + $0xc0] sm:$0xff] %v780
  %845 = vst [vmem:[#allocation2 + $0xc8] sm:$0xff] %v781
  %846 = vst [vmem:[#allocation2 + $0xd0] sm:$0xff] %v782
  %847 = vst [vmem:[#allocation2 + $0xd8] sm:$0xff] %v783
  %848 = vst [vmem:[#allocation2 + $0xe0] sm:$0xff] %v784
  %849 = vst [vmem:[#allocation2 + $0xe8] sm:$0xff] %v785
  %850 = vst [vmem:[#allocation2 + $0xf0] sm:$0xff] %v786
  %851 = vst [vmem:[#allocation2 + $0xf8] sm:$0xff] %v787
  %852 = vst [vmem:[#allocation2 + $0x100] sm:$0xff] %v788
  %853 = vst [vmem:[#allocation2 + $0x108] sm:$0xff] %v789
  %854 = vst [vmem:[#allocation2 + $0x110] sm:$0xff] %v790
  %855 = vst [vmem:[#allocation2 + $0x118] sm:$0xff] %v791
  %856 = vst [vmem:[#allocation2 + $0x120] sm:$0xff] %v792
  %857 = vst [vmem:[#allocation2 + $0x128] sm:$0xff] %v793
  %858 = vst [vmem:[#allocation2 + $0x130] sm:$0xff] %v794
  %859 = vst [vmem:[#allocation2 + $0x138] sm:$0xff] %v795
  %860 = vst [vmem:[#allocation2 + $0x140] sm:$0xff] %v796
  %861 = vst [vmem:[#allocation2 + $0x148] sm:$0xff] %v797
  %862 = vst [vmem:[#allocation2 + $0x150] sm:$0xff] %v798
  %863 = vst [vmem:[#allocation2 + $0x158] sm:$0xff] %v799
  %864 = vst [vmem:[#allocation2 + $0x160] sm:$0xff] %v800
  %865 = vst [vmem:[#allocation2 + $0x168] sm:$0xff] %v801
  %866 = vst [vmem:[#allocation2 + $0x170] sm:$0xff] %v802
  %867 = vst [vmem:[#allocation2 + $0x178] sm:$0xff] %v803
  %868 = vst [vmem:[#allocation2 + $0x180] sm:$0xff] %v804
  %869 = vst [vmem:[#allocation2 + $0x188] sm:$0xff] %v805
  %870 = vst [vmem:[#allocation2 + $0x190] sm:$0xff] %v806
  %871 = vst [vmem:[#allocation2 + $0x198] sm:$0xff] %v807
  %872 = vst [vmem:[#allocation2 + $0x1a0] sm:$0xff] %v808
  %873 = vst [vmem:[#allocation2 + $0x1a8] sm:$0xff] %v809
  %874 = vst [vmem:[#allocation2 + $0x1b0] sm:$0xff] %v810
  %875 = vst [vmem:[#allocation2 + $0x1b8] sm:$0xff] %v811
  %876 = vst [vmem:[#allocation2 + $0x1c0] sm:$0xff] %v812
  %877 = vst [vmem:[#allocation2 + $0x1c8] sm:$0xff] %v813
  %878 = vst [vmem:[#allocation2 + $0x1d0] sm:$0xff] %v814
  %879 = vst [vmem:[#allocation2 + $0x1d8] sm:$0xff] %v815
  %880 = vst [vmem:[#allocation2 + $0x1e0] sm:$0xff] %v816
  %881 = vst [vmem:[#allocation2 + $0x1e8] sm:$0xff] %v817
  %882 = vst [vmem:[#allocation2 + $0x1f0] sm:$0xff] %v818
  %883 = vst [vmem:[#allocation2 + $0x1f8] sm:$0xff] %v819
  // Predicated region
  $region14: #{discriminator_forward.8} parent=0 // pred_check
    %p884 = pneg %p15
  $region15: #{discriminator_forward.8} parent=0 // pred_check_branch
    %886 = sbr.rel (%p884) target = $region17
  $region16: #{discriminator_forward.8} parent=0 // pred_region
    %v887 = vld [vmem:[#allocation2] sm:$0xff]
    %v888 = vld [vmem:[#allocation2 + $0x8] sm:$0xff]
    %v889 = vld [vmem:[#allocation2 + $0x10] sm:$0xff]
    %v890 = vld [vmem:[#allocation2 + $0x18] sm:$0xff]
    %v891 = vld [vmem:[#allocation2 + $0x20] sm:$0xff]
    %v892 = vld [vmem:[#allocation2 + $0x28] sm:$0xff]
    %v893 = vld [vmem:[#allocation2 + $0x30] sm:$0xff]
    %v894 = vld [vmem:[#allocation2 + $0x38] sm:$0xff]
    %v895 = vld [vmem:[#allocation2 + $0x40] sm:$0xff]
    %v896 = vld [vmem:[#allocation2 + $0x48] sm:$0xff]
    %v897 = vld [vmem:[#allocation2 + $0x50] sm:$0xff]
    %v898 = vld [vmem:[#allocation2 + $0x58] sm:$0xff]
    %v899 = vld [vmem:[#allocation2 + $0x60] sm:$0xff]
    %v900 = vld [vmem:[#allocation2 + $0x68] sm:$0xff]
    %v901 = vld [vmem:[#allocation2 + $0x70] sm:$0xff]
    %v902 = vld [vmem:[#allocation2 + $0x78] sm:$0xff]
    %v903 = vld [vmem:[#allocation2 + $0x80] sm:$0xff]
    %v904 = vld [vmem:[#allocation2 + $0x88] sm:$0xff]
    %v905 = vld [vmem:[#allocation2 + $0x90] sm:$0xff]
    %v906 = vld [vmem:[#allocation2 + $0x98] sm:$0xff]
    %v907 = vld [vmem:[#allocation2 + $0xa0] sm:$0xff]
    %v908 = vld [vmem:[#allocation2 + $0xa8] sm:$0xff]
    %v909 = vld [vmem:[#allocation2 + $0xb0] sm:$0xff]
    %v910 = vld [vmem:[#allocation2 + $0xb8] sm:$0xff]
    %v911 = vld [vmem:[#allocation2 + $0xc0] sm:$0xff]
    %v912 = vld [vmem:[#allocation2 + $0xc8] sm:$0xff]
    %v913 = vld [vmem:[#allocation2 + $0xd0] sm:$0xff]
    %v914 = vld [vmem:[#allocation2 + $0xd8] sm:$0xff]
    %v915 = vld [vmem:[#allocation2 + $0xe0] sm:$0xff]
    %v916 = vld [vmem:[#allocation2 + $0xe8] sm:$0xff]
    %v917 = vld [vmem:[#allocation2 + $0xf0] sm:$0xff]
    %v918 = vld [vmem:[#allocation2 + $0xf8] sm:$0xff]
    %v919 = vld [vmem:[#allocation2 + $0x100] sm:$0xff]
    %v920 = vld [vmem:[#allocation2 + $0x108] sm:$0xff]
    %v921 = vld [vmem:[#allocation2 + $0x110] sm:$0xff]
    %v922 = vld [vmem:[#allocation2 + $0x118] sm:$0xff]
    %v923 = vld [vmem:[#allocation2 + $0x120] sm:$0xff]
    %v924 = vld [vmem:[#allocation2 + $0x128] sm:$0xff]
    %v925 = vld [vmem:[#allocation2 + $0x130] sm:$0xff]
    %v926 = vld [vmem:[#allocation2 + $0x138] sm:$0xff]
    %v927 = vld [vmem:[#allocation2 + $0x140] sm:$0xff]
    %v928 = vld [vmem:[#allocation2 + $0x148] sm:$0xff]
    %v929 = vld [vmem:[#allocation2 + $0x150] sm:$0xff]
    %v930 = vld [vmem:[#allocation2 + $0x158] sm:$0xff]
    %v931 = vld [vmem:[#allocation2 + $0x160] sm:$0xff]
    %v932 = vld [vmem:[#allocation2 + $0x168] sm:$0xff]
    %v933 = vld [vmem:[#allocation2 + $0x170] sm:$0xff]
    %v934 = vld [vmem:[#allocation2 + $0x178] sm:$0xff]
    %v935 = vld [vmem:[#allocation2 + $0x180] sm:$0xff]
    %v936 = vld [vmem:[#allocation2 + $0x188] sm:$0xff]
    %v937 = vld [vmem:[#allocation2 + $0x190] sm:$0xff]
    %v938 = vld [vmem:[#allocation2 + $0x198] sm:$0xff]
    %v939 = vld [vmem:[#allocation2 + $0x1a0] sm:$0xff]
    %v940 = vld [vmem:[#allocation2 + $0x1a8] sm:$0xff]
    %v941 = vld [vmem:[#allocation2 + $0x1b0] sm:$0xff]
    %v942 = vld [vmem:[#allocation2 + $0x1b8] sm:$0xff]
    %v943 = vld [vmem:[#allocation2 + $0x1c0] sm:$0xff]
    %v944 = vld [vmem:[#allocation2 + $0x1c8] sm:$0xff]
    %v945 = vld [vmem:[#allocation2 + $0x1d0] sm:$0xff]
    %v946 = vld [vmem:[#allocation2 + $0x1d8] sm:$0xff]
    %v947 = vld [vmem:[#allocation2 + $0x1e0] sm:$0xff]
    %v948 = vld [vmem:[#allocation2 + $0x1e8] sm:$0xff]
    %v949 = vld [vmem:[#allocation2 + $0x1f0] sm:$0xff]
    %v950 = vld [vmem:[#allocation2 + $0x1f8] sm:$0xff]
    %v951 = vpack.c.bf16 %v888, %v887
    %v952 = vpack.c.bf16 %v890, %v889
    %v953 = vpack.c.bf16 %v892, %v891
    %v954 = vpack.c.bf16 %v894, %v893
    %v955 = vpack.c.bf16 %v896, %v895
    %v956 = vpack.c.bf16 %v898, %v897
    %v957 = vpack.c.bf16 %v900, %v899
    %v958 = vpack.c.bf16 %v902, %v901
    %v959 = vpack.c.bf16 %v904, %v903
    %v960 = vpack.c.bf16 %v906, %v905
    %v961 = vpack.c.bf16 %v908, %v907
    %v962 = vpack.c.bf16 %v910, %v909
    %v963 = vpack.c.bf16 %v912, %v911
    %v964 = vpack.c.bf16 %v914, %v913
    %v965 = vpack.c.bf16 %v916, %v915
    %v966 = vpack.c.bf16 %v918, %v917
    %v967 = vpack.c.bf16 %v920, %v919
    %v968 = vpack.c.bf16 %v922, %v921
    %v969 = vpack.c.bf16 %v924, %v923
    %v970 = vpack.c.bf16 %v926, %v925
    %v971 = vpack.c.bf16 %v928, %v927
    %v972 = vpack.c.bf16 %v930, %v929
    %v973 = vpack.c.bf16 %v932, %v931
    %v974 = vpack.c.bf16 %v934, %v933
    %v975 = vpack.c.bf16 %v936, %v935
    %v976 = vpack.c.bf16 %v938, %v937
    %v977 = vpack.c.bf16 %v940, %v939
    %v978 = vpack.c.bf16 %v942, %v941
    %v979 = vpack.c.bf16 %v944, %v943
    %v980 = vpack.c.bf16 %v946, %v945
    %v981 = vpack.c.bf16 %v948, %v947
    %v982 = vpack.c.bf16 %v950, %v949
    %v1015 = vunpack.c.l.b16 %v951
    %v1016 = vunpack.c.h.b16 %v951
    %v1017 = vunpack.c.l.b16 %v952
    %v1018 = vunpack.c.h.b16 %v952
    %v1019 = vunpack.c.l.b16 %v953
    %v1020 = vunpack.c.h.b16 %v953
    %v1021 = vunpack.c.l.b16 %v954
    %v1022 = vunpack.c.h.b16 %v954
    %v1023 = vunpack.c.l.b16 %v955
    %v1024 = vunpack.c.h.b16 %v955
    %v1025 = vunpack.c.l.b16 %v956
    %v1026 = vunpack.c.h.b16 %v956
    %v1027 = vunpack.c.l.b16 %v957
    %v1028 = vunpack.c.h.b16 %v957
    %v1029 = vunpack.c.l.b16 %v958
    %v1030 = vunpack.c.h.b16 %v958
    %v1031 = vunpack.c.l.b16 %v959
    %v1032 = vunpack.c.h.b16 %v959
    %v1033 = vunpack.c.l.b16 %v960
    %v1034 = vunpack.c.h.b16 %v960
    %v1035 = vunpack.c.l.b16 %v961
    %v1036 = vunpack.c.h.b16 %v961
    %v1037 = vunpack.c.l.b16 %v962
    %v1038 = vunpack.c.h.b16 %v962
    %v1039 = vunpack.c.l.b16 %v963
    %v1040 = vunpack.c.h.b16 %v963
    %v1041 = vunpack.c.l.b16 %v964
    %v1042 = vunpack.c.h.b16 %v964
    %v1043 = vunpack.c.l.b16 %v965
    %v1044 = vunpack.c.h.b16 %v965
    %v1045 = vunpack.c.l.b16 %v966
    %v1046 = vunpack.c.h.b16 %v966
    %v1047 = vunpack.c.l.b16 %v967
    %v1048 = vunpack.c.h.b16 %v967
    %v1049 = vunpack.c.l.b16 %v968
    %v1050 = vunpack.c.h.b16 %v968
    %v1051 = vunpack.c.l.b16 %v969
    %v1052 = vunpack.c.h.b16 %v969
    %v1053 = vunpack.c.l.b16 %v970
    %v1054 = vunpack.c.h.b16 %v970
    %v1055 = vunpack.c.l.b16 %v971
    %v1056 = vunpack.c.h.b16 %v971
    %v1057 = vunpack.c.l.b16 %v972
    %v1058 = vunpack.c.h.b16 %v972
    %v1059 = vunpack.c.l.b16 %v973
    %v1060 = vunpack.c.h.b16 %v973
    %v1061 = vunpack.c.l.b16 %v974
    %v1062 = vunpack.c.h.b16 %v974
    %v1063 = vunpack.c.l.b16 %v975
    %v1064 = vunpack.c.h.b16 %v975
    %v1065 = vunpack.c.l.b16 %v976
    %v1066 = vunpack.c.h.b16 %v976
    %v1067 = vunpack.c.l.b16 %v977
    %v1068 = vunpack.c.h.b16 %v977
    %v1069 = vunpack.c.l.b16 %v978
    %v1070 = vunpack.c.h.b16 %v978
    %v1071 = vunpack.c.l.b16 %v979
    %v1072 = vunpack.c.h.b16 %v979
    %v1073 = vunpack.c.l.b16 %v980
    %v1074 = vunpack.c.h.b16 %v980
    %v1075 = vunpack.c.l.b16 %v981
    %v1076 = vunpack.c.h.b16 %v981
    %v1077 = vunpack.c.l.b16 %v982
    %v1078 = vunpack.c.h.b16 %v982
    %v1079 = vpack.c.b16 %v1015, %v1015
    %v1080 = vpack.c.b16 %v1016, %v1016
    %v1081 = vpack.c.b16 %v1017, %v1017
    %v1082 = vpack.c.b16 %v1018, %v1018
    %v1083 = vpack.c.b16 %v1019, %v1019
    %v1084 = vpack.c.b16 %v1020, %v1020
    %v1085 = vpack.c.b16 %v1021, %v1021
    %v1086 = vpack.c.b16 %v1022, %v1022
    %v1087 = vpack.c.b16 %v1023, %v1023
    %v1088 = vpack.c.b16 %v1024, %v1024
    %v1089 = vpack.c.b16 %v1025, %v1025
    %v1090 = vpack.c.b16 %v1026, %v1026
    %v1091 = vpack.c.b16 %v1027, %v1027
    %v1092 = vpack.c.b16 %v1028, %v1028
    %v1093 = vpack.c.b16 %v1029, %v1029
    %v1094 = vpack.c.b16 %v1030, %v1030
    %v1095 = vpack.c.b16 %v1031, %v1031
    %v1096 = vpack.c.b16 %v1032, %v1032
    %v1097 = vpack.c.b16 %v1033, %v1033
    %v1098 = vpack.c.b16 %v1034, %v1034
    %v1099 = vpack.c.b16 %v1035, %v1035
    %v1100 = vpack.c.b16 %v1036, %v1036
    %v1101 = vpack.c.b16 %v1037, %v1037
    %v1102 = vpack.c.b16 %v1038, %v1038
    %v1103 = vpack.c.b16 %v1039, %v1039
    %v1104 = vpack.c.b16 %v1040, %v1040
    %v1105 = vpack.c.b16 %v1041, %v1041
    %v1106 = vpack.c.b16 %v1042, %v1042
    %v1107 = vpack.c.b16 %v1043, %v1043
    %v1108 = vpack.c.b16 %v1044, %v1044
    %v1109 = vpack.c.b16 %v1045, %v1045
    %v1110 = vpack.c.b16 %v1046, %v1046
    %v1111 = vpack.c.b16 %v1047, %v1047
    %v1112 = vpack.c.b16 %v1048, %v1048
    %v1113 = vpack.c.b16 %v1049, %v1049
    %v1114 = vpack.c.b16 %v1050, %v1050
    %v1115 = vpack.c.b16 %v1051, %v1051
    %v1116 = vpack.c.b16 %v1052, %v1052
    %v1117 = vpack.c.b16 %v1053, %v1053
    %v1118 = vpack.c.b16 %v1054, %v1054
    %v1119 = vpack.c.b16 %v1055, %v1055
    %v1120 = vpack.c.b16 %v1056, %v1056
    %v1121 = vpack.c.b16 %v1057, %v1057
    %v1122 = vpack.c.b16 %v1058, %v1058
    %v1123 = vpack.c.b16 %v1059, %v1059
    %v1124 = vpack.c.b16 %v1060, %v1060
    %v1125 = vpack.c.b16 %v1061, %v1061
    %v1126 = vpack.c.b16 %v1062, %v1062
    %v1127 = vpack.c.b16 %v1063, %v1063
    %v1128 = vpack.c.b16 %v1064, %v1064
    %v1129 = vpack.c.b16 %v1065, %v1065
    %v1130 = vpack.c.b16 %v1066, %v1066
    %v1131 = vpack.c.b16 %v1067, %v1067
    %v1132 = vpack.c.b16 %v1068, %v1068
    %v1133 = vpack.c.b16 %v1069, %v1069
    %v1134 = vpack.c.b16 %v1070, %v1070
    %v1135 = vpack.c.b16 %v1071, %v1071
    %v1136 = vpack.c.b16 %v1072, %v1072
    %v1137 = vpack.c.b16 %v1073, %v1073
    %v1138 = vpack.c.b16 %v1074, %v1074
    %v1139 = vpack.c.b16 %v1075, %v1075
    %v1140 = vpack.c.b16 %v1076, %v1076
    %v1141 = vpack.c.b16 %v1077, %v1077
    %v1142 = vpack.c.b16 %v1078, %v1078
    %1207 = vst [vmem:[%s2] sm:$0xf] %v1079
    %1208 = vst [vmem:[%s2 + $0x4] sm:$0xf] %v1080
    %1209 = vst [vmem:[%s2 + $0x8] sm:$0xf] %v1081
    %1210 = vst [vmem:[%s2 + $0xc] sm:$0xf] %v1082
    %1211 = vst [vmem:[%s2 + $0x10] sm:$0xf] %v1083
    %1212 = vst [vmem:[%s2 + $0x14] sm:$0xf] %v1084
    %1213 = vst [vmem:[%s2 + $0x18] sm:$0xf] %v1085
    %1214 = vst [vmem:[%s2 + $0x1c] sm:$0xf] %v1086
    %1215 = vst [vmem:[%s2 + $0x20] sm:$0xf] %v1087
    %1216 = vst [vmem:[%s2 + $0x24] sm:$0xf] %v1088
    %1217 = vst [vmem:[%s2 + $0x28] sm:$0xf] %v1089
    %1218 = vst [vmem:[%s2 + $0x2c] sm:$0xf] %v1090
    %1219 = vst [vmem:[%s2 + $0x30] sm:$0xf] %v1091
    %1220 = vst [vmem:[%s2 + $0x34] sm:$0xf] %v1092
    %1221 = vst [vmem:[%s2 + $0x38] sm:$0xf] %v1093
    %1222 = vst [vmem:[%s2 + $0x3c] sm:$0xf] %v1094
    %1223 = vst [vmem:[%s2 + $0x40] sm:$0xf] %v1095
    %1224 = vst [vmem:[%s2 + $0x44] sm:$0xf] %v1096
    %1225 = vst [vmem:[%s2 + $0x48] sm:$0xf] %v1097
    %1226 = vst [vmem:[%s2 + $0x4c] sm:$0xf] %v1098
    %1227 = vst [vmem:[%s2 + $0x50] sm:$0xf] %v1099
    %1228 = vst [vmem:[%s2 + $0x54] sm:$0xf] %v1100
    %1229 = vst [vmem:[%s2 + $0x58] sm:$0xf] %v1101
    %1230 = vst [vmem:[%s2 + $0x5c] sm:$0xf] %v1102
    %1231 = vst [vmem:[%s2 + $0x60] sm:$0xf] %v1103
    %1232 = vst [vmem:[%s2 + $0x64] sm:$0xf] %v1104
    %1233 = vst [vmem:[%s2 + $0x68] sm:$0xf] %v1105
    %1234 = vst [vmem:[%s2 + $0x6c] sm:$0xf] %v1106
    %1235 = vst [vmem:[%s2 + $0x70] sm:$0xf] %v1107
    %1236 = vst [vmem:[%s2 + $0x74] sm:$0xf] %v1108
    %1237 = vst [vmem:[%s2 + $0x78] sm:$0xf] %v1109
    %1238 = vst [vmem:[%s2 + $0x7c] sm:$0xf] %v1110
    %1239 = vst [vmem:[%s2 + $0x80] sm:$0xf] %v1111
    %1240 = vst [vmem:[%s2 + $0x84] sm:$0xf] %v1112
    %1241 = vst [vmem:[%s2 + $0x88] sm:$0xf] %v1113
    %1242 = vst [vmem:[%s2 + $0x8c] sm:$0xf] %v1114
    %1243 = vst [vmem:[%s2 + $0x90] sm:$0xf] %v1115
    %1244 = vst [vmem:[%s2 + $0x94] sm:$0xf] %v1116
    %1245 = vst [vmem:[%s2 + $0x98] sm:$0xf] %v1117
    %1246 = vst [vmem:[%s2 + $0x9c] sm:$0xf] %v1118
    %1247 = vst [vmem:[%s2 + $0xa0] sm:$0xf] %v1119
    %1248 = vst [vmem:[%s2 + $0xa4] sm:$0xf] %v1120
    %1249 = vst [vmem:[%s2 + $0xa8] sm:$0xf] %v1121
    %1250 = vst [vmem:[%s2 + $0xac] sm:$0xf] %v1122
    %1251 = vst [vmem:[%s2 + $0xb0] sm:$0xf] %v1123
    %1252 = vst [vmem:[%s2 + $0xb4] sm:$0xf] %v1124
    %1253 = vst [vmem:[%s2 + $0xb8] sm:$0xf] %v1125
    %1254 = vst [vmem:[%s2 + $0xbc] sm:$0xf] %v1126
    %1255 = vst [vmem:[%s2 + $0xc0] sm:$0xf] %v1127
    %1256 = vst [vmem:[%s2 + $0xc4] sm:$0xf] %v1128
    %1257 = vst [vmem:[%s2 + $0xc8] sm:$0xf] %v1129
    %1258 = vst [vmem:[%s2 + $0xcc] sm:$0xf] %v1130
    %1259 = vst [vmem:[%s2 + $0xd0] sm:$0xf] %v1131
    %1260 = vst [vmem:[%s2 + $0xd4] sm:$0xf] %v1132
    %1261 = vst [vmem:[%s2 + $0xd8] sm:$0xf] %v1133
    %1262 = vst [vmem:[%s2 + $0xdc] sm:$0xf] %v1134
    %1263 = vst [vmem:[%s2 + $0xe0] sm:$0xf] %v1135
    %1264 = vst [vmem:[%s2 + $0xe4] sm:$0xf] %v1136
    %1265 = vst [vmem:[%s2 + $0xe8] sm:$0xf] %v1137
    %1266 = vst [vmem:[%s2 + $0xec] sm:$0xf] %v1138
    %1267 = vst [vmem:[%s2 + $0xf0] sm:$0xf] %v1139
    %1268 = vst [vmem:[%s2 + $0xf4] sm:$0xf] %v1140
    %1269 = vst [vmem:[%s2 + $0xf8] sm:$0xf] %v1141
    %1270 = vst [vmem:[%s2 + $0xfc] sm:$0xf] %v1142
    %v1271 = vadd.f32 %v887, %v888
    %v1272 = vadd.f32 %v1271, %v889
    %v1273 = vadd.f32 %v1272, %v890
    %v1274 = vadd.f32 %v1273, %v891
    %v1275 = vadd.f32 %v1274, %v892
    %v1276 = vadd.f32 %v1275, %v893
    %v1277 = vadd.f32 %v1276, %v894
    %v1278 = vadd.f32 %v1277, %v895
    %v1279 = vadd.f32 %v1278, %v896
    %v1280 = vadd.f32 %v1279, %v897
    %v1281 = vadd.f32 %v1280, %v898
    %v1282 = vadd.f32 %v1281, %v899
    %v1283 = vadd.f32 %v1282, %v900
    %v1284 = vadd.f32 %v1283, %v901
    %v1285 = vadd.f32 %v1284, %v902
    %v1286 = vadd.f32 %v1285, %v903
    %v1287 = vadd.f32 %v1286, %v904
    %v1288 = vadd.f32 %v1287, %v905
    %v1289 = vadd.f32 %v1288, %v906
    %v1290 = vadd.f32 %v1289, %v907
    %v1291 = vadd.f32 %v1290, %v908
    %v1292 = vadd.f32 %v1291, %v909
    %v1293 = vadd.f32 %v1292, %v910
    %v1294 = vadd.f32 %v1293, %v911
    %v1295 = vadd.f32 %v1294, %v912
    %v1296 = vadd.f32 %v1295, %v913
    %v1297 = vadd.f32 %v1296, %v914
    %v1298 = vadd.f32 %v1297, %v915
    %v1299 = vadd.f32 %v1298, %v916
    %v1300 = vadd.f32 %v1299, %v917
    %v1301 = vadd.f32 %v1300, %v918
    %v1302 = vadd.f32 %v1301, %v919
    %v1303 = vadd.f32 %v1302, %v920
    %v1304 = vadd.f32 %v1303, %v921
    %v1305 = vadd.f32 %v1304, %v922
    %v1306 = vadd.f32 %v1305, %v923
    %v1307 = vadd.f32 %v1306, %v924
    %v1308 = vadd.f32 %v1307, %v925
    %v1309 = vadd.f32 %v1308, %v926
    %v1310 = vadd.f32 %v1309, %v927
    %v1311 = vadd.f32 %v1310, %v928
    %v1312 = vadd.f32 %v1311, %v929
    %v1313 = vadd.f32 %v1312, %v930
    %v1314 = vadd.f32 %v1313, %v931
    %v1315 = vadd.f32 %v1314, %v932
    %v1316 = vadd.f32 %v1315, %v933
    %v1317 = vadd.f32 %v1316, %v934
    %v1318 = vadd.f32 %v1317, %v935
    %v1319 = vadd.f32 %v1318, %v936
    %v1320 = vadd.f32 %v1319, %v937
    %v1321 = vadd.f32 %v1320, %v938
    %v1322 = vadd.f32 %v1321, %v939
    %v1323 = vadd.f32 %v1322, %v940
    %v1324 = vadd.f32 %v1323, %v941
    %v1325 = vadd.f32 %v1324, %v942
    %v1326 = vadd.f32 %v1325, %v943
    %v1327 = vadd.f32 %v1326, %v944
    %v1328 = vadd.f32 %v1327, %v945
    %v1329 = vadd.f32 %v1328, %v946
    %v1330 = vadd.f32 %v1329, %v947
    %v1331 = vadd.f32 %v1330, %v948
    %v1332 = vadd.f32 %v1331, %v949
    %v1333 = vadd.f32 %v1332, %v950
    %v1334 = vrot.slane %v1333, 4
    %v1335 = vadd.f32 %v1333, %v1334
    %v1336 = vrot.slane %v1335, 2
    %v1337 = vadd.f32 %v1335, %v1336
    %v1338 = vrot.slane %v1337, 1
    %v1339 = vadd.f32 %v1337, %v1338
    %v1340 = vmul.f32 %v887, %v887
    %v1341 = vmul.f32 %v888, %v888
    %v1342 = vmul.f32 %v889, %v889
    %v1343 = vmul.f32 %v890, %v890
    %v1344 = vmul.f32 %v891, %v891
    %v1345 = vmul.f32 %v892, %v892
    %v1346 = vmul.f32 %v893, %v893
    %v1347 = vmul.f32 %v894, %v894
    %v1348 = vmul.f32 %v895, %v895
    %v1349 = vmul.f32 %v896, %v896
    %v1350 = vmul.f32 %v897, %v897
    %v1351 = vmul.f32 %v898, %v898
    %v1352 = vmul.f32 %v899, %v899
    %v1353 = vmul.f32 %v900, %v900
    %v1354 = vmul.f32 %v901, %v901
    %v1355 = vmul.f32 %v902, %v902
    %v1356 = vmul.f32 %v903, %v903
    %v1357 = vmul.f32 %v904, %v904
    %v1358 = vmul.f32 %v905, %v905
    %v1359 = vmul.f32 %v906, %v906
    %v1360 = vmul.f32 %v907, %v907
    %v1361 = vmul.f32 %v908, %v908
    %v1362 = vmul.f32 %v909, %v909
    %v1363 = vmul.f32 %v910, %v910
    %v1364 = vmul.f32 %v911, %v911
    %v1365 = vmul.f32 %v912, %v912
    %v1366 = vmul.f32 %v913, %v913
    %v1367 = vmul.f32 %v914, %v914
    %v1368 = vmul.f32 %v915, %v915
    %v1369 = vmul.f32 %v916, %v916
    %v1370 = vmul.f32 %v917, %v917
    %v1371 = vmul.f32 %v918, %v918
    %v1372 = vmul.f32 %v919, %v919
    %v1373 = vmul.f32 %v920, %v920
    %v1374 = vmul.f32 %v921, %v921
    %v1375 = vmul.f32 %v922, %v922
    %v1376 = vmul.f32 %v923, %v923
    %v1377 = vmul.f32 %v924, %v924
    %v1378 = vmul.f32 %v925, %v925
    %v1379 = vmul.f32 %v926, %v926
    %v1380 = vmul.f32 %v927, %v927
    %v1381 = vmul.f32 %v928, %v928
    %v1382 = vmul.f32 %v929, %v929
    %v1383 = vmul.f32 %v930, %v930
    %v1384 = vmul.f32 %v931, %v931
    %v1385 = vmul.f32 %v932, %v932
    %v1386 = vmul.f32 %v933, %v933
    %v1387 = vmul.f32 %v934, %v934
    %v1388 = vmul.f32 %v935, %v935
    %v1389 = vmul.f32 %v936, %v936
    %v1390 = vmul.f32 %v937, %v937
    %v1391 = vmul.f32 %v938, %v938
    %v1392 = vmul.f32 %v939, %v939
    %v1393 = vmul.f32 %v940, %v940
    %v1394 = vmul.f32 %v941, %v941
    %v1395 = vmul.f32 %v942, %v942
    %v1396 = vmul.f32 %v943, %v943
    %v1397 = vmul.f32 %v944, %v944
    %v1398 = vmul.f32 %v945, %v945
    %v1399 = vmul.f32 %v946, %v946
    %v1400 = vmul.f32 %v947, %v947
    %v1401 = vmul.f32 %v948, %v948
    %v1402 = vmul.f32 %v949, %v949
    %v1403 = vmul.f32 %v950, %v950
    %v1404 = vadd.f32 %v1340, %v1341
    %v1405 = vadd.f32 %v1404, %v1342
    %v1406 = vadd.f32 %v1405, %v1343
    %v1407 = vadd.f32 %v1406, %v1344
    %v1408 = vadd.f32 %v1407, %v1345
    %v1409 = vadd.f32 %v1408, %v1346
    %v1410 = vadd.f32 %v1409, %v1347
    %v1411 = vadd.f32 %v1410, %v1348
    %v1412 = vadd.f32 %v1411, %v1349
    %v1413 = vadd.f32 %v1412, %v1350
    %v1414 = vadd.f32 %v1413, %v1351
    %v1415 = vadd.f32 %v1414, %v1352
    %v1416 = vadd.f32 %v1415, %v1353
    %v1417 = vadd.f32 %v1416, %v1354
    %v1418 = vadd.f32 %v1417, %v1355
    %v1419 = vadd.f32 %v1418, %v1356
    %v1420 = vadd.f32 %v1419, %v1357
    %v1421 = vadd.f32 %v1420, %v1358
    %v1422 = vadd.f32 %v1421, %v1359
    %v1423 = vadd.f32 %v1422, %v1360
    %v1424 = vadd.f32 %v1423, %v1361
    %v1425 = vadd.f32 %v1424, %v1362
    %v1426 = vadd.f32 %v1425, %v1363
    %v1427 = vadd.f32 %v1426, %v1364
    %v1428 = vadd.f32 %v1427, %v1365
    %v1429 = vadd.f32 %v1428, %v1366
    %v1430 = vadd.f32 %v1429, %v1367
    %v1431 = vadd.f32 %v1430, %v1368
    %v1432 = vadd.f32 %v1431, %v1369
    %v1433 = vadd.f32 %v1432, %v1370
    %v1434 = vadd.f32 %v1433, %v1371
    %v1435 = vadd.f32 %v1434, %v1372
    %v1436 = vadd.f32 %v1435, %v1373
    %v1437 = vadd.f32 %v1436, %v1374
    %v1438 = vadd.f32 %v1437, %v1375
    %v1439 = vadd.f32 %v1438, %v1376
    %v1440 = vadd.f32 %v1439, %v1377
    %v1441 = vadd.f32 %v1440, %v1378
    %v1442 = vadd.f32 %v1441, %v1379
    %v1443 = vadd.f32 %v1442, %v1380
    %v1444 = vadd.f32 %v1443, %v1381
    %v1445 = vadd.f32 %v1444, %v1382
    %v1446 = vadd.f32 %v1445, %v1383
    %v1447 = vadd.f32 %v1446, %v1384
    %v1448 = vadd.f32 %v1447, %v1385
    %v1449 = vadd.f32 %v1448, %v1386
    %v1450 = vadd.f32 %v1449, %v1387
    %v1451 = vadd.f32 %v1450, %v1388
    %v1452 = vadd.f32 %v1451, %v1389
    %v1453 = vadd.f32 %v1452, %v1390
    %v1454 = vadd.f32 %v1453, %v1391
    %v1455 = vadd.f32 %v1454, %v1392
    %v1456 = vadd.f32 %v1455, %v1393
    %v1457 = vadd.f32 %v1456, %v1394
    %v1458 = vadd.f32 %v1457, %v1395
    %v1459 = vadd.f32 %v1458, %v1396
    %v1460 = vadd.f32 %v1459, %v1397
    %v1461 = vadd.f32 %v1460, %v1398
    %v1462 = vadd.f32 %v1461, %v1399
    %v1463 = vadd.f32 %v1462, %v1400
    %v1464 = vadd.f32 %v1463, %v1401
    %v1465 = vadd.f32 %v1464, %v1402
    %v1466 = vadd.f32 %v1465, %v1403
    %v1467 = vrot.slane %v1466, 4
    %v1468 = vadd.f32 %v1466, %v1467
    %v1469 = vrot.slane %v1468, 2
    %v1470 = vadd.f32 %v1468, %v1469
    %v1471 = vrot.slane %v1470, 1
    %v1472 = vadd.f32 %v1470, %v1471
    %1473 = vst [vmem:[%s3] sm:$0xff] %v1339
    %1474 = vst [vmem:[%s4] sm:$0xff] %v1472
  $region17: #{discriminator_forward.8} parent=0 // pred_fallthru
    _
  // Predicated region
  $region18: #{discriminator_forward.8} parent=0 // pred_check
    _
  $region19: #{discriminator_forward.8} parent=0 // pred_check_branch
    %1476 = sbr.rel (0) target = $region21
  $region20: #{discriminator_forward.8} parent=0 // pred_region
    _
  $region21: #{discriminator_forward.8} parent=0 // pred_fallthru
    _
  // Predicated region
  $region22: #{discriminator_forward.8} parent=0 // pred_check
    _
  $region23: #{discriminator_forward.8} parent=0 // pred_check_branch
    %1478 = sbr.rel (0) target = $region25
  $region24: #{discriminator_forward.8} parent=0 // pred_region
    _
  $region25: #{discriminator_forward.8} parent=0 // pred_fallthru
    _
  // Predicated region
  $region26: #{discriminator_forward.8} parent=0 // pred_check
    _
  $region27: #{discriminator_forward.8} parent=0 // pred_check_branch
    %1480 = sbr.rel (0) target = $region29
  $region28: #{discriminator_forward.8} parent=0 // pred_region
    _
  $region29: #{discriminator_forward.8} parent=0 // pred_fallthru
    _
  // Predicated region
  $region30: #{discriminator_forward.8} parent=0 // pred_check
    _
  $region31: #{discriminator_forward.8} parent=0 // pred_check_branch
    %1482 = sbr.rel (0) target = $region33
  $region32: #{discriminator_forward.8} parent=0 // pred_region
    _
  $region33: #{discriminator_forward.8} parent=0 // pred_fallthru
    _
  // Predicated region
  $region34: #{discriminator_forward.8} parent=0 // pred_check
    _
  $region35: #{discriminator_forward.8} parent=0 // pred_check_branch
    %1484 = sbr.rel (0) target = $region37
  $region36: #{discriminator_forward.8} parent=0 // pred_region
    _
  $region37: #{discriminator_forward.8} parent=0 // pred_fallthru
    _
  // Predicated region
  $region38: #{discriminator_forward.8} parent=0 // pred_check
    _
  $region39: #{discriminator_forward.8} parent=0 // pred_check_branch
    %1486 = sbr.rel (0) target = $region41
  $region40: #{discriminator_forward.8} parent=0 // pred_region
    _
  $region41: #{discriminator_forward.8} parent=0 // pred_fallthru
    _

// kernel: discriminator_forward.9
$region0: #{discriminator_forward.9}
  #allocation0 [shape = 'u32[]', space=smem, size = 0x4, offset = 0x4, fixed_abs, tag = 'smem constant byte address 0x4 - core index']
  #allocation1 [shape = 'u32[144,128]{1,0:T(1,128)}', space=vmem, size = 0x12000, scoped, tag = 'internal scratch']
  %s0 = inlined_call_operand.vmem [shape: bf16[512,128], index: 0, kind: input, shape index: {}]
  %s1 = inlined_call_operand.vmem [shape: f32[1,128], index: 1, kind: input, shape index: {}]
  %s2 = inlined_call_operand.vmem [shape: f32[1,128], index: 2, kind: input, shape index: {}]
  %s3 = inlined_call_operand.vmem [shape: bf16[512,128], index: 3, kind: output, shape index: {}]
  %s4 = sld [smem:[#allocation0]]
  $region22: #{discriminator_forward.9} parent=0
    _
  %s6 = ssub.s32 1, %s4
  %s7 = scalar_select 0, %s6, %s4
  // Predicated region
  $region2: #{discriminator_forward.9} parent=0 // pred_check
    _
  $region3: #{discriminator_forward.9} parent=0 // pred_check_branch
    %9 = sbr.rel (0) target = $region5
  $region4: #{discriminator_forward.9} parent=0 // pred_region
    _
  $region5: #{discriminator_forward.9} parent=0 // pred_fallthru
    _
  // Predicated region
  $region6: #{discriminator_forward.9} parent=0 // pred_check
    _
  $region7: #{discriminator_forward.9} parent=0 // pred_check_branch
    %11 = sbr.rel (0) target = $region9
  $region8: #{discriminator_forward.9} parent=0 // pred_region
    _
  $region9: #{discriminator_forward.9} parent=0 // pred_fallthru
    _
  // Predicated region
  $region10: #{discriminator_forward.9} parent=0 // pred_check
    _
  $region11: #{discriminator_forward.9} parent=0 // pred_check_branch
    %13 = sbr.rel (0) target = $region13
  $region12: #{discriminator_forward.9} parent=0 // pred_region
    _
  $region13: #{discriminator_forward.9} parent=0 // pred_fallthru
    _
  %v14 = vld [vmem:[%s0] sm:$0xf]
  %v15 = vld [vmem:[%s0 + $0x4] sm:$0xf]
  %v16 = vld [vmem:[%s0 + $0x8] sm:$0xf]
  %v17 = vld [vmem:[%s0 + $0xc] sm:$0xf]
  %v18 = vld [vmem:[%s0 + $0x10] sm:$0xf]
  %v19 = vld [vmem:[%s0 + $0x14] sm:$0xf]
  %v20 = vld [vmem:[%s0 + $0x18] sm:$0xf]
  %v21 = vld [vmem:[%s0 + $0x1c] sm:$0xf]
  %v22 = vld [vmem:[%s0 + $0x20] sm:$0xf]
  %v23 = vld [vmem:[%s0 + $0x24] sm:$0xf]
  %v24 = vld [vmem:[%s0 + $0x28] sm:$0xf]
  %v25 = vld [vmem:[%s0 + $0x2c] sm:$0xf]
  %v26 = vld [vmem:[%s0 + $0x30] sm:$0xf]
  %v27 = vld [vmem:[%s0 + $0x34] sm:$0xf]
  %v28 = vld [vmem:[%s0 + $0x38] sm:$0xf]
  %v29 = vld [vmem:[%s0 + $0x3c] sm:$0xf]
  %v30 = vld [vmem:[%s0 + $0x40] sm:$0xf]
  %v31 = vld [vmem:[%s0 + $0x44] sm:$0xf]
  %v32 = vld [vmem:[%s0 + $0x48] sm:$0xf]
  %v33 = vld [vmem:[%s0 + $0x4c] sm:$0xf]
  %v34 = vld [vmem:[%s0 + $0x50] sm:$0xf]
  %v35 = vld [vmem:[%s0 + $0x54] sm:$0xf]
  %v36 = vld [vmem:[%s0 + $0x58] sm:$0xf]
  %v37 = vld [vmem:[%s0 + $0x5c] sm:$0xf]
  %v38 = vld [vmem:[%s0 + $0x60] sm:$0xf]
  %v39 = vld [vmem:[%s0 + $0x64] sm:$0xf]
  %v40 = vld [vmem:[%s0 + $0x68] sm:$0xf]
  %v41 = vld [vmem:[%s0 + $0x6c] sm:$0xf]
  %v42 = vld [vmem:[%s0 + $0x70] sm:$0xf]
  %v43 = vld [vmem:[%s0 + $0x74] sm:$0xf]
  %v44 = vld [vmem:[%s0 + $0x78] sm:$0xf]
  %v45 = vld [vmem:[%s0 + $0x7c] sm:$0xf]
  %v46 = vld [vmem:[%s0 + $0x80] sm:$0xf]
  %v47 = vld [vmem:[%s0 + $0x84] sm:$0xf]
  %v48 = vld [vmem:[%s0 + $0x88] sm:$0xf]
  %v49 = vld [vmem:[%s0 + $0x8c] sm:$0xf]
  %v50 = vld [vmem:[%s0 + $0x90] sm:$0xf]
  %v51 = vld [vmem:[%s0 + $0x94] sm:$0xf]
  %v52 = vld [vmem:[%s0 + $0x98] sm:$0xf]
  %v53 = vld [vmem:[%s0 + $0x9c] sm:$0xf]
  %v54 = vld [vmem:[%s0 + $0xa0] sm:$0xf]
  %v55 = vld [vmem:[%s0 + $0xa4] sm:$0xf]
  %v56 = vld [vmem:[%s0 + $0xa8] sm:$0xf]
  %v57 = vld [vmem:[%s0 + $0xac] sm:$0xf]
  %v58 = vld [vmem:[%s0 + $0xb0] sm:$0xf]
  %v59 = vld [vmem:[%s0 + $0xb4] sm:$0xf]
  %v60 = vld [vmem:[%s0 + $0xb8] sm:$0xf]
  %v61 = vld [vmem:[%s0 + $0xbc] sm:$0xf]
  %v62 = vld [vmem:[%s0 + $0xc0] sm:$0xf]
  %v63 = vld [vmem:[%s0 + $0xc4] sm:$0xf]
  %v64 = vld [vmem:[%s0 + $0xc8] sm:$0xf]
  %v65 = vld [vmem:[%s0 + $0xcc] sm:$0xf]
  %v66 = vld [vmem:[%s0 + $0xd0] sm:$0xf]
  %v67 = vld [vmem:[%s0 + $0xd4] sm:$0xf]
  %v68 = vld [vmem:[%s0 + $0xd8] sm:$0xf]
  %v69 = vld [vmem:[%s0 + $0xdc] sm:$0xf]
  %v70 = vld [vmem:[%s0 + $0xe0] sm:$0xf]
  %v71 = vld [vmem:[%s0 + $0xe4] sm:$0xf]
  %v72 = vld [vmem:[%s0 + $0xe8] sm:$0xf]
  %v73 = vld [vmem:[%s0 + $0xec] sm:$0xf]
  %v74 = vld [vmem:[%s0 + $0xf0] sm:$0xf]
  %v75 = vld [vmem:[%s0 + $0xf4] sm:$0xf]
  %v76 = vld [vmem:[%s0 + $0xf8] sm:$0xf]
  %v77 = vld [vmem:[%s0 + $0xfc] sm:$0xf]
  %v78 = vunpack.c.l.bf16 %v14
  %v79 = vunpack.c.l.bf16 %v15
  %v80 = vunpack.c.l.bf16 %v16
  %v81 = vunpack.c.l.bf16 %v17
  %v82 = vunpack.c.l.bf16 %v18
  %v83 = vunpack.c.l.bf16 %v19
  %v84 = vunpack.c.l.bf16 %v20
  %v85 = vunpack.c.l.bf16 %v21
  %v86 = vunpack.c.l.bf16 %v22
  %v87 = vunpack.c.l.bf16 %v23
  %v88 = vunpack.c.l.bf16 %v24
  %v89 = vunpack.c.l.bf16 %v25
  %v90 = vunpack.c.l.bf16 %v26
  %v91 = vunpack.c.l.bf16 %v27
  %v92 = vunpack.c.l.bf16 %v28
  %v93 = vunpack.c.l.bf16 %v29
  %v94 = vunpack.c.l.bf16 %v30
  %v95 = vunpack.c.l.bf16 %v31
  %v96 = vunpack.c.l.bf16 %v32
  %v97 = vunpack.c.l.bf16 %v33
  %v98 = vunpack.c.l.bf16 %v34
  %v99 = vunpack.c.l.bf16 %v35
  %v100 = vunpack.c.l.bf16 %v36
  %v101 = vunpack.c.l.bf16 %v37
  %v102 = vunpack.c.l.bf16 %v38
  %v103 = vunpack.c.l.bf16 %v39
  %v104 = vunpack.c.l.bf16 %v40
  %v105 = vunpack.c.l.bf16 %v41
  %v106 = vunpack.c.l.bf16 %v42
  %v107 = vunpack.c.l.bf16 %v43
  %v108 = vunpack.c.l.bf16 %v44
  %v109 = vunpack.c.l.bf16 %v45
  %v110 = vunpack.c.l.bf16 %v46
  %v111 = vunpack.c.l.bf16 %v47
  %v112 = vunpack.c.l.bf16 %v48
  %v113 = vunpack.c.l.bf16 %v49
  %v114 = vunpack.c.l.bf16 %v50
  %v115 = vunpack.c.l.bf16 %v51
  %v116 = vunpack.c.l.bf16 %v52
  %v117 = vunpack.c.l.bf16 %v53
  %v118 = vunpack.c.l.bf16 %v54
  %v119 = vunpack.c.l.bf16 %v55
  %v120 = vunpack.c.l.bf16 %v56
  %v121 = vunpack.c.l.bf16 %v57
  %v122 = vunpack.c.l.bf16 %v58
  %v123 = vunpack.c.l.bf16 %v59
  %v124 = vunpack.c.l.bf16 %v60
  %v125 = vunpack.c.l.bf16 %v61
  %v126 = vunpack.c.l.bf16 %v62
  %v127 = vunpack.c.l.bf16 %v63
  %v128 = vunpack.c.l.bf16 %v64
  %v129 = vunpack.c.l.bf16 %v65
  %v130 = vunpack.c.l.bf16 %v66
  %v131 = vunpack.c.l.bf16 %v67
  %v132 = vunpack.c.l.bf16 %v68
  %v133 = vunpack.c.l.bf16 %v69
  %v134 = vunpack.c.l.bf16 %v70
  %v135 = vunpack.c.l.bf16 %v71
  %v136 = vunpack.c.l.bf16 %v72
  %v137 = vunpack.c.l.bf16 %v73
  %v138 = vunpack.c.l.bf16 %v74
  %v139 = vunpack.c.l.bf16 %v75
  %v140 = vunpack.c.l.bf16 %v76
  %v141 = vunpack.c.l.bf16 %v77
  %v142 = vld [vmem:[%s1] sm:$0x1]
  %v144 = vlaneseq
  %v145 = vshrl.u32 %v144, 7
  %v146 = vsub.s32 0, %v145
  %v147 = vrot.slane %v142, %v146
  %v149 = vmul.f32 %v78, %v147
  %v150 = vmul.f32 %v79, %v147
  %v151 = vmul.f32 %v80, %v147
  %v152 = vmul.f32 %v81, %v147
  %v153 = vmul.f32 %v82, %v147
  %v154 = vmul.f32 %v83, %v147
  %v155 = vmul.f32 %v84, %v147
  %v156 = vmul.f32 %v85, %v147
  %v157 = vmul.f32 %v86, %v147
  %v158 = vmul.f32 %v87, %v147
  %v159 = vmul.f32 %v88, %v147
  %v160 = vmul.f32 %v89, %v147
  %v161 = vmul.f32 %v90, %v147
  %v162 = vmul.f32 %v91, %v147
  %v163 = vmul.f32 %v92, %v147
  %v164 = vmul.f32 %v93, %v147
  %v165 = vmul.f32 %v94, %v147
  %v166 = vmul.f32 %v95, %v147
  %v167 = vmul.f32 %v96, %v147
  %v168 = vmul.f32 %v97, %v147
  %v169 = vmul.f32 %v98, %v147
  %v170 = vmul.f32 %v99, %v147
  %v171 = vmul.f32 %v100, %v147
  %v172 = vmul.f32 %v101, %v147
  %v173 = vmul.f32 %v102, %v147
  %v174 = vmul.f32 %v103, %v147
  %v175 = vmul.f32 %v104, %v147
  %v176 = vmul.f32 %v105, %v147
  %v177 = vmul.f32 %v106, %v147
  %v178 = vmul.f32 %v107, %v147
  %v179 = vmul.f32 %v108, %v147
  %v180 = vmul.f32 %v109, %v147
  %v181 = vmul.f32 %v110, %v147
  %v182 = vmul.f32 %v111, %v147
  %v183 = vmul.f32 %v112, %v147
  %v184 = vmul.f32 %v113, %v147
  %v185 = vmul.f32 %v114, %v147
  %v186 = vmul.f32 %v115, %v147
  %v187 = vmul.f32 %v116, %v147
  %v188 = vmul.f32 %v117, %v147
  %v189 = vmul.f32 %v118, %v147
  %v190 = vmul.f32 %v119, %v147
  %v191 = vmul.f32 %v120, %v147
  %v192 = vmul.f32 %v121, %v147
  %v193 = vmul.f32 %v122, %v147
  %v194 = vmul.f32 %v123, %v147
  %v195 = vmul.f32 %v124, %v147
  %v196 = vmul.f32 %v125, %v147
  %v197 = vmul.f32 %v126, %v147
  %v198 = vmul.f32 %v127, %v147
  %v199 = vmul.f32 %v128, %v147
  %v200 = vmul.f32 %v129, %v147
  %v201 = vmul.f32 %v130, %v147
  %v202 = vmul.f32 %v131, %v147
  %v203 = vmul.f32 %v132, %v147
  %v204 = vmul.f32 %v133, %v147
  %v205 = vmul.f32 %v134, %v147
  %v206 = vmul.f32 %v135, %v147
  %v207 = vmul.f32 %v136, %v147
  %v208 = vmul.f32 %v137, %v147
  %v209 = vmul.f32 %v138, %v147
  %v210 = vmul.f32 %v139, %v147
  %v211 = vmul.f32 %v140, %v147
  %v212 = vmul.f32 %v141, %v147
  %v213 = vld [vmem:[%s2] sm:$0x1]
  %v215 = vlaneseq
  %v216 = vshrl.u32 %v215, 7
  %v217 = vsub.s32 0, %v216
  %v218 = vrot.slane %v213, %v217
  %v220 = vadd.f32 %v149, %v218
  %v221 = vadd.f32 %v150, %v218
  %v222 = vadd.f32 %v151, %v218
  %v223 = vadd.f32 %v152, %v218
  %v224 = vadd.f32 %v153, %v218
  %v225 = vadd.f32 %v154, %v218
  %v226 = vadd.f32 %v155, %v218
  %v227 = vadd.f32 %v156, %v218
  %v228 = vadd.f32 %v157, %v218
  %v229 = vadd.f32 %v158, %v218
  %v230 = vadd.f32 %v159, %v218
  %v231 = vadd.f32 %v160, %v218
  %v232 = vadd.f32 %v161, %v218
  %v233 = vadd.f32 %v162, %v218
  %v234 = vadd.f32 %v163, %v218
  %v235 = vadd.f32 %v164, %v218
  %v236 = vadd.f32 %v165, %v218
  %v237 = vadd.f32 %v166, %v218
  %v238 = vadd.f32 %v167, %v218
  %v239 = vadd.f32 %v168, %v218
  %v240 = vadd.f32 %v169, %v218
  %v241 = vadd.f32 %v170, %v218
  %v242 = vadd.f32 %v171, %v218
  %v243 = vadd.f32 %v172, %v218
  %v244 = vadd.f32 %v173, %v218
  %v245 = vadd.f32 %v174, %v218
  %v246 = vadd.f32 %v175, %v218
  %v247 = vadd.f32 %v176, %v218
  %v248 = vadd.f32 %v177, %v218
  %v249 = vadd.f32 %v178, %v218
  %v250 = vadd.f32 %v179, %v218
  %v251 = vadd.f32 %v180, %v218
  %v252 = vadd.f32 %v181, %v218
  %v253 = vadd.f32 %v182, %v218
  %v254 = vadd.f32 %v183, %v218
  %v255 = vadd.f32 %v184, %v218
  %v256 = vadd.f32 %v185, %v218
  %v257 = vadd.f32 %v186, %v218
  %v258 = vadd.f32 %v187, %v218
  %v259 = vadd.f32 %v188, %v218
  %v260 = vadd.f32 %v189, %v218
  %v261 = vadd.f32 %v190, %v218
  %v262 = vadd.f32 %v191, %v218
  %v263 = vadd.f32 %v192, %v218
  %v264 = vadd.f32 %v193, %v218
  %v265 = vadd.f32 %v194, %v218
  %v266 = vadd.f32 %v195, %v218
  %v267 = vadd.f32 %v196, %v218
  %v268 = vadd.f32 %v197, %v218
  %v269 = vadd.f32 %v198, %v218
  %v270 = vadd.f32 %v199, %v218
  %v271 = vadd.f32 %v200, %v218
  %v272 = vadd.f32 %v201, %v218
  %v273 = vadd.f32 %v202, %v218
  %v274 = vadd.f32 %v203, %v218
  %v275 = vadd.f32 %v204, %v218
  %v276 = vadd.f32 %v205, %v218
  %v277 = vadd.f32 %v206, %v218
  %v278 = vadd.f32 %v207, %v218
  %v279 = vadd.f32 %v208, %v218
  %v280 = vadd.f32 %v209, %v218
  %v281 = vadd.f32 %v210, %v218
  %v282 = vadd.f32 %v211, %v218
  %v283 = vadd.f32 %v212, %v218
  %vm284 = vcmp.ge.f32.partialorder %v220, 0.0
  %vm285 = vcmp.ge.f32.partialorder %v221, 0.0
  %vm286 = vcmp.ge.f32.partialorder %v222, 0.0
  %vm287 = vcmp.ge.f32.partialorder %v223, 0.0
  %vm288 = vcmp.ge.f32.partialorder %v224, 0.0
  %vm289 = vcmp.ge.f32.partialorder %v225, 0.0
  %vm290 = vcmp.ge.f32.partialorder %v226, 0.0
  %vm291 = vcmp.ge.f32.partialorder %v227, 0.0
  %vm292 = vcmp.ge.f32.partialorder %v228, 0.0
  %vm293 = vcmp.ge.f32.partialorder %v229, 0.0
  %vm294 = vcmp.ge.f32.partialorder %v230, 0.0
  %vm295 = vcmp.ge.f32.partialorder %v231, 0.0
  %vm296 = vcmp.ge.f32.partialorder %v232, 0.0
  %vm297 = vcmp.ge.f32.partialorder %v233, 0.0
  %vm298 = vcmp.ge.f32.partialorder %v234, 0.0
  %vm299 = vcmp.ge.f32.partialorder %v235, 0.0
  %vm300 = vcmp.ge.f32.partialorder %v236, 0.0
  %vm301 = vcmp.ge.f32.partialorder %v237, 0.0
  %vm302 = vcmp.ge.f32.partialorder %v238, 0.0
  %vm303 = vcmp.ge.f32.partialorder %v239, 0.0
  %vm304 = vcmp.ge.f32.partialorder %v240, 0.0
  %vm305 = vcmp.ge.f32.partialorder %v241, 0.0
  %vm306 = vcmp.ge.f32.partialorder %v242, 0.0
  %vm307 = vcmp.ge.f32.partialorder %v243, 0.0
  %vm308 = vcmp.ge.f32.partialorder %v244, 0.0
  %vm309 = vcmp.ge.f32.partialorder %v245, 0.0
  %vm310 = vcmp.ge.f32.partialorder %v246, 0.0
  %vm311 = vcmp.ge.f32.partialorder %v247, 0.0
  %vm312 = vcmp.ge.f32.partialorder %v248, 0.0
  %vm313 = vcmp.ge.f32.partialorder %v249, 0.0
  %vm314 = vcmp.ge.f32.partialorder %v250, 0.0
  %vm315 = vcmp.ge.f32.partialorder %v251, 0.0
  %vm316 = vcmp.ge.f32.partialorder %v252, 0.0
  %vm317 = vcmp.ge.f32.partialorder %v253, 0.0
  %vm318 = vcmp.ge.f32.partialorder %v254, 0.0
  %vm319 = vcmp.ge.f32.partialorder %v255, 0.0
  %vm320 = vcmp.ge.f32.partialorder %v256, 0.0
  %vm321 = vcmp.ge.f32.partialorder %v257, 0.0
  %vm322 = vcmp.ge.f32.partialorder %v258, 0.0
  %vm323 = vcmp.ge.f32.partialorder %v259, 0.0
  %vm324 = vcmp.ge.f32.partialorder %v260, 0.0
  %vm325 = vcmp.ge.f32.partialorder %v261, 0.0
  %vm326 = vcmp.ge.f32.partialorder %v262, 0.0
  %vm327 = vcmp.ge.f32.partialorder %v263, 0.0
  %vm328 = vcmp.ge.f32.partialorder %v264, 0.0
  %vm329 = vcmp.ge.f32.partialorder %v265, 0.0
  %vm330 = vcmp.ge.f32.partialorder %v266, 0.0
  %vm331 = vcmp.ge.f32.partialorder %v267, 0.0
  %vm332 = vcmp.ge.f32.partialorder %v268, 0.0
  %vm333 = vcmp.ge.f32.partialorder %v269, 0.0
  %vm334 = vcmp.ge.f32.partialorder %v270, 0.0
  %vm335 = vcmp.ge.f32.partialorder %v271, 0.0
  %vm336 = vcmp.ge.f32.partialorder %v272, 0.0
  %vm337 = vcmp.ge.f32.partialorder %v273, 0.0
  %vm338 = vcmp.ge.f32.partialorder %v274, 0.0
  %vm339 = vcmp.ge.f32.partialorder %v275, 0.0
  %vm340 = vcmp.ge.f32.partialorder %v276, 0.0
  %vm341 = vcmp.ge.f32.partialorder %v277, 0.0
  %vm342 = vcmp.ge.f32.partialorder %v278, 0.0
  %vm343 = vcmp.ge.f32.partialorder %v279, 0.0
  %vm344 = vcmp.ge.f32.partialorder %v280, 0.0
  %vm345 = vcmp.ge.f32.partialorder %v281, 0.0
  %vm346 = vcmp.ge.f32.partialorder %v282, 0.0
  %vm347 = vcmp.ge.f32.partialorder %v283, 0.0
  %v348 = vmul.f32 %v220, 0.2
  %v349 = vmul.f32 %v221, 0.2
  %v350 = vmul.f32 %v222, 0.2
  %v351 = vmul.f32 %v223, 0.2
  %v352 = vmul.f32 %v224, 0.2
  %v353 = vmul.f32 %v225, 0.2
  %v354 = vmul.f32 %v226, 0.2
  %v355 = vmul.f32 %v227, 0.2
  %v356 = vmul.f32 %v228, 0.2
  %v357 = vmul.f32 %v229, 0.2
  %v358 = vmul.f32 %v230, 0.2
  %v359 = vmul.f32 %v231, 0.2
  %v360 = vmul.f32 %v232, 0.2
  %v361 = vmul.f32 %v233, 0.2
  %v362 = vmul.f32 %v234, 0.2
  %v363 = vmul.f32 %v235, 0.2
  %v364 = vmul.f32 %v236, 0.2
  %v365 = vmul.f32 %v237, 0.2
  %v366 = vmul.f32 %v238, 0.2
  %v367 = vmul.f32 %v239, 0.2
  %v368 = vmul.f32 %v240, 0.2
  %v369 = vmul.f32 %v241, 0.2
  %v370 = vmul.f32 %v242, 0.2
  %v371 = vmul.f32 %v243, 0.2
  %v372 = vmul.f32 %v244, 0.2
  %v373 = vmul.f32 %v245, 0.2
  %v374 = vmul.f32 %v246, 0.2
  %v375 = vmul.f32 %v247, 0.2
  %v376 = vmul.f32 %v248, 0.2
  %v377 = vmul.f32 %v249, 0.2
  %v378 = vmul.f32 %v250, 0.2
  %v379 = vmul.f32 %v251, 0.2
  %v380 = vmul.f32 %v252, 0.2
  %v381 = vmul.f32 %v253, 0.2
  %v382 = vmul.f32 %v254, 0.2
  %v383 = vmul.f32 %v255, 0.2
  %v384 = vmul.f32 %v256, 0.2
  %v385 = vmul.f32 %v257, 0.2
  %v386 = vmul.f32 %v258, 0.2
  %v387 = vmul.f32 %v259, 0.2
  %v388 = vmul.f32 %v260, 0.2
  %v389 = vmul.f32 %v261, 0.2
  %v390 = vmul.f32 %v262, 0.2
  %v391 = vmul.f32 %v263, 0.2
  %v392 = vmul.f32 %v264, 0.2
  %v393 = vmul.f32 %v265, 0.2
  %v394 = vmul.f32 %v266, 0.2
  %v395 = vmul.f32 %v267, 0.2
  %v396 = vmul.f32 %v268, 0.2
  %v397 = vmul.f32 %v269, 0.2
  %v398 = vmul.f32 %v270, 0.2
  %v399 = vmul.f32 %v271, 0.2
  %v400 = vmul.f32 %v272, 0.2
  %v401 = vmul.f32 %v273, 0.2
  %v402 = vmul.f32 %v274, 0.2
  %v403 = vmul.f32 %v275, 0.2
  %v404 = vmul.f32 %v276, 0.2
  %v405 = vmul.f32 %v277, 0.2
  %v406 = vmul.f32 %v278, 0.2
  %v407 = vmul.f32 %v279, 0.2
  %v408 = vmul.f32 %v280, 0.2
  %v409 = vmul.f32 %v281, 0.2
  %v410 = vmul.f32 %v282, 0.2
  %v411 = vmul.f32 %v283, 0.2
  %v412 = vsel %vm284, %v220, %v348
  %v413 = vsel %vm285, %v221, %v349
  %v414 = vsel %vm286, %v222, %v350
  %v415 = vsel %vm287, %v223, %v351
  %v416 = vsel %vm288, %v224, %v352
  %v417 = vsel %vm289, %v225, %v353
  %v418 = vsel %vm290, %v226, %v354
  %v419 = vsel %vm291, %v227, %v355
  %v420 = vsel %vm292, %v228, %v356
  %v421 = vsel %vm293, %v229, %v357
  %v422 = vsel %vm294, %v230, %v358
  %v423 = vsel %vm295, %v231, %v359
  %v424 = vsel %vm296, %v232, %v360
  %v425 = vsel %vm297, %v233, %v361
  %v426 = vsel %vm298, %v234, %v362
  %v427 = vsel %vm299, %v235, %v363
  %v428 = vsel %vm300, %v236, %v364
  %v429 = vsel %vm301, %v237, %v365
  %v430 = vsel %vm302, %v238, %v366
  %v431 = vsel %vm303, %v239, %v367
  %v432 = vsel %vm304, %v240, %v368
  %v433 = vsel %vm305, %v241, %v369
  %v434 = vsel %vm306, %v242, %v370
  %v435 = vsel %vm307, %v243, %v371
  %v436 = vsel %vm308, %v244, %v372
  %v437 = vsel %vm309, %v245, %v373
  %v438 = vsel %vm310, %v246, %v374
  %v439 = vsel %vm311, %v247, %v375
  %v440 = vsel %vm312, %v248, %v376
  %v441 = vsel %vm313, %v249, %v377
  %v442 = vsel %vm314, %v250, %v378
  %v443 = vsel %vm315, %v251, %v379
  %v444 = vsel %vm316, %v252, %v380
  %v445 = vsel %vm317, %v253, %v381
  %v446 = vsel %vm318, %v254, %v382
  %v447 = vsel %vm319, %v255, %v383
  %v448 = vsel %vm320, %v256, %v384
  %v449 = vsel %vm321, %v257, %v385
  %v450 = vsel %vm322, %v258, %v386
  %v451 = vsel %vm323, %v259, %v387
  %v452 = vsel %vm324, %v260, %v388
  %v453 = vsel %vm325, %v261, %v389
  %v454 = vsel %vm326, %v262, %v390
  %v455 = vsel %vm327, %v263, %v391
  %v456 = vsel %vm328, %v264, %v392
  %v457 = vsel %vm329, %v265, %v393
  %v458 = vsel %vm330, %v266, %v394
  %v459 = vsel %vm331, %v267, %v395
  %v460 = vsel %vm332, %v268, %v396
  %v461 = vsel %vm333, %v269, %v397
  %v462 = vsel %vm334, %v270, %v398
  %v463 = vsel %vm335, %v271, %v399
  %v464 = vsel %vm336, %v272, %v400
  %v465 = vsel %vm337, %v273, %v401
  %v466 = vsel %vm338, %v274, %v402
  %v467 = vsel %vm339, %v275, %v403
  %v468 = vsel %vm340, %v276, %v404
  %v469 = vsel %vm341, %v277, %v405
  %v470 = vsel %vm342, %v278, %v406
  %v471 = vsel %vm343, %v279, %v407
  %v472 = vsel %vm344, %v280, %v408
  %v473 = vsel %vm345, %v281, %v409
  %v474 = vsel %vm346, %v282, %v410
  %v475 = vsel %vm347, %v283, %v411
  %v476 = vpack.c.bf16 %v413, %v412
  %v477 = vpack.c.bf16 %v415, %v414
  %v478 = vpack.c.bf16 %v417, %v416
  %v479 = vpack.c.bf16 %v419, %v418
  %v480 = vpack.c.bf16 %v421, %v420
  %v481 = vpack.c.bf16 %v423, %v422
  %v482 = vpack.c.bf16 %v425, %v424
  %v483 = vpack.c.bf16 %v427, %v426
  %v484 = vpack.c.bf16 %v429, %v428
  %v485 = vpack.c.bf16 %v431, %v430
  %v486 = vpack.c.bf16 %v433, %v432
  %v487 = vpack.c.bf16 %v435, %v434
  %v488 = vpack.c.bf16 %v437, %v436
  %v489 = vpack.c.bf16 %v439, %v438
  %v490 = vpack.c.bf16 %v441, %v440
  %v491 = vpack.c.bf16 %v443, %v442
  %v492 = vpack.c.bf16 %v445, %v444
  %v493 = vpack.c.bf16 %v447, %v446
  %v494 = vpack.c.bf16 %v449, %v448
  %v495 = vpack.c.bf16 %v451, %v450
  %v496 = vpack.c.bf16 %v453, %v452
  %v497 = vpack.c.bf16 %v455, %v454
  %v498 = vpack.c.bf16 %v457, %v456
  %v499 = vpack.c.bf16 %v459, %v458
  %v500 = vpack.c.bf16 %v461, %v460
  %v501 = vpack.c.bf16 %v463, %v462
  %v502 = vpack.c.bf16 %v465, %v464
  %v503 = vpack.c.bf16 %v467, %v466
  %v504 = vpack.c.bf16 %v469, %v468
  %v505 = vpack.c.bf16 %v471, %v470
  %v506 = vpack.c.bf16 %v473, %v472
  %v507 = vpack.c.bf16 %v475, %v474
  %v540 = vunpack.c.l.b16 %v476
  %v541 = vunpack.c.h.b16 %v476
  %v542 = vunpack.c.l.b16 %v477
  %v543 = vunpack.c.h.b16 %v477
  %v544 = vunpack.c.l.b16 %v478
  %v545 = vunpack.c.h.b16 %v478
  %v546 = vunpack.c.l.b16 %v479
  %v547 = vunpack.c.h.b16 %v479
  %v548 = vunpack.c.l.b16 %v480
  %v549 = vunpack.c.h.b16 %v480
  %v550 = vunpack.c.l.b16 %v481
  %v551 = vunpack.c.h.b16 %v481
  %v552 = vunpack.c.l.b16 %v482
  %v553 = vunpack.c.h.b16 %v482
  %v554 = vunpack.c.l.b16 %v483
  %v555 = vunpack.c.h.b16 %v483
  %v556 = vunpack.c.l.b16 %v484
  %v557 = vunpack.c.h.b16 %v484
  %v558 = vunpack.c.l.b16 %v485
  %v559 = vunpack.c.h.b16 %v485
  %v560 = vunpack.c.l.b16 %v486
  %v561 = vunpack.c.h.b16 %v486
  %v562 = vunpack.c.l.b16 %v487
  %v563 = vunpack.c.h.b16 %v487
  %v564 = vunpack.c.l.b16 %v488
  %v565 = vunpack.c.h.b16 %v488
  %v566 = vunpack.c.l.b16 %v489
  %v567 = vunpack.c.h.b16 %v489
  %v568 = vunpack.c.l.b16 %v490
  %v569 = vunpack.c.h.b16 %v490
  %v570 = vunpack.c.l.b16 %v491
  %v571 = vunpack.c.h.b16 %v491
  %v572 = vunpack.c.l.b16 %v492
  %v573 = vunpack.c.h.b16 %v492
  %v574 = vunpack.c.l.b16 %v493
  %v575 = vunpack.c.h.b16 %v493
  %v576 = vunpack.c.l.b16 %v494
  %v577 = vunpack.c.h.b16 %v494
  %v578 = vunpack.c.l.b16 %v495
  %v579 = vunpack.c.h.b16 %v495
  %v580 = vunpack.c.l.b16 %v496
  %v581 = vunpack.c.h.b16 %v496
  %v582 = vunpack.c.l.b16 %v497
  %v583 = vunpack.c.h.b16 %v497
  %v584 = vunpack.c.l.b16 %v498
  %v585 = vunpack.c.h.b16 %v498
  %v586 = vunpack.c.l.b16 %v499
  %v587 = vunpack.c.h.b16 %v499
  %v588 = vunpack.c.l.b16 %v500
  %v589 = vunpack.c.h.b16 %v500
  %v590 = vunpack.c.l.b16 %v501
  %v591 = vunpack.c.h.b16 %v501
  %v592 = vunpack.c.l.b16 %v502
  %v593 = vunpack.c.h.b16 %v502
  %v594 = vunpack.c.l.b16 %v503
  %v595 = vunpack.c.h.b16 %v503
  %v596 = vunpack.c.l.b16 %v504
  %v597 = vunpack.c.h.b16 %v504
  %v598 = vunpack.c.l.b16 %v505
  %v599 = vunpack.c.h.b16 %v505
  %v600 = vunpack.c.l.b16 %v506
  %v601 = vunpack.c.h.b16 %v506
  %v602 = vunpack.c.l.b16 %v507
  %v603 = vunpack.c.h.b16 %v507
  %v604 = vpack.c.b16 %v540, %v540
  %v605 = vpack.c.b16 %v541, %v541
  %v606 = vpack.c.b16 %v542, %v542
  %v607 = vpack.c.b16 %v543, %v543
  %v608 = vpack.c.b16 %v544, %v544
  %v609 = vpack.c.b16 %v545, %v545
  %v610 = vpack.c.b16 %v546, %v546
  %v611 = vpack.c.b16 %v547, %v547
  %v612 = vpack.c.b16 %v548, %v548
  %v613 = vpack.c.b16 %v549, %v549
  %v614 = vpack.c.b16 %v550, %v550
  %v615 = vpack.c.b16 %v551, %v551
  %v616 = vpack.c.b16 %v552, %v552
  %v617 = vpack.c.b16 %v553, %v553
  %v618 = vpack.c.b16 %v554, %v554
  %v619 = vpack.c.b16 %v555, %v555
  %v620 = vpack.c.b16 %v556, %v556
  %v621 = vpack.c.b16 %v557, %v557
  %v622 = vpack.c.b16 %v558, %v558
  %v623 = vpack.c.b16 %v559, %v559
  %v624 = vpack.c.b16 %v560, %v560
  %v625 = vpack.c.b16 %v561, %v561
  %v626 = vpack.c.b16 %v562, %v562
  %v627 = vpack.c.b16 %v563, %v563
  %v628 = vpack.c.b16 %v564, %v564
  %v629 = vpack.c.b16 %v565, %v565
  %v630 = vpack.c.b16 %v566, %v566
  %v631 = vpack.c.b16 %v567, %v567
  %v632 = vpack.c.b16 %v568, %v568
  %v633 = vpack.c.b16 %v569, %v569
  %v634 = vpack.c.b16 %v570, %v570
  %v635 = vpack.c.b16 %v571, %v571
  %v636 = vpack.c.b16 %v572, %v572
  %v637 = vpack.c.b16 %v573, %v573
  %v638 = vpack.c.b16 %v574, %v574
  %v639 = vpack.c.b16 %v575, %v575
  %v640 = vpack.c.b16 %v576, %v576
  %v641 = vpack.c.b16 %v577, %v577
  %v642 = vpack.c.b16 %v578, %v578
  %v643 = vpack.c.b16 %v579, %v579
  %v644 = vpack.c.b16 %v580, %v580
  %v645 = vpack.c.b16 %v581, %v581
  %v646 = vpack.c.b16 %v582, %v582
  %v647 = vpack.c.b16 %v583, %v583
  %v648 = vpack.c.b16 %v584, %v584
  %v649 = vpack.c.b16 %v585, %v585
  %v650 = vpack.c.b16 %v586, %v586
  %v651 = vpack.c.b16 %v587, %v587
  %v652 = vpack.c.b16 %v588, %v588
  %v653 = vpack.c.b16 %v589, %v589
  %v654 = vpack.c.b16 %v590, %v590
  %v655 = vpack.c.b16 %v591, %v591
  %v656 = vpack.c.b16 %v592, %v592
  %v657 = vpack.c.b16 %v593, %v593
  %v658 = vpack.c.b16 %v594, %v594
  %v659 = vpack.c.b16 %v595, %v595
  %v660 = vpack.c.b16 %v596, %v596
  %v661 = vpack.c.b16 %v597, %v597
  %v662 = vpack.c.b16 %v598, %v598
  %v663 = vpack.c.b16 %v599, %v599
  %v664 = vpack.c.b16 %v600, %v600
  %v665 = vpack.c.b16 %v601, %v601
  %v666 = vpack.c.b16 %v602, %v602
  %v667 = vpack.c.b16 %v603, %v603
  %732 = vst [vmem:[%s3] sm:$0xf] %v604
  %733 = vst [vmem:[%s3 + $0x4] sm:$0xf] %v605
  %734 = vst [vmem:[%s3 + $0x8] sm:$0xf] %v606
  %735 = vst [vmem:[%s3 + $0xc] sm:$0xf] %v607
  %736 = vst [vmem:[%s3 + $0x10] sm:$0xf] %v608
  %737 = vst [vmem:[%s3 + $0x14] sm:$0xf] %v609
  %738 = vst [vmem:[%s3 + $0x18] sm:$0xf] %v610
  %739 = vst [vmem:[%s3 + $0x1c] sm:$0xf] %v611
  %740 = vst [vmem:[%s3 + $0x20] sm:$0xf] %v612
  %741 = vst [vmem:[%s3 + $0x24] sm:$0xf] %v613
  %742 = vst [vmem:[%s3 + $0x28] sm:$0xf] %v614
  %743 = vst [vmem:[%s3 + $0x2c] sm:$0xf] %v615
  %744 = vst [vmem:[%s3 + $0x30] sm:$0xf] %v616
  %745 = vst [vmem:[%s3 + $0x34] sm:$0xf] %v617
  %746 = vst [vmem:[%s3 + $0x38] sm:$0xf] %v618
  %747 = vst [vmem:[%s3 + $0x3c] sm:$0xf] %v619
  %748 = vst [vmem:[%s3 + $0x40] sm:$0xf] %v620
  %749 = vst [vmem:[%s3 + $0x44] sm:$0xf] %v621
  %750 = vst [vmem:[%s3 + $0x48] sm:$0xf] %v622
  %751 = vst [vmem:[%s3 + $0x4c] sm:$0xf] %v623
  %752 = vst [vmem:[%s3 + $0x50] sm:$0xf] %v624
  %753 = vst [vmem:[%s3 + $0x54] sm:$0xf] %v625
  %754 = vst [vmem:[%s3 + $0x58] sm:$0xf] %v626
  %755 = vst [vmem:[%s3 + $0x5c] sm:$0xf] %v627
  %756 = vst [vmem:[%s3 + $0x60] sm:$0xf] %v628
  %757 = vst [vmem:[%s3 + $0x64] sm:$0xf] %v629
  %758 = vst [vmem:[%s3 + $0x68] sm:$0xf] %v630
  %759 = vst [vmem:[%s3 + $0x6c] sm:$0xf] %v631
  %760 = vst [vmem:[%s3 + $0x70] sm:$0xf] %v632
  %761 = vst [vmem:[%s3 + $0x74] sm:$0xf] %v633
  %762 = vst [vmem:[%s3 + $0x78] sm:$0xf] %v634
  %763 = vst [vmem:[%s3 + $0x7c] sm:$0xf] %v635
  %764 = vst [vmem:[%s3 + $0x80] sm:$0xf] %v636
  %765 = vst [vmem:[%s3 + $0x84] sm:$0xf] %v637
  %766 = vst [vmem:[%s3 + $0x88] sm:$0xf] %v638
  %767 = vst [vmem:[%s3 + $0x8c] sm:$0xf] %v639
  %768 = vst [vmem:[%s3 + $0x90] sm:$0xf] %v640
  %769 = vst [vmem:[%s3 + $0x94] sm:$0xf] %v641
  %770 = vst [vmem:[%s3 + $0x98] sm:$0xf] %v642
  %771 = vst [vmem:[%s3 + $0x9c] sm:$0xf] %v643
  %772 = vst [vmem:[%s3 + $0xa0] sm:$0xf] %v644
  %773 = vst [vmem:[%s3 + $0xa4] sm:$0xf] %v645
  %774 = vst [vmem:[%s3 + $0xa8] sm:$0xf] %v646
  %775 = vst [vmem:[%s3 + $0xac] sm:$0xf] %v647
  %776 = vst [vmem:[%s3 + $0xb0] sm:$0xf] %v648
  %777 = vst [vmem:[%s3 + $0xb4] sm:$0xf] %v649
  %778 = vst [vmem:[%s3 + $0xb8] sm:$0xf] %v650
  %779 = vst [vmem:[%s3 + $0xbc] sm:$0xf] %v651
  %780 = vst [vmem:[%s3 + $0xc0] sm:$0xf] %v652
  %781 = vst [vmem:[%s3 + $0xc4] sm:$0xf] %v653
  %782 = vst [vmem:[%s3 + $0xc8] sm:$0xf] %v654
  %783 = vst [vmem:[%s3 + $0xcc] sm:$0xf] %v655
  %784 = vst [vmem:[%s3 + $0xd0] sm:$0xf] %v656
  %785 = vst [vmem:[%s3 + $0xd4] sm:$0xf] %v657
  %786 = vst [vmem:[%s3 + $0xd8] sm:$0xf] %v658
  %787 = vst [vmem:[%s3 + $0xdc] sm:$0xf] %v659
  %788 = vst [vmem:[%s3 + $0xe0] sm:$0xf] %v660
  %789 = vst [vmem:[%s3 + $0xe4] sm:$0xf] %v661
  %790 = vst [vmem:[%s3 + $0xe8] sm:$0xf] %v662
  %791 = vst [vmem:[%s3 + $0xec] sm:$0xf] %v663
  %792 = vst [vmem:[%s3 + $0xf0] sm:$0xf] %v664
  %793 = vst [vmem:[%s3 + $0xf4] sm:$0xf] %v665
  %794 = vst [vmem:[%s3 + $0xf8] sm:$0xf] %v666
  %795 = vst [vmem:[%s3 + $0xfc] sm:$0xf] %v667
  // Predicated region
  $region14: #{discriminator_forward.9} parent=0 // pred_check
    _
  $region15: #{discriminator_forward.9} parent=0 // pred_check_branch
    %797 = sbr.rel (0) target = $region17
  $region16: #{discriminator_forward.9} parent=0 // pred_region
    _
  $region17: #{discriminator_forward.9} parent=0 // pred_fallthru
    _
  // Predicated region
  $region18: #{discriminator_forward.9} parent=0 // pred_check
    _
  $region19: #{discriminator_forward.9} parent=0 // pred_check_branch
    %799 = sbr.rel (0) target = $region21
  $region20: #{discriminator_forward.9} parent=0 // pred_region
    _
  $region21: #{discriminator_forward.9} parent=0 // pred_fallthru
    _

// kernel: discriminator_forward.10
$region0: #{discriminator_forward.10}
  #allocation0 [shape = 'u32[]', space=smem, size = 0x4, offset = 0x4, fixed_abs, tag = 'smem constant byte address 0x4 - core index']
  #allocation1 [shape = 'u32[144,128]{1,0:T(1,128)}', space=vmem, size = 0x12000, scoped, tag = 'internal scratch']
  #allocation2 [shape = 'f32[128,128]{1,0:T(8,128)}', space=vmem, size = 0x10000, scoped, tag = 'scratch operand']
  %s0 = inlined_call_operand.vmem [shape: bf16[128,256], index: 0, kind: input, shape index: {}]
  %s1 = inlined_call_operand.vmem [shape: bf16[256,128], index: 1, kind: input, shape index: {}]
  %s2 = inlined_call_operand.vmem [shape: bf16[128,128], index: 2, kind: output, shape index: {0}]
  %s3 = inlined_call_operand.vmem [shape: f32[1,8,128], index: 3, kind: output, shape index: {1}]
  %s4 = inlined_call_operand.vmem [shape: f32[1,8,128], index: 4, kind: output, shape index: {2}]
  %5 = xla_tuple %s2, %s3, %s4
  %s6 = sld [smem:[#allocation0]]
  $region42: #{discriminator_forward.10} parent=0
    _
  %s8 = ssub.s32 1, %s6
  %s9 = scalar_select 0, %s8, %s6
  // Predicated region
  $region2: #{discriminator_forward.10} parent=0 // pred_check
    _
  $region3: #{discriminator_forward.10} parent=0 // pred_check_branch
    %11 = sbr.rel (0) target = $region5
  $region4: #{discriminator_forward.10} parent=0 // pred_region
    _
  $region5: #{discriminator_forward.10} parent=0 // pred_fallthru
    _
  // Predicated region
  $region6: #{discriminator_forward.10} parent=0 // pred_check
    _
  $region7: #{discriminator_forward.10} parent=0 // pred_check_branch
    %13 = sbr.rel (0) target = $region9
  $region8: #{discriminator_forward.10} parent=0 // pred_region
    _
  $region9: #{discriminator_forward.10} parent=0 // pred_fallthru
    _
  %p15 = scmp.eq.s32.totalorder 0, 0
  // Predicated region
  $region10: #{discriminator_forward.10} parent=0 // pred_check
    %p16 = pneg %p15
  $region11: #{discriminator_forward.10} parent=0 // pred_check_branch
    %18 = sbr.rel (%p16) target = $region13
  $region12: #{discriminator_forward.10} parent=0 // pred_region
    %19 = vst [vmem:[#allocation2] sm:$0xff] 0.0
    %20 = vst [vmem:[#allocation2 + $0x8] sm:$0xff] 0.0
    %21 = vst [vmem:[#allocation2 + $0x10] sm:$0xff] 0.0
    %22 = vst [vmem:[#allocation2 + $0x18] sm:$0xff] 0.0
    %23 = vst [vmem:[#allocation2 + $0x20] sm:$0xff] 0.0
    %24 = vst [vmem:[#allocation2 + $0x28] sm:$0xff] 0.0
    %25 = vst [vmem:[#allocation2 + $0x30] sm:$0xff] 0.0
    %26 = vst [vmem:[#allocation2 + $0x38] sm:$0xff] 0.0
    %27 = vst [vmem:[#allocation2 + $0x40] sm:$0xff] 0.0
    %28 = vst [vmem:[#allocation2 + $0x48] sm:$0xff] 0.0
    %29 = vst [vmem:[#allocation2 + $0x50] sm:$0xff] 0.0
    %30 = vst [vmem:[#allocation2 + $0x58] sm:$0xff] 0.0
    %31 = vst [vmem:[#allocation2 + $0x60] sm:$0xff] 0.0
    %32 = vst [vmem:[#allocation2 + $0x68] sm:$0xff] 0.0
    %33 = vst [vmem:[#allocation2 + $0x70] sm:$0xff] 0.0
    %34 = vst [vmem:[#allocation2 + $0x78] sm:$0xff] 0.0
  $region13: #{discriminator_forward.10} parent=0 // pred_fallthru
    _
  %v35 = vld [vmem:[#allocation2] sm:$0xff]
  %v36 = vld [vmem:[#allocation2 + $0x8] sm:$0xff]
  %v37 = vld [vmem:[#allocation2 + $0x10] sm:$0xff]
  %v38 = vld [vmem:[#allocation2 + $0x18] sm:$0xff]
  %v39 = vld [vmem:[#allocation2 + $0x20] sm:$0xff]
  %v40 = vld [vmem:[#allocation2 + $0x28] sm:$0xff]
  %v41 = vld [vmem:[#allocation2 + $0x30] sm:$0xff]
  %v42 = vld [vmem:[#allocation2 + $0x38] sm:$0xff]
  %v43 = vld [vmem:[#allocation2 + $0x40] sm:$0xff]
  %v44 = vld [vmem:[#allocation2 + $0x48] sm:$0xff]
  %v45 = vld [vmem:[#allocation2 + $0x50] sm:$0xff]
  %v46 = vld [vmem:[#allocation2 + $0x58] sm:$0xff]
  %v47 = vld [vmem:[#allocation2 + $0x60] sm:$0xff]
  %v48 = vld [vmem:[#allocation2 + $0x68] sm:$0xff]
  %v49 = vld [vmem:[#allocation2 + $0x70] sm:$0xff]
  %v50 = vld [vmem:[#allocation2 + $0x78] sm:$0xff]
  %v51 = vld [vmem:[%s0] sm:$0xff]
  %v52 = vld [vmem:[%s0 + $0x8] sm:$0xff]
  %v53 = vld [vmem:[%s0 + $0x10] sm:$0xff]
  %v54 = vld [vmem:[%s0 + $0x18] sm:$0xff]
  %v55 = vld [vmem:[%s0 + $0x20] sm:$0xff]
  %v56 = vld [vmem:[%s0 + $0x28] sm:$0xff]
  %v57 = vld [vmem:[%s0 + $0x30] sm:$0xff]
  %v58 = vld [vmem:[%s0 + $0x38] sm:$0xff]
  %v59 = vld [vmem:[%s0 + $0x40] sm:$0xff]
  %v60 = vld [vmem:[%s0 + $0x48] sm:$0xff]
  %v61 = vld [vmem:[%s0 + $0x50] sm:$0xff]
  %v62 = vld [vmem:[%s0 + $0x58] sm:$0xff]
  %v63 = vld [vmem:[%s0 + $0x60] sm:$0xff]
  %v64 = vld [vmem:[%s0 + $0x68] sm:$0xff]
  %v65 = vld [vmem:[%s0 + $0x70] sm:$0xff]
  %v66 = vld [vmem:[%s0 + $0x78] sm:$0xff]
  %v67 = vld [vmem:[%s1] sm:$0xf]
  %v68 = vld [vmem:[%s1 + $0x4] sm:$0xf]
  %v69 = vld [vmem:[%s1 + $0x8] sm:$0xf]
  %v70 = vld [vmem:[%s1 + $0xc] sm:$0xf]
  %v71 = vld [vmem:[%s1 + $0x10] sm:$0xf]
  %v72 = vld [vmem:[%s1 + $0x14] sm:$0xf]
  %v73 = vld [vmem:[%s1 + $0x18] sm:$0xf]
  %v74 = vld [vmem:[%s1 + $0x1c] sm:$0xf]
  %v75 = vld [vmem:[%s1 + $0x20] sm:$0xf]
  %v76 = vld [vmem:[%s1 + $0x24] sm:$0xf]
  %v77 = vld [vmem:[%s1 + $0x28] sm:$0xf]
  %v78 = vld [vmem:[%s1 + $0x2c] sm:$0xf]
  %v79 = vld [vmem:[%s1 + $0x30] sm:$0xf]
  %v80 = vld [vmem:[%s1 + $0x34] sm:$0xf]
  %v81 = vld [vmem:[%s1 + $0x38] sm:$0xf]
  %v82 = vld [vmem:[%s1 + $0x3c] sm:$0xf]
  %v83 = vld [vmem:[%s1 + $0x40] sm:$0xf]
  %v84 = vld [vmem:[%s1 + $0x44] sm:$0xf]
  %v85 = vld [vmem:[%s1 + $0x48] sm:$0xf]
  %v86 = vld [vmem:[%s1 + $0x4c] sm:$0xf]
  %v87 = vld [vmem:[%s1 + $0x50] sm:$0xf]
  %v88 = vld [vmem:[%s1 + $0x54] sm:$0xf]
  %v89 = vld [vmem:[%s1 + $0x58] sm:$0xf]
  %v90 = vld [vmem:[%s1 + $0x5c] sm:$0xf]
  %v91 = vld [vmem:[%s1 + $0x60] sm:$0xf]
  %v92 = vld [vmem:[%s1 + $0x64] sm:$0xf]
  %v93 = vld [vmem:[%s1 + $0x68] sm:$0xf]
  %v94 = vld [vmem:[%s1 + $0x6c] sm:$0xf]
  %v95 = vld [vmem:[%s1 + $0x70] sm:$0xf]
  %v96 = vld [vmem:[%s1 + $0x74] sm:$0xf]
  %v97 = vld [vmem:[%s1 + $0x78] sm:$0xf]
  %v98 = vld [vmem:[%s1 + $0x7c] sm:$0xf]
  %v115 = vunpack.c.l.b16 %v51
  %v116 = vunpack.c.h.b16 %v51
  %v117 = vunpack.c.l.b16 %v52
  %v118 = vunpack.c.h.b16 %v52
  %v119 = vunpack.c.l.b16 %v53
  %v120 = vunpack.c.h.b16 %v53
  %v121 = vunpack.c.l.b16 %v54
  %v122 = vunpack.c.h.b16 %v54
  %v123 = vunpack.c.l.b16 %v55
  %v124 = vunpack.c.h.b16 %v55
  %v125 = vunpack.c.l.b16 %v56
  %v126 = vunpack.c.h.b16 %v56
  %v127 = vunpack.c.l.b16 %v57
  %v128 = vunpack.c.h.b16 %v57
  %v129 = vunpack.c.l.b16 %v58
  %v130 = vunpack.c.h.b16 %v58
  %v131 = vunpack.c.l.b16 %v59
  %v132 = vunpack.c.h.b16 %v59
  %v133 = vunpack.c.l.b16 %v60
  %v134 = vunpack.c.h.b16 %v60
  %v135 = vunpack.c.l.b16 %v61
  %v136 = vunpack.c.h.b16 %v61
  %v137 = vunpack.c.l.b16 %v62
  %v138 = vunpack.c.h.b16 %v62
  %v139 = vunpack.c.l.b16 %v63
  %v140 = vunpack.c.h.b16 %v63
  %v141 = vunpack.c.l.b16 %v64
  %v142 = vunpack.c.h.b16 %v64
  %v143 = vunpack.c.l.b16 %v65
  %v144 = vunpack.c.h.b16 %v65
  %v145 = vunpack.c.l.b16 %v66
  %v146 = vunpack.c.h.b16 %v66
  %v147 = vpack.c.b16 %v117, %v115
  %v148 = vpack.c.b16 %v118, %v116
  %v149 = vpack.c.b16 %v121, %v119
  %v150 = vpack.c.b16 %v122, %v120
  %v151 = vpack.c.b16 %v125, %v123
  %v152 = vpack.c.b16 %v126, %v124
  %v153 = vpack.c.b16 %v129, %v127
  %v154 = vpack.c.b16 %v130, %v128
  %v155 = vpack.c.b16 %v133, %v131
  %v156 = vpack.c.b16 %v134, %v132
  %v157 = vpack.c.b16 %v137, %v135
  %v158 = vpack.c.b16 %v138, %v136
  %v159 = vpack.c.b16 %v141, %v139
  %v160 = vpack.c.b16 %v142, %v140
  %v161 = vpack.c.b16 %v145, %v143
  %v162 = vpack.c.b16 %v146, %v144
  %v211 = vunpack.c.l.b16 %v67
  %v212 = vunpack.c.l.b16 %v68
  %v213 = vunpack.c.l.b16 %v69
  %v214 = vunpack.c.l.b16 %v70
  %v215 = vunpack.c.l.b16 %v71
  %v216 = vunpack.c.l.b16 %v72
  %v217 = vunpack.c.l.b16 %v73
  %v218 = vunpack.c.l.b16 %v74
  %v219 = vunpack.c.l.b16 %v75
  %v220 = vunpack.c.l.b16 %v76
  %v221 = vunpack.c.l.b16 %v77
  %v222 = vunpack.c.l.b16 %v78
  %v223 = vunpack.c.l.b16 %v79
  %v224 = vunpack.c.l.b16 %v80
  %v225 = vunpack.c.l.b16 %v81
  %v226 = vunpack.c.l.b16 %v82
  %v227 = vunpack.c.l.b16 %v83
  %v228 = vunpack.c.l.b16 %v84
  %v229 = vunpack.c.l.b16 %v85
  %v230 = vunpack.c.l.b16 %v86
  %v231 = vunpack.c.l.b16 %v87
  %v232 = vunpack.c.l.b16 %v88
  %v233 = vunpack.c.l.b16 %v89
  %v234 = vunpack.c.l.b16 %v90
  %v235 = vunpack.c.l.b16 %v91
  %v236 = vunpack.c.l.b16 %v92
  %v237 = vunpack.c.l.b16 %v93
  %v238 = vunpack.c.l.b16 %v94
  %v239 = vunpack.c.l.b16 %v95
  %v240 = vunpack.c.l.b16 %v96
  %v241 = vunpack.c.l.b16 %v97
  %v242 = vunpack.c.l.b16 %v98
  %v243 = vpack.c.b16 %v212, %v211
  %v244 = vpack.c.b16 %v214, %v213
  %v245 = vpack.c.b16 %v216, %v215
  %v246 = vpack.c.b16 %v218, %v217
  %v247 = vpack.c.b16 %v220, %v219
  %v248 = vpack.c.b16 %v222, %v221
  %v249 = vpack.c.b16 %v224, %v223
  %v250 = vpack.c.b16 %v226, %v225
  %v251 = vpack.c.b16 %v228, %v227
  %v252 = vpack.c.b16 %v230, %v229
  %v253 = vpack.c.b16 %v232, %v231
  %v254 = vpack.c.b16 %v234, %v233
  %v255 = vpack.c.b16 %v236, %v235
  %v256 = vpack.c.b16 %v238, %v237
  %v257 = vpack.c.b16 %v240, %v239
  %v258 = vpack.c.b16 %v242, %v241
  %275 = vmatprep.subr.bf16.mxu0 0
  %276 = vmatpush1.bf16.msra.mxu0 %v243
  %277 = vmatprep.subr.bf16.mxu0 0
  %278 = vmatpush1.bf16.msra.mxu0 %v244
  %279 = vmatprep.subr.bf16.mxu0 0
  %280 = vmatpush1.bf16.msra.mxu0 %v245
  %281 = vmatprep.subr.bf16.mxu0 0
  %282 = vmatpush1.bf16.msra.mxu0 %v246
  %283 = vmatprep.subr.bf16.mxu0 0
  %284 = vmatpush1.bf16.msra.mxu0 %v247
  %285 = vmatprep.subr.bf16.mxu0 0
  %286 = vmatpush1.bf16.msra.mxu0 %v248
  %287 = vmatprep.subr.bf16.mxu0 0
  %288 = vmatpush1.bf16.msra.mxu0 %v249
  %289 = vmatprep.subr.bf16.mxu0 0
  %290 = vmatpush1.bf16.msra.mxu0 %v250
  %291 = vmatprep.subr.bf16.mxu0 0
  %292 = vmatpush1.bf16.msra.mxu0 %v251
  %293 = vmatprep.subr.bf16.mxu0 0
  %294 = vmatpush1.bf16.msra.mxu0 %v252
  %295 = vmatprep.subr.bf16.mxu0 0
  %296 = vmatpush1.bf16.msra.mxu0 %v253
  %297 = vmatprep.subr.bf16.mxu0 0
  %298 = vmatpush1.bf16.msra.mxu0 %v254
  %299 = vmatprep.subr.bf16.mxu0 0
  %300 = vmatpush1.bf16.msra.mxu0 %v255
  %301 = vmatprep.subr.bf16.mxu0 0
  %302 = vmatpush1.bf16.msra.mxu0 %v256
  %303 = vmatprep.subr.bf16.mxu0 0
  %304 = vmatpush1.bf16.msra.mxu0 %v257
  %305 = vmatprep.subr.bf16.mxu0 0
  %306 = vmatpush1.bf16.msra.mxu0 %v258
  %307 = vmatprep.mubr.bf16.mxu0 %v148
  %308 = vmatmul.mubr.bf16.gmra.mrb[0].mxu0 %v147
  %v309 = vpop.f32.mrb[0].mxu0
  %v310 = vadd.f32 0.0, %v309
  %v311 = vpop.f32.mrb[0].mxu0
  %v312 = vpop.f32.mrb[0].mxu0
  %v313 = vadd.f32 0.0, %v312
  %v314 = vpop.f32.mrb[0].mxu0
  %315 = vmatprep.mubr.bf16.mxu0 %v150
  %316 = vmatmul.mubr.bf16.gmra.mrb[0].mxu0 %v149
  %v317 = vpop.f32.mrb[0].mxu0
  %v318 = vadd.f32 0.0, %v317
  %v319 = vpop.f32.mrb[0].mxu0
  %v320 = vpop.f32.mrb[0].mxu0
  %v321 = vadd.f32 0.0, %v320
  %v322 = vpop.f32.mrb[0].mxu0
  %323 = vmatprep.mubr.bf16.mxu0 %v152
  %324 = vmatmul.mubr.bf16.gmra.mrb[0].mxu0 %v151
  %v325 = vpop.f32.mrb[0].mxu0
  %v326 = vadd.f32 0.0, %v325
  %v327 = vpop.f32.mrb[0].mxu0
  %v328 = vpop.f32.mrb[0].mxu0
  %v329 = vadd.f32 0.0, %v328
  %v330 = vpop.f32.mrb[0].mxu0
  %331 = vmatprep.mubr.bf16.mxu0 %v154
  %332 = vmatmul.mubr.bf16.gmra.mrb[0].mxu0 %v153
  %v333 = vpop.f32.mrb[0].mxu0
  %v334 = vadd.f32 0.0, %v333
  %v335 = vpop.f32.mrb[0].mxu0
  %v336 = vpop.f32.mrb[0].mxu0
  %v337 = vadd.f32 0.0, %v336
  %v338 = vpop.f32.mrb[0].mxu0
  %339 = vmatprep.mubr.bf16.mxu0 %v156
  %340 = vmatmul.mubr.bf16.gmra.mrb[0].mxu0 %v155
  %v341 = vpop.f32.mrb[0].mxu0
  %v342 = vadd.f32 0.0, %v341
  %v343 = vpop.f32.mrb[0].mxu0
  %v344 = vpop.f32.mrb[0].mxu0
  %v345 = vadd.f32 0.0, %v344
  %v346 = vpop.f32.mrb[0].mxu0
  %347 = vmatprep.mubr.bf16.mxu0 %v158
  %348 = vmatmul.mubr.bf16.gmra.mrb[0].mxu0 %v157
  %v349 = vpop.f32.mrb[0].mxu0
  %v350 = vadd.f32 0.0, %v349
  %v351 = vpop.f32.mrb[0].mxu0
  %v352 = vpop.f32.mrb[0].mxu0
  %v353 = vadd.f32 0.0, %v352
  %v354 = vpop.f32.mrb[0].mxu0
  %355 = vmatprep.mubr.bf16.mxu0 %v160
  %356 = vmatmul.mubr.bf16.gmra.mrb[0].mxu0 %v159
  %v357 = vpop.f32.mrb[0].mxu0
  %v358 = vadd.f32 0.0, %v357
  %v359 = vpop.f32.mrb[0].mxu0
  %v360 = vpop.f32.mrb[0].mxu0
  %v361 = vadd.f32 0.0, %v360
  %v362 = vpop.f32.mrb[0].mxu0
  %363 = vmatprep.mubr.bf16.mxu0 %v162
  %364 = vmatmul.mubr.bf16.gmra.mrb[0].mxu0 %v161
  %v365 = vpop.f32.mrb[0].mxu0
  %v366 = vadd.f32 0.0, %v365
  %v367 = vpop.f32.mrb[0].mxu0
  %v368 = vpop.f32.mrb[0].mxu0
  %v369 = vadd.f32 0.0, %v368
  %v370 = vpop.f32.mrb[0].mxu0
  %371 = vdwg.mxu0
  %v372 = vadd.f32 %v35, %v310
  %v373 = vadd.f32 %v36, %v313
  %v374 = vadd.f32 %v37, %v318
  %v375 = vadd.f32 %v38, %v321
  %v376 = vadd.f32 %v39, %v326
  %v377 = vadd.f32 %v40, %v329
  %v378 = vadd.f32 %v41, %v334
  %v379 = vadd.f32 %v42, %v337
  %v380 = vadd.f32 %v43, %v342
  %v381 = vadd.f32 %v44, %v345
  %v382 = vadd.f32 %v45, %v350
  %v383 = vadd.f32 %v46, %v353
  %v384 = vadd.f32 %v47, %v358
  %v385 = vadd.f32 %v48, %v361
  %v386 = vadd.f32 %v49, %v366
  %v387 = vadd.f32 %v50, %v369
  %388 = vst [vmem:[#allocation2] sm:$0xff] %v372
  %389 = vst [vmem:[#allocation2 + $0x8] sm:$0xff] %v373
  %390 = vst [vmem:[#allocation2 + $0x10] sm:$0xff] %v374
  %391 = vst [vmem:[#allocation2 + $0x18] sm:$0xff] %v375
  %392 = vst [vmem:[#allocation2 + $0x20] sm:$0xff] %v376
  %393 = vst [vmem:[#allocation2 + $0x28] sm:$0xff] %v377
  %394 = vst [vmem:[#allocation2 + $0x30] sm:$0xff] %v378
  %395 = vst [vmem:[#allocation2 + $0x38] sm:$0xff] %v379
  %396 = vst [vmem:[#allocation2 + $0x40] sm:$0xff] %v380
  %397 = vst [vmem:[#allocation2 + $0x48] sm:$0xff] %v381
  %398 = vst [vmem:[#allocation2 + $0x50] sm:$0xff] %v382
  %399 = vst [vmem:[#allocation2 + $0x58] sm:$0xff] %v383
  %400 = vst [vmem:[#allocation2 + $0x60] sm:$0xff] %v384
  %401 = vst [vmem:[#allocation2 + $0x68] sm:$0xff] %v385
  %402 = vst [vmem:[#allocation2 + $0x70] sm:$0xff] %v386
  %403 = vst [vmem:[#allocation2 + $0x78] sm:$0xff] %v387
  // Predicated region
  $region14: #{discriminator_forward.10} parent=0 // pred_check
    %p404 = pneg %p15
  $region15: #{discriminator_forward.10} parent=0 // pred_check_branch
    %406 = sbr.rel (%p404) target = $region17
  $region16: #{discriminator_forward.10} parent=0 // pred_region
    %v407 = vld [vmem:[#allocation2] sm:$0xff]
    %v408 = vld [vmem:[#allocation2 + $0x8] sm:$0xff]
    %v409 = vld [vmem:[#allocation2 + $0x10] sm:$0xff]
    %v410 = vld [vmem:[#allocation2 + $0x18] sm:$0xff]
    %v411 = vld [vmem:[#allocation2 + $0x20] sm:$0xff]
    %v412 = vld [vmem:[#allocation2 + $0x28] sm:$0xff]
    %v413 = vld [vmem:[#allocation2 + $0x30] sm:$0xff]
    %v414 = vld [vmem:[#allocation2 + $0x38] sm:$0xff]
    %v415 = vld [vmem:[#allocation2 + $0x40] sm:$0xff]
    %v416 = vld [vmem:[#allocation2 + $0x48] sm:$0xff]
    %v417 = vld [vmem:[#allocation2 + $0x50] sm:$0xff]
    %v418 = vld [vmem:[#allocation2 + $0x58] sm:$0xff]
    %v419 = vld [vmem:[#allocation2 + $0x60] sm:$0xff]
    %v420 = vld [vmem:[#allocation2 + $0x68] sm:$0xff]
    %v421 = vld [vmem:[#allocation2 + $0x70] sm:$0xff]
    %v422 = vld [vmem:[#allocation2 + $0x78] sm:$0xff]
    %v423 = vpack.c.bf16 %v408, %v407
    %v424 = vpack.c.bf16 %v410, %v409
    %v425 = vpack.c.bf16 %v412, %v411
    %v426 = vpack.c.bf16 %v414, %v413
    %v427 = vpack.c.bf16 %v416, %v415
    %v428 = vpack.c.bf16 %v418, %v417
    %v429 = vpack.c.bf16 %v420, %v419
    %v430 = vpack.c.bf16 %v422, %v421
    %v439 = vunpack.c.l.b16 %v423
    %v440 = vunpack.c.h.b16 %v423
    %v441 = vunpack.c.l.b16 %v424
    %v442 = vunpack.c.h.b16 %v424
    %v443 = vunpack.c.l.b16 %v425
    %v444 = vunpack.c.h.b16 %v425
    %v445 = vunpack.c.l.b16 %v426
    %v446 = vunpack.c.h.b16 %v426
    %v447 = vunpack.c.l.b16 %v427
    %v448 = vunpack.c.h.b16 %v427
    %v449 = vunpack.c.l.b16 %v428
    %v450 = vunpack.c.h.b16 %v428
    %v451 = vunpack.c.l.b16 %v429
    %v452 = vunpack.c.h.b16 %v429
    %v453 = vunpack.c.l.b16 %v430
    %v454 = vunpack.c.h.b16 %v430
    %v455 = vpack.c.b16 %v439, %v439
    %v456 = vpack.c.b16 %v440, %v440
    %v457 = vpack.c.b16 %v441, %v441
    %v458 = vpack.c.b16 %v442, %v442
    %v459 = vpack.c.b16 %v443, %v443
    %v460 = vpack.c.b16 %v444, %v444
    %v461 = vpack.c.b16 %v445, %v445
    %v462 = vpack.c.b16 %v446, %v446
    %v463 = vpack.c.b16 %v447, %v447
    %v464 = vpack.c.b16 %v448, %v448
    %v465 = vpack.c.b16 %v449, %v449
    %v466 = vpack.c.b16 %v450, %v450
    %v467 = vpack.c.b16 %v451, %v451
    %v468 = vpack.c.b16 %v452, %v452
    %v469 = vpack.c.b16 %v453, %v453
    %v470 = vpack.c.b16 %v454, %v454
    %487 = vst [vmem:[%s2] sm:$0xf] %v455
    %488 = vst [vmem:[%s2 + $0x4] sm:$0xf] %v456
    %489 = vst [vmem:[%s2 + $0x8] sm:$0xf] %v457
    %490 = vst [vmem:[%s2 + $0xc] sm:$0xf] %v458
    %491 = vst [vmem:[%s2 + $0x10] sm:$0xf] %v459
    %492 = vst [vmem:[%s2 + $0x14] sm:$0xf] %v460
    %493 = vst [vmem:[%s2 + $0x18] sm:$0xf] %v461
    %494 = vst [vmem:[%s2 + $0x1c] sm:$0xf] %v462
    %495 = vst [vmem:[%s2 + $0x20] sm:$0xf] %v463
    %496 = vst [vmem:[%s2 + $0x24] sm:$0xf] %v464
    %497 = vst [vmem:[%s2 + $0x28] sm:$0xf] %v465
    %498 = vst [vmem:[%s2 + $0x2c] sm:$0xf] %v466
    %499 = vst [vmem:[%s2 + $0x30] sm:$0xf] %v467
    %500 = vst [vmem:[%s2 + $0x34] sm:$0xf] %v468
    %501 = vst [vmem:[%s2 + $0x38] sm:$0xf] %v469
    %502 = vst [vmem:[%s2 + $0x3c] sm:$0xf] %v470
    %v503 = vadd.f32 %v407, %v408
    %v504 = vadd.f32 %v503, %v409
    %v505 = vadd.f32 %v504, %v410
    %v506 = vadd.f32 %v505, %v411
    %v507 = vadd.f32 %v506, %v412
    %v508 = vadd.f32 %v507, %v413
    %v509 = vadd.f32 %v508, %v414
    %v510 = vadd.f32 %v509, %v415
    %v511 = vadd.f32 %v510, %v416
    %v512 = vadd.f32 %v511, %v417
    %v513 = vadd.f32 %v512, %v418
    %v514 = vadd.f32 %v513, %v419
    %v515 = vadd.f32 %v514, %v420
    %v516 = vadd.f32 %v515, %v421
    %v517 = vadd.f32 %v516, %v422
    %v518 = vrot.slane %v517, 4
    %v519 = vadd.f32 %v517, %v518
    %v520 = vrot.slane %v519, 2
    %v521 = vadd.f32 %v519, %v520
    %v522 = vrot.slane %v521, 1
    %v523 = vadd.f32 %v521, %v522
    %v524 = vmul.f32 %v407, %v407
    %v525 = vmul.f32 %v408, %v408
    %v526 = vmul.f32 %v409, %v409
    %v527 = vmul.f32 %v410, %v410
    %v528 = vmul.f32 %v411, %v411
    %v529 = vmul.f32 %v412, %v412
    %v530 = vmul.f32 %v413, %v413
    %v531 = vmul.f32 %v414, %v414
    %v532 = vmul.f32 %v415, %v415
    %v533 = vmul.f32 %v416, %v416
    %v534 = vmul.f32 %v417, %v417
    %v535 = vmul.f32 %v418, %v418
    %v536 = vmul.f32 %v419, %v419
    %v537 = vmul.f32 %v420, %v420
    %v538 = vmul.f32 %v421, %v421
    %v539 = vmul.f32 %v422, %v422
    %v540 = vadd.f32 %v524, %v525
    %v541 = vadd.f32 %v540, %v526
    %v542 = vadd.f32 %v541, %v527
    %v543 = vadd.f32 %v542, %v528
    %v544 = vadd.f32 %v543, %v529
    %v545 = vadd.f32 %v544, %v530
    %v546 = vadd.f32 %v545, %v531
    %v547 = vadd.f32 %v546, %v532
    %v548 = vadd.f32 %v547, %v533
    %v549 = vadd.f32 %v548, %v534
    %v550 = vadd.f32 %v549, %v535
    %v551 = vadd.f32 %v550, %v536
    %v552 = vadd.f32 %v551, %v537
    %v553 = vadd.f32 %v552, %v538
    %v554 = vadd.f32 %v553, %v539
    %v555 = vrot.slane %v554, 4
    %v556 = vadd.f32 %v554, %v555
    %v557 = vrot.slane %v556, 2
    %v558 = vadd.f32 %v556, %v557
    %v559 = vrot.slane %v558, 1
    %v560 = vadd.f32 %v558, %v559
    %561 = vst [vmem:[%s3] sm:$0xff] %v523
    %562 = vst [vmem:[%s4] sm:$0xff] %v560
  $region17: #{discriminator_forward.10} parent=0 // pred_fallthru
    _
  // Predicated region
  $region18: #{discriminator_forward.10} parent=0 // pred_check
    _
  $region19: #{discriminator_forward.10} parent=0 // pred_check_branch
    %564 = sbr.rel (0) target = $region21
  $region20: #{discriminator_forward.10} parent=0 // pred_region
    _
  $region21: #{discriminator_forward.10} parent=0 // pred_fallthru
    _
  // Predicated region
  $region22: #{discriminator_forward.10} parent=0 // pred_check
    _
  $region23: #{discriminator_forward.10} parent=0 // pred_check_branch
    %566 = sbr.rel (0) target = $region25
  $region24: #{discriminator_forward.10} parent=0 // pred_region
    _
  $region25: #{discriminator_forward.10} parent=0 // pred_fallthru
    _
  // Predicated region
  $region26: #{discriminator_forward.10} parent=0 // pred_check
    _
  $region27: #{discriminator_forward.10} parent=0 // pred_check_branch
    %568 = sbr.rel (0) target = $region29
  $region28: #{discriminator_forward.10} parent=0 // pred_region
    _
  $region29: #{discriminator_forward.10} parent=0 // pred_fallthru
    _
  // Predicated region
  $region30: #{discriminator_forward.10} parent=0 // pred_check
    _
  $region31: #{discriminator_forward.10} parent=0 // pred_check_branch
    %570 = sbr.rel (0) target = $region33
  $region32: #{discriminator_forward.10} parent=0 // pred_region
    _
  $region33: #{discriminator_forward.10} parent=0 // pred_fallthru
    _
  // Predicated region
  $region34: #{discriminator_forward.10} parent=0 // pred_check
    _
  $region35: #{discriminator_forward.10} parent=0 // pred_check_branch
    %572 = sbr.rel (0) target = $region37
  $region36: #{discriminator_forward.10} parent=0 // pred_region
    _
  $region37: #{discriminator_forward.10} parent=0 // pred_fallthru
    _
  // Predicated region
  $region38: #{discriminator_forward.10} parent=0 // pred_check
    _
  $region39: #{discriminator_forward.10} parent=0 // pred_check_branch
    %574 = sbr.rel (0) target = $region41
  $region40: #{discriminator_forward.10} parent=0 // pred_region
    _
  $region41: #{discriminator_forward.10} parent=0 // pred_fallthru
    _

// kernel: discriminator_forward.11
$region0: #{discriminator_forward.11}
  #allocation0 [shape = 'u32[]', space=smem, size = 0x4, offset = 0x4, fixed_abs, tag = 'smem constant byte address 0x4 - core index']
  #allocation1 [shape = 'u32[144,128]{1,0:T(1,128)}', space=vmem, size = 0x12000, scoped, tag = 'internal scratch']
  %s0 = inlined_call_operand.vmem [shape: bf16[128,128], index: 0, kind: input, shape index: {}]
  %s1 = inlined_call_operand.vmem [shape: f32[1,128], index: 1, kind: input, shape index: {}]
  %s2 = inlined_call_operand.vmem [shape: f32[1,128], index: 2, kind: input, shape index: {}]
  %s3 = inlined_call_operand.vmem [shape: bf16[128,128], index: 3, kind: output, shape index: {}]
  %s4 = sld [smem:[#allocation0]]
  $region22: #{discriminator_forward.11} parent=0
    _
  %s6 = ssub.s32 1, %s4
  %s7 = scalar_select 0, %s6, %s4
  // Predicated region
  $region2: #{discriminator_forward.11} parent=0 // pred_check
    _
  $region3: #{discriminator_forward.11} parent=0 // pred_check_branch
    %9 = sbr.rel (0) target = $region5
  $region4: #{discriminator_forward.11} parent=0 // pred_region
    _
  $region5: #{discriminator_forward.11} parent=0 // pred_fallthru
    _
  // Predicated region
  $region6: #{discriminator_forward.11} parent=0 // pred_check
    _
  $region7: #{discriminator_forward.11} parent=0 // pred_check_branch
    %11 = sbr.rel (0) target = $region9
  $region8: #{discriminator_forward.11} parent=0 // pred_region
    _
  $region9: #{discriminator_forward.11} parent=0 // pred_fallthru
    _
  // Predicated region
  $region10: #{discriminator_forward.11} parent=0 // pred_check
    _
  $region11: #{discriminator_forward.11} parent=0 // pred_check_branch
    %13 = sbr.rel (0) target = $region13
  $region12: #{discriminator_forward.11} parent=0 // pred_region
    _
  $region13: #{discriminator_forward.11} parent=0 // pred_fallthru
    _
  %v14 = vld [vmem:[%s0] sm:$0xf]
  %v15 = vld [vmem:[%s0 + $0x4] sm:$0xf]
  %v16 = vld [vmem:[%s0 + $0x8] sm:$0xf]
  %v17 = vld [vmem:[%s0 + $0xc] sm:$0xf]
  %v18 = vld [vmem:[%s0 + $0x10] sm:$0xf]
  %v19 = vld [vmem:[%s0 + $0x14] sm:$0xf]
  %v20 = vld [vmem:[%s0 + $0x18] sm:$0xf]
  %v21 = vld [vmem:[%s0 + $0x1c] sm:$0xf]
  %v22 = vld [vmem:[%s0 + $0x20] sm:$0xf]
  %v23 = vld [vmem:[%s0 + $0x24] sm:$0xf]
  %v24 = vld [vmem:[%s0 + $0x28] sm:$0xf]
  %v25 = vld [vmem:[%s0 + $0x2c] sm:$0xf]
  %v26 = vld [vmem:[%s0 + $0x30] sm:$0xf]
  %v27 = vld [vmem:[%s0 + $0x34] sm:$0xf]
  %v28 = vld [vmem:[%s0 + $0x38] sm:$0xf]
  %v29 = vld [vmem:[%s0 + $0x3c] sm:$0xf]
  %v30 = vunpack.c.l.bf16 %v14
  %v31 = vunpack.c.l.bf16 %v15
  %v32 = vunpack.c.l.bf16 %v16
  %v33 = vunpack.c.l.bf16 %v17
  %v34 = vunpack.c.l.bf16 %v18
  %v35 = vunpack.c.l.bf16 %v19
  %v36 = vunpack.c.l.bf16 %v20
  %v37 = vunpack.c.l.bf16 %v21
  %v38 = vunpack.c.l.bf16 %v22
  %v39 = vunpack.c.l.bf16 %v23
  %v40 = vunpack.c.l.bf16 %v24
  %v41 = vunpack.c.l.bf16 %v25
  %v42 = vunpack.c.l.bf16 %v26
  %v43 = vunpack.c.l.bf16 %v27
  %v44 = vunpack.c.l.bf16 %v28
  %v45 = vunpack.c.l.bf16 %v29
  %v46 = vld [vmem:[%s1] sm:$0x1]
  %v48 = vlaneseq
  %v49 = vshrl.u32 %v48, 7
  %v50 = vsub.s32 0, %v49
  %v51 = vrot.slane %v46, %v50
  %v53 = vmul.f32 %v30, %v51
  %v54 = vmul.f32 %v31, %v51
  %v55 = vmul.f32 %v32, %v51
  %v56 = vmul.f32 %v33, %v51
  %v57 = vmul.f32 %v34, %v51
  %v58 = vmul.f32 %v35, %v51
  %v59 = vmul.f32 %v36, %v51
  %v60 = vmul.f32 %v37, %v51
  %v61 = vmul.f32 %v38, %v51
  %v62 = vmul.f32 %v39, %v51
  %v63 = vmul.f32 %v40, %v51
  %v64 = vmul.f32 %v41, %v51
  %v65 = vmul.f32 %v42, %v51
  %v66 = vmul.f32 %v43, %v51
  %v67 = vmul.f32 %v44, %v51
  %v68 = vmul.f32 %v45, %v51
  %v69 = vld [vmem:[%s2] sm:$0x1]
  %v71 = vlaneseq
  %v72 = vshrl.u32 %v71, 7
  %v73 = vsub.s32 0, %v72
  %v74 = vrot.slane %v69, %v73
  %v76 = vadd.f32 %v53, %v74
  %v77 = vadd.f32 %v54, %v74
  %v78 = vadd.f32 %v55, %v74
  %v79 = vadd.f32 %v56, %v74
  %v80 = vadd.f32 %v57, %v74
  %v81 = vadd.f32 %v58, %v74
  %v82 = vadd.f32 %v59, %v74
  %v83 = vadd.f32 %v60, %v74
  %v84 = vadd.f32 %v61, %v74
  %v85 = vadd.f32 %v62, %v74
  %v86 = vadd.f32 %v63, %v74
  %v87 = vadd.f32 %v64, %v74
  %v88 = vadd.f32 %v65, %v74
  %v89 = vadd.f32 %v66, %v74
  %v90 = vadd.f32 %v67, %v74
  %v91 = vadd.f32 %v68, %v74
  %vm92 = vcmp.ge.f32.partialorder %v76, 0.0
  %vm93 = vcmp.ge.f32.partialorder %v77, 0.0
  %vm94 = vcmp.ge.f32.partialorder %v78, 0.0
  %vm95 = vcmp.ge.f32.partialorder %v79, 0.0
  %vm96 = vcmp.ge.f32.partialorder %v80, 0.0
  %vm97 = vcmp.ge.f32.partialorder %v81, 0.0
  %vm98 = vcmp.ge.f32.partialorder %v82, 0.0
  %vm99 = vcmp.ge.f32.partialorder %v83, 0.0
  %vm100 = vcmp.ge.f32.partialorder %v84, 0.0
  %vm101 = vcmp.ge.f32.partialorder %v85, 0.0
  %vm102 = vcmp.ge.f32.partialorder %v86, 0.0
  %vm103 = vcmp.ge.f32.partialorder %v87, 0.0
  %vm104 = vcmp.ge.f32.partialorder %v88, 0.0
  %vm105 = vcmp.ge.f32.partialorder %v89, 0.0
  %vm106 = vcmp.ge.f32.partialorder %v90, 0.0
  %vm107 = vcmp.ge.f32.partialorder %v91, 0.0
  %v108 = vmul.f32 %v76, 0.2
  %v109 = vmul.f32 %v77, 0.2
  %v110 = vmul.f32 %v78, 0.2
  %v111 = vmul.f32 %v79, 0.2
  %v112 = vmul.f32 %v80, 0.2
  %v113 = vmul.f32 %v81, 0.2
  %v114 = vmul.f32 %v82, 0.2
  %v115 = vmul.f32 %v83, 0.2
  %v116 = vmul.f32 %v84, 0.2
  %v117 = vmul.f32 %v85, 0.2
  %v118 = vmul.f32 %v86, 0.2
  %v119 = vmul.f32 %v87, 0.2
  %v120 = vmul.f32 %v88, 0.2
  %v121 = vmul.f32 %v89, 0.2
  %v122 = vmul.f32 %v90, 0.2
  %v123 = vmul.f32 %v91, 0.2
  %v124 = vsel %vm92, %v76, %v108
  %v125 = vsel %vm93, %v77, %v109
  %v126 = vsel %vm94, %v78, %v110
  %v127 = vsel %vm95, %v79, %v111
  %v128 = vsel %vm96, %v80, %v112
  %v129 = vsel %vm97, %v81, %v113
  %v130 = vsel %vm98, %v82, %v114
  %v131 = vsel %vm99, %v83, %v115
  %v132 = vsel %vm100, %v84, %v116
  %v133 = vsel %vm101, %v85, %v117
  %v134 = vsel %vm102, %v86, %v118
  %v135 = vsel %vm103, %v87, %v119
  %v136 = vsel %vm104, %v88, %v120
  %v137 = vsel %vm105, %v89, %v121
  %v138 = vsel %vm106, %v90, %v122
  %v139 = vsel %vm107, %v91, %v123
  %v140 = vpack.c.bf16 %v125, %v124
  %v141 = vpack.c.bf16 %v127, %v126
  %v142 = vpack.c.bf16 %v129, %v128
  %v143 = vpack.c.bf16 %v131, %v130
  %v144 = vpack.c.bf16 %v133, %v132
  %v145 = vpack.c.bf16 %v135, %v134
  %v146 = vpack.c.bf16 %v137, %v136
  %v147 = vpack.c.bf16 %v139, %v138
  %v156 = vunpack.c.l.b16 %v140
  %v157 = vunpack.c.h.b16 %v140
  %v158 = vunpack.c.l.b16 %v141
  %v159 = vunpack.c.h.b16 %v141
  %v160 = vunpack.c.l.b16 %v142
  %v161 = vunpack.c.h.b16 %v142
  %v162 = vunpack.c.l.b16 %v143
  %v163 = vunpack.c.h.b16 %v143
  %v164 = vunpack.c.l.b16 %v144
  %v165 = vunpack.c.h.b16 %v144
  %v166 = vunpack.c.l.b16 %v145
  %v167 = vunpack.c.h.b16 %v145
  %v168 = vunpack.c.l.b16 %v146
  %v169 = vunpack.c.h.b16 %v146
  %v170 = vunpack.c.l.b16 %v147
  %v171 = vunpack.c.h.b16 %v147
  %v172 = vpack.c.b16 %v156, %v156
  %v173 = vpack.c.b16 %v157, %v157
  %v174 = vpack.c.b16 %v158, %v158
  %v175 = vpack.c.b16 %v159, %v159
  %v176 = vpack.c.b16 %v160, %v160
  %v177 = vpack.c.b16 %v161, %v161
  %v178 = vpack.c.b16 %v162, %v162
  %v179 = vpack.c.b16 %v163, %v163
  %v180 = vpack.c.b16 %v164, %v164
  %v181 = vpack.c.b16 %v165, %v165
  %v182 = vpack.c.b16 %v166, %v166
  %v183 = vpack.c.b16 %v167, %v167
  %v184 = vpack.c.b16 %v168, %v168
  %v185 = vpack.c.b16 %v169, %v169
  %v186 = vpack.c.b16 %v170, %v170
  %v187 = vpack.c.b16 %v171, %v171
  %204 = vst [vmem:[%s3] sm:$0xf] %v172
  %205 = vst [vmem:[%s3 + $0x4] sm:$0xf] %v173
  %206 = vst [vmem:[%s3 + $0x8] sm:$0xf] %v174
  %207 = vst [vmem:[%s3 + $0xc] sm:$0xf] %v175
  %208 = vst [vmem:[%s3 + $0x10] sm:$0xf] %v176
  %209 = vst [vmem:[%s3 + $0x14] sm:$0xf] %v177
  %210 = vst [vmem:[%s3 + $0x18] sm:$0xf] %v178
  %211 = vst [vmem:[%s3 + $0x1c] sm:$0xf] %v179
  %212 = vst [vmem:[%s3 + $0x20] sm:$0xf] %v180
  %213 = vst [vmem:[%s3 + $0x24] sm:$0xf] %v181
  %214 = vst [vmem:[%s3 + $0x28] sm:$0xf] %v182
  %215 = vst [vmem:[%s3 + $0x2c] sm:$0xf] %v183
  %216 = vst [vmem:[%s3 + $0x30] sm:$0xf] %v184
  %217 = vst [vmem:[%s3 + $0x34] sm:$0xf] %v185
  %218 = vst [vmem:[%s3 + $0x38] sm:$0xf] %v186
  %219 = vst [vmem:[%s3 + $0x3c] sm:$0xf] %v187
  // Predicated region
  $region14: #{discriminator_forward.11} parent=0 // pred_check
    _
  $region15: #{discriminator_forward.11} parent=0 // pred_check_branch
    %221 = sbr.rel (0) target = $region17
  $region16: #{discriminator_forward.11} parent=0 // pred_region
    _
  $region17: #{discriminator_forward.11} parent=0 // pred_fallthru
    _
  // Predicated region
  $region18: #{discriminator_forward.11} parent=0 // pred_check
    _
  $region19: #{discriminator_forward.11} parent=0 // pred_check_branch
    %223 = sbr.rel (0) target = $region21
  $region20: #{discriminator_forward.11} parent=0 // pred_region
    _
  $region21: #{discriminator_forward.11} parent=0 // pred_fallthru
    _

// kernel: discriminator_forward.12
$region0: #{discriminator_forward.12}
  #allocation0 [shape = 'u32[]', space=smem, size = 0x4, offset = 0x4, fixed_abs, tag = 'smem constant byte address 0x4 - core index']
  #allocation1 [shape = 'u32[144,128]{1,0:T(1,128)}', space=vmem, size = 0x12000, scoped, tag = 'internal scratch']
  #allocation2 [shape = 'f32[32,128]{1,0:T(8,128)}', space=vmem, size = 0x4000, scoped, tag = 'scratch operand']
  %s0 = inlined_call_operand.vmem [shape: bf16[32,512], index: 0, kind: input, shape index: {}]
  %s1 = inlined_call_operand.vmem [shape: bf16[512,128], index: 1, kind: input, shape index: {}]
  %s2 = inlined_call_operand.vmem [shape: bf16[32,128], index: 2, kind: output, shape index: {0}]
  %s3 = inlined_call_operand.vmem [shape: f32[1,8,128], index: 3, kind: output, shape index: {1}]
  %s4 = inlined_call_operand.vmem [shape: f32[1,8,128], index: 4, kind: output, shape index: {2}]
  %5 = xla_tuple %s2, %s3, %s4
  %s6 = sld [smem:[#allocation0]]
  $region103: #{discriminator_forward.12} parent=0
    _
  %s8 = ssub.s32 1, %s6
  %s9 = scalar_select 0, %s8, %s6
  $region1: #{discriminator_forward.12} parent=0
    #allocation3 [shape = 'u8[32768]{0}', space=vmem, size = 0x8000, scoped, tag = 'input window, operand 0']
    loop: start=0, step=1, limit=4
    $region2: #{discriminator_forward.12} parent=1 // loop_pre_header
      _
    $region3: #{discriminator_forward.12} parent=1 // loop_header
      %s11 = sphi 0, %s15
      %p12 = scmp.ge.s32.totalorder %s11, 4
      %s18 = sphi 0, %s30
      %s19 = sphi 0, %s26
      %s20 = sphi 0, %s18
      %s21 = sphi 0, %s19
      %s22 = sphi 0, %s20
      %s23 = sphi 0, %s21
      %s35 = sphi 0, %s37
      %s38 = sphi 0, %s35
      %s39 = sphi 0, %s38
      %s55 = sphi 0, %s39
      %s61 = sphi 0, %s63
      %s64 = sphi 0, %s61
      %s65 = sphi 0, %s64
      %s81 = sphi 0, %s65
      %s87 = sphi 0, %s89
      %s90 = sphi 0, %s87
      %s91 = sphi 0, %s90
      %s107 = sphi 0, %s91
      %s113 = sphi 0, %s115
      %s116 = sphi 0, %s113
      %s117 = sphi 0, %s116
      %s133 = sphi 0, %s117
      %s139 = sphi 0, %s141
      %s142 = sphi 0, %s139
      %s143 = sphi 0, %s142
      %s159 = sphi 0, %s143
    $region4: #{discriminator_forward.12} parent=1 // loop_header_branch
      %14 = sbr.rel (%p12) target = $region8
    $region5: #{discriminator_forward.12} parent=1 // loop_body
      %s16 = ssub.s32 %s11, 1
      %s17 = ssub.s32 %s11, 2
      %s24 = sadd.s32 1, %s19
      %p25 = scmp.ge.s32.totalorder %s24, 2
      %s26 = scalar_select %p25, 0, %s24
      %s27 = sadd.s32 1, %s18
      %s28 = scalar_select %p25, %s27, %s18
      %p29 = scmp.ge.s32.totalorder %s28, 1
      %s30 = scalar_select %p29, 0, %s28
      %s31 = ssub.s32 %s18, %s30
      %s32 = ssub.s32 %s19, %s26
      %s33 = sor.u32 %s31, %s32
      %p34 = scmp.eq.s32.totalorder %s33, 0
      %s36 = sadd.s32 %s35, 1
      %s37 = scalar_select %p34, %s35, %s36
      %p40 = pneg %p34
      %p41 = scmp.eq.s32.totalorder %s11, 1
      %p42 = por %p40, %p41
      %p43 = scmp.ne.s32.totalorder %s35, %s38
      %p44 = scmp.eq.s32.totalorder %s11, 0
      %p45 = por %p43, %p44
      %p46 = scmp.ne.s32.totalorder %s35, %s38
      %p47 = scmp.eq.s32.totalorder %s16, 1
      %p48 = por %p46, %p47
      %p49 = scmp.ne.s32.totalorder %s38, %s39
      %p50 = scmp.eq.s32.totalorder %s16, 0
      %p51 = por %p49, %p50
      %p52 = scmp.ne.s32.totalorder %s38, %s39
      %p53 = scmp.eq.s32.totalorder %s17, 1
      %p54 = por %p52, %p53
      %p56 = scmp.ne.s32.totalorder %s39, %s55
      %p57 = scmp.eq.s32.totalorder %s17, 0
      %p58 = por %p56, %p57
      %s59 = ssub.s32 %s19, %s26
      %p60 = scmp.eq.s32.totalorder %s59, 0
      %s62 = sadd.s32 %s61, 1
      %s63 = scalar_select %p60, %s61, %s62
      %p66 = pneg %p60
      %p67 = scmp.eq.s32.totalorder %s11, 1
      %p68 = por %p66, %p67
      %p69 = scmp.ne.s32.totalorder %s61, %s64
      %p70 = scmp.eq.s32.totalorder %s11, 0
      %p71 = por %p69, %p70
      %p72 = scmp.ne.s32.totalorder %s61, %s64
      %p73 = scmp.eq.s32.totalorder %s16, 1
      %p74 = por %p72, %p73
      %p75 = scmp.ne.s32.totalorder %s64, %s65
      %p76 = scmp.eq.s32.totalorder %s16, 0
      %p77 = por %p75, %p76
      %p78 = scmp.ne.s32.totalorder %s64, %s65
      %p79 = scmp.eq.s32.totalorder %s17, 1
      %p80 = por %p78, %p79
      %p82 = scmp.ne.s32.totalorder %s65, %s81
      %p83 = scmp.eq.s32.totalorder %s17, 0
      %p84 = por %p82, %p83
      %s85 = ssub.s32 %s18, %s30
      %p86 = scmp.eq.s32.totalorder %s85, 0
      %s88 = sadd.s32 %s87, 1
      %s89 = scalar_select %p86, %s87, %s88
      %p92 = pneg %p86
      %p93 = scmp.eq.s32.totalorder %s11, 1
      %p94 = por %p92, %p93
      %p95 = scmp.ne.s32.totalorder %s87, %s90
      %p96 = scmp.eq.s32.totalorder %s11, 0
      %p97 = por %p95, %p96
      %p98 = scmp.ne.s32.totalorder %s87, %s90
      %p99 = scmp.eq.s32.totalorder %s16, 1
      %p100 = por %p98, %p99
      %p101 = scmp.ne.s32.totalorder %s90, %s91
      %p102 = scmp.eq.s32.totalorder %s16, 0
      %p103 = por %p101, %p102
      %p104 = scmp.ne.s32.totalorder %s90, %s91
      %p105 = scmp.eq.s32.totalorder %s17, 1
      %p106 = por %p104, %p105
      %p108 = scmp.ne.s32.totalorder %s91, %s107
      %p109 = scmp.eq.s32.totalorder %s17, 0
      %p110 = por %p108, %p109
      %s111 = ssub.s32 %s18, %s30
      %p112 = scmp.eq.s32.totalorder %s111, 0
      %s114 = sadd.s32 %s113, 1
      %s115 = scalar_select %p112, %s113, %s114
      %p118 = pneg %p112
      %p119 = scmp.eq.s32.totalorder %s11, 1
      %p120 = por %p118, %p119
      %p121 = scmp.ne.s32.totalorder %s113, %s116
      %p122 = scmp.eq.s32.totalorder %s11, 0
      %p123 = por %p121, %p122
      %p124 = scmp.ne.s32.totalorder %s113, %s116
      %p125 = scmp.eq.s32.totalorder %s16, 1
      %p126 = por %p124, %p125
      %p127 = scmp.ne.s32.totalorder %s116, %s117
      %p128 = scmp.eq.s32.totalorder %s16, 0
      %p129 = por %p127, %p128
      %p130 = scmp.ne.s32.totalorder %s116, %s117
      %p131 = scmp.eq.s32.totalorder %s17, 1
      %p132 = por %p130, %p131
      %p134 = scmp.ne.s32.totalorder %s117, %s133
      %p135 = scmp.eq.s32.totalorder %s17, 0
      %p136 = por %p134, %p135
      %s137 = ssub.s32 %s18, %s30
      %p138 = scmp.eq.s32.totalorder %s137, 0
      %s140 = sadd.s32 %s139, 1
      %s141 = scalar_select %p138, %s139, %s140
      %p144 = pneg %p138
      %p145 = scmp.eq.s32.totalorder %s11, 1
      %p146 = por %p144, %p145
      %p147 = scmp.ne.s32.totalorder %s139, %s142
      %p148 = scmp.eq.s32.totalorder %s11, 0
      %p149 = por %p147, %p148
      %p150 = scmp.ne.s32.totalorder %s139, %s142
      %p151 = scmp.eq.s32.totalorder %s16, 1
      %p152 = por %p150, %p151
      %p153 = scmp.ne.s32.totalorder %s142, %s143
      %p154 = scmp.eq.s32.totalorder %s16, 0
      %p155 = por %p153, %p154
      %p156 = scmp.ne.s32.totalorder %s142, %s143
      %p157 = scmp.eq.s32.totalorder %s17, 1
      %p158 = por %p156, %p157
      %p160 = scmp.ne.s32.totalorder %s143, %s159
      %p161 = scmp.eq.s32.totalorder %s17, 0
      %p162 = por %p160, %p161
      %p163 = scmp.le.s32.totalorder 1, %s11
      %p164 = scmp.lt.s32.totalorder %s11, 3
      %p165 = pnand %p163, %p164
      %p166 = pneg %p165
      // Predicated region
      $region9: #{discriminator_forward.12} parent=5 // pred_check
        _
      $region10: #{discriminator_forward.12} parent=5 // pred_check_branch
        %168 = sbr.rel (%p165) target = $region12
      $region11: #{discriminator_forward.12} parent=5 // pred_region
        %s169 = ssub.s32 %s11, 1
      $region12: #{discriminator_forward.12} parent=5 // pred_fallthru
        _
      %p170 = scmp.lt.s32.totalorder %s11, 2
      // Predicated region
      $region13: #{discriminator_forward.12} parent=5 // pred_check
        %p171 = pneg %p170
      $region14: #{discriminator_forward.12} parent=5 // pred_check_branch
        %173 = sbr.rel (%p171) target = $region16
      $region15: #{discriminator_forward.12} parent=5 // pred_region
        // Predicated region
        $region17: #{discriminator_forward.12} parent=15 // pred_check
          %p174 = pneg %p45
        $region18: #{discriminator_forward.12} parent=15 // pred_check_branch
          %176 = sbr.rel (%p174) target = $region20
        $region19: #{discriminator_forward.12} parent=15 // pred_region
          %s177 = sand.u32 %s35, 1
          %s178 = sand.u32 %s35, 1
          %s179 = smul.addr %s178, 32
          %s180 = scalar_lea.vmem [#allocation3], %s179
          %s181 = smul.u32 4, %s18
          %s182 = smul.u32 2, %s19
          %s183 = smul.addr %s181, 4
          %s184 = sadd.s32 %s182, %s183
          %s185 = smul.addr %s184, 4
          %s186 = scalar_lea.vmem %s0, %s185
          // Predicated region
          $region21: #{discriminator_forward.12} parent=19 // pred_check
            _
          $region22: #{discriminator_forward.12} parent=19 // pred_check_branch
            %188 = sbr.rel (0) target = $region24
          $region23: #{discriminator_forward.12} parent=19 // pred_region
            // Predicated region
            $region25: #{discriminator_forward.12} parent=23 // pred_check
              _
            $region26: #{discriminator_forward.12} parent=23 // pred_check_branch
              %190 = sbr.rel (0) target = $region28
            $region27: #{discriminator_forward.12} parent=23 // pred_region
              // Predicated region
              $region40: #{discriminator_forward.12} parent=27 // pred_check
                _
              $region41: #{discriminator_forward.12} parent=27 // pred_check_branch
                %211 = sbr.rel (0) target = $region43
              $region42: #{discriminator_forward.12} parent=27 // pred_region
                loop: start=0, step=1, limit=1
                $region44: #{discriminator_forward.12} parent=42 // loop_pre_header
                  _
                $region45: #{discriminator_forward.12} parent=42 // loop_header
                  %s213 = sphi 0, %s217
                  %p214 = scmp.ge.s32.totalorder %s213, 1
                  %s218 = sphi %s186, %s186
                  %s219 = sphi %s180, %s180
                $region46: #{discriminator_forward.12} parent=42 // loop_header_branch
                  %216 = sbr.rel (%p214) target = $region50
                $region47: #{discriminator_forward.12} parent=42 // loop_body
                  %v220 = vld [vmem:[%s218] sm:$0xff]
                  %221 = vst [vmem:[%s219] sm:$0xff] %v220
                  %v222 = vld [vmem:[%s218 + $0x10] sm:$0xff]
                  %223 = vst [vmem:[%s219 + $0x8] sm:$0xff] %v222
                  %v224 = vld [vmem:[%s218 + $0x20] sm:$0xff]
                  %225 = vst [vmem:[%s219 + $0x10] sm:$0xff] %v224
                  %v226 = vld [vmem:[%s218 + $0x30] sm:$0xff]
                  %227 = vst [vmem:[%s219 + $0x18] sm:$0xff] %v226
                $region48: #{discriminator_forward.12} parent=42 // loop_footer
                  %s217 = sadd.s32 1, %s213
                $region49: #{discriminator_forward.12} parent=42 // loop_footer_branch
                  %212 = sbr.rel target = $region45
                $region50: #{discriminator_forward.12} parent=42 // loop_exit
                  _
              $region43: #{discriminator_forward.12} parent=27 // pred_fallthru
                _
              // Predicated region
              $region51: #{discriminator_forward.12} parent=27 // pred_check
                _
              $region52: #{discriminator_forward.12} parent=27 // pred_check_branch
                %229 = sbr.rel target = $region54
              $region53: #{discriminator_forward.12} parent=27 // pred_region
                _
              $region54: #{discriminator_forward.12} parent=27 // pred_fallthru
                _
            $region28: #{discriminator_forward.12} parent=23 // pred_fallthru
              _
            // Predicated region
            $region29: #{discriminator_forward.12} parent=23 // pred_check
              _
            $region30: #{discriminator_forward.12} parent=23 // pred_check_branch
              %192 = sbr.rel target = $region32
            $region31: #{discriminator_forward.12} parent=23 // pred_region
              loop: start=0, step=1, limit=1
              $region33: #{discriminator_forward.12} parent=31 // loop_pre_header
                _
              $region34: #{discriminator_forward.12} parent=31 // loop_header
                %s195 = sphi 0, %s199
                %p196 = scmp.ge.s32.totalorder %s195, 1
                %s200 = sphi %s186, %s186
                %s201 = sphi %s180, %s180
              $region35: #{discriminator_forward.12} parent=31 // loop_header_branch
                %198 = sbr.rel (%p196) target = $region39
              $region36: #{discriminator_forward.12} parent=31 // loop_body
                %v202 = vld [vmem:[%s200] sm:$0xff]
                %203 = vst [vmem:[%s201] sm:$0xff] %v202
                %v204 = vld [vmem:[%s200 + $0x10] sm:$0xff]
                %205 = vst [vmem:[%s201 + $0x8] sm:$0xff] %v204
                %v206 = vld [vmem:[%s200 + $0x20] sm:$0xff]
                %207 = vst [vmem:[%s201 + $0x10] sm:$0xff] %v206
                %v208 = vld [vmem:[%s200 + $0x30] sm:$0xff]
                %209 = vst [vmem:[%s201 + $0x18] sm:$0xff] %v208
              $region37: #{discriminator_forward.12} parent=31 // loop_footer
                %s199 = sadd.s32 1, %s195
              $region38: #{discriminator_forward.12} parent=31 // loop_footer_branch
                %194 = sbr.rel target = $region34
              $region39: #{discriminator_forward.12} parent=31 // loop_exit
                _
            $region32: #{discriminator_forward.12} parent=23 // pred_fallthru
              _
          $region24: #{discriminator_forward.12} parent=19 // pred_fallthru
            _
          %230 = vnop
        $region20: #{discriminator_forward.12} parent=15 // pred_fallthru
          _
        // Predicated region
        $region55: #{discriminator_forward.12} parent=15 // pred_check
          %p231 = pneg %p71
        $region56: #{discriminator_forward.12} parent=15 // pred_check_branch
          %233 = sbr.rel (%p231) target = $region58
        $region57: #{discriminator_forward.12} parent=15 // pred_region
          %s234 = smul.u32 32, %s19
          %p235 = scmp.lt.s32.totalorder %s234, 63
          %s236 = scalar_select %p235, %s234, 63
          %s237 = smul.addr %s236, 4
          %s238 = scalar_lea.vmem %s1, %s237
          %s239 = smul.u32 32, %s19
        $region58: #{discriminator_forward.12} parent=15 // pred_fallthru
          _
      $region16: #{discriminator_forward.12} parent=5 // pred_fallthru
        _
      %p240 = scmp.le.s32.totalorder 1, %s11
      %p241 = scmp.lt.s32.totalorder %s11, 3
      %p242 = pnand %p240, %p241
      %p243 = pneg %p242
      // Predicated region
      $region59: #{discriminator_forward.12} parent=5 // pred_check
        _
      $region60: #{discriminator_forward.12} parent=5 // pred_check_branch
        %245 = sbr.rel (%p242) target = $region62
      $region61: #{discriminator_forward.12} parent=5 // pred_region
        %s246 = ssub.s32 %s11, 1
        %s247 = sand.u32 %s38, 1
        %s248 = sand.u32 %s38, 1
        %s249 = smul.addr %s248, 32
        %s250 = scalar_lea.vmem [#allocation3], %s249
        // Predicated region
        $region63: #{discriminator_forward.12} parent=61 // pred_check
          %p251 = pneg %p51
        $region64: #{discriminator_forward.12} parent=61 // pred_check_branch
          %253 = sbr.rel (%p251) target = $region66
        $region65: #{discriminator_forward.12} parent=61 // pred_region
          _
        $region66: #{discriminator_forward.12} parent=61 // pred_fallthru
          _
        %s254 = sand.u32 %s38, 1
        %s255 = sand.u32 %s38, 1
        %s256 = smul.addr %s255, 32
        %s257 = scalar_lea.vmem [#allocation3], %s256
        %p258 = pneg %p51
        %p259 = pneg %p48
        %s260 = smul.u32 32, %s21
        %p261 = scmp.lt.s32.totalorder %s260, 63
        %s262 = scalar_select %p261, %s260, 63
        %s263 = smul.addr %s262, 4
        %s264 = scalar_lea.vmem %s1, %s263
        %p265 = pneg %p77
        %p266 = pneg %p74
        %p267 = pneg %p103
        %p268 = pneg %p100
        %s269 = smul.u32 4, %s20
        %p270 = scmp.lt.s32.totalorder %s269, 3
        %s271 = scalar_select %p270, %s269, 3
        %s272 = smul.addr %s271, 4
        %s273 = scalar_lea.vmem %s2, %s272
        %p274 = pneg %p129
        %p275 = pneg %p126
        %p276 = scmp.lt.s32.totalorder %s20, 0
        %s277 = scalar_select %p276, %s20, 0
        %s278 = smul.addr %s277, 8
        %s279 = scalar_lea.vmem %s3, %s278
        %p280 = pneg %p155
        %p281 = pneg %p152
        %p282 = scmp.lt.s32.totalorder %s20, 0
        %s283 = scalar_select %p282, %s20, 0
        %s284 = smul.addr %s283, 8
        %s285 = scalar_lea.vmem %s4, %s284
        %s286 = smul.u32 4, %s20
        %s287 = smul.u32 2, %s21
        %s288 = smul.u32 32, %s21
        %p289 = scmp.lt.s32.totalorder %s288, 63
        %s290 = scalar_select %p289, %s288, 63
        %s291 = smul.addr %s290, 4
        %s292 = scalar_lea.vmem %s1, %s291
        %s293 = smul.u32 32, %s21
        %s294 = smul.u32 4, %s20
        %p295 = scmp.lt.s32.totalorder %s294, 3
        %s296 = scalar_select %p295, %s294, 3
        %s297 = smul.addr %s296, 4
        %s298 = scalar_lea.vmem %s2, %s297
        %s299 = smul.u32 4, %s20
        %p300 = scmp.lt.s32.totalorder %s20, 0
        %s301 = scalar_select %p300, %s20, 0
        %s302 = smul.addr %s301, 8
        %s303 = scalar_lea.vmem %s3, %s302
        %p304 = scmp.lt.s32.totalorder %s20, 0
        %s305 = scalar_select %p304, %s20, 0
        %s306 = smul.addr %s305, 8
        %s307 = scalar_lea.vmem %s4, %s306
        %p309 = scmp.eq.s32.totalorder %s21, 0
        // Predicated region
        $region67: #{discriminator_forward.12} parent=61 // pred_check
          %p310 = pneg %p309
        $region68: #{discriminator_forward.12} parent=61 // pred_check_branch
          %312 = sbr.rel (%p310) target = $region70
        $region69: #{discriminator_forward.12} parent=61 // pred_region
          %313 = vst [vmem:[#allocation2] sm:$0xff] 0.0
          %314 = vst [vmem:[#allocation2 + $0x8] sm:$0xff] 0.0
          %315 = vst [vmem:[#allocation2 + $0x10] sm:$0xff] 0.0
          %316 = vst [vmem:[#allocation2 + $0x18] sm:$0xff] 0.0
        $region70: #{discriminator_forward.12} parent=61 // pred_fallthru
          _
        %v317 = vld [vmem:[#allocation2] sm:$0xff]
        %v318 = vld [vmem:[#allocation2 + $0x8] sm:$0xff]
        %v319 = vld [vmem:[#allocation2 + $0x10] sm:$0xff]
        %v320 = vld [vmem:[#allocation2 + $0x18] sm:$0xff]
        %v321 = vld [vmem:[%s250] sm:$0xff]
        %v322 = vld [vmem:[%s250 + $0x8] sm:$0xff]
        %v323 = vld [vmem:[%s250 + $0x10] sm:$0xff]
        %v324 = vld [vmem:[%s250 + $0x18] sm:$0xff]
        %v325 = vld [vmem:[%s292] sm:$0xf]
        %v326 = vld [vmem:[%s292 + $0x4] sm:$0xf]
        %v327 = vld [vmem:[%s292 + $0x8] sm:$0xf]
        %v328 = vld [vmem:[%s292 + $0xc] sm:$0xf]
        %v329 = vld [vmem:[%s292 + $0x10] sm:$0xf]
        %v330 = vld [vmem:[%s292 + $0x14] sm:$0xf]
        %v331 = vld [vmem:[%s292 + $0x18] sm:$0xf]
        %v332 = vld [vmem:[%s292 + $0x1c] sm:$0xf]
        %v333 = vld [vmem:[%s292 + $0x20] sm:$0xf]
        %v334 = vld [vmem:[%s292 + $0x24] sm:$0xf]
        %v335 = vld [vmem:[%s292 + $0x28] sm:$0xf]
        %v336 = vld [vmem:[%s292 + $0x2c] sm:$0xf]
        %v337 = vld [vmem:[%s292 + $0x30] sm:$0xf]
        %v338 = vld [vmem:[%s292 + $0x34] sm:$0xf]
        %v339 = vld [vmem:[%s292 + $0x38] sm:$0xf]
        %v340 = vld [vmem:[%s292 + $0x3c] sm:$0xf]
        %v341 = vld [vmem:[%s292 + $0x40] sm:$0xf]
        %v342 = vld [vmem:[%s292 + $0x44] sm:$0xf]
        %v343 = vld [vmem:[%s292 + $0x48] sm:$0xf]
        %v344 = vld [vmem:[%s292 + $0x4c] sm:$0xf]
        %v345 = vld [vmem:[%s292 + $0x50] sm:$0xf]
        %v346 = vld [vmem:[%s292 + $0x54] sm:$0xf]
        %v347 = vld [vmem:[%s292 + $0x58] sm:$0xf]
        %v348 = vld [vmem:[%s292 + $0x5c] sm:$0xf]
        %v349 = vld [vmem:[%s292 + $0x60] sm:$0xf]
        %v350 = vld [vmem:[%s292 + $0x64] sm:$0xf]
        %v351 = vld [vmem:[%s292 + $0x68] sm:$0xf]
        %v352 = vld [vmem:[%s292 + $0x6c] sm:$0xf]
        %v353 = vld [vmem:[%s292 + $0x70] sm:$0xf]
        %v354 = vld [vmem:[%s292 + $0x74] sm:$0xf]
        %v355 = vld [vmem:[%s292 + $0x78] sm:$0xf]
        %v356 = vld [vmem:[%s292 + $0x7c] sm:$0xf]
        %v361 = vunpack.c.l.b16 %v321
        %v362 = vunpack.c.h.b16 %v321
        %v363 = vunpack.c.l.b16 %v322
        %v364 = vunpack.c.h.b16 %v322
        %v365 = vunpack.c.l.b16 %v323
        %v366 = vunpack.c.h.b16 %v323
        %v367 = vunpack.c.l.b16 %v324
        %v368 = vunpack.c.h.b16 %v324
        %v369 = vpack.c.b16 %v363, %v361
        %v370 = vpack.c.b16 %v364, %v362
        %v371 = vpack.c.b16 %v367, %v365
        %v372 = vpack.c.b16 %v368, %v366
        %v409 = vunpack.c.l.b16 %v325
        %v410 = vunpack.c.l.b16 %v326
        %v411 = vunpack.c.l.b16 %v327
        %v412 = vunpack.c.l.b16 %v328
        %v413 = vunpack.c.l.b16 %v329
        %v414 = vunpack.c.l.b16 %v330
        %v415 = vunpack.c.l.b16 %v331
        %v416 = vunpack.c.l.b16 %v332
        %v417 = vunpack.c.l.b16 %v333
        %v418 = vunpack.c.l.b16 %v334
        %v419 = vunpack.c.l.b16 %v335
        %v420 = vunpack.c.l.b16 %v336
        %v421 = vunpack.c.l.b16 %v337
        %v422 = vunpack.c.l.b16 %v338
        %v423 = vunpack.c.l.b16 %v339
        %v424 = vunpack.c.l.b16 %v340
        %v425 = vunpack.c.l.b16 %v341
        %v426 = vunpack.c.l.b16 %v342
        %v427 = vunpack.c.l.b16 %v343
        %v428 = vunpack.c.l.b16 %v344
        %v429 = vunpack.c.l.b16 %v345
        %v430 = vunpack.c.l.b16 %v346
        %v431 = vunpack.c.l.b16 %v347
        %v432 = vunpack.c.l.b16 %v348
        %v433 = vunpack.c.l.b16 %v349
        %v434 = vunpack.c.l.b16 %v350
        %v435 = vunpack.c.l.b16 %v351
        %v436 = vunpack.c.l.b16 %v352
        %v437 = vunpack.c.l.b16 %v353
        %v438 = vunpack.c.l.b16 %v354
        %v439 = vunpack.c.l.b16 %v355
        %v440 = vunpack.c.l.b16 %v356
        %v441 = vpack.c.b16 %v410, %v409
        %v442 = vpack.c.b16 %v412, %v411
        %v443 = vpack.c.b16 %v414, %v413
        %v444 = vpack.c.b16 %v416, %v415
        %v445 = vpack.c.b16 %v418, %v417
        %v446 = vpack.c.b16 %v420, %v419
        %v447 = vpack.c.b16 %v422, %v421
        %v448 = vpack.c.b16 %v424, %v423
        %v449 = vpack.c.b16 %v426, %v425
        %v450 = vpack.c.b16 %v428, %v427
        %v451 = vpack.c.b16 %v430, %v429
        %v452 = vpack.c.b16 %v432, %v431
        %v453 = vpack.c.b16 %v434, %v433
        %v454 = vpack.c.b16 %v436, %v435
        %v455 = vpack.c.b16 %v438, %v437
        %v456 = vpack.c.b16 %v440, %v439
        %473 = vmatprep.subr.bf16.mxu0 0
        %474 = vmatpush1.bf16.msra.mxu0 %v441
        %475 = vmatprep.subr.bf16.mxu0 0
        %476 = vmatpush1.bf16.msra.mxu0 %v442
        %477 = vmatprep.subr.bf16.mxu0 0
        %478 = vmatpush1.bf16.msra.mxu0 %v443
        %479 = vmatprep.subr.bf16.mxu0 0
        %480 = vmatpush1.bf16.msra.mxu0 %v444
        %481 = vmatprep.subr.bf16.mxu0 0
        %482 = vmatpush1.bf16.msra.mxu0 %v445
        %483 = vmatprep.subr.bf16.mxu0 0
        %484 = vmatpush1.bf16.msra.mxu0 %v446
        %485 = vmatprep.subr.bf16.mxu0 0
        %486 = vmatpush1.bf16.msra.mxu0 %v447
        %487 = vmatprep.subr.bf16.mxu0 0
        %488 = vmatpush1.bf16.msra.mxu0 %v448
        %489 = vmatprep.subr.bf16.mxu0 0
        %490 = vmatpush1.bf16.msra.mxu0 %v449
        %491 = vmatprep.subr.bf16.mxu0 0
        %492 = vmatpush1.bf16.msra.mxu0 %v450
        %493 = vmatprep.subr.bf16.mxu0 0
        %494 = vmatpush1.bf16.msra.mxu0 %v451
        %495 = vmatprep.subr.bf16.mxu0 0
        %496 = vmatpush1.bf16.msra.mxu0 %v452
        %497 = vmatprep.subr.bf16.mxu0 0
        %498 = vmatpush1.bf16.msra.mxu0 %v453
        %499 = vmatprep.subr.bf16.mxu0 0
        %500 = vmatpush1.bf16.msra.mxu0 %v454
        %501 = vmatprep.subr.bf16.mxu0 0
        %502 = vmatpush1.bf16.msra.mxu0 %v455
        %503 = vmatprep.subr.bf16.mxu0 0
        %504 = vmatpush1.bf16.msra.mxu0 %v456
        %505 = vmatprep.mubr.bf16.mxu0 %v370
        %506 = vmatmul.mubr.bf16.gmra.mrb[0].mxu0 %v369
        %v507 = vpop.f32.mrb[0].mxu0
        %v508 = vadd.f32 0.0, %v507
        %v509 = vpop.f32.mrb[0].mxu0
        %v510 = vpop.f32.mrb[0].mxu0
        %v511 = vadd.f32 0.0, %v510
        %v512 = vpop.f32.mrb[0].mxu0
        %513 = vmatprep.mubr.bf16.mxu0 %v372
        %514 = vmatmul.mubr.bf16.gmra.mrb[0].mxu0 %v371
        %v515 = vpop.f32.mrb[0].mxu0
        %v516 = vadd.f32 0.0, %v515
        %v517 = vpop.f32.mrb[0].mxu0
        %v518 = vpop.f32.mrb[0].mxu0
        %v519 = vadd.f32 0.0, %v518
        %v520 = vpop.f32.mrb[0].mxu0
        %521 = vdwg.mxu0
        %v522 = vadd.f32 %v317, %v508
        %v523 = vadd.f32 %v318, %v511
        %v524 = vadd.f32 %v319, %v516
        %v525 = vadd.f32 %v320, %v519
        %526 = vst [vmem:[#allocation2] sm:$0xff] %v522
        %527 = vst [vmem:[#allocation2 + $0x8] sm:$0xff] %v523
        %528 = vst [vmem:[#allocation2 + $0x10] sm:$0xff] %v524
        %529 = vst [vmem:[#allocation2 + $0x18] sm:$0xff] %v525
        %p530 = scmp.eq.s32.totalorder %s21, 1
        // Predicated region
        $region71: #{discriminator_forward.12} parent=61 // pred_check
          %p531 = pneg %p530
        $region72: #{discriminator_forward.12} parent=61 // pred_check_branch
          %533 = sbr.rel (%p531) target = $region74
        $region73: #{discriminator_forward.12} parent=61 // pred_region
          %v534 = vld [vmem:[#allocation2] sm:$0xff]
          %v535 = vld [vmem:[#allocation2 + $0x8] sm:$0xff]
          %v536 = vld [vmem:[#allocation2 + $0x10] sm:$0xff]
          %v537 = vld [vmem:[#allocation2 + $0x18] sm:$0xff]
          %v538 = vpack.c.bf16 %v535, %v534
          %v539 = vpack.c.bf16 %v537, %v536
          %v542 = vunpack.c.l.b16 %v538
          %v543 = vunpack.c.h.b16 %v538
          %v544 = vunpack.c.l.b16 %v539
          %v545 = vunpack.c.h.b16 %v539
          %v546 = vpack.c.b16 %v542, %v542
          %v547 = vpack.c.b16 %v543, %v543
          %v548 = vpack.c.b16 %v544, %v544
          %v549 = vpack.c.b16 %v545, %v545
          %554 = vst [vmem:[%s298] sm:$0xf] %v546
          %555 = vst [vmem:[%s298 + $0x4] sm:$0xf] %v547
          %556 = vst [vmem:[%s298 + $0x8] sm:$0xf] %v548
          %557 = vst [vmem:[%s298 + $0xc] sm:$0xf] %v549
          %v558 = vadd.f32 %v534, %v535
          %v559 = vadd.f32 %v558, %v536
          %v560 = vadd.f32 %v559, %v537
          %v561 = vrot.slane %v560, 4
          %v562 = vadd.f32 %v560, %v561
          %v563 = vrot.slane %v562, 2
          %v564 = vadd.f32 %v562, %v563
          %v565 = vrot.slane %v564, 1
          %v566 = vadd.f32 %v564, %v565
          %v567 = vmul.f32 %v534, %v534
          %v568 = vmul.f32 %v535, %v535
          %v569 = vmul.f32 %v536, %v536
          %v570 = vmul.f32 %v537, %v537
          %v571 = vadd.f32 %v567, %v568
          %v572 = vadd.f32 %v571, %v569
          %v573 = vadd.f32 %v572, %v570
          %v574 = vrot.slane %v573, 4
          %v575 = vadd.f32 %v573, %v574
          %v576 = vrot.slane %v575, 2
          %v577 = vadd.f32 %v575, %v576
          %v578 = vrot.slane %v577, 1
          %v579 = vadd.f32 %v577, %v578
          %580 = vst [vmem:[%s303] sm:$0xff] %v566
          %581 = vst [vmem:[%s307] sm:$0xff] %v579
        $region74: #{discriminator_forward.12} parent=61 // pred_fallthru
          _
        %s582 = smul.u32 4, %s20
        %p583 = scmp.lt.s32.totalorder %s582, 3
        %s584 = scalar_select %p583, %s582, 3
        %s585 = smul.addr %s584, 4
        %s586 = scalar_lea.vmem %s2, %s585
        %p587 = scmp.lt.s32.totalorder %s20, 0
        %s588 = scalar_select %p587, %s20, 0
        %s589 = smul.addr %s588, 8
        %s590 = scalar_lea.vmem %s3, %s589
        %p591 = scmp.lt.s32.totalorder %s20, 0
        %s592 = scalar_select %p591, %s20, 0
        %s593 = smul.addr %s592, 8
        %s594 = scalar_lea.vmem %s4, %s593
        // Predicated region
        $region75: #{discriminator_forward.12} parent=61 // pred_check
          %p595 = pneg %p100
        $region76: #{discriminator_forward.12} parent=61 // pred_check_branch
          %597 = sbr.rel (%p595) target = $region78
        $region77: #{discriminator_forward.12} parent=61 // pred_region
          %s598 = smul.u32 4, %s20
        $region78: #{discriminator_forward.12} parent=61 // pred_fallthru
          _
        // Predicated region
        $region79: #{discriminator_forward.12} parent=61 // pred_check
          %p599 = pneg %p126
        $region80: #{discriminator_forward.12} parent=61 // pred_check_branch
          %601 = sbr.rel (%p599) target = $region82
        $region81: #{discriminator_forward.12} parent=61 // pred_region
          _
        $region82: #{discriminator_forward.12} parent=61 // pred_fallthru
          _
        // Predicated region
        $region83: #{discriminator_forward.12} parent=61 // pred_check
          %p602 = pneg %p152
        $region84: #{discriminator_forward.12} parent=61 // pred_check_branch
          %604 = sbr.rel (%p602) target = $region86
        $region85: #{discriminator_forward.12} parent=61 // pred_region
          _
        $region86: #{discriminator_forward.12} parent=61 // pred_fallthru
          _
        // Predicated region
        $region87: #{discriminator_forward.12} parent=61 // pred_check
          %p605 = pneg %p100
        $region88: #{discriminator_forward.12} parent=61 // pred_check_branch
          %607 = sbr.rel (%p605) target = $region90
        $region89: #{discriminator_forward.12} parent=61 // pred_region
          %s608 = smul.u32 4, %s20
          %p609 = scmp.lt.s32.totalorder %s608, 3
          %s610 = scalar_select %p609, %s608, 3
          %s611 = smul.addr %s610, 4
          %s612 = scalar_lea.vmem %s2, %s611
        $region90: #{discriminator_forward.12} parent=61 // pred_fallthru
          _
        // Predicated region
        $region91: #{discriminator_forward.12} parent=61 // pred_check
          %p613 = pneg %p126
        $region92: #{discriminator_forward.12} parent=61 // pred_check_branch
          %615 = sbr.rel (%p613) target = $region94
        $region93: #{discriminator_forward.12} parent=61 // pred_region
          %p616 = scmp.lt.s32.totalorder %s20, 0
          %s617 = scalar_select %p616, %s20, 0
          %s618 = smul.addr %s617, 8
          %s619 = scalar_lea.vmem %s3, %s618
        $region94: #{discriminator_forward.12} parent=61 // pred_fallthru
          _
        // Predicated region
        $region95: #{discriminator_forward.12} parent=61 // pred_check
          %p620 = pneg %p152
        $region96: #{discriminator_forward.12} parent=61 // pred_check_branch
          %622 = sbr.rel (%p620) target = $region98
        $region97: #{discriminator_forward.12} parent=61 // pred_region
          %p623 = scmp.lt.s32.totalorder %s20, 0
          %s624 = scalar_select %p623, %s20, 0
          %s625 = smul.addr %s624, 8
          %s626 = scalar_lea.vmem %s4, %s625
        $region98: #{discriminator_forward.12} parent=61 // pred_fallthru
          _
      $region62: #{discriminator_forward.12} parent=5 // pred_fallthru
        _
      %p627 = scmp.le.s32.totalorder 2, %s11
      // Predicated region
      $region99: #{discriminator_forward.12} parent=5 // pred_check
        %p628 = pneg %p627
      $region100: #{discriminator_forward.12} parent=5 // pred_check_branch
        %630 = sbr.rel (%p628) target = $region102
      $region101: #{discriminator_forward.12} parent=5 // pred_region
        %s631 = ssub.s32 %s11, 2
      $region102: #{discriminator_forward.12} parent=5 // pred_fallthru
        _
    $region6: #{discriminator_forward.12} parent=1 // loop_footer
      %s15 = sadd.s32 1, %s11
    $region7: #{discriminator_forward.12} parent=1 // loop_footer_branch
      %10 = sbr.rel target = $region3
    $region8: #{discriminator_forward.12} parent=1 // loop_exit
      _

// kernel: discriminator_forward.13
$region0: #{discriminator_forward.13}
  #allocation0 [shape = 'u32[]', space=smem, size = 0x4, offset = 0x4, fixed_abs, tag = 'smem constant byte address 0x4 - core index']
  #allocation1 [shape = 'u32[144,128]{1,0:T(1,128)}', space=vmem, size = 0x12000, scoped, tag = 'internal scratch']
  %s0 = inlined_call_operand.vmem [shape: bf16[32,128], index: 0, kind: input, shape index: {}]
  %s1 = inlined_call_operand.vmem [shape: f32[1,128], index: 1, kind: input, shape index: {}]
  %s2 = inlined_call_operand.vmem [shape: f32[1,128], index: 2, kind: input, shape index: {}]
  %s3 = inlined_call_operand.vmem [shape: bf16[32,128], index: 3, kind: output, shape index: {}]
  %s4 = sld [smem:[#allocation0]]
  $region22: #{discriminator_forward.13} parent=0
    _
  %s6 = ssub.s32 1, %s4
  %s7 = scalar_select 0, %s6, %s4
  // Predicated region
  $region2: #{discriminator_forward.13} parent=0 // pred_check
    _
  $region3: #{discriminator_forward.13} parent=0 // pred_check_branch
    %9 = sbr.rel (0) target = $region5
  $region4: #{discriminator_forward.13} parent=0 // pred_region
    _
  $region5: #{discriminator_forward.13} parent=0 // pred_fallthru
    _
  // Predicated region
  $region6: #{discriminator_forward.13} parent=0 // pred_check
    _
  $region7: #{discriminator_forward.13} parent=0 // pred_check_branch
    %11 = sbr.rel (0) target = $region9
  $region8: #{discriminator_forward.13} parent=0 // pred_region
    _
  $region9: #{discriminator_forward.13} parent=0 // pred_fallthru
    _
  // Predicated region
  $region10: #{discriminator_forward.13} parent=0 // pred_check
    _
  $region11: #{discriminator_forward.13} parent=0 // pred_check_branch
    %13 = sbr.rel (0) target = $region13
  $region12: #{discriminator_forward.13} parent=0 // pred_region
    _
  $region13: #{discriminator_forward.13} parent=0 // pred_fallthru
    _
  %v14 = vld [vmem:[%s0] sm:$0xf]
  %v15 = vld [vmem:[%s0 + $0x4] sm:$0xf]
  %v16 = vld [vmem:[%s0 + $0x8] sm:$0xf]
  %v17 = vld [vmem:[%s0 + $0xc] sm:$0xf]
  %v18 = vunpack.c.l.bf16 %v14
  %v19 = vunpack.c.l.bf16 %v15
  %v20 = vunpack.c.l.bf16 %v16
  %v21 = vunpack.c.l.bf16 %v17
  %v22 = vld [vmem:[%s1] sm:$0x1]
  %v24 = vlaneseq
  %v25 = vshrl.u32 %v24, 7
  %v26 = vsub.s32 0, %v25
  %v27 = vrot.slane %v22, %v26
  %v29 = vmul.f32 %v18, %v27
  %v30 = vmul.f32 %v19, %v27
  %v31 = vmul.f32 %v20, %v27
  %v32 = vmul.f32 %v21, %v27
  %v33 = vld [vmem:[%s2] sm:$0x1]
  %v35 = vlaneseq
  %v36 = vshrl.u32 %v35, 7
  %v37 = vsub.s32 0, %v36
  %v38 = vrot.slane %v33, %v37
  %v40 = vadd.f32 %v29, %v38
  %v41 = vadd.f32 %v30, %v38
  %v42 = vadd.f32 %v31, %v38
  %v43 = vadd.f32 %v32, %v38
  %vm44 = vcmp.ge.f32.partialorder %v40, 0.0
  %vm45 = vcmp.ge.f32.partialorder %v41, 0.0
  %vm46 = vcmp.ge.f32.partialorder %v42, 0.0
  %vm47 = vcmp.ge.f32.partialorder %v43, 0.0
  %v48 = vmul.f32 %v40, 0.2
  %v49 = vmul.f32 %v41, 0.2
  %v50 = vmul.f32 %v42, 0.2
  %v51 = vmul.f32 %v43, 0.2
  %v52 = vsel %vm44, %v40, %v48
  %v53 = vsel %vm45, %v41, %v49
  %v54 = vsel %vm46, %v42, %v50
  %v55 = vsel %vm47, %v43, %v51
  %v56 = vpack.c.bf16 %v53, %v52
  %v57 = vpack.c.bf16 %v55, %v54
  %v60 = vunpack.c.l.b16 %v56
  %v61 = vunpack.c.h.b16 %v56
  %v62 = vunpack.c.l.b16 %v57
  %v63 = vunpack.c.h.b16 %v57
  %v64 = vpack.c.b16 %v60, %v60
  %v65 = vpack.c.b16 %v61, %v61
  %v66 = vpack.c.b16 %v62, %v62
  %v67 = vpack.c.b16 %v63, %v63
  %72 = vst [vmem:[%s3] sm:$0xf] %v64
  %73 = vst [vmem:[%s3 + $0x4] sm:$0xf] %v65
  %74 = vst [vmem:[%s3 + $0x8] sm:$0xf] %v66
  %75 = vst [vmem:[%s3 + $0xc] sm:$0xf] %v67
  // Predicated region
  $region14: #{discriminator_forward.13} parent=0 // pred_check
    _
  $region15: #{discriminator_forward.13} parent=0 // pred_check_branch
    %77 = sbr.rel (0) target = $region17
  $region16: #{discriminator_forward.13} parent=0 // pred_region
    _
  $region17: #{discriminator_forward.13} parent=0 // pred_fallthru
    _
  // Predicated region
  $region18: #{discriminator_forward.13} parent=0 // pred_check
    _
  $region19: #{discriminator_forward.13} parent=0 // pred_check_branch
    %79 = sbr.rel (0) target = $region21
  $region20: #{discriminator_forward.13} parent=0 // pred_region
    _
  $region21: #{discriminator_forward.13} parent=0 // pred_fallthru
    _

</llo_original>
